<compile_context>
chip_gen: v7x
topology: tpu7x:2x2x1
jax: 0.10.0
libtpu: 0.0.40
codegen_flags: <defaults>
</compile_context>

<pallas_src>
import jax
import jax.numpy as jnp
from jax.experimental import pallas as pl
from jax.experimental.pallas import tpu as pltpu


def domain_kernel(x_ref, w1_ref, b1_ref, w2_ref, b2_ref, w3_ref, b3_ref, o_ref):
    # x_ref: (TM, IN) f32 ; w1: (IN, H) bf16 ; w2: (H, H) bf16
    # b1/b2: (1, H) f32 ; w3: (1, H) f32 lane-dense row ; b3: (1,) f32 scalar in SMEM
    # o_ref: (TM, 1) f32
    x = x_ref[...].astype(jnp.bfloat16)  # cast in VMEM; no extra wrapper HBM pass

    # fc1 + ReLU (dropout1 = identity in eval mode). bf16 MXU operands, f32 accumulate.
    h1 = jnp.dot(x, w1_ref[...], preferred_element_type=jnp.float32) + b1_ref[...]
    h1 = jnp.maximum(h1, 0.0).astype(jnp.bfloat16)

    # fc2 + ReLU (dropout2 = identity in eval mode).
    h2 = jnp.dot(h1, w2_ref[...], preferred_element_type=jnp.float32) + b2_ref[...]
    h2 = jnp.maximum(h2, 0.0)

    # fc3 (hidden -> 1): lane-dense VPU multiply + lane reduction instead of a
    # >99%-padded N=1 MXU matmul.  b3 read from SMEM as a scalar.
    logit = jnp.sum(h2 * w3_ref[...], axis=-1, keepdims=True) + b3_ref[0]

    # Sigmoid on the EUP slot.
    o_ref[...] = jax.nn.sigmoid(logit).astype(o_ref.dtype)


def _round_up(n, m):
    return ((n + m - 1) // m) * m


def domain_forward(x, alpha, params):
    """Pallas wrapper. `alpha` only affects the backward pass of the GRL, so the
    forward pass ignores it (identity). Params come from init_params and keep the
    fc1/fc2 weights persistently in bf16 (cast once, not per call)."""
    del alpha  # GRL is identity in forward
    w1, b1, w2, b2, w3_row, b3 = params
    B, in_features = x.shape
    hidden = w1.shape[1]

    # Batch tile: up to 256 rows per grid step (fills the 256-wide MXU M dim on
    # v6e/v7x, halves grid steps; 2x the natural 128 rows on v5e).  Pad B if needed.
    TM = min(256, _round_up(B, 8))
    Bp = _round_up(B, TM)
    if Bp != B:
        x = jnp.pad(x, ((0, Bp - B), (0, 0)))
    num_tiles = Bp // TM

    # Megacore-shard the batch only when per-core compute outweighs the duplicated
    # resident-weight DMA (the kernel is weight-DMA-bound at small batch).
    dim_sem = ("parallel",) if Bp >= 1024 else ("arbitrary",)

    bytes_accessed = (
        Bp * in_features * 4          # x (f32, DMA'd per batch tile)
        + w1.size * 2 + w2.size * 2   # bf16 resident weights, DMA'd once
        + b1.size * 4 + b2.size * 4 + w3_row.size * 4 + b3.size * 4
        + Bp * 4                      # output
    )
    cost = pl.CostEstimate(
        flops=2 * Bp * (in_features * hidden + hidden * hidden + hidden),
        transcendentals=Bp,
        bytes_accessed=bytes_accessed,
    )

    out = pl.pallas_call(
        domain_kernel,
        out_shape=jax.ShapeDtypeStruct((Bp, 1), jnp.float32),
        grid=(num_tiles,),
        in_specs=[
            pl.BlockSpec((TM, in_features), lambda i: (i, 0)),      # x batch tile (f32)
            pl.BlockSpec((in_features, hidden), lambda i: (0, 0)),  # w1 bf16 (VMEM-resident)
            pl.BlockSpec((1, hidden), lambda i: (0, 0)),            # b1 (resident)
            pl.BlockSpec((hidden, hidden), lambda i: (0, 0)),       # w2 bf16 (resident)
            pl.BlockSpec((1, hidden), lambda i: (0, 0)),            # b2 (resident)
            pl.BlockSpec((1, hidden), lambda i: (0, 0)),            # w3 lane-dense row
            pl.BlockSpec(memory_space=pltpu.MemorySpace.SMEM),      # b3 1-D scalar in SMEM
        ],
        out_specs=pl.BlockSpec((TM, 1), lambda i: (i, 0)),
        compiler_params=pltpu.CompilerParams(
            dimension_semantics=dim_sem,
            vmem_limit_bytes=32 * 1024 * 1024,  # safe on v7x's 64 MiB physical VMEM
        ),
        cost_estimate=cost,
    )(x, w1, b1, w2, b2, w3_row, b3)

    return out[:B]


def init_params(key, in_features, hidden_size):
    """Parameters in their kernel-ready layout:
      * nn.Linear weights pre-transposed to [in, out];
      * fc1/fc2 weights persisted in bf16 (cast ONCE here, never per call);
      * fc3 weight flattened to a lane-dense [1, hidden] f32 row;
      * fc3 bias a 1-D f32 scalar (SMEM)."""
    k1, k2, k3, k4, k5, k6 = jax.random.split(key, 6)
    w1 = (jax.random.normal(k1, (in_features, hidden_size), jnp.float32) * 0.01
          ).astype(jnp.bfloat16)
    b1 = jax.random.normal(k2, (1, hidden_size), jnp.float32) * 0.01
    w2 = (jax.random.normal(k3, (hidden_size, hidden_size), jnp.float32) * 0.01
          ).astype(jnp.bfloat16)
    b2 = jax.random.normal(k4, (1, hidden_size), jnp.float32) * 0.01
    w3_row = jax.random.normal(k5, (1, hidden_size), jnp.float32) * 0.3
    b3 = jax.random.normal(k6, (1,), jnp.float32) * 0.3
    return (w1, b1, w2, b2, w3_row, b3)


def _reference_f32(x, params):
    """Pure-JAX f32 reference of the PyTorch forward (eval mode).  Uses the same
    (bf16-rounded) parameter values the kernel sees, but runs the matmuls in f32,
    so it checks the kernel's bf16-operand / f32-accumulate precision for real."""
    w1, b1, w2, b2, w3_row, b3 = params
    h1 = jnp.maximum(jnp.dot(x, w1.astype(jnp.float32)) + b1, 0.0)
    h2 = jnp.maximum(jnp.dot(h1, w2.astype(jnp.float32)) + b2, 0.0)
    logit = jnp.sum(h2 * w3_row, axis=-1, keepdims=True) + b3[0]
    return jax.nn.sigmoid(logit)


if __name__ == "__main__":
    # Module-default feature sizes (in_features=512, hidden_size=1024).
    in_features, hidden_size = 512, 1024
    key = jax.random.PRNGKey(0)
    kx, kp, kx2 = jax.random.split(key, 3)
    params = init_params(kp, in_features, hidden_size)
    alpha = 0.5  # unused in forward (GRL identity)

    # Case 1: multi-tile batch (2 grid steps at TM=256, no padding).
    x = jax.random.normal(kx, (512, in_features), jnp.float32)
    out = jax.block_until_ready(domain_forward(x, alpha, params))
    ref = _reference_f32(x, params)
    assert out.shape == (512, 1), out.shape
    assert jnp.allclose(out, ref, atol=2e-2, rtol=2e-2), "mismatch vs f32 reference"

    # Case 2: tiny batch (single grid step, padded rows sliced off).
    x_small = jax.random.normal(kx2, (3, in_features), jnp.float32)
    out_small = jax.block_until_ready(domain_forward(x_small, alpha, params))
    ref_small = _reference_f32(x_small, params)
    assert out_small.shape == (3, 1), out_small.shape
    assert jnp.allclose(out_small, ref_small, atol=2e-2, rtol=2e-2), \
        "mismatch vs f32 reference (small batch)"

    print("KERNEL_OK")
</pallas_src>

<mosaic_0001>
module attributes {stable_mosaic.version = 11 : i64} {
  func.func @domain_kernel(%arg0: i32, %arg1: memref<256x512xf32, #tpu.memory_space<vmem>>, %arg2: memref<512x1024xbf16, #tpu.memory_space<vmem>>, %arg3: memref<1x1024xf32, #tpu.memory_space<vmem>>, %arg4: memref<1024x1024xbf16, #tpu.memory_space<vmem>>, %arg5: memref<1x1024xf32, #tpu.memory_space<vmem>>, %arg6: memref<1x1024xf32, #tpu.memory_space<vmem>>, %arg7: memref<1xf32, #tpu.memory_space<smem>>, %arg8: memref<256x1xf32, #tpu.memory_space<vmem>>) attributes {dimension_semantics = [#tpu.dimension_semantics<arbitrary>], iteration_bounds = array<i64: 2>, scalar_prefetch = 0 : i64, scratch_operands = 0 : i64, tpu.core_type = #tpu.core_type<tc>, window_params = [{transform_indices = @transform_0, window_bounds = array<i64: 256, 512>}, {pipeline_mode = #tpu.pipeline_mode<synchronous>, transform_indices = @transform_1, window_bounds = array<i64: 512, 1024>}, {pipeline_mode = #tpu.pipeline_mode<synchronous>, transform_indices = @transform_2, window_bounds = array<i64: 1, 1024>}, {pipeline_mode = #tpu.pipeline_mode<synchronous>, transform_indices = @transform_3, window_bounds = array<i64: 1024, 1024>}, {pipeline_mode = #tpu.pipeline_mode<synchronous>, transform_indices = @transform_4, window_bounds = array<i64: 1, 1024>}, {pipeline_mode = #tpu.pipeline_mode<synchronous>, transform_indices = @transform_5, window_bounds = array<i64: 1, 1024>}, {transform_indices = @transform_6, window_bounds = array<i64: 1>}, {transform_indices = @transform_7, window_bounds = array<i64: 256, 1>}]} {
    %c0 = arith.constant 0 : index
    %c0_0 = arith.constant 0 : index
    %0 = vector.load %arg1[%c0, %c0_0] : memref<256x512xf32, #tpu.memory_space<vmem>>, vector<256x512xf32>
    %1 = arith.truncf %0 : vector<256x512xf32> to vector<256x512xbf16>
    %c0_1 = arith.constant 0 : index
    %c0_2 = arith.constant 0 : index
    %2 = vector.load %arg2[%c0_1, %c0_2] : memref<512x1024xbf16, #tpu.memory_space<vmem>>, vector<512x1024xbf16>
    %cst = arith.constant dense<0.000000e+00> : vector<256x1024xf32>
    %3 = tpu.matmul %1, %2, %cst {dimension_numbers = #tpu.dot_dimension_numbers<[1], [0], [0], [1], [0, 0, 1, 1], [], []>} : vector<256x512xbf16>, vector<512x1024xbf16>, vector<256x1024xf32> -> vector<256x1024xf32>
    %c0_3 = arith.constant 0 : index
    %c0_4 = arith.constant 0 : index
    %4 = vector.load %arg3[%c0_3, %c0_4] : memref<1x1024xf32, #tpu.memory_space<vmem>>, vector<1x1024xf32>
    %5 = vector.broadcast %4 : vector<1x1024xf32> to vector<256x1024xf32>
    %6 = arith.addf %3, %5 : vector<256x1024xf32>
    %cst_5 = arith.constant 0.000000e+00 : f32
    %7 = vector.broadcast %cst_5 : f32 to vector<256x1024xf32>
    %8 = arith.maximumf %6, %7 : vector<256x1024xf32>
    %9 = arith.truncf %8 : vector<256x1024xf32> to vector<256x1024xbf16>
    %c0_6 = arith.constant 0 : index
    %c0_7 = arith.constant 0 : index
    %10 = vector.load %arg4[%c0_6, %c0_7] : memref<1024x1024xbf16, #tpu.memory_space<vmem>>, vector<1024x1024xbf16>
    %cst_8 = arith.constant dense<0.000000e+00> : vector<256x1024xf32>
    %11 = tpu.matmul %9, %10, %cst_8 {dimension_numbers = #tpu.dot_dimension_numbers<[1], [0], [0], [1], [0, 0, 1, 1], [], []>} : vector<256x1024xbf16>, vector<1024x1024xbf16>, vector<256x1024xf32> -> vector<256x1024xf32>
    %c0_9 = arith.constant 0 : index
    %c0_10 = arith.constant 0 : index
    %12 = vector.load %arg5[%c0_9, %c0_10] : memref<1x1024xf32, #tpu.memory_space<vmem>>, vector<1x1024xf32>
    %13 = vector.broadcast %12 : vector<1x1024xf32> to vector<256x1024xf32>
    %14 = arith.addf %11, %13 : vector<256x1024xf32>
    %cst_11 = arith.constant 0.000000e+00 : f32
    %15 = vector.broadcast %cst_11 : f32 to vector<256x1024xf32>
    %16 = arith.maximumf %14, %15 : vector<256x1024xf32>
    %c0_12 = arith.constant 0 : index
    %c0_13 = arith.constant 0 : index
    %17 = vector.load %arg6[%c0_12, %c0_13] : memref<1x1024xf32, #tpu.memory_space<vmem>>, vector<1x1024xf32>
    %18 = vector.broadcast %17 : vector<1x1024xf32> to vector<256x1024xf32>
    %19 = arith.mulf %16, %18 : vector<256x1024xf32>
    %cst_14 = arith.constant dense<0.000000e+00> : vector<256xf32>
    %20 = vector.multi_reduction <add>, %19, %cst_14 [1] : vector<256x1024xf32> to vector<256xf32>
    %21 = vector.shape_cast %20 : vector<256xf32> to vector<256x1xf32>
    %c0_15 = arith.constant 0 : index
    %22 = memref.load %arg7[%c0_15] : memref<1xf32, #tpu.memory_space<smem>>
    %23 = vector.broadcast %22 : f32 to vector<256x1xf32>
    %24 = arith.addf %21, %23 : vector<256x1xf32>
    %25 = arith.negf %24 : vector<256x1xf32>
    %26 = math.exp %25 : vector<256x1xf32>
    %cst_16 = arith.constant 1.000000e+00 : f32
    %27 = vector.broadcast %cst_16 : f32 to vector<256x1xf32>
    %28 = arith.addf %27, %26 : vector<256x1xf32>
    %29 = arith.divf %27, %28 : vector<256x1xf32>
    %c0_17 = arith.constant 0 : index
    %c0_18 = arith.constant 0 : index
    %30 = vector.load %arg8[%c0_17, %c0_18] : memref<256x1xf32, #tpu.memory_space<vmem>>, vector<256x1xf32>
    tpu.vector_store %arg8[%c0_17, %c0_18], %29 {strides = array<i32>} : memref<256x1xf32, #tpu.memory_space<vmem>>, vector<256x1xf32>,
    return
  }
  func.func @transform_0(%arg0: i32) -> (i32, i32) {
    %c0_i32 = arith.constant 0 : i32
    %c0_i32_0 = arith.constant 0 : i32
    return %arg0, %c0_i32 : i32, i32
  }
  func.func @transform_1(%arg0: i32) -> (i32, i32) {
    %c0_i32 = arith.constant 0 : i32
    %c0_i32_0 = arith.constant 0 : i32
    %c0_i32_1 = arith.constant 0 : i32
    return %c0_i32, %c0_i32_0 : i32, i32
  }
  func.func @transform_2(%arg0: i32) -> (i32, i32) {
    %c0_i32 = arith.constant 0 : i32
    %c0_i32_0 = arith.constant 0 : i32
    %c0_i32_1 = arith.constant 0 : i32
    return %c0_i32, %c0_i32_0 : i32, i32
  }
  func.func @transform_3(%arg0: i32) -> (i32, i32) {
    %c0_i32 = arith.constant 0 : i32
    %c0_i32_0 = arith.constant 0 : i32
    %c0_i32_1 = arith.constant 0 : i32
    return %c0_i32, %c0_i32_0 : i32, i32
  }
  func.func @transform_4(%arg0: i32) -> (i32, i32) {
    %c0_i32 = arith.constant 0 : i32
    %c0_i32_0 = arith.constant 0 : i32
    %c0_i32_1 = arith.constant 0 : i32
    return %c0_i32, %c0_i32_0 : i32, i32
  }
  func.func @transform_5(%arg0: i32) -> (i32, i32) {
    %c0_i32 = arith.constant 0 : i32
    %c0_i32_0 = arith.constant 0 : i32
    %c0_i32_1 = arith.constant 0 : i32
    return %c0_i32, %c0_i32_0 : i32, i32
  }
  func.func @transform_6(%arg0: i32) -> i32 {
    %c0_i32 = arith.constant 0 : i32
    %c0_i32_0 = arith.constant 0 : i32
    return %c0_i32 : i32
  }
  func.func @transform_7(%arg0: i32) -> (i32, i32) {
    %c0_i32 = arith.constant 0 : i32
    %c0_i32_0 = arith.constant 0 : i32
    return %arg0, %c0_i32 : i32, i32
  }
}

</mosaic_0001>

<llo_original>
// kernel: tpu_custom_call.1
$region0: #{tpu_custom_call.1}
  #allocation0 [shape = 'u32[]', space=smem, size = 0x4, offset = 0x4, fixed_abs, tag = 'smem constant byte address 0x4 - core index']
  #allocation1 [shape = 'u32[144,128]{1,0:T(1,128)}', space=vmem, size = 0x12000, scoped, tag = 'internal scratch']
  #allocation2 [shape = 'f32[1]{0:T(128)S(6)}', space=smem, size = 0x200, scoped, tag = 'scoped memory for tpu_custom_call.1']
  %s0 = inlined_call_operand.hbm [shape: f32[512,512], index: 0, kind: input, shape index: {}]
  %s1 = inlined_call_operand.hbm [shape: bf16[512,1024], index: 1, kind: input, shape index: {}]
  %s2 = inlined_call_operand.hbm [shape: f32[1,1024], index: 2, kind: input, shape index: {}]
  %s3 = inlined_call_operand.hbm [shape: bf16[1024,1024], index: 3, kind: input, shape index: {}]
  %s4 = inlined_call_operand.hbm [shape: f32[1,1024], index: 4, kind: input, shape index: {}]
  %s5 = inlined_call_operand.hbm [shape: f32[1,1024], index: 5, kind: input, shape index: {}]
  %s6 = inlined_call_operand.<no memory space> [shape: f32[1], index: 6, kind: input, shape index: {}]
  %s7 = inlined_call_operand.vmem [shape: f32[512,1], index: 7, kind: output, shape index: {}]
  %s8 = sld [smem:[#allocation0]]
  $region85: #{tpu_custom_call.1} parent=0
    _
  %s10 = ssub.s32 1, %s8
  %s11 = scalar_select 0, %s10, %s8
  %12 = sst [smem:[#allocation2]] %s6
  $region1: #{tpu_custom_call.1} parent=0
    #allocation3 [shape = 'u8[1048576]{0}', space=vmem, size = 0x100000, scoped, tag = 'input window, operand 0']
    #allocation4 [shape = 's32[2]{0}', space=sflag, size = 0x8, scoped, tag = 'scoped memory for tpu_custom_call.1']
    #allocation5 [shape = 'u8[1048576]{0}', space=vmem, size = 0x100000, scoped, tag = 'input window, operand 1, single buffered']
    #allocation6 [shape = 's32[1]{0}', space=sflag, size = 0x4, scoped, tag = 'scoped memory for tpu_custom_call.1']
    #allocation7 [shape = 'u8[4096]{0}', space=vmem, size = 0x1000, scoped, tag = 'input window, operand 2, single buffered']
    #allocation8 [shape = 'u8[2097152]{0}', space=vmem, size = 0x200000, scoped, tag = 'input window, operand 3, single buffered']
    #allocation9 [shape = 's32[1]{0}', space=sflag, size = 0x4, scoped, tag = 'scoped memory for tpu_custom_call.1']
    #allocation10 [shape = 'u8[4096]{0}', space=vmem, size = 0x1000, scoped, tag = 'input window, operand 4, single buffered']
    #allocation11 [shape = 'u8[4096]{0}', space=vmem, size = 0x1000, scoped, tag = 'input window, operand 5, single buffered']
    #allocation12 [shape = 's32[1]{0}', space=sflag, size = 0x4, scoped, tag = 'scoped memory for tpu_custom_call.1']
    %13 = vsyncpa [#allocation4], 0
    %s14 = scalar_lea.sflag [#allocation4], 1
    %15 = vsyncpa %s14, 0
    %16 = vsyncpa [#allocation6], 0
    %17 = vsyncpa [#allocation9], 0
    %18 = vsyncpa [#allocation12], 0
    loop: start=0, step=1, limit=4
    $region2: #{tpu_custom_call.1} parent=1 // loop_pre_header
      _
    $region3: #{tpu_custom_call.1} parent=1 // loop_header
      %s20 = sphi 0, %s24
      %p21 = scmp.ge.s32.totalorder %s20, 4
      %s30 = sphi 0, %s32
      %s33 = sphi 0, %s30
      %s34 = sphi 0, %s33
      %s50 = sphi 0, %s34
      %s54 = sphi 0, %s54
      %s56 = sphi 0, %s54
      %s57 = sphi 0, %s56
      %s71 = sphi 0, %s57
      %s75 = sphi 0, %s75
      %s77 = sphi 0, %s75
      %s78 = sphi 0, %s77
      %s92 = sphi 0, %s78
      %s96 = sphi 0, %s96
      %s98 = sphi 0, %s96
      %s99 = sphi 0, %s98
      %s113 = sphi 0, %s99
      %s117 = sphi 0, %s117
      %s119 = sphi 0, %s117
      %s120 = sphi 0, %s119
      %s134 = sphi 0, %s120
      %s138 = sphi 0, %s138
      %s140 = sphi 0, %s138
      %s141 = sphi 0, %s140
      %s155 = sphi 0, %s141
      %s159 = sphi 0, %s159
      %s161 = sphi 0, %s159
      %s162 = sphi 0, %s161
      %s176 = sphi 0, %s162
      %s182 = sphi 0, %s184
      %s185 = sphi 0, %s182
      %s186 = sphi 0, %s185
      %s202 = sphi 0, %s186
    $region4: #{tpu_custom_call.1} parent=1 // loop_header_branch
      %23 = sbr.rel (%p21) target = $region8
    $region5: #{tpu_custom_call.1} parent=1 // loop_body
      %s25 = ssub.s32 %s20, 1
      %s26 = ssub.s32 %s20, 2
      %s27 = sadd.s32 %s20, 1
      %s28 = ssub.s32 %s20, %s27
      %p29 = scmp.eq.s32.totalorder %s28, 0
      %s31 = sadd.s32 %s30, 1
      %s32 = scalar_select %p29, %s30, %s31
      %p35 = pneg %p29
      %p36 = scmp.eq.s32.totalorder %s20, 1
      %p37 = por %p35, %p36
      %p38 = scmp.ne.s32.totalorder %s30, %s33
      %p39 = scmp.eq.s32.totalorder %s20, 0
      %p40 = por %p38, %p39
      %p41 = scmp.ne.s32.totalorder %s30, %s33
      %p42 = scmp.eq.s32.totalorder %s25, 1
      %p43 = por %p41, %p42
      %p44 = scmp.ne.s32.totalorder %s33, %s34
      %p45 = scmp.eq.s32.totalorder %s25, 0
      %p46 = por %p44, %p45
      %p47 = scmp.ne.s32.totalorder %s33, %s34
      %p48 = scmp.eq.s32.totalorder %s26, 1
      %p49 = por %p47, %p48
      %p51 = scmp.ne.s32.totalorder %s34, %s50
      %p52 = scmp.eq.s32.totalorder %s26, 0
      %p53 = por %p51, %p52
      %s55 = sadd.s32 %s54, 1
      %p58 = scmp.eq.s32.totalorder %s20, 1
      %p59 = scmp.ne.s32.totalorder %s54, %s56
      %p60 = scmp.eq.s32.totalorder %s20, 0
      %p61 = por %p59, %p60
      %p62 = scmp.ne.s32.totalorder %s54, %s56
      %p63 = scmp.eq.s32.totalorder %s25, 1
      %p64 = por %p62, %p63
      %p65 = scmp.ne.s32.totalorder %s56, %s57
      %p66 = scmp.eq.s32.totalorder %s25, 0
      %p67 = por %p65, %p66
      %p68 = scmp.ne.s32.totalorder %s56, %s57
      %p69 = scmp.eq.s32.totalorder %s26, 1
      %p70 = por %p68, %p69
      %p72 = scmp.ne.s32.totalorder %s57, %s71
      %p73 = scmp.eq.s32.totalorder %s26, 0
      %p74 = por %p72, %p73
      %s76 = sadd.s32 %s75, 1
      %p79 = scmp.eq.s32.totalorder %s20, 1
      %p80 = scmp.ne.s32.totalorder %s75, %s77
      %p81 = scmp.eq.s32.totalorder %s20, 0
      %p82 = por %p80, %p81
      %p83 = scmp.ne.s32.totalorder %s75, %s77
      %p84 = scmp.eq.s32.totalorder %s25, 1
      %p85 = por %p83, %p84
      %p86 = scmp.ne.s32.totalorder %s77, %s78
      %p87 = scmp.eq.s32.totalorder %s25, 0
      %p88 = por %p86, %p87
      %p89 = scmp.ne.s32.totalorder %s77, %s78
      %p90 = scmp.eq.s32.totalorder %s26, 1
      %p91 = por %p89, %p90
      %p93 = scmp.ne.s32.totalorder %s78, %s92
      %p94 = scmp.eq.s32.totalorder %s26, 0
      %p95 = por %p93, %p94
      %s97 = sadd.s32 %s96, 1
      %p100 = scmp.eq.s32.totalorder %s20, 1
      %p101 = scmp.ne.s32.totalorder %s96, %s98
      %p102 = scmp.eq.s32.totalorder %s20, 0
      %p103 = por %p101, %p102
      %p104 = scmp.ne.s32.totalorder %s96, %s98
      %p105 = scmp.eq.s32.totalorder %s25, 1
      %p106 = por %p104, %p105
      %p107 = scmp.ne.s32.totalorder %s98, %s99
      %p108 = scmp.eq.s32.totalorder %s25, 0
      %p109 = por %p107, %p108
      %p110 = scmp.ne.s32.totalorder %s98, %s99
      %p111 = scmp.eq.s32.totalorder %s26, 1
      %p112 = por %p110, %p111
      %p114 = scmp.ne.s32.totalorder %s99, %s113
      %p115 = scmp.eq.s32.totalorder %s26, 0
      %p116 = por %p114, %p115
      %s118 = sadd.s32 %s117, 1
      %p121 = scmp.eq.s32.totalorder %s20, 1
      %p122 = scmp.ne.s32.totalorder %s117, %s119
      %p123 = scmp.eq.s32.totalorder %s20, 0
      %p124 = por %p122, %p123
      %p125 = scmp.ne.s32.totalorder %s117, %s119
      %p126 = scmp.eq.s32.totalorder %s25, 1
      %p127 = por %p125, %p126
      %p128 = scmp.ne.s32.totalorder %s119, %s120
      %p129 = scmp.eq.s32.totalorder %s25, 0
      %p130 = por %p128, %p129
      %p131 = scmp.ne.s32.totalorder %s119, %s120
      %p132 = scmp.eq.s32.totalorder %s26, 1
      %p133 = por %p131, %p132
      %p135 = scmp.ne.s32.totalorder %s120, %s134
      %p136 = scmp.eq.s32.totalorder %s26, 0
      %p137 = por %p135, %p136
      %s139 = sadd.s32 %s138, 1
      %p142 = scmp.eq.s32.totalorder %s20, 1
      %p143 = scmp.ne.s32.totalorder %s138, %s140
      %p144 = scmp.eq.s32.totalorder %s20, 0
      %p145 = por %p143, %p144
      %p146 = scmp.ne.s32.totalorder %s138, %s140
      %p147 = scmp.eq.s32.totalorder %s25, 1
      %p148 = por %p146, %p147
      %p149 = scmp.ne.s32.totalorder %s140, %s141
      %p150 = scmp.eq.s32.totalorder %s25, 0
      %p151 = por %p149, %p150
      %p152 = scmp.ne.s32.totalorder %s140, %s141
      %p153 = scmp.eq.s32.totalorder %s26, 1
      %p154 = por %p152, %p153
      %p156 = scmp.ne.s32.totalorder %s141, %s155
      %p157 = scmp.eq.s32.totalorder %s26, 0
      %p158 = por %p156, %p157
      %s160 = sadd.s32 %s159, 1
      %p163 = scmp.eq.s32.totalorder %s20, 1
      %p164 = scmp.ne.s32.totalorder %s159, %s161
      %p165 = scmp.eq.s32.totalorder %s20, 0
      %p166 = por %p164, %p165
      %p167 = scmp.ne.s32.totalorder %s159, %s161
      %p168 = scmp.eq.s32.totalorder %s25, 1
      %p169 = por %p167, %p168
      %p170 = scmp.ne.s32.totalorder %s161, %s162
      %p171 = scmp.eq.s32.totalorder %s25, 0
      %p172 = por %p170, %p171
      %p173 = scmp.ne.s32.totalorder %s161, %s162
      %p174 = scmp.eq.s32.totalorder %s26, 1
      %p175 = por %p173, %p174
      %p177 = scmp.ne.s32.totalorder %s162, %s176
      %p178 = scmp.eq.s32.totalorder %s26, 0
      %p179 = por %p177, %p178
      %s180 = ssub.s32 %s20, %s27
      %p181 = scmp.eq.s32.totalorder %s180, 0
      %s183 = sadd.s32 %s182, 1
      %s184 = scalar_select %p181, %s182, %s183
      %p187 = pneg %p181
      %p188 = scmp.eq.s32.totalorder %s20, 1
      %p189 = por %p187, %p188
      %p190 = scmp.ne.s32.totalorder %s182, %s185
      %p191 = scmp.eq.s32.totalorder %s20, 0
      %p192 = por %p190, %p191
      %p193 = scmp.ne.s32.totalorder %s182, %s185
      %p194 = scmp.eq.s32.totalorder %s25, 1
      %p195 = por %p193, %p194
      %p196 = scmp.ne.s32.totalorder %s185, %s186
      %p197 = scmp.eq.s32.totalorder %s25, 0
      %p198 = por %p196, %p197
      %p199 = scmp.ne.s32.totalorder %s185, %s186
      %p200 = scmp.eq.s32.totalorder %s26, 1
      %p201 = por %p199, %p200
      %p203 = scmp.ne.s32.totalorder %s186, %s202
      %p204 = scmp.eq.s32.totalorder %s26, 0
      %p205 = por %p203, %p204
      %p206 = scmp.le.s32.totalorder 1, %s20
      %p207 = scmp.lt.s32.totalorder %s20, 3
      %p208 = pnand %p206, %p207
      %p209 = pneg %p208
      // Predicated region
      $region9: #{tpu_custom_call.1} parent=5 // pred_check
        _
      $region10: #{tpu_custom_call.1} parent=5 // pred_check_branch
        %211 = sbr.rel (%p208) target = $region12
      $region11: #{tpu_custom_call.1} parent=5 // pred_region
        %s212 = ssub.s32 %s20, 1
        // Predicated region
        $region13: #{tpu_custom_call.1} parent=11 // pred_check
          %p213 = pneg %p67
        $region14: #{tpu_custom_call.1} parent=11 // pred_check_branch
          %215 = sbr.rel (%p213) target = $region16
        $region15: #{tpu_custom_call.1} parent=11 // pred_region
          %s217 = ssub.s32 32768, 32768
          %218 = vsyncadd [#allocation6], %s217
          %s219 = sshll.u32 [#allocation5], 4
          %s220 = int_to_ptr.vmem [resolvable:$true] %s219
          %225 = dma.hbm_to_vmem [thread:$0]  %s1, 32768, %s220, [#allocation6], 512, 512, 32
        $region16: #{tpu_custom_call.1} parent=11 // pred_fallthru
          _
        // Predicated region
        $region17: #{tpu_custom_call.1} parent=11 // pred_check
          %p226 = pneg %p88
        $region18: #{tpu_custom_call.1} parent=11 // pred_check_branch
          %228 = sbr.rel (%p226) target = $region20
        $region19: #{tpu_custom_call.1} parent=11 // pred_region
          %s230 = ssub.s32 128, 128
          %231 = vsyncadd [#allocation6], %s230
          %s233 = sshll.u32 [#allocation7], 4
          %s234 = int_to_ptr.vmem [resolvable:$true] %s233
          %236 = dma.hbm_to_vmem [thread:$0]  %s2, 128, %s234, [#allocation6]
        $region20: #{tpu_custom_call.1} parent=11 // pred_fallthru
          _
        // Predicated region
        $region21: #{tpu_custom_call.1} parent=11 // pred_check
          %p237 = pneg %p109
        $region22: #{tpu_custom_call.1} parent=11 // pred_check_branch
          %239 = sbr.rel (%p237) target = $region24
        $region23: #{tpu_custom_call.1} parent=11 // pred_region
          %s241 = ssub.s32 65536, 65536
          %242 = vsyncadd [#allocation9], %s241
          %s243 = sshll.u32 [#allocation8], 4
          %s244 = int_to_ptr.vmem [resolvable:$true] %s243
          %249 = dma.hbm_to_vmem [thread:$0]  %s3, 65536, %s244, [#allocation9], 512, 512, 32
        $region24: #{tpu_custom_call.1} parent=11 // pred_fallthru
          _
        // Predicated region
        $region25: #{tpu_custom_call.1} parent=11 // pred_check
          %p250 = pneg %p130
        $region26: #{tpu_custom_call.1} parent=11 // pred_check_branch
          %252 = sbr.rel (%p250) target = $region28
        $region27: #{tpu_custom_call.1} parent=11 // pred_region
          %s254 = ssub.s32 128, 128
          %255 = vsyncadd [#allocation9], %s254
          %s257 = sshll.u32 [#allocation10], 4
          %s258 = int_to_ptr.vmem [resolvable:$true] %s257
          %260 = dma.hbm_to_vmem [thread:$0]  %s4, 128, %s258, [#allocation9]
        $region28: #{tpu_custom_call.1} parent=11 // pred_fallthru
          _
        // Predicated region
        $region29: #{tpu_custom_call.1} parent=11 // pred_check
          %p261 = pneg %p151
        $region30: #{tpu_custom_call.1} parent=11 // pred_check_branch
          %263 = sbr.rel (%p261) target = $region32
        $region31: #{tpu_custom_call.1} parent=11 // pred_region
          %s265 = ssub.s32 128, 128
          %266 = vsyncadd [#allocation12], %s265
          %s268 = sshll.u32 [#allocation11], 4
          %s269 = int_to_ptr.vmem [resolvable:$true] %s268
          %271 = dma.hbm_to_vmem [thread:$0]  %s5, 128, %s269, [#allocation12]
        $region32: #{tpu_custom_call.1} parent=11 // pred_fallthru
          _
        // Predicated region
        $region33: #{tpu_custom_call.1} parent=11 // pred_check
          %p272 = pneg %p172
        $region34: #{tpu_custom_call.1} parent=11 // pred_check_branch
          %274 = sbr.rel (%p272) target = $region36
        $region35: #{tpu_custom_call.1} parent=11 // pred_region
          _
        $region36: #{tpu_custom_call.1} parent=11 // pred_fallthru
          _
      $region12: #{tpu_custom_call.1} parent=5 // pred_fallthru
        _
      %p275 = scmp.lt.s32.totalorder %s20, 2
      // Predicated region
      $region37: #{tpu_custom_call.1} parent=5 // pred_check
        %p276 = pneg %p275
      $region38: #{tpu_custom_call.1} parent=5 // pred_check_branch
        %278 = sbr.rel (%p276) target = $region40
      $region39: #{tpu_custom_call.1} parent=5 // pred_region
        // Predicated region
        $region41: #{tpu_custom_call.1} parent=39 // pred_check
          %p279 = pneg %p40
        $region42: #{tpu_custom_call.1} parent=39 // pred_check_branch
          %281 = sbr.rel (%p279) target = $region44
        $region43: #{tpu_custom_call.1} parent=39 // pred_region
          %s282 = sand.u32 %s30, 1
          %s283 = scalar_lea.sflag [#allocation4], %s282
          %s284 = sand.u32 %s30, 1
          %s285 = smul.addr %s284, 1024
          %s286 = scalar_lea.vmem [#allocation3], %s285
          %s287 = smul.u32 32, %s20
          %s289 = ssub.s32 16384, 16384
          %290 = vsyncadd %s283, %s289
          %s291 = smul.addr %s287, 4
          %s292 = smul.addr %s291, 128
          %s293 = scalar_lea.hbm %s0, %s292
          %s294 = sshll.u32 %s286, 4
          %s295 = int_to_ptr.vmem [resolvable:$true] %s294
          %300 = dma.hbm_to_vmem [thread:$0]  %s293, 16384, %s295, %s283, 512, 512, 32
        $region44: #{tpu_custom_call.1} parent=39 // pred_fallthru
          _
      $region40: #{tpu_custom_call.1} parent=5 // pred_fallthru
        _
      %p301 = scmp.le.s32.totalorder 1, %s20
      %p302 = scmp.lt.s32.totalorder %s20, 3
      %p303 = pnand %p301, %p302
      %p304 = pneg %p303
      // Predicated region
      $region45: #{tpu_custom_call.1} parent=5 // pred_check
        _
      $region46: #{tpu_custom_call.1} parent=5 // pred_check_branch
        %306 = sbr.rel (%p303) target = $region48
      $region47: #{tpu_custom_call.1} parent=5 // pred_region
        %s307 = ssub.s32 %s20, 1
        %s308 = sand.u32 %s33, 1
        %s309 = scalar_lea.sflag [#allocation4], %s308
        %s310 = sand.u32 %s33, 1
        %s311 = smul.addr %s310, 1024
        %s312 = scalar_lea.vmem [#allocation3], %s311
        // Predicated region
        $region49: #{tpu_custom_call.1} parent=47 // pred_check
          %p313 = pneg %p46
        $region50: #{tpu_custom_call.1} parent=47 // pred_check_branch
          %315 = sbr.rel (%p313) target = $region52
        $region51: #{tpu_custom_call.1} parent=47 // pred_region
          %316 = dma.done %s309, 16384
        $region52: #{tpu_custom_call.1} parent=47 // pred_fallthru
          _
        // Predicated region
        $region53: #{tpu_custom_call.1} parent=47 // pred_check
          %p317 = pneg %p67
        $region54: #{tpu_custom_call.1} parent=47 // pred_check_branch
          %319 = sbr.rel (%p317) target = $region56
        $region55: #{tpu_custom_call.1} parent=47 // pred_region
          %320 = dma.done [#allocation6], 32768
        $region56: #{tpu_custom_call.1} parent=47 // pred_fallthru
          _
        // Predicated region
        $region57: #{tpu_custom_call.1} parent=47 // pred_check
          %p321 = pneg %p88
        $region58: #{tpu_custom_call.1} parent=47 // pred_check_branch
          %323 = sbr.rel (%p321) target = $region60
        $region59: #{tpu_custom_call.1} parent=47 // pred_region
          %324 = dma.done [#allocation6], 128
        $region60: #{tpu_custom_call.1} parent=47 // pred_fallthru
          _
        // Predicated region
        $region61: #{tpu_custom_call.1} parent=47 // pred_check
          %p325 = pneg %p109
        $region62: #{tpu_custom_call.1} parent=47 // pred_check_branch
          %327 = sbr.rel (%p325) target = $region64
        $region63: #{tpu_custom_call.1} parent=47 // pred_region
          %328 = dma.done [#allocation9], 65536
        $region64: #{tpu_custom_call.1} parent=47 // pred_fallthru
          _
        // Predicated region
        $region65: #{tpu_custom_call.1} parent=47 // pred_check
          %p329 = pneg %p130
        $region66: #{tpu_custom_call.1} parent=47 // pred_check_branch
          %331 = sbr.rel (%p329) target = $region68
        $region67: #{tpu_custom_call.1} parent=47 // pred_region
          %332 = dma.done [#allocation9], 128
        $region68: #{tpu_custom_call.1} parent=47 // pred_fallthru
          _
        // Predicated region
        $region69: #{tpu_custom_call.1} parent=47 // pred_check
          %p333 = pneg %p151
        $region70: #{tpu_custom_call.1} parent=47 // pred_check_branch
          %335 = sbr.rel (%p333) target = $region72
        $region71: #{tpu_custom_call.1} parent=47 // pred_region
          %336 = dma.done [#allocation12], 128
        $region72: #{tpu_custom_call.1} parent=47 // pred_fallthru
          _
        %s337 = sand.u32 %s33, 1
        %s338 = scalar_lea.sflag [#allocation4], %s337
        %s339 = sand.u32 %s33, 1
        %s340 = smul.addr %s339, 1024
        %s341 = scalar_lea.vmem [#allocation3], %s340
        %p342 = pneg %p46
        %p343 = pneg %p43
        %p344 = pneg %p67
        %p345 = pneg %p64
        %p346 = pneg %p88
        %p347 = pneg %p85
        %p348 = pneg %p109
        %p349 = pneg %p106
        %p350 = pneg %p130
        %p351 = pneg %p127
        %p352 = pneg %p151
        %p353 = pneg %p148
        %p354 = pneg %p172
        %p355 = pneg %p169
        %p356 = pneg %p198
        %p357 = pneg %p195
        %s358 = smul.u32 32, %s25
        %p359 = scmp.lt.s32.totalorder %s358, 63
        %s360 = scalar_select %p359, %s358, 63
        %s361 = smul.addr %s360, 8
        %s362 = scalar_lea.vmem %s7, %s361
        %s363 = smul.u32 32, %s25
        %s364 = smul.u32 32, %s25
        %p365 = scmp.lt.s32.totalorder %s364, 63
        %s366 = scalar_select %p365, %s364, 63
        %s367 = smul.addr %s366, 8
        %s368 = scalar_lea.vmem %s7, %s367
        %s369 = smul.u32 32, %s25
        %v370 = vld [vmem:[%s312] sm:$0xff]
        %v371 = vld [vmem:[%s312 + $0x8] sm:$0xff]
        %v372 = vld [vmem:[%s312 + $0x10] sm:$0xff]
        %v373 = vld [vmem:[%s312 + $0x18] sm:$0xff]
        %v374 = vld [vmem:[%s312 + $0x20] sm:$0xff]
        %v375 = vld [vmem:[%s312 + $0x28] sm:$0xff]
        %v376 = vld [vmem:[%s312 + $0x30] sm:$0xff]
        %v377 = vld [vmem:[%s312 + $0x38] sm:$0xff]
        %v378 = vld [vmem:[%s312 + $0x40] sm:$0xff]
        %v379 = vld [vmem:[%s312 + $0x48] sm:$0xff]
        %v380 = vld [vmem:[%s312 + $0x50] sm:$0xff]
        %v381 = vld [vmem:[%s312 + $0x58] sm:$0xff]
        %v382 = vld [vmem:[%s312 + $0x60] sm:$0xff]
        %v383 = vld [vmem:[%s312 + $0x68] sm:$0xff]
        %v384 = vld [vmem:[%s312 + $0x70] sm:$0xff]
        %v385 = vld [vmem:[%s312 + $0x78] sm:$0xff]
        %v386 = vld [vmem:[%s312 + $0x80] sm:$0xff]
        %v387 = vld [vmem:[%s312 + $0x88] sm:$0xff]
        %v388 = vld [vmem:[%s312 + $0x90] sm:$0xff]
        %v389 = vld [vmem:[%s312 + $0x98] sm:$0xff]
        %v390 = vld [vmem:[%s312 + $0xa0] sm:$0xff]
        %v391 = vld [vmem:[%s312 + $0xa8] sm:$0xff]
        %v392 = vld [vmem:[%s312 + $0xb0] sm:$0xff]
        %v393 = vld [vmem:[%s312 + $0xb8] sm:$0xff]
        %v394 = vld [vmem:[%s312 + $0xc0] sm:$0xff]
        %v395 = vld [vmem:[%s312 + $0xc8] sm:$0xff]
        %v396 = vld [vmem:[%s312 + $0xd0] sm:$0xff]
        %v397 = vld [vmem:[%s312 + $0xd8] sm:$0xff]
        %v398 = vld [vmem:[%s312 + $0xe0] sm:$0xff]
        %v399 = vld [vmem:[%s312 + $0xe8] sm:$0xff]
        %v400 = vld [vmem:[%s312 + $0xf0] sm:$0xff]
        %v401 = vld [vmem:[%s312 + $0xf8] sm:$0xff]
        %v402 = vld [vmem:[%s312 + $0x100] sm:$0xff]
        %v403 = vld [vmem:[%s312 + $0x108] sm:$0xff]
        %v404 = vld [vmem:[%s312 + $0x110] sm:$0xff]
        %v405 = vld [vmem:[%s312 + $0x118] sm:$0xff]
        %v406 = vld [vmem:[%s312 + $0x120] sm:$0xff]
        %v407 = vld [vmem:[%s312 + $0x128] sm:$0xff]
        %v408 = vld [vmem:[%s312 + $0x130] sm:$0xff]
        %v409 = vld [vmem:[%s312 + $0x138] sm:$0xff]
        %v410 = vld [vmem:[%s312 + $0x140] sm:$0xff]
        %v411 = vld [vmem:[%s312 + $0x148] sm:$0xff]
        %v412 = vld [vmem:[%s312 + $0x150] sm:$0xff]
        %v413 = vld [vmem:[%s312 + $0x158] sm:$0xff]
        %v414 = vld [vmem:[%s312 + $0x160] sm:$0xff]
        %v415 = vld [vmem:[%s312 + $0x168] sm:$0xff]
        %v416 = vld [vmem:[%s312 + $0x170] sm:$0xff]
        %v417 = vld [vmem:[%s312 + $0x178] sm:$0xff]
        %v418 = vld [vmem:[%s312 + $0x180] sm:$0xff]
        %v419 = vld [vmem:[%s312 + $0x188] sm:$0xff]
        %v420 = vld [vmem:[%s312 + $0x190] sm:$0xff]
        %v421 = vld [vmem:[%s312 + $0x198] sm:$0xff]
        %v422 = vld [vmem:[%s312 + $0x1a0] sm:$0xff]
        %v423 = vld [vmem:[%s312 + $0x1a8] sm:$0xff]
        %v424 = vld [vmem:[%s312 + $0x1b0] sm:$0xff]
        %v425 = vld [vmem:[%s312 + $0x1b8] sm:$0xff]
        %v426 = vld [vmem:[%s312 + $0x1c0] sm:$0xff]
        %v427 = vld [vmem:[%s312 + $0x1c8] sm:$0xff]
        %v428 = vld [vmem:[%s312 + $0x1d0] sm:$0xff]
        %v429 = vld [vmem:[%s312 + $0x1d8] sm:$0xff]
        %v430 = vld [vmem:[%s312 + $0x1e0] sm:$0xff]
        %v431 = vld [vmem:[%s312 + $0x1e8] sm:$0xff]
        %v432 = vld [vmem:[%s312 + $0x1f0] sm:$0xff]
        %v433 = vld [vmem:[%s312 + $0x1f8] sm:$0xff]
        %v434 = vld [vmem:[%s312 + $0x200] sm:$0xff]
        %v435 = vld [vmem:[%s312 + $0x208] sm:$0xff]
        %v436 = vld [vmem:[%s312 + $0x210] sm:$0xff]
        %v437 = vld [vmem:[%s312 + $0x218] sm:$0xff]
        %v438 = vld [vmem:[%s312 + $0x220] sm:$0xff]
        %v439 = vld [vmem:[%s312 + $0x228] sm:$0xff]
        %v440 = vld [vmem:[%s312 + $0x230] sm:$0xff]
        %v441 = vld [vmem:[%s312 + $0x238] sm:$0xff]
        %v442 = vld [vmem:[%s312 + $0x240] sm:$0xff]
        %v443 = vld [vmem:[%s312 + $0x248] sm:$0xff]
        %v444 = vld [vmem:[%s312 + $0x250] sm:$0xff]
        %v445 = vld [vmem:[%s312 + $0x258] sm:$0xff]
        %v446 = vld [vmem:[%s312 + $0x260] sm:$0xff]
        %v447 = vld [vmem:[%s312 + $0x268] sm:$0xff]
        %v448 = vld [vmem:[%s312 + $0x270] sm:$0xff]
        %v449 = vld [vmem:[%s312 + $0x278] sm:$0xff]
        %v450 = vld [vmem:[%s312 + $0x280] sm:$0xff]
        %v451 = vld [vmem:[%s312 + $0x288] sm:$0xff]
        %v452 = vld [vmem:[%s312 + $0x290] sm:$0xff]
        %v453 = vld [vmem:[%s312 + $0x298] sm:$0xff]
        %v454 = vld [vmem:[%s312 + $0x2a0] sm:$0xff]
        %v455 = vld [vmem:[%s312 + $0x2a8] sm:$0xff]
        %v456 = vld [vmem:[%s312 + $0x2b0] sm:$0xff]
        %v457 = vld [vmem:[%s312 + $0x2b8] sm:$0xff]
        %v458 = vld [vmem:[%s312 + $0x2c0] sm:$0xff]
        %v459 = vld [vmem:[%s312 + $0x2c8] sm:$0xff]
        %v460 = vld [vmem:[%s312 + $0x2d0] sm:$0xff]
        %v461 = vld [vmem:[%s312 + $0x2d8] sm:$0xff]
        %v462 = vld [vmem:[%s312 + $0x2e0] sm:$0xff]
        %v463 = vld [vmem:[%s312 + $0x2e8] sm:$0xff]
        %v464 = vld [vmem:[%s312 + $0x2f0] sm:$0xff]
        %v465 = vld [vmem:[%s312 + $0x2f8] sm:$0xff]
        %v466 = vld [vmem:[%s312 + $0x300] sm:$0xff]
        %v467 = vld [vmem:[%s312 + $0x308] sm:$0xff]
        %v468 = vld [vmem:[%s312 + $0x310] sm:$0xff]
        %v469 = vld [vmem:[%s312 + $0x318] sm:$0xff]
        %v470 = vld [vmem:[%s312 + $0x320] sm:$0xff]
        %v471 = vld [vmem:[%s312 + $0x328] sm:$0xff]
        %v472 = vld [vmem:[%s312 + $0x330] sm:$0xff]
        %v473 = vld [vmem:[%s312 + $0x338] sm:$0xff]
        %v474 = vld [vmem:[%s312 + $0x340] sm:$0xff]
        %v475 = vld [vmem:[%s312 + $0x348] sm:$0xff]
        %v476 = vld [vmem:[%s312 + $0x350] sm:$0xff]
        %v477 = vld [vmem:[%s312 + $0x358] sm:$0xff]
        %v478 = vld [vmem:[%s312 + $0x360] sm:$0xff]
        %v479 = vld [vmem:[%s312 + $0x368] sm:$0xff]
        %v480 = vld [vmem:[%s312 + $0x370] sm:$0xff]
        %v481 = vld [vmem:[%s312 + $0x378] sm:$0xff]
        %v482 = vld [vmem:[%s312 + $0x380] sm:$0xff]
        %v483 = vld [vmem:[%s312 + $0x388] sm:$0xff]
        %v484 = vld [vmem:[%s312 + $0x390] sm:$0xff]
        %v485 = vld [vmem:[%s312 + $0x398] sm:$0xff]
        %v486 = vld [vmem:[%s312 + $0x3a0] sm:$0xff]
        %v487 = vld [vmem:[%s312 + $0x3a8] sm:$0xff]
        %v488 = vld [vmem:[%s312 + $0x3b0] sm:$0xff]
        %v489 = vld [vmem:[%s312 + $0x3b8] sm:$0xff]
        %v490 = vld [vmem:[%s312 + $0x3c0] sm:$0xff]
        %v491 = vld [vmem:[%s312 + $0x3c8] sm:$0xff]
        %v492 = vld [vmem:[%s312 + $0x3d0] sm:$0xff]
        %v493 = vld [vmem:[%s312 + $0x3d8] sm:$0xff]
        %v494 = vld [vmem:[%s312 + $0x3e0] sm:$0xff]
        %v495 = vld [vmem:[%s312 + $0x3e8] sm:$0xff]
        %v496 = vld [vmem:[%s312 + $0x3f0] sm:$0xff]
        %v497 = vld [vmem:[%s312 + $0x3f8] sm:$0xff]
        %v498 = vpack.c.bf16 %v374, %v370
        %v499 = vpack.c.bf16 %v375, %v371
        %v500 = vpack.c.bf16 %v376, %v372
        %v501 = vpack.c.bf16 %v377, %v373
        %v502 = vpack.c.bf16 %v382, %v378
        %v503 = vpack.c.bf16 %v383, %v379
        %v504 = vpack.c.bf16 %v384, %v380
        %v505 = vpack.c.bf16 %v385, %v381
        %v506 = vpack.c.bf16 %v390, %v386
        %v507 = vpack.c.bf16 %v391, %v387
        %v508 = vpack.c.bf16 %v392, %v388
        %v509 = vpack.c.bf16 %v393, %v389
        %v510 = vpack.c.bf16 %v398, %v394
        %v511 = vpack.c.bf16 %v399, %v395
        %v512 = vpack.c.bf16 %v400, %v396
        %v513 = vpack.c.bf16 %v401, %v397
        %v514 = vpack.c.bf16 %v406, %v402
        %v515 = vpack.c.bf16 %v407, %v403
        %v516 = vpack.c.bf16 %v408, %v404
        %v517 = vpack.c.bf16 %v409, %v405
        %v518 = vpack.c.bf16 %v414, %v410
        %v519 = vpack.c.bf16 %v415, %v411
        %v520 = vpack.c.bf16 %v416, %v412
        %v521 = vpack.c.bf16 %v417, %v413
        %v522 = vpack.c.bf16 %v422, %v418
        %v523 = vpack.c.bf16 %v423, %v419
        %v524 = vpack.c.bf16 %v424, %v420
        %v525 = vpack.c.bf16 %v425, %v421
        %v526 = vpack.c.bf16 %v430, %v426
        %v527 = vpack.c.bf16 %v431, %v427
        %v528 = vpack.c.bf16 %v432, %v428
        %v529 = vpack.c.bf16 %v433, %v429
        %v530 = vpack.c.bf16 %v438, %v434
        %v531 = vpack.c.bf16 %v439, %v435
        %v532 = vpack.c.bf16 %v440, %v436
        %v533 = vpack.c.bf16 %v441, %v437
        %v534 = vpack.c.bf16 %v446, %v442
        %v535 = vpack.c.bf16 %v447, %v443
        %v536 = vpack.c.bf16 %v448, %v444
        %v537 = vpack.c.bf16 %v449, %v445
        %v538 = vpack.c.bf16 %v454, %v450
        %v539 = vpack.c.bf16 %v455, %v451
        %v540 = vpack.c.bf16 %v456, %v452
        %v541 = vpack.c.bf16 %v457, %v453
        %v542 = vpack.c.bf16 %v462, %v458
        %v543 = vpack.c.bf16 %v463, %v459
        %v544 = vpack.c.bf16 %v464, %v460
        %v545 = vpack.c.bf16 %v465, %v461
        %v546 = vpack.c.bf16 %v470, %v466
        %v547 = vpack.c.bf16 %v471, %v467
        %v548 = vpack.c.bf16 %v472, %v468
        %v549 = vpack.c.bf16 %v473, %v469
        %v550 = vpack.c.bf16 %v478, %v474
        %v551 = vpack.c.bf16 %v479, %v475
        %v552 = vpack.c.bf16 %v480, %v476
        %v553 = vpack.c.bf16 %v481, %v477
        %v554 = vpack.c.bf16 %v486, %v482
        %v555 = vpack.c.bf16 %v487, %v483
        %v556 = vpack.c.bf16 %v488, %v484
        %v557 = vpack.c.bf16 %v489, %v485
        %v558 = vpack.c.bf16 %v494, %v490
        %v559 = vpack.c.bf16 %v495, %v491
        %v560 = vpack.c.bf16 %v496, %v492
        %v561 = vpack.c.bf16 %v497, %v493
        %v562 = vld [vmem:[#allocation5] sm:$0xff]
        %v563 = vld [vmem:[#allocation5 + $0x8] sm:$0xff]
        %v564 = vld [vmem:[#allocation5 + $0x10] sm:$0xff]
        %v565 = vld [vmem:[#allocation5 + $0x18] sm:$0xff]
        %v566 = vld [vmem:[#allocation5 + $0x20] sm:$0xff]
        %v567 = vld [vmem:[#allocation5 + $0x28] sm:$0xff]
        %v568 = vld [vmem:[#allocation5 + $0x30] sm:$0xff]
        %v569 = vld [vmem:[#allocation5 + $0x38] sm:$0xff]
        %v570 = vld [vmem:[#allocation5 + $0x40] sm:$0xff]
        %v571 = vld [vmem:[#allocation5 + $0x48] sm:$0xff]
        %v572 = vld [vmem:[#allocation5 + $0x50] sm:$0xff]
        %v573 = vld [vmem:[#allocation5 + $0x58] sm:$0xff]
        %v574 = vld [vmem:[#allocation5 + $0x60] sm:$0xff]
        %v575 = vld [vmem:[#allocation5 + $0x68] sm:$0xff]
        %v576 = vld [vmem:[#allocation5 + $0x70] sm:$0xff]
        %v577 = vld [vmem:[#allocation5 + $0x78] sm:$0xff]
        %v578 = vld [vmem:[#allocation5 + $0x80] sm:$0xff]
        %v579 = vld [vmem:[#allocation5 + $0x88] sm:$0xff]
        %v580 = vld [vmem:[#allocation5 + $0x90] sm:$0xff]
        %v581 = vld [vmem:[#allocation5 + $0x98] sm:$0xff]
        %v582 = vld [vmem:[#allocation5 + $0xa0] sm:$0xff]
        %v583 = vld [vmem:[#allocation5 + $0xa8] sm:$0xff]
        %v584 = vld [vmem:[#allocation5 + $0xb0] sm:$0xff]
        %v585 = vld [vmem:[#allocation5 + $0xb8] sm:$0xff]
        %v586 = vld [vmem:[#allocation5 + $0xc0] sm:$0xff]
        %v587 = vld [vmem:[#allocation5 + $0xc8] sm:$0xff]
        %v588 = vld [vmem:[#allocation5 + $0xd0] sm:$0xff]
        %v589 = vld [vmem:[#allocation5 + $0xd8] sm:$0xff]
        %v590 = vld [vmem:[#allocation5 + $0xe0] sm:$0xff]
        %v591 = vld [vmem:[#allocation5 + $0xe8] sm:$0xff]
        %v592 = vld [vmem:[#allocation5 + $0xf0] sm:$0xff]
        %v593 = vld [vmem:[#allocation5 + $0xf8] sm:$0xff]
        %v594 = vld [vmem:[#allocation5 + $0x100] sm:$0xff]
        %v595 = vld [vmem:[#allocation5 + $0x108] sm:$0xff]
        %v596 = vld [vmem:[#allocation5 + $0x110] sm:$0xff]
        %v597 = vld [vmem:[#allocation5 + $0x118] sm:$0xff]
        %v598 = vld [vmem:[#allocation5 + $0x120] sm:$0xff]
        %v599 = vld [vmem:[#allocation5 + $0x128] sm:$0xff]
        %v600 = vld [vmem:[#allocation5 + $0x130] sm:$0xff]
        %v601 = vld [vmem:[#allocation5 + $0x138] sm:$0xff]
        %v602 = vld [vmem:[#allocation5 + $0x140] sm:$0xff]
        %v603 = vld [vmem:[#allocation5 + $0x148] sm:$0xff]
        %v604 = vld [vmem:[#allocation5 + $0x150] sm:$0xff]
        %v605 = vld [vmem:[#allocation5 + $0x158] sm:$0xff]
        %v606 = vld [vmem:[#allocation5 + $0x160] sm:$0xff]
        %v607 = vld [vmem:[#allocation5 + $0x168] sm:$0xff]
        %v608 = vld [vmem:[#allocation5 + $0x170] sm:$0xff]
        %v609 = vld [vmem:[#allocation5 + $0x178] sm:$0xff]
        %v610 = vld [vmem:[#allocation5 + $0x180] sm:$0xff]
        %v611 = vld [vmem:[#allocation5 + $0x188] sm:$0xff]
        %v612 = vld [vmem:[#allocation5 + $0x190] sm:$0xff]
        %v613 = vld [vmem:[#allocation5 + $0x198] sm:$0xff]
        %v614 = vld [vmem:[#allocation5 + $0x1a0] sm:$0xff]
        %v615 = vld [vmem:[#allocation5 + $0x1a8] sm:$0xff]
        %v616 = vld [vmem:[#allocation5 + $0x1b0] sm:$0xff]
        %v617 = vld [vmem:[#allocation5 + $0x1b8] sm:$0xff]
        %v618 = vld [vmem:[#allocation5 + $0x1c0] sm:$0xff]
        %v619 = vld [vmem:[#allocation5 + $0x1c8] sm:$0xff]
        %v620 = vld [vmem:[#allocation5 + $0x1d0] sm:$0xff]
        %v621 = vld [vmem:[#allocation5 + $0x1d8] sm:$0xff]
        %v622 = vld [vmem:[#allocation5 + $0x1e0] sm:$0xff]
        %v623 = vld [vmem:[#allocation5 + $0x1e8] sm:$0xff]
        %v624 = vld [vmem:[#allocation5 + $0x1f0] sm:$0xff]
        %v625 = vld [vmem:[#allocation5 + $0x1f8] sm:$0xff]
        %v626 = vld [vmem:[#allocation5 + $0x200] sm:$0xff]
        %v627 = vld [vmem:[#allocation5 + $0x208] sm:$0xff]
        %v628 = vld [vmem:[#allocation5 + $0x210] sm:$0xff]
        %v629 = vld [vmem:[#allocation5 + $0x218] sm:$0xff]
        %v630 = vld [vmem:[#allocation5 + $0x220] sm:$0xff]
        %v631 = vld [vmem:[#allocation5 + $0x228] sm:$0xff]
        %v632 = vld [vmem:[#allocation5 + $0x230] sm:$0xff]
        %v633 = vld [vmem:[#allocation5 + $0x238] sm:$0xff]
        %v634 = vld [vmem:[#allocation5 + $0x240] sm:$0xff]
        %v635 = vld [vmem:[#allocation5 + $0x248] sm:$0xff]
        %v636 = vld [vmem:[#allocation5 + $0x250] sm:$0xff]
        %v637 = vld [vmem:[#allocation5 + $0x258] sm:$0xff]
        %v638 = vld [vmem:[#allocation5 + $0x260] sm:$0xff]
        %v639 = vld [vmem:[#allocation5 + $0x268] sm:$0xff]
        %v640 = vld [vmem:[#allocation5 + $0x270] sm:$0xff]
        %v641 = vld [vmem:[#allocation5 + $0x278] sm:$0xff]
        %v642 = vld [vmem:[#allocation5 + $0x280] sm:$0xff]
        %v643 = vld [vmem:[#allocation5 + $0x288] sm:$0xff]
        %v644 = vld [vmem:[#allocation5 + $0x290] sm:$0xff]
        %v645 = vld [vmem:[#allocation5 + $0x298] sm:$0xff]
        %v646 = vld [vmem:[#allocation5 + $0x2a0] sm:$0xff]
        %v647 = vld [vmem:[#allocation5 + $0x2a8] sm:$0xff]
        %v648 = vld [vmem:[#allocation5 + $0x2b0] sm:$0xff]
        %v649 = vld [vmem:[#allocation5 + $0x2b8] sm:$0xff]
        %v650 = vld [vmem:[#allocation5 + $0x2c0] sm:$0xff]
        %v651 = vld [vmem:[#allocation5 + $0x2c8] sm:$0xff]
        %v652 = vld [vmem:[#allocation5 + $0x2d0] sm:$0xff]
        %v653 = vld [vmem:[#allocation5 + $0x2d8] sm:$0xff]
        %v654 = vld [vmem:[#allocation5 + $0x2e0] sm:$0xff]
        %v655 = vld [vmem:[#allocation5 + $0x2e8] sm:$0xff]
        %v656 = vld [vmem:[#allocation5 + $0x2f0] sm:$0xff]
        %v657 = vld [vmem:[#allocation5 + $0x2f8] sm:$0xff]
        %v658 = vld [vmem:[#allocation5 + $0x300] sm:$0xff]
        %v659 = vld [vmem:[#allocation5 + $0x308] sm:$0xff]
        %v660 = vld [vmem:[#allocation5 + $0x310] sm:$0xff]
        %v661 = vld [vmem:[#allocation5 + $0x318] sm:$0xff]
        %v662 = vld [vmem:[#allocation5 + $0x320] sm:$0xff]
        %v663 = vld [vmem:[#allocation5 + $0x328] sm:$0xff]
        %v664 = vld [vmem:[#allocation5 + $0x330] sm:$0xff]
        %v665 = vld [vmem:[#allocation5 + $0x338] sm:$0xff]
        %v666 = vld [vmem:[#allocation5 + $0x340] sm:$0xff]
        %v667 = vld [vmem:[#allocation5 + $0x348] sm:$0xff]
        %v668 = vld [vmem:[#allocation5 + $0x350] sm:$0xff]
        %v669 = vld [vmem:[#allocation5 + $0x358] sm:$0xff]
        %v670 = vld [vmem:[#allocation5 + $0x360] sm:$0xff]
        %v671 = vld [vmem:[#allocation5 + $0x368] sm:$0xff]
        %v672 = vld [vmem:[#allocation5 + $0x370] sm:$0xff]
        %v673 = vld [vmem:[#allocation5 + $0x378] sm:$0xff]
        %v674 = vld [vmem:[#allocation5 + $0x380] sm:$0xff]
        %v675 = vld [vmem:[#allocation5 + $0x388] sm:$0xff]
        %v676 = vld [vmem:[#allocation5 + $0x390] sm:$0xff]
        %v677 = vld [vmem:[#allocation5 + $0x398] sm:$0xff]
        %v678 = vld [vmem:[#allocation5 + $0x3a0] sm:$0xff]
        %v679 = vld [vmem:[#allocation5 + $0x3a8] sm:$0xff]
        %v680 = vld [vmem:[#allocation5 + $0x3b0] sm:$0xff]
        %v681 = vld [vmem:[#allocation5 + $0x3b8] sm:$0xff]
        %v682 = vld [vmem:[#allocation5 + $0x3c0] sm:$0xff]
        %v683 = vld [vmem:[#allocation5 + $0x3c8] sm:$0xff]
        %v684 = vld [vmem:[#allocation5 + $0x3d0] sm:$0xff]
        %v685 = vld [vmem:[#allocation5 + $0x3d8] sm:$0xff]
        %v686 = vld [vmem:[#allocation5 + $0x3e0] sm:$0xff]
        %v687 = vld [vmem:[#allocation5 + $0x3e8] sm:$0xff]
        %v688 = vld [vmem:[#allocation5 + $0x3f0] sm:$0xff]
        %v689 = vld [vmem:[#allocation5 + $0x3f8] sm:$0xff]
        %v690 = vld [vmem:[#allocation5 + $0x400] sm:$0xff]
        %v691 = vld [vmem:[#allocation5 + $0x408] sm:$0xff]
        %v692 = vld [vmem:[#allocation5 + $0x410] sm:$0xff]
        %v693 = vld [vmem:[#allocation5 + $0x418] sm:$0xff]
        %v694 = vld [vmem:[#allocation5 + $0x420] sm:$0xff]
        %v695 = vld [vmem:[#allocation5 + $0x428] sm:$0xff]
        %v696 = vld [vmem:[#allocation5 + $0x430] sm:$0xff]
        %v697 = vld [vmem:[#allocation5 + $0x438] sm:$0xff]
        %v698 = vld [vmem:[#allocation5 + $0x440] sm:$0xff]
        %v699 = vld [vmem:[#allocation5 + $0x448] sm:$0xff]
        %v700 = vld [vmem:[#allocation5 + $0x450] sm:$0xff]
        %v701 = vld [vmem:[#allocation5 + $0x458] sm:$0xff]
        %v702 = vld [vmem:[#allocation5 + $0x460] sm:$0xff]
        %v703 = vld [vmem:[#allocation5 + $0x468] sm:$0xff]
        %v704 = vld [vmem:[#allocation5 + $0x470] sm:$0xff]
        %v705 = vld [vmem:[#allocation5 + $0x478] sm:$0xff]
        %v706 = vld [vmem:[#allocation5 + $0x480] sm:$0xff]
        %v707 = vld [vmem:[#allocation5 + $0x488] sm:$0xff]
        %v708 = vld [vmem:[#allocation5 + $0x490] sm:$0xff]
        %v709 = vld [vmem:[#allocation5 + $0x498] sm:$0xff]
        %v710 = vld [vmem:[#allocation5 + $0x4a0] sm:$0xff]
        %v711 = vld [vmem:[#allocation5 + $0x4a8] sm:$0xff]
        %v712 = vld [vmem:[#allocation5 + $0x4b0] sm:$0xff]
        %v713 = vld [vmem:[#allocation5 + $0x4b8] sm:$0xff]
        %v714 = vld [vmem:[#allocation5 + $0x4c0] sm:$0xff]
        %v715 = vld [vmem:[#allocation5 + $0x4c8] sm:$0xff]
        %v716 = vld [vmem:[#allocation5 + $0x4d0] sm:$0xff]
        %v717 = vld [vmem:[#allocation5 + $0x4d8] sm:$0xff]
        %v718 = vld [vmem:[#allocation5 + $0x4e0] sm:$0xff]
        %v719 = vld [vmem:[#allocation5 + $0x4e8] sm:$0xff]
        %v720 = vld [vmem:[#allocation5 + $0x4f0] sm:$0xff]
        %v721 = vld [vmem:[#allocation5 + $0x4f8] sm:$0xff]
        %v722 = vld [vmem:[#allocation5 + $0x500] sm:$0xff]
        %v723 = vld [vmem:[#allocation5 + $0x508] sm:$0xff]
        %v724 = vld [vmem:[#allocation5 + $0x510] sm:$0xff]
        %v725 = vld [vmem:[#allocation5 + $0x518] sm:$0xff]
        %v726 = vld [vmem:[#allocation5 + $0x520] sm:$0xff]
        %v727 = vld [vmem:[#allocation5 + $0x528] sm:$0xff]
        %v728 = vld [vmem:[#allocation5 + $0x530] sm:$0xff]
        %v729 = vld [vmem:[#allocation5 + $0x538] sm:$0xff]
        %v730 = vld [vmem:[#allocation5 + $0x540] sm:$0xff]
        %v731 = vld [vmem:[#allocation5 + $0x548] sm:$0xff]
        %v732 = vld [vmem:[#allocation5 + $0x550] sm:$0xff]
        %v733 = vld [vmem:[#allocation5 + $0x558] sm:$0xff]
        %v734 = vld [vmem:[#allocation5 + $0x560] sm:$0xff]
        %v735 = vld [vmem:[#allocation5 + $0x568] sm:$0xff]
        %v736 = vld [vmem:[#allocation5 + $0x570] sm:$0xff]
        %v737 = vld [vmem:[#allocation5 + $0x578] sm:$0xff]
        %v738 = vld [vmem:[#allocation5 + $0x580] sm:$0xff]
        %v739 = vld [vmem:[#allocation5 + $0x588] sm:$0xff]
        %v740 = vld [vmem:[#allocation5 + $0x590] sm:$0xff]
        %v741 = vld [vmem:[#allocation5 + $0x598] sm:$0xff]
        %v742 = vld [vmem:[#allocation5 + $0x5a0] sm:$0xff]
        %v743 = vld [vmem:[#allocation5 + $0x5a8] sm:$0xff]
        %v744 = vld [vmem:[#allocation5 + $0x5b0] sm:$0xff]
        %v745 = vld [vmem:[#allocation5 + $0x5b8] sm:$0xff]
        %v746 = vld [vmem:[#allocation5 + $0x5c0] sm:$0xff]
        %v747 = vld [vmem:[#allocation5 + $0x5c8] sm:$0xff]
        %v748 = vld [vmem:[#allocation5 + $0x5d0] sm:$0xff]
        %v749 = vld [vmem:[#allocation5 + $0x5d8] sm:$0xff]
        %v750 = vld [vmem:[#allocation5 + $0x5e0] sm:$0xff]
        %v751 = vld [vmem:[#allocation5 + $0x5e8] sm:$0xff]
        %v752 = vld [vmem:[#allocation5 + $0x5f0] sm:$0xff]
        %v753 = vld [vmem:[#allocation5 + $0x5f8] sm:$0xff]
        %v754 = vld [vmem:[#allocation5 + $0x600] sm:$0xff]
        %v755 = vld [vmem:[#allocation5 + $0x608] sm:$0xff]
        %v756 = vld [vmem:[#allocation5 + $0x610] sm:$0xff]
        %v757 = vld [vmem:[#allocation5 + $0x618] sm:$0xff]
        %v758 = vld [vmem:[#allocation5 + $0x620] sm:$0xff]
        %v759 = vld [vmem:[#allocation5 + $0x628] sm:$0xff]
        %v760 = vld [vmem:[#allocation5 + $0x630] sm:$0xff]
        %v761 = vld [vmem:[#allocation5 + $0x638] sm:$0xff]
        %v762 = vld [vmem:[#allocation5 + $0x640] sm:$0xff]
        %v763 = vld [vmem:[#allocation5 + $0x648] sm:$0xff]
        %v764 = vld [vmem:[#allocation5 + $0x650] sm:$0xff]
        %v765 = vld [vmem:[#allocation5 + $0x658] sm:$0xff]
        %v766 = vld [vmem:[#allocation5 + $0x660] sm:$0xff]
        %v767 = vld [vmem:[#allocation5 + $0x668] sm:$0xff]
        %v768 = vld [vmem:[#allocation5 + $0x670] sm:$0xff]
        %v769 = vld [vmem:[#allocation5 + $0x678] sm:$0xff]
        %v770 = vld [vmem:[#allocation5 + $0x680] sm:$0xff]
        %v771 = vld [vmem:[#allocation5 + $0x688] sm:$0xff]
        %v772 = vld [vmem:[#allocation5 + $0x690] sm:$0xff]
        %v773 = vld [vmem:[#allocation5 + $0x698] sm:$0xff]
        %v774 = vld [vmem:[#allocation5 + $0x6a0] sm:$0xff]
        %v775 = vld [vmem:[#allocation5 + $0x6a8] sm:$0xff]
        %v776 = vld [vmem:[#allocation5 + $0x6b0] sm:$0xff]
        %v777 = vld [vmem:[#allocation5 + $0x6b8] sm:$0xff]
        %v778 = vld [vmem:[#allocation5 + $0x6c0] sm:$0xff]
        %v779 = vld [vmem:[#allocation5 + $0x6c8] sm:$0xff]
        %v780 = vld [vmem:[#allocation5 + $0x6d0] sm:$0xff]
        %v781 = vld [vmem:[#allocation5 + $0x6d8] sm:$0xff]
        %v782 = vld [vmem:[#allocation5 + $0x6e0] sm:$0xff]
        %v783 = vld [vmem:[#allocation5 + $0x6e8] sm:$0xff]
        %v784 = vld [vmem:[#allocation5 + $0x6f0] sm:$0xff]
        %v785 = vld [vmem:[#allocation5 + $0x6f8] sm:$0xff]
        %v786 = vld [vmem:[#allocation5 + $0x700] sm:$0xff]
        %v787 = vld [vmem:[#allocation5 + $0x708] sm:$0xff]
        %v788 = vld [vmem:[#allocation5 + $0x710] sm:$0xff]
        %v789 = vld [vmem:[#allocation5 + $0x718] sm:$0xff]
        %v790 = vld [vmem:[#allocation5 + $0x720] sm:$0xff]
        %v791 = vld [vmem:[#allocation5 + $0x728] sm:$0xff]
        %v792 = vld [vmem:[#allocation5 + $0x730] sm:$0xff]
        %v793 = vld [vmem:[#allocation5 + $0x738] sm:$0xff]
        %v794 = vld [vmem:[#allocation5 + $0x740] sm:$0xff]
        %v795 = vld [vmem:[#allocation5 + $0x748] sm:$0xff]
        %v796 = vld [vmem:[#allocation5 + $0x750] sm:$0xff]
        %v797 = vld [vmem:[#allocation5 + $0x758] sm:$0xff]
        %v798 = vld [vmem:[#allocation5 + $0x760] sm:$0xff]
        %v799 = vld [vmem:[#allocation5 + $0x768] sm:$0xff]
        %v800 = vld [vmem:[#allocation5 + $0x770] sm:$0xff]
        %v801 = vld [vmem:[#allocation5 + $0x778] sm:$0xff]
        %v802 = vld [vmem:[#allocation5 + $0x780] sm:$0xff]
        %v803 = vld [vmem:[#allocation5 + $0x788] sm:$0xff]
        %v804 = vld [vmem:[#allocation5 + $0x790] sm:$0xff]
        %v805 = vld [vmem:[#allocation5 + $0x798] sm:$0xff]
        %v806 = vld [vmem:[#allocation5 + $0x7a0] sm:$0xff]
        %v807 = vld [vmem:[#allocation5 + $0x7a8] sm:$0xff]
        %v808 = vld [vmem:[#allocation5 + $0x7b0] sm:$0xff]
        %v809 = vld [vmem:[#allocation5 + $0x7b8] sm:$0xff]
        %v810 = vld [vmem:[#allocation5 + $0x7c0] sm:$0xff]
        %v811 = vld [vmem:[#allocation5 + $0x7c8] sm:$0xff]
        %v812 = vld [vmem:[#allocation5 + $0x7d0] sm:$0xff]
        %v813 = vld [vmem:[#allocation5 + $0x7d8] sm:$0xff]
        %v814 = vld [vmem:[#allocation5 + $0x7e0] sm:$0xff]
        %v815 = vld [vmem:[#allocation5 + $0x7e8] sm:$0xff]
        %v816 = vld [vmem:[#allocation5 + $0x7f0] sm:$0xff]
        %v817 = vld [vmem:[#allocation5 + $0x7f8] sm:$0xff]
        %v818 = vld [vmem:[#allocation7] sm:$0xff]
        %v820 = vlaneseq
        %v821 = vshrl.u32 %v820, 7
        %v822 = vsub.s32 0, %v821
        %v823 = vrot.slane %v818, %v822
        %v824 = vlaneseq
        %v825 = vshrl.u32 %v824, 7
        %v826 = vsub.s32 1, %v825
        %v827 = vrot.slane %v818, %v826
        %v828 = vlaneseq
        %v829 = vshrl.u32 %v828, 7
        %v830 = vsub.s32 2, %v829
        %v831 = vrot.slane %v818, %v830
        %v832 = vlaneseq
        %v833 = vshrl.u32 %v832, 7
        %v834 = vsub.s32 3, %v833
        %v835 = vrot.slane %v818, %v834
        %v836 = vlaneseq
        %v837 = vshrl.u32 %v836, 7
        %v838 = vsub.s32 4, %v837
        %v839 = vrot.slane %v818, %v838
        %v840 = vlaneseq
        %v841 = vshrl.u32 %v840, 7
        %v842 = vsub.s32 5, %v841
        %v843 = vrot.slane %v818, %v842
        %v844 = vlaneseq
        %v845 = vshrl.u32 %v844, 7
        %v846 = vsub.s32 6, %v845
        %v847 = vrot.slane %v818, %v846
        %v848 = vlaneseq
        %v849 = vshrl.u32 %v848, 7
        %v850 = vsub.s32 7, %v849
        %v851 = vrot.slane %v818, %v850
        %v1116 = vunpack.c.l.b16 %v562
        %v1117 = vunpack.c.h.b16 %v562
        %v1118 = vunpack.c.l.b16 %v563
        %v1119 = vunpack.c.h.b16 %v563
        %v1120 = vunpack.c.l.b16 %v564
        %v1121 = vunpack.c.h.b16 %v564
        %v1122 = vunpack.c.l.b16 %v565
        %v1123 = vunpack.c.h.b16 %v565
        %v1124 = vunpack.c.l.b16 %v566
        %v1125 = vunpack.c.h.b16 %v566
        %v1126 = vunpack.c.l.b16 %v567
        %v1127 = vunpack.c.h.b16 %v567
        %v1128 = vunpack.c.l.b16 %v568
        %v1129 = vunpack.c.h.b16 %v568
        %v1130 = vunpack.c.l.b16 %v569
        %v1131 = vunpack.c.h.b16 %v569
        %v1132 = vunpack.c.l.b16 %v570
        %v1133 = vunpack.c.h.b16 %v570
        %v1134 = vunpack.c.l.b16 %v571
        %v1135 = vunpack.c.h.b16 %v571
        %v1136 = vunpack.c.l.b16 %v572
        %v1137 = vunpack.c.h.b16 %v572
        %v1138 = vunpack.c.l.b16 %v573
        %v1139 = vunpack.c.h.b16 %v573
        %v1140 = vunpack.c.l.b16 %v574
        %v1141 = vunpack.c.h.b16 %v574
        %v1142 = vunpack.c.l.b16 %v575
        %v1143 = vunpack.c.h.b16 %v575
        %v1144 = vunpack.c.l.b16 %v576
        %v1145 = vunpack.c.h.b16 %v576
        %v1146 = vunpack.c.l.b16 %v577
        %v1147 = vunpack.c.h.b16 %v577
        %v1148 = vunpack.c.l.b16 %v578
        %v1149 = vunpack.c.h.b16 %v578
        %v1150 = vunpack.c.l.b16 %v579
        %v1151 = vunpack.c.h.b16 %v579
        %v1152 = vunpack.c.l.b16 %v580
        %v1153 = vunpack.c.h.b16 %v580
        %v1154 = vunpack.c.l.b16 %v581
        %v1155 = vunpack.c.h.b16 %v581
        %v1156 = vunpack.c.l.b16 %v582
        %v1157 = vunpack.c.h.b16 %v582
        %v1158 = vunpack.c.l.b16 %v583
        %v1159 = vunpack.c.h.b16 %v583
        %v1160 = vunpack.c.l.b16 %v584
        %v1161 = vunpack.c.h.b16 %v584
        %v1162 = vunpack.c.l.b16 %v585
        %v1163 = vunpack.c.h.b16 %v585
        %v1164 = vunpack.c.l.b16 %v586
        %v1165 = vunpack.c.h.b16 %v586
        %v1166 = vunpack.c.l.b16 %v587
        %v1167 = vunpack.c.h.b16 %v587
        %v1168 = vunpack.c.l.b16 %v588
        %v1169 = vunpack.c.h.b16 %v588
        %v1170 = vunpack.c.l.b16 %v589
        %v1171 = vunpack.c.h.b16 %v589
        %v1172 = vunpack.c.l.b16 %v590
        %v1173 = vunpack.c.h.b16 %v590
        %v1174 = vunpack.c.l.b16 %v591
        %v1175 = vunpack.c.h.b16 %v591
        %v1176 = vunpack.c.l.b16 %v592
        %v1177 = vunpack.c.h.b16 %v592
        %v1178 = vunpack.c.l.b16 %v593
        %v1179 = vunpack.c.h.b16 %v593
        %v1180 = vunpack.c.l.b16 %v594
        %v1181 = vunpack.c.h.b16 %v594
        %v1182 = vunpack.c.l.b16 %v595
        %v1183 = vunpack.c.h.b16 %v595
        %v1184 = vunpack.c.l.b16 %v596
        %v1185 = vunpack.c.h.b16 %v596
        %v1186 = vunpack.c.l.b16 %v597
        %v1187 = vunpack.c.h.b16 %v597
        %v1188 = vunpack.c.l.b16 %v598
        %v1189 = vunpack.c.h.b16 %v598
        %v1190 = vunpack.c.l.b16 %v599
        %v1191 = vunpack.c.h.b16 %v599
        %v1192 = vunpack.c.l.b16 %v600
        %v1193 = vunpack.c.h.b16 %v600
        %v1194 = vunpack.c.l.b16 %v601
        %v1195 = vunpack.c.h.b16 %v601
        %v1196 = vunpack.c.l.b16 %v602
        %v1197 = vunpack.c.h.b16 %v602
        %v1198 = vunpack.c.l.b16 %v603
        %v1199 = vunpack.c.h.b16 %v603
        %v1200 = vunpack.c.l.b16 %v604
        %v1201 = vunpack.c.h.b16 %v604
        %v1202 = vunpack.c.l.b16 %v605
        %v1203 = vunpack.c.h.b16 %v605
        %v1204 = vunpack.c.l.b16 %v606
        %v1205 = vunpack.c.h.b16 %v606
        %v1206 = vunpack.c.l.b16 %v607
        %v1207 = vunpack.c.h.b16 %v607
        %v1208 = vunpack.c.l.b16 %v608
        %v1209 = vunpack.c.h.b16 %v608
        %v1210 = vunpack.c.l.b16 %v609
        %v1211 = vunpack.c.h.b16 %v609
        %v1212 = vunpack.c.l.b16 %v610
        %v1213 = vunpack.c.h.b16 %v610
        %v1214 = vunpack.c.l.b16 %v611
        %v1215 = vunpack.c.h.b16 %v611
        %v1216 = vunpack.c.l.b16 %v612
        %v1217 = vunpack.c.h.b16 %v612
        %v1218 = vunpack.c.l.b16 %v613
        %v1219 = vunpack.c.h.b16 %v613
        %v1220 = vunpack.c.l.b16 %v614
        %v1221 = vunpack.c.h.b16 %v614
        %v1222 = vunpack.c.l.b16 %v615
        %v1223 = vunpack.c.h.b16 %v615
        %v1224 = vunpack.c.l.b16 %v616
        %v1225 = vunpack.c.h.b16 %v616
        %v1226 = vunpack.c.l.b16 %v617
        %v1227 = vunpack.c.h.b16 %v617
        %v1228 = vunpack.c.l.b16 %v618
        %v1229 = vunpack.c.h.b16 %v618
        %v1230 = vunpack.c.l.b16 %v619
        %v1231 = vunpack.c.h.b16 %v619
        %v1232 = vunpack.c.l.b16 %v620
        %v1233 = vunpack.c.h.b16 %v620
        %v1234 = vunpack.c.l.b16 %v621
        %v1235 = vunpack.c.h.b16 %v621
        %v1236 = vunpack.c.l.b16 %v622
        %v1237 = vunpack.c.h.b16 %v622
        %v1238 = vunpack.c.l.b16 %v623
        %v1239 = vunpack.c.h.b16 %v623
        %v1240 = vunpack.c.l.b16 %v624
        %v1241 = vunpack.c.h.b16 %v624
        %v1242 = vunpack.c.l.b16 %v625
        %v1243 = vunpack.c.h.b16 %v625
        %v1244 = vunpack.c.l.b16 %v626
        %v1245 = vunpack.c.h.b16 %v626
        %v1246 = vunpack.c.l.b16 %v627
        %v1247 = vunpack.c.h.b16 %v627
        %v1248 = vunpack.c.l.b16 %v628
        %v1249 = vunpack.c.h.b16 %v628
        %v1250 = vunpack.c.l.b16 %v629
        %v1251 = vunpack.c.h.b16 %v629
        %v1252 = vunpack.c.l.b16 %v630
        %v1253 = vunpack.c.h.b16 %v630
        %v1254 = vunpack.c.l.b16 %v631
        %v1255 = vunpack.c.h.b16 %v631
        %v1256 = vunpack.c.l.b16 %v632
        %v1257 = vunpack.c.h.b16 %v632
        %v1258 = vunpack.c.l.b16 %v633
        %v1259 = vunpack.c.h.b16 %v633
        %v1260 = vunpack.c.l.b16 %v634
        %v1261 = vunpack.c.h.b16 %v634
        %v1262 = vunpack.c.l.b16 %v635
        %v1263 = vunpack.c.h.b16 %v635
        %v1264 = vunpack.c.l.b16 %v636
        %v1265 = vunpack.c.h.b16 %v636
        %v1266 = vunpack.c.l.b16 %v637
        %v1267 = vunpack.c.h.b16 %v637
        %v1268 = vunpack.c.l.b16 %v638
        %v1269 = vunpack.c.h.b16 %v638
        %v1270 = vunpack.c.l.b16 %v639
        %v1271 = vunpack.c.h.b16 %v639
        %v1272 = vunpack.c.l.b16 %v640
        %v1273 = vunpack.c.h.b16 %v640
        %v1274 = vunpack.c.l.b16 %v641
        %v1275 = vunpack.c.h.b16 %v641
        %v1276 = vunpack.c.l.b16 %v642
        %v1277 = vunpack.c.h.b16 %v642
        %v1278 = vunpack.c.l.b16 %v643
        %v1279 = vunpack.c.h.b16 %v643
        %v1280 = vunpack.c.l.b16 %v644
        %v1281 = vunpack.c.h.b16 %v644
        %v1282 = vunpack.c.l.b16 %v645
        %v1283 = vunpack.c.h.b16 %v645
        %v1284 = vunpack.c.l.b16 %v646
        %v1285 = vunpack.c.h.b16 %v646
        %v1286 = vunpack.c.l.b16 %v647
        %v1287 = vunpack.c.h.b16 %v647
        %v1288 = vunpack.c.l.b16 %v648
        %v1289 = vunpack.c.h.b16 %v648
        %v1290 = vunpack.c.l.b16 %v649
        %v1291 = vunpack.c.h.b16 %v649
        %v1292 = vunpack.c.l.b16 %v650
        %v1293 = vunpack.c.h.b16 %v650
        %v1294 = vunpack.c.l.b16 %v651
        %v1295 = vunpack.c.h.b16 %v651
        %v1296 = vunpack.c.l.b16 %v652
        %v1297 = vunpack.c.h.b16 %v652
        %v1298 = vunpack.c.l.b16 %v653
        %v1299 = vunpack.c.h.b16 %v653
        %v1300 = vunpack.c.l.b16 %v654
        %v1301 = vunpack.c.h.b16 %v654
        %v1302 = vunpack.c.l.b16 %v655
        %v1303 = vunpack.c.h.b16 %v655
        %v1304 = vunpack.c.l.b16 %v656
        %v1305 = vunpack.c.h.b16 %v656
        %v1306 = vunpack.c.l.b16 %v657
        %v1307 = vunpack.c.h.b16 %v657
        %v1308 = vunpack.c.l.b16 %v658
        %v1309 = vunpack.c.h.b16 %v658
        %v1310 = vunpack.c.l.b16 %v659
        %v1311 = vunpack.c.h.b16 %v659
        %v1312 = vunpack.c.l.b16 %v660
        %v1313 = vunpack.c.h.b16 %v660
        %v1314 = vunpack.c.l.b16 %v661
        %v1315 = vunpack.c.h.b16 %v661
        %v1316 = vunpack.c.l.b16 %v662
        %v1317 = vunpack.c.h.b16 %v662
        %v1318 = vunpack.c.l.b16 %v663
        %v1319 = vunpack.c.h.b16 %v663
        %v1320 = vunpack.c.l.b16 %v664
        %v1321 = vunpack.c.h.b16 %v664
        %v1322 = vunpack.c.l.b16 %v665
        %v1323 = vunpack.c.h.b16 %v665
        %v1324 = vunpack.c.l.b16 %v666
        %v1325 = vunpack.c.h.b16 %v666
        %v1326 = vunpack.c.l.b16 %v667
        %v1327 = vunpack.c.h.b16 %v667
        %v1328 = vunpack.c.l.b16 %v668
        %v1329 = vunpack.c.h.b16 %v668
        %v1330 = vunpack.c.l.b16 %v669
        %v1331 = vunpack.c.h.b16 %v669
        %v1332 = vunpack.c.l.b16 %v670
        %v1333 = vunpack.c.h.b16 %v670
        %v1334 = vunpack.c.l.b16 %v671
        %v1335 = vunpack.c.h.b16 %v671
        %v1336 = vunpack.c.l.b16 %v672
        %v1337 = vunpack.c.h.b16 %v672
        %v1338 = vunpack.c.l.b16 %v673
        %v1339 = vunpack.c.h.b16 %v673
        %v1340 = vunpack.c.l.b16 %v674
        %v1341 = vunpack.c.h.b16 %v674
        %v1342 = vunpack.c.l.b16 %v675
        %v1343 = vunpack.c.h.b16 %v675
        %v1344 = vunpack.c.l.b16 %v676
        %v1345 = vunpack.c.h.b16 %v676
        %v1346 = vunpack.c.l.b16 %v677
        %v1347 = vunpack.c.h.b16 %v677
        %v1348 = vunpack.c.l.b16 %v678
        %v1349 = vunpack.c.h.b16 %v678
        %v1350 = vunpack.c.l.b16 %v679
        %v1351 = vunpack.c.h.b16 %v679
        %v1352 = vunpack.c.l.b16 %v680
        %v1353 = vunpack.c.h.b16 %v680
        %v1354 = vunpack.c.l.b16 %v681
        %v1355 = vunpack.c.h.b16 %v681
        %v1356 = vunpack.c.l.b16 %v682
        %v1357 = vunpack.c.h.b16 %v682
        %v1358 = vunpack.c.l.b16 %v683
        %v1359 = vunpack.c.h.b16 %v683
        %v1360 = vunpack.c.l.b16 %v684
        %v1361 = vunpack.c.h.b16 %v684
        %v1362 = vunpack.c.l.b16 %v685
        %v1363 = vunpack.c.h.b16 %v685
        %v1364 = vunpack.c.l.b16 %v686
        %v1365 = vunpack.c.h.b16 %v686
        %v1366 = vunpack.c.l.b16 %v687
        %v1367 = vunpack.c.h.b16 %v687
        %v1368 = vunpack.c.l.b16 %v688
        %v1369 = vunpack.c.h.b16 %v688
        %v1370 = vunpack.c.l.b16 %v689
        %v1371 = vunpack.c.h.b16 %v689
        %v1372 = vunpack.c.l.b16 %v690
        %v1373 = vunpack.c.h.b16 %v690
        %v1374 = vunpack.c.l.b16 %v691
        %v1375 = vunpack.c.h.b16 %v691
        %v1376 = vunpack.c.l.b16 %v692
        %v1377 = vunpack.c.h.b16 %v692
        %v1378 = vunpack.c.l.b16 %v693
        %v1379 = vunpack.c.h.b16 %v693
        %v1380 = vunpack.c.l.b16 %v694
        %v1381 = vunpack.c.h.b16 %v694
        %v1382 = vunpack.c.l.b16 %v695
        %v1383 = vunpack.c.h.b16 %v695
        %v1384 = vunpack.c.l.b16 %v696
        %v1385 = vunpack.c.h.b16 %v696
        %v1386 = vunpack.c.l.b16 %v697
        %v1387 = vunpack.c.h.b16 %v697
        %v1388 = vunpack.c.l.b16 %v698
        %v1389 = vunpack.c.h.b16 %v698
        %v1390 = vunpack.c.l.b16 %v699
        %v1391 = vunpack.c.h.b16 %v699
        %v1392 = vunpack.c.l.b16 %v700
        %v1393 = vunpack.c.h.b16 %v700
        %v1394 = vunpack.c.l.b16 %v701
        %v1395 = vunpack.c.h.b16 %v701
        %v1396 = vunpack.c.l.b16 %v702
        %v1397 = vunpack.c.h.b16 %v702
        %v1398 = vunpack.c.l.b16 %v703
        %v1399 = vunpack.c.h.b16 %v703
        %v1400 = vunpack.c.l.b16 %v704
        %v1401 = vunpack.c.h.b16 %v704
        %v1402 = vunpack.c.l.b16 %v705
        %v1403 = vunpack.c.h.b16 %v705
        %v1404 = vunpack.c.l.b16 %v706
        %v1405 = vunpack.c.h.b16 %v706
        %v1406 = vunpack.c.l.b16 %v707
        %v1407 = vunpack.c.h.b16 %v707
        %v1408 = vunpack.c.l.b16 %v708
        %v1409 = vunpack.c.h.b16 %v708
        %v1410 = vunpack.c.l.b16 %v709
        %v1411 = vunpack.c.h.b16 %v709
        %v1412 = vunpack.c.l.b16 %v710
        %v1413 = vunpack.c.h.b16 %v710
        %v1414 = vunpack.c.l.b16 %v711
        %v1415 = vunpack.c.h.b16 %v711
        %v1416 = vunpack.c.l.b16 %v712
        %v1417 = vunpack.c.h.b16 %v712
        %v1418 = vunpack.c.l.b16 %v713
        %v1419 = vunpack.c.h.b16 %v713
        %v1420 = vunpack.c.l.b16 %v714
        %v1421 = vunpack.c.h.b16 %v714
        %v1422 = vunpack.c.l.b16 %v715
        %v1423 = vunpack.c.h.b16 %v715
        %v1424 = vunpack.c.l.b16 %v716
        %v1425 = vunpack.c.h.b16 %v716
        %v1426 = vunpack.c.l.b16 %v717
        %v1427 = vunpack.c.h.b16 %v717
        %v1428 = vunpack.c.l.b16 %v718
        %v1429 = vunpack.c.h.b16 %v718
        %v1430 = vunpack.c.l.b16 %v719
        %v1431 = vunpack.c.h.b16 %v719
        %v1432 = vunpack.c.l.b16 %v720
        %v1433 = vunpack.c.h.b16 %v720
        %v1434 = vunpack.c.l.b16 %v721
        %v1435 = vunpack.c.h.b16 %v721
        %v1436 = vunpack.c.l.b16 %v722
        %v1437 = vunpack.c.h.b16 %v722
        %v1438 = vunpack.c.l.b16 %v723
        %v1439 = vunpack.c.h.b16 %v723
        %v1440 = vunpack.c.l.b16 %v724
        %v1441 = vunpack.c.h.b16 %v724
        %v1442 = vunpack.c.l.b16 %v725
        %v1443 = vunpack.c.h.b16 %v725
        %v1444 = vunpack.c.l.b16 %v726
        %v1445 = vunpack.c.h.b16 %v726
        %v1446 = vunpack.c.l.b16 %v727
        %v1447 = vunpack.c.h.b16 %v727
        %v1448 = vunpack.c.l.b16 %v728
        %v1449 = vunpack.c.h.b16 %v728
        %v1450 = vunpack.c.l.b16 %v729
        %v1451 = vunpack.c.h.b16 %v729
        %v1452 = vunpack.c.l.b16 %v730
        %v1453 = vunpack.c.h.b16 %v730
        %v1454 = vunpack.c.l.b16 %v731
        %v1455 = vunpack.c.h.b16 %v731
        %v1456 = vunpack.c.l.b16 %v732
        %v1457 = vunpack.c.h.b16 %v732
        %v1458 = vunpack.c.l.b16 %v733
        %v1459 = vunpack.c.h.b16 %v733
        %v1460 = vunpack.c.l.b16 %v734
        %v1461 = vunpack.c.h.b16 %v734
        %v1462 = vunpack.c.l.b16 %v735
        %v1463 = vunpack.c.h.b16 %v735
        %v1464 = vunpack.c.l.b16 %v736
        %v1465 = vunpack.c.h.b16 %v736
        %v1466 = vunpack.c.l.b16 %v737
        %v1467 = vunpack.c.h.b16 %v737
        %v1468 = vunpack.c.l.b16 %v738
        %v1469 = vunpack.c.h.b16 %v738
        %v1470 = vunpack.c.l.b16 %v739
        %v1471 = vunpack.c.h.b16 %v739
        %v1472 = vunpack.c.l.b16 %v740
        %v1473 = vunpack.c.h.b16 %v740
        %v1474 = vunpack.c.l.b16 %v741
        %v1475 = vunpack.c.h.b16 %v741
        %v1476 = vunpack.c.l.b16 %v742
        %v1477 = vunpack.c.h.b16 %v742
        %v1478 = vunpack.c.l.b16 %v743
        %v1479 = vunpack.c.h.b16 %v743
        %v1480 = vunpack.c.l.b16 %v744
        %v1481 = vunpack.c.h.b16 %v744
        %v1482 = vunpack.c.l.b16 %v745
        %v1483 = vunpack.c.h.b16 %v745
        %v1484 = vunpack.c.l.b16 %v746
        %v1485 = vunpack.c.h.b16 %v746
        %v1486 = vunpack.c.l.b16 %v747
        %v1487 = vunpack.c.h.b16 %v747
        %v1488 = vunpack.c.l.b16 %v748
        %v1489 = vunpack.c.h.b16 %v748
        %v1490 = vunpack.c.l.b16 %v749
        %v1491 = vunpack.c.h.b16 %v749
        %v1492 = vunpack.c.l.b16 %v750
        %v1493 = vunpack.c.h.b16 %v750
        %v1494 = vunpack.c.l.b16 %v751
        %v1495 = vunpack.c.h.b16 %v751
        %v1496 = vunpack.c.l.b16 %v752
        %v1497 = vunpack.c.h.b16 %v752
        %v1498 = vunpack.c.l.b16 %v753
        %v1499 = vunpack.c.h.b16 %v753
        %v1500 = vunpack.c.l.b16 %v754
        %v1501 = vunpack.c.h.b16 %v754
        %v1502 = vunpack.c.l.b16 %v755
        %v1503 = vunpack.c.h.b16 %v755
        %v1504 = vunpack.c.l.b16 %v756
        %v1505 = vunpack.c.h.b16 %v756
        %v1506 = vunpack.c.l.b16 %v757
        %v1507 = vunpack.c.h.b16 %v757
        %v1508 = vunpack.c.l.b16 %v758
        %v1509 = vunpack.c.h.b16 %v758
        %v1510 = vunpack.c.l.b16 %v759
        %v1511 = vunpack.c.h.b16 %v759
        %v1512 = vunpack.c.l.b16 %v760
        %v1513 = vunpack.c.h.b16 %v760
        %v1514 = vunpack.c.l.b16 %v761
        %v1515 = vunpack.c.h.b16 %v761
        %v1516 = vunpack.c.l.b16 %v762
        %v1517 = vunpack.c.h.b16 %v762
        %v1518 = vunpack.c.l.b16 %v763
        %v1519 = vunpack.c.h.b16 %v763
        %v1520 = vunpack.c.l.b16 %v764
        %v1521 = vunpack.c.h.b16 %v764
        %v1522 = vunpack.c.l.b16 %v765
        %v1523 = vunpack.c.h.b16 %v765
        %v1524 = vunpack.c.l.b16 %v766
        %v1525 = vunpack.c.h.b16 %v766
        %v1526 = vunpack.c.l.b16 %v767
        %v1527 = vunpack.c.h.b16 %v767
        %v1528 = vunpack.c.l.b16 %v768
        %v1529 = vunpack.c.h.b16 %v768
        %v1530 = vunpack.c.l.b16 %v769
        %v1531 = vunpack.c.h.b16 %v769
        %v1532 = vunpack.c.l.b16 %v770
        %v1533 = vunpack.c.h.b16 %v770
        %v1534 = vunpack.c.l.b16 %v771
        %v1535 = vunpack.c.h.b16 %v771
        %v1536 = vunpack.c.l.b16 %v772
        %v1537 = vunpack.c.h.b16 %v772
        %v1538 = vunpack.c.l.b16 %v773
        %v1539 = vunpack.c.h.b16 %v773
        %v1540 = vunpack.c.l.b16 %v774
        %v1541 = vunpack.c.h.b16 %v774
        %v1542 = vunpack.c.l.b16 %v775
        %v1543 = vunpack.c.h.b16 %v775
        %v1544 = vunpack.c.l.b16 %v776
        %v1545 = vunpack.c.h.b16 %v776
        %v1546 = vunpack.c.l.b16 %v777
        %v1547 = vunpack.c.h.b16 %v777
        %v1548 = vunpack.c.l.b16 %v778
        %v1549 = vunpack.c.h.b16 %v778
        %v1550 = vunpack.c.l.b16 %v779
        %v1551 = vunpack.c.h.b16 %v779
        %v1552 = vunpack.c.l.b16 %v780
        %v1553 = vunpack.c.h.b16 %v780
        %v1554 = vunpack.c.l.b16 %v781
        %v1555 = vunpack.c.h.b16 %v781
        %v1556 = vunpack.c.l.b16 %v782
        %v1557 = vunpack.c.h.b16 %v782
        %v1558 = vunpack.c.l.b16 %v783
        %v1559 = vunpack.c.h.b16 %v783
        %v1560 = vunpack.c.l.b16 %v784
        %v1561 = vunpack.c.h.b16 %v784
        %v1562 = vunpack.c.l.b16 %v785
        %v1563 = vunpack.c.h.b16 %v785
        %v1564 = vunpack.c.l.b16 %v786
        %v1565 = vunpack.c.h.b16 %v786
        %v1566 = vunpack.c.l.b16 %v787
        %v1567 = vunpack.c.h.b16 %v787
        %v1568 = vunpack.c.l.b16 %v788
        %v1569 = vunpack.c.h.b16 %v788
        %v1570 = vunpack.c.l.b16 %v789
        %v1571 = vunpack.c.h.b16 %v789
        %v1572 = vunpack.c.l.b16 %v790
        %v1573 = vunpack.c.h.b16 %v790
        %v1574 = vunpack.c.l.b16 %v791
        %v1575 = vunpack.c.h.b16 %v791
        %v1576 = vunpack.c.l.b16 %v792
        %v1577 = vunpack.c.h.b16 %v792
        %v1578 = vunpack.c.l.b16 %v793
        %v1579 = vunpack.c.h.b16 %v793
        %v1580 = vunpack.c.l.b16 %v794
        %v1581 = vunpack.c.h.b16 %v794
        %v1582 = vunpack.c.l.b16 %v795
        %v1583 = vunpack.c.h.b16 %v795
        %v1584 = vunpack.c.l.b16 %v796
        %v1585 = vunpack.c.h.b16 %v796
        %v1586 = vunpack.c.l.b16 %v797
        %v1587 = vunpack.c.h.b16 %v797
        %v1588 = vunpack.c.l.b16 %v798
        %v1589 = vunpack.c.h.b16 %v798
        %v1590 = vunpack.c.l.b16 %v799
        %v1591 = vunpack.c.h.b16 %v799
        %v1592 = vunpack.c.l.b16 %v800
        %v1593 = vunpack.c.h.b16 %v800
        %v1594 = vunpack.c.l.b16 %v801
        %v1595 = vunpack.c.h.b16 %v801
        %v1596 = vunpack.c.l.b16 %v802
        %v1597 = vunpack.c.h.b16 %v802
        %v1598 = vunpack.c.l.b16 %v803
        %v1599 = vunpack.c.h.b16 %v803
        %v1600 = vunpack.c.l.b16 %v804
        %v1601 = vunpack.c.h.b16 %v804
        %v1602 = vunpack.c.l.b16 %v805
        %v1603 = vunpack.c.h.b16 %v805
        %v1604 = vunpack.c.l.b16 %v806
        %v1605 = vunpack.c.h.b16 %v806
        %v1606 = vunpack.c.l.b16 %v807
        %v1607 = vunpack.c.h.b16 %v807
        %v1608 = vunpack.c.l.b16 %v808
        %v1609 = vunpack.c.h.b16 %v808
        %v1610 = vunpack.c.l.b16 %v809
        %v1611 = vunpack.c.h.b16 %v809
        %v1612 = vunpack.c.l.b16 %v810
        %v1613 = vunpack.c.h.b16 %v810
        %v1614 = vunpack.c.l.b16 %v811
        %v1615 = vunpack.c.h.b16 %v811
        %v1616 = vunpack.c.l.b16 %v812
        %v1617 = vunpack.c.h.b16 %v812
        %v1618 = vunpack.c.l.b16 %v813
        %v1619 = vunpack.c.h.b16 %v813
        %v1620 = vunpack.c.l.b16 %v814
        %v1621 = vunpack.c.h.b16 %v814
        %v1622 = vunpack.c.l.b16 %v815
        %v1623 = vunpack.c.h.b16 %v815
        %v1624 = vunpack.c.l.b16 %v816
        %v1625 = vunpack.c.h.b16 %v816
        %v1626 = vunpack.c.l.b16 %v817
        %v1627 = vunpack.c.h.b16 %v817
        %v1628 = vpack.c.b16 %v1124, %v1116
        %v1629 = vpack.c.b16 %v1125, %v1117
        %v1630 = vpack.c.b16 %v1126, %v1118
        %v1631 = vpack.c.b16 %v1127, %v1119
        %v1632 = vpack.c.b16 %v1128, %v1120
        %v1633 = vpack.c.b16 %v1129, %v1121
        %v1634 = vpack.c.b16 %v1130, %v1122
        %v1635 = vpack.c.b16 %v1131, %v1123
        %v1636 = vpack.c.b16 %v1140, %v1132
        %v1637 = vpack.c.b16 %v1141, %v1133
        %v1638 = vpack.c.b16 %v1142, %v1134
        %v1639 = vpack.c.b16 %v1143, %v1135
        %v1640 = vpack.c.b16 %v1144, %v1136
        %v1641 = vpack.c.b16 %v1145, %v1137
        %v1642 = vpack.c.b16 %v1146, %v1138
        %v1643 = vpack.c.b16 %v1147, %v1139
        %v1644 = vpack.c.b16 %v1156, %v1148
        %v1645 = vpack.c.b16 %v1157, %v1149
        %v1646 = vpack.c.b16 %v1158, %v1150
        %v1647 = vpack.c.b16 %v1159, %v1151
        %v1648 = vpack.c.b16 %v1160, %v1152
        %v1649 = vpack.c.b16 %v1161, %v1153
        %v1650 = vpack.c.b16 %v1162, %v1154
        %v1651 = vpack.c.b16 %v1163, %v1155
        %v1652 = vpack.c.b16 %v1172, %v1164
        %v1653 = vpack.c.b16 %v1173, %v1165
        %v1654 = vpack.c.b16 %v1174, %v1166
        %v1655 = vpack.c.b16 %v1175, %v1167
        %v1656 = vpack.c.b16 %v1176, %v1168
        %v1657 = vpack.c.b16 %v1177, %v1169
        %v1658 = vpack.c.b16 %v1178, %v1170
        %v1659 = vpack.c.b16 %v1179, %v1171
        %v1660 = vpack.c.b16 %v1188, %v1180
        %v1661 = vpack.c.b16 %v1189, %v1181
        %v1662 = vpack.c.b16 %v1190, %v1182
        %v1663 = vpack.c.b16 %v1191, %v1183
        %v1664 = vpack.c.b16 %v1192, %v1184
        %v1665 = vpack.c.b16 %v1193, %v1185
        %v1666 = vpack.c.b16 %v1194, %v1186
        %v1667 = vpack.c.b16 %v1195, %v1187
        %v1668 = vpack.c.b16 %v1204, %v1196
        %v1669 = vpack.c.b16 %v1205, %v1197
        %v1670 = vpack.c.b16 %v1206, %v1198
        %v1671 = vpack.c.b16 %v1207, %v1199
        %v1672 = vpack.c.b16 %v1208, %v1200
        %v1673 = vpack.c.b16 %v1209, %v1201
        %v1674 = vpack.c.b16 %v1210, %v1202
        %v1675 = vpack.c.b16 %v1211, %v1203
        %v1676 = vpack.c.b16 %v1220, %v1212
        %v1677 = vpack.c.b16 %v1221, %v1213
        %v1678 = vpack.c.b16 %v1222, %v1214
        %v1679 = vpack.c.b16 %v1223, %v1215
        %v1680 = vpack.c.b16 %v1224, %v1216
        %v1681 = vpack.c.b16 %v1225, %v1217
        %v1682 = vpack.c.b16 %v1226, %v1218
        %v1683 = vpack.c.b16 %v1227, %v1219
        %v1684 = vpack.c.b16 %v1236, %v1228
        %v1685 = vpack.c.b16 %v1237, %v1229
        %v1686 = vpack.c.b16 %v1238, %v1230
        %v1687 = vpack.c.b16 %v1239, %v1231
        %v1688 = vpack.c.b16 %v1240, %v1232
        %v1689 = vpack.c.b16 %v1241, %v1233
        %v1690 = vpack.c.b16 %v1242, %v1234
        %v1691 = vpack.c.b16 %v1243, %v1235
        %v1692 = vpack.c.b16 %v1252, %v1244
        %v1693 = vpack.c.b16 %v1253, %v1245
        %v1694 = vpack.c.b16 %v1254, %v1246
        %v1695 = vpack.c.b16 %v1255, %v1247
        %v1696 = vpack.c.b16 %v1256, %v1248
        %v1697 = vpack.c.b16 %v1257, %v1249
        %v1698 = vpack.c.b16 %v1258, %v1250
        %v1699 = vpack.c.b16 %v1259, %v1251
        %v1700 = vpack.c.b16 %v1268, %v1260
        %v1701 = vpack.c.b16 %v1269, %v1261
        %v1702 = vpack.c.b16 %v1270, %v1262
        %v1703 = vpack.c.b16 %v1271, %v1263
        %v1704 = vpack.c.b16 %v1272, %v1264
        %v1705 = vpack.c.b16 %v1273, %v1265
        %v1706 = vpack.c.b16 %v1274, %v1266
        %v1707 = vpack.c.b16 %v1275, %v1267
        %v1708 = vpack.c.b16 %v1284, %v1276
        %v1709 = vpack.c.b16 %v1285, %v1277
        %v1710 = vpack.c.b16 %v1286, %v1278
        %v1711 = vpack.c.b16 %v1287, %v1279
        %v1712 = vpack.c.b16 %v1288, %v1280
        %v1713 = vpack.c.b16 %v1289, %v1281
        %v1714 = vpack.c.b16 %v1290, %v1282
        %v1715 = vpack.c.b16 %v1291, %v1283
        %v1716 = vpack.c.b16 %v1300, %v1292
        %v1717 = vpack.c.b16 %v1301, %v1293
        %v1718 = vpack.c.b16 %v1302, %v1294
        %v1719 = vpack.c.b16 %v1303, %v1295
        %v1720 = vpack.c.b16 %v1304, %v1296
        %v1721 = vpack.c.b16 %v1305, %v1297
        %v1722 = vpack.c.b16 %v1306, %v1298
        %v1723 = vpack.c.b16 %v1307, %v1299
        %v1724 = vpack.c.b16 %v1316, %v1308
        %v1725 = vpack.c.b16 %v1317, %v1309
        %v1726 = vpack.c.b16 %v1318, %v1310
        %v1727 = vpack.c.b16 %v1319, %v1311
        %v1728 = vpack.c.b16 %v1320, %v1312
        %v1729 = vpack.c.b16 %v1321, %v1313
        %v1730 = vpack.c.b16 %v1322, %v1314
        %v1731 = vpack.c.b16 %v1323, %v1315
        %v1732 = vpack.c.b16 %v1332, %v1324
        %v1733 = vpack.c.b16 %v1333, %v1325
        %v1734 = vpack.c.b16 %v1334, %v1326
        %v1735 = vpack.c.b16 %v1335, %v1327
        %v1736 = vpack.c.b16 %v1336, %v1328
        %v1737 = vpack.c.b16 %v1337, %v1329
        %v1738 = vpack.c.b16 %v1338, %v1330
        %v1739 = vpack.c.b16 %v1339, %v1331
        %v1740 = vpack.c.b16 %v1348, %v1340
        %v1741 = vpack.c.b16 %v1349, %v1341
        %v1742 = vpack.c.b16 %v1350, %v1342
        %v1743 = vpack.c.b16 %v1351, %v1343
        %v1744 = vpack.c.b16 %v1352, %v1344
        %v1745 = vpack.c.b16 %v1353, %v1345
        %v1746 = vpack.c.b16 %v1354, %v1346
        %v1747 = vpack.c.b16 %v1355, %v1347
        %v1748 = vpack.c.b16 %v1364, %v1356
        %v1749 = vpack.c.b16 %v1365, %v1357
        %v1750 = vpack.c.b16 %v1366, %v1358
        %v1751 = vpack.c.b16 %v1367, %v1359
        %v1752 = vpack.c.b16 %v1368, %v1360
        %v1753 = vpack.c.b16 %v1369, %v1361
        %v1754 = vpack.c.b16 %v1370, %v1362
        %v1755 = vpack.c.b16 %v1371, %v1363
        %v1756 = vpack.c.b16 %v1380, %v1372
        %v1757 = vpack.c.b16 %v1381, %v1373
        %v1758 = vpack.c.b16 %v1382, %v1374
        %v1759 = vpack.c.b16 %v1383, %v1375
        %v1760 = vpack.c.b16 %v1384, %v1376
        %v1761 = vpack.c.b16 %v1385, %v1377
        %v1762 = vpack.c.b16 %v1386, %v1378
        %v1763 = vpack.c.b16 %v1387, %v1379
        %v1764 = vpack.c.b16 %v1396, %v1388
        %v1765 = vpack.c.b16 %v1397, %v1389
        %v1766 = vpack.c.b16 %v1398, %v1390
        %v1767 = vpack.c.b16 %v1399, %v1391
        %v1768 = vpack.c.b16 %v1400, %v1392
        %v1769 = vpack.c.b16 %v1401, %v1393
        %v1770 = vpack.c.b16 %v1402, %v1394
        %v1771 = vpack.c.b16 %v1403, %v1395
        %v1772 = vpack.c.b16 %v1412, %v1404
        %v1773 = vpack.c.b16 %v1413, %v1405
        %v1774 = vpack.c.b16 %v1414, %v1406
        %v1775 = vpack.c.b16 %v1415, %v1407
        %v1776 = vpack.c.b16 %v1416, %v1408
        %v1777 = vpack.c.b16 %v1417, %v1409
        %v1778 = vpack.c.b16 %v1418, %v1410
        %v1779 = vpack.c.b16 %v1419, %v1411
        %v1780 = vpack.c.b16 %v1428, %v1420
        %v1781 = vpack.c.b16 %v1429, %v1421
        %v1782 = vpack.c.b16 %v1430, %v1422
        %v1783 = vpack.c.b16 %v1431, %v1423
        %v1784 = vpack.c.b16 %v1432, %v1424
        %v1785 = vpack.c.b16 %v1433, %v1425
        %v1786 = vpack.c.b16 %v1434, %v1426
        %v1787 = vpack.c.b16 %v1435, %v1427
        %v1788 = vpack.c.b16 %v1444, %v1436
        %v1789 = vpack.c.b16 %v1445, %v1437
        %v1790 = vpack.c.b16 %v1446, %v1438
        %v1791 = vpack.c.b16 %v1447, %v1439
        %v1792 = vpack.c.b16 %v1448, %v1440
        %v1793 = vpack.c.b16 %v1449, %v1441
        %v1794 = vpack.c.b16 %v1450, %v1442
        %v1795 = vpack.c.b16 %v1451, %v1443
        %v1796 = vpack.c.b16 %v1460, %v1452
        %v1797 = vpack.c.b16 %v1461, %v1453
        %v1798 = vpack.c.b16 %v1462, %v1454
        %v1799 = vpack.c.b16 %v1463, %v1455
        %v1800 = vpack.c.b16 %v1464, %v1456
        %v1801 = vpack.c.b16 %v1465, %v1457
        %v1802 = vpack.c.b16 %v1466, %v1458
        %v1803 = vpack.c.b16 %v1467, %v1459
        %v1804 = vpack.c.b16 %v1476, %v1468
        %v1805 = vpack.c.b16 %v1477, %v1469
        %v1806 = vpack.c.b16 %v1478, %v1470
        %v1807 = vpack.c.b16 %v1479, %v1471
        %v1808 = vpack.c.b16 %v1480, %v1472
        %v1809 = vpack.c.b16 %v1481, %v1473
        %v1810 = vpack.c.b16 %v1482, %v1474
        %v1811 = vpack.c.b16 %v1483, %v1475
        %v1812 = vpack.c.b16 %v1492, %v1484
        %v1813 = vpack.c.b16 %v1493, %v1485
        %v1814 = vpack.c.b16 %v1494, %v1486
        %v1815 = vpack.c.b16 %v1495, %v1487
        %v1816 = vpack.c.b16 %v1496, %v1488
        %v1817 = vpack.c.b16 %v1497, %v1489
        %v1818 = vpack.c.b16 %v1498, %v1490
        %v1819 = vpack.c.b16 %v1499, %v1491
        %v1820 = vpack.c.b16 %v1508, %v1500
        %v1821 = vpack.c.b16 %v1509, %v1501
        %v1822 = vpack.c.b16 %v1510, %v1502
        %v1823 = vpack.c.b16 %v1511, %v1503
        %v1824 = vpack.c.b16 %v1512, %v1504
        %v1825 = vpack.c.b16 %v1513, %v1505
        %v1826 = vpack.c.b16 %v1514, %v1506
        %v1827 = vpack.c.b16 %v1515, %v1507
        %v1828 = vpack.c.b16 %v1524, %v1516
        %v1829 = vpack.c.b16 %v1525, %v1517
        %v1830 = vpack.c.b16 %v1526, %v1518
        %v1831 = vpack.c.b16 %v1527, %v1519
        %v1832 = vpack.c.b16 %v1528, %v1520
        %v1833 = vpack.c.b16 %v1529, %v1521
        %v1834 = vpack.c.b16 %v1530, %v1522
        %v1835 = vpack.c.b16 %v1531, %v1523
        %v1836 = vpack.c.b16 %v1540, %v1532
        %v1837 = vpack.c.b16 %v1541, %v1533
        %v1838 = vpack.c.b16 %v1542, %v1534
        %v1839 = vpack.c.b16 %v1543, %v1535
        %v1840 = vpack.c.b16 %v1544, %v1536
        %v1841 = vpack.c.b16 %v1545, %v1537
        %v1842 = vpack.c.b16 %v1546, %v1538
        %v1843 = vpack.c.b16 %v1547, %v1539
        %v1844 = vpack.c.b16 %v1556, %v1548
        %v1845 = vpack.c.b16 %v1557, %v1549
        %v1846 = vpack.c.b16 %v1558, %v1550
        %v1847 = vpack.c.b16 %v1559, %v1551
        %v1848 = vpack.c.b16 %v1560, %v1552
        %v1849 = vpack.c.b16 %v1561, %v1553
        %v1850 = vpack.c.b16 %v1562, %v1554
        %v1851 = vpack.c.b16 %v1563, %v1555
        %v1852 = vpack.c.b16 %v1572, %v1564
        %v1853 = vpack.c.b16 %v1573, %v1565
        %v1854 = vpack.c.b16 %v1574, %v1566
        %v1855 = vpack.c.b16 %v1575, %v1567
        %v1856 = vpack.c.b16 %v1576, %v1568
        %v1857 = vpack.c.b16 %v1577, %v1569
        %v1858 = vpack.c.b16 %v1578, %v1570
        %v1859 = vpack.c.b16 %v1579, %v1571
        %v1860 = vpack.c.b16 %v1588, %v1580
        %v1861 = vpack.c.b16 %v1589, %v1581
        %v1862 = vpack.c.b16 %v1590, %v1582
        %v1863 = vpack.c.b16 %v1591, %v1583
        %v1864 = vpack.c.b16 %v1592, %v1584
        %v1865 = vpack.c.b16 %v1593, %v1585
        %v1866 = vpack.c.b16 %v1594, %v1586
        %v1867 = vpack.c.b16 %v1595, %v1587
        %v1868 = vpack.c.b16 %v1604, %v1596
        %v1869 = vpack.c.b16 %v1605, %v1597
        %v1870 = vpack.c.b16 %v1606, %v1598
        %v1871 = vpack.c.b16 %v1607, %v1599
        %v1872 = vpack.c.b16 %v1608, %v1600
        %v1873 = vpack.c.b16 %v1609, %v1601
        %v1874 = vpack.c.b16 %v1610, %v1602
        %v1875 = vpack.c.b16 %v1611, %v1603
        %v1876 = vpack.c.b16 %v1620, %v1612
        %v1877 = vpack.c.b16 %v1621, %v1613
        %v1878 = vpack.c.b16 %v1622, %v1614
        %v1879 = vpack.c.b16 %v1623, %v1615
        %v1880 = vpack.c.b16 %v1624, %v1616
        %v1881 = vpack.c.b16 %v1625, %v1617
        %v1882 = vpack.c.b16 %v1626, %v1618
        %v1883 = vpack.c.b16 %v1627, %v1619
        %2140 = vmatprep.subr.bf16.mxu0 %v1629
        %2141 = vmatpush1.bf16.msra.mxu0 %v1628
        %2142 = vmatprep.subr.bf16.mxu0 %v1637
        %2143 = vmatpush1.bf16.msra.mxu0 %v1636
        %2144 = vmatprep.subr.bf16.mxu0 %v1645
        %2145 = vmatpush1.bf16.msra.mxu0 %v1644
        %2146 = vmatprep.subr.bf16.mxu0 %v1653
        %2147 = vmatpush1.bf16.msra.mxu0 %v1652
        %2148 = vmatprep.subr.bf16.mxu0 %v1661
        %2149 = vmatpush1.bf16.msra.mxu0 %v1660
        %2150 = vmatprep.subr.bf16.mxu0 %v1669
        %2151 = vmatpush1.bf16.msra.mxu0 %v1668
        %2152 = vmatprep.subr.bf16.mxu0 %v1677
        %2153 = vmatpush1.bf16.msra.mxu0 %v1676
        %2154 = vmatprep.subr.bf16.mxu0 %v1685
        %2155 = vmatpush1.bf16.msra.mxu0 %v1684
        %2156 = vmatprep.subr.bf16.mxu0 %v1693
        %2157 = vmatpush1.bf16.msra.mxu0 %v1692
        %2158 = vmatprep.subr.bf16.mxu0 %v1701
        %2159 = vmatpush1.bf16.msra.mxu0 %v1700
        %2160 = vmatprep.subr.bf16.mxu0 %v1709
        %2161 = vmatpush1.bf16.msra.mxu0 %v1708
        %2162 = vmatprep.subr.bf16.mxu0 %v1717
        %2163 = vmatpush1.bf16.msra.mxu0 %v1716
        %2164 = vmatprep.subr.bf16.mxu0 %v1725
        %2165 = vmatpush1.bf16.msra.mxu0 %v1724
        %2166 = vmatprep.subr.bf16.mxu0 %v1733
        %2167 = vmatpush1.bf16.msra.mxu0 %v1732
        %2168 = vmatprep.subr.bf16.mxu0 %v1741
        %2169 = vmatpush1.bf16.msra.mxu0 %v1740
        %2170 = vmatprep.subr.bf16.mxu0 %v1749
        %2171 = vmatpush1.bf16.msra.mxu0 %v1748
        %2172 = vmatprep.mubr.bf16.mxu0 %v499
        %2173 = vmatmul.mubr.bf16.gmra.mrb[0].mxu0 %v498
        %v2174 = vpop.f32.mrb[0].mxu0
        %v2175 = vadd.f32 %v823, %v2174
        %v2176 = vpop.f32.mrb[0].mxu0
        %v2177 = vadd.f32 %v827, %v2176
        %v2178 = vpop.f32.mrb[0].mxu0
        %v2179 = vadd.f32 %v823, %v2178
        %v2180 = vpop.f32.mrb[0].mxu0
        %v2181 = vadd.f32 %v827, %v2180
        %2182 = vmatprep.mubr.bf16.mxu0 %v503
        %2183 = vmatmul.mubr.bf16.gmra.mrb[0].mxu0 %v502
        %v2184 = vpop.f32.mrb[0].mxu0
        %v2185 = vadd.f32 %v823, %v2184
        %v2186 = vpop.f32.mrb[0].mxu0
        %v2187 = vadd.f32 %v827, %v2186
        %v2188 = vpop.f32.mrb[0].mxu0
        %v2189 = vadd.f32 %v823, %v2188
        %v2190 = vpop.f32.mrb[0].mxu0
        %v2191 = vadd.f32 %v827, %v2190
        %2192 = vmatprep.mubr.bf16.mxu0 %v507
        %2193 = vmatmul.mubr.bf16.gmra.mrb[0].mxu0 %v506
        %v2194 = vpop.f32.mrb[0].mxu0
        %v2195 = vadd.f32 %v823, %v2194
        %v2196 = vpop.f32.mrb[0].mxu0
        %v2197 = vadd.f32 %v827, %v2196
        %v2198 = vpop.f32.mrb[0].mxu0
        %v2199 = vadd.f32 %v823, %v2198
        %v2200 = vpop.f32.mrb[0].mxu0
        %v2201 = vadd.f32 %v827, %v2200
        %2202 = vmatprep.mubr.bf16.mxu0 %v511
        %2203 = vmatmul.mubr.bf16.gmra.mrb[0].mxu0 %v510
        %v2204 = vpop.f32.mrb[0].mxu0
        %v2205 = vadd.f32 %v823, %v2204
        %v2206 = vpop.f32.mrb[0].mxu0
        %v2207 = vadd.f32 %v827, %v2206
        %v2208 = vpop.f32.mrb[0].mxu0
        %v2209 = vadd.f32 %v823, %v2208
        %v2210 = vpop.f32.mrb[0].mxu0
        %v2211 = vadd.f32 %v827, %v2210
        %2212 = vmatprep.mubr.bf16.mxu0 %v515
        %2213 = vmatmul.mubr.bf16.gmra.mrb[0].mxu0 %v514
        %v2214 = vpop.f32.mrb[0].mxu0
        %v2215 = vadd.f32 %v823, %v2214
        %v2216 = vpop.f32.mrb[0].mxu0
        %v2217 = vadd.f32 %v827, %v2216
        %v2218 = vpop.f32.mrb[0].mxu0
        %v2219 = vadd.f32 %v823, %v2218
        %v2220 = vpop.f32.mrb[0].mxu0
        %v2221 = vadd.f32 %v827, %v2220
        %2222 = vmatprep.mubr.bf16.mxu0 %v519
        %2223 = vmatmul.mubr.bf16.gmra.mrb[0].mxu0 %v518
        %v2224 = vpop.f32.mrb[0].mxu0
        %v2225 = vadd.f32 %v823, %v2224
        %v2226 = vpop.f32.mrb[0].mxu0
        %v2227 = vadd.f32 %v827, %v2226
        %v2228 = vpop.f32.mrb[0].mxu0
        %v2229 = vadd.f32 %v823, %v2228
        %v2230 = vpop.f32.mrb[0].mxu0
        %v2231 = vadd.f32 %v827, %v2230
        %2232 = vmatprep.mubr.bf16.mxu0 %v523
        %2233 = vmatmul.mubr.bf16.gmra.mrb[0].mxu0 %v522
        %v2234 = vpop.f32.mrb[0].mxu0
        %v2235 = vadd.f32 %v823, %v2234
        %v2236 = vpop.f32.mrb[0].mxu0
        %v2237 = vadd.f32 %v827, %v2236
        %v2238 = vpop.f32.mrb[0].mxu0
        %v2239 = vadd.f32 %v823, %v2238
        %v2240 = vpop.f32.mrb[0].mxu0
        %v2241 = vadd.f32 %v827, %v2240
        %2242 = vmatprep.mubr.bf16.mxu0 %v527
        %2243 = vmatmul.mubr.bf16.gmra.mrb[0].mxu0 %v526
        %v2244 = vpop.f32.mrb[0].mxu0
        %v2245 = vadd.f32 %v823, %v2244
        %v2246 = vpop.f32.mrb[0].mxu0
        %v2247 = vadd.f32 %v827, %v2246
        %v2248 = vpop.f32.mrb[0].mxu0
        %v2249 = vadd.f32 %v823, %v2248
        %v2250 = vpop.f32.mrb[0].mxu0
        %v2251 = vadd.f32 %v827, %v2250
        %2252 = vmatprep.mubr.bf16.mxu0 %v531
        %2253 = vmatmul.mubr.bf16.gmra.mrb[0].mxu0 %v530
        %v2254 = vpop.f32.mrb[0].mxu0
        %v2255 = vadd.f32 %v823, %v2254
        %v2256 = vpop.f32.mrb[0].mxu0
        %v2257 = vadd.f32 %v827, %v2256
        %v2258 = vpop.f32.mrb[0].mxu0
        %v2259 = vadd.f32 %v823, %v2258
        %v2260 = vpop.f32.mrb[0].mxu0
        %v2261 = vadd.f32 %v827, %v2260
        %2262 = vmatprep.mubr.bf16.mxu0 %v535
        %2263 = vmatmul.mubr.bf16.gmra.mrb[0].mxu0 %v534
        %v2264 = vpop.f32.mrb[0].mxu0
        %v2265 = vadd.f32 %v823, %v2264
        %v2266 = vpop.f32.mrb[0].mxu0
        %v2267 = vadd.f32 %v827, %v2266
        %v2268 = vpop.f32.mrb[0].mxu0
        %v2269 = vadd.f32 %v823, %v2268
        %v2270 = vpop.f32.mrb[0].mxu0
        %v2271 = vadd.f32 %v827, %v2270
        %2272 = vmatprep.mubr.bf16.mxu0 %v539
        %2273 = vmatmul.mubr.bf16.gmra.mrb[0].mxu0 %v538
        %v2274 = vpop.f32.mrb[0].mxu0
        %v2275 = vadd.f32 %v823, %v2274
        %v2276 = vpop.f32.mrb[0].mxu0
        %v2277 = vadd.f32 %v827, %v2276
        %v2278 = vpop.f32.mrb[0].mxu0
        %v2279 = vadd.f32 %v823, %v2278
        %v2280 = vpop.f32.mrb[0].mxu0
        %v2281 = vadd.f32 %v827, %v2280
        %2282 = vmatprep.mubr.bf16.mxu0 %v543
        %2283 = vmatmul.mubr.bf16.gmra.mrb[0].mxu0 %v542
        %v2284 = vpop.f32.mrb[0].mxu0
        %v2285 = vadd.f32 %v823, %v2284
        %v2286 = vpop.f32.mrb[0].mxu0
        %v2287 = vadd.f32 %v827, %v2286
        %v2288 = vpop.f32.mrb[0].mxu0
        %v2289 = vadd.f32 %v823, %v2288
        %v2290 = vpop.f32.mrb[0].mxu0
        %v2291 = vadd.f32 %v827, %v2290
        %2292 = vmatprep.mubr.bf16.mxu0 %v547
        %2293 = vmatmul.mubr.bf16.gmra.mrb[0].mxu0 %v546
        %v2294 = vpop.f32.mrb[0].mxu0
        %v2295 = vadd.f32 %v823, %v2294
        %v2296 = vpop.f32.mrb[0].mxu0
        %v2297 = vadd.f32 %v827, %v2296
        %v2298 = vpop.f32.mrb[0].mxu0
        %v2299 = vadd.f32 %v823, %v2298
        %v2300 = vpop.f32.mrb[0].mxu0
        %v2301 = vadd.f32 %v827, %v2300
        %2302 = vmatprep.mubr.bf16.mxu0 %v551
        %2303 = vmatmul.mubr.bf16.gmra.mrb[0].mxu0 %v550
        %v2304 = vpop.f32.mrb[0].mxu0
        %v2305 = vadd.f32 %v823, %v2304
        %v2306 = vpop.f32.mrb[0].mxu0
        %v2307 = vadd.f32 %v827, %v2306
        %v2308 = vpop.f32.mrb[0].mxu0
        %v2309 = vadd.f32 %v823, %v2308
        %v2310 = vpop.f32.mrb[0].mxu0
        %v2311 = vadd.f32 %v827, %v2310
        %2312 = vmatprep.mubr.bf16.mxu0 %v555
        %2313 = vmatmul.mubr.bf16.gmra.mrb[0].mxu0 %v554
        %v2314 = vpop.f32.mrb[0].mxu0
        %v2315 = vadd.f32 %v823, %v2314
        %v2316 = vpop.f32.mrb[0].mxu0
        %v2317 = vadd.f32 %v827, %v2316
        %v2318 = vpop.f32.mrb[0].mxu0
        %v2319 = vadd.f32 %v823, %v2318
        %v2320 = vpop.f32.mrb[0].mxu0
        %v2321 = vadd.f32 %v827, %v2320
        %2322 = vmatprep.mubr.bf16.mxu0 %v559
        %2323 = vmatmul.mubr.bf16.gmra.mrb[0].mxu0 %v558
        %v2324 = vpop.f32.mrb[0].mxu0
        %v2325 = vadd.f32 %v823, %v2324
        %v2326 = vpop.f32.mrb[0].mxu0
        %v2327 = vadd.f32 %v827, %v2326
        %v2328 = vpop.f32.mrb[0].mxu0
        %v2329 = vadd.f32 %v823, %v2328
        %v2330 = vpop.f32.mrb[0].mxu0
        %v2331 = vadd.f32 %v827, %v2330
        %2332 = vdwg.mxu0
        %2333 = vmatprep.subr.bf16.mxu0 %v1757
        %2334 = vmatpush1.bf16.msra.mxu0 %v1756
        %2335 = vmatprep.subr.bf16.mxu0 %v1765
        %2336 = vmatpush1.bf16.msra.mxu0 %v1764
        %2337 = vmatprep.subr.bf16.mxu0 %v1773
        %2338 = vmatpush1.bf16.msra.mxu0 %v1772
        %2339 = vmatprep.subr.bf16.mxu0 %v1781
        %2340 = vmatpush1.bf16.msra.mxu0 %v1780
        %2341 = vmatprep.subr.bf16.mxu0 %v1789
        %2342 = vmatpush1.bf16.msra.mxu0 %v1788
        %2343 = vmatprep.subr.bf16.mxu0 %v1797
        %2344 = vmatpush1.bf16.msra.mxu0 %v1796
        %2345 = vmatprep.subr.bf16.mxu0 %v1805
        %2346 = vmatpush1.bf16.msra.mxu0 %v1804
        %2347 = vmatprep.subr.bf16.mxu0 %v1813
        %2348 = vmatpush1.bf16.msra.mxu0 %v1812
        %2349 = vmatprep.subr.bf16.mxu0 %v1821
        %2350 = vmatpush1.bf16.msra.mxu0 %v1820
        %2351 = vmatprep.subr.bf16.mxu0 %v1829
        %2352 = vmatpush1.bf16.msra.mxu0 %v1828
        %2353 = vmatprep.subr.bf16.mxu0 %v1837
        %2354 = vmatpush1.bf16.msra.mxu0 %v1836
        %2355 = vmatprep.subr.bf16.mxu0 %v1845
        %2356 = vmatpush1.bf16.msra.mxu0 %v1844
        %2357 = vmatprep.subr.bf16.mxu0 %v1853
        %2358 = vmatpush1.bf16.msra.mxu0 %v1852
        %2359 = vmatprep.subr.bf16.mxu0 %v1861
        %2360 = vmatpush1.bf16.msra.mxu0 %v1860
        %2361 = vmatprep.subr.bf16.mxu0 %v1869
        %2362 = vmatpush1.bf16.msra.mxu0 %v1868
        %2363 = vmatprep.subr.bf16.mxu0 %v1877
        %2364 = vmatpush1.bf16.msra.mxu0 %v1876
        %2365 = vmatprep.mubr.bf16.mxu0 %v501
        %2366 = vmatmul.mubr.bf16.gmra.mrb[0].mxu0 %v500
        %v2367 = vpop.f32.mrb[0].mxu0
        %v2368 = vadd.f32 %v2175, %v2367
        %v2369 = vpop.f32.mrb[0].mxu0
        %v2370 = vadd.f32 %v2177, %v2369
        %v2371 = vpop.f32.mrb[0].mxu0
        %v2372 = vadd.f32 %v2179, %v2371
        %v2373 = vpop.f32.mrb[0].mxu0
        %v2374 = vadd.f32 %v2181, %v2373
        %2375 = vmatprep.mubr.bf16.mxu0 %v505
        %2376 = vmatmul.mubr.bf16.gmra.mrb[0].mxu0 %v504
        %v2377 = vpop.f32.mrb[0].mxu0
        %v2378 = vadd.f32 %v2185, %v2377
        %v2379 = vpop.f32.mrb[0].mxu0
        %v2380 = vadd.f32 %v2187, %v2379
        %v2381 = vpop.f32.mrb[0].mxu0
        %v2382 = vadd.f32 %v2189, %v2381
        %v2383 = vpop.f32.mrb[0].mxu0
        %v2384 = vadd.f32 %v2191, %v2383
        %2385 = vmatprep.mubr.bf16.mxu0 %v509
        %2386 = vmatmul.mubr.bf16.gmra.mrb[0].mxu0 %v508
        %v2387 = vpop.f32.mrb[0].mxu0
        %v2388 = vadd.f32 %v2195, %v2387
        %v2389 = vpop.f32.mrb[0].mxu0
        %v2390 = vadd.f32 %v2197, %v2389
        %v2391 = vpop.f32.mrb[0].mxu0
        %v2392 = vadd.f32 %v2199, %v2391
        %v2393 = vpop.f32.mrb[0].mxu0
        %v2394 = vadd.f32 %v2201, %v2393
        %2395 = vmatprep.mubr.bf16.mxu0 %v513
        %2396 = vmatmul.mubr.bf16.gmra.mrb[0].mxu0 %v512
        %v2397 = vpop.f32.mrb[0].mxu0
        %v2398 = vadd.f32 %v2205, %v2397
        %v2399 = vpop.f32.mrb[0].mxu0
        %v2400 = vadd.f32 %v2207, %v2399
        %v2401 = vpop.f32.mrb[0].mxu0
        %v2402 = vadd.f32 %v2209, %v2401
        %v2403 = vpop.f32.mrb[0].mxu0
        %v2404 = vadd.f32 %v2211, %v2403
        %2405 = vmatprep.mubr.bf16.mxu0 %v517
        %2406 = vmatmul.mubr.bf16.gmra.mrb[0].mxu0 %v516
        %v2407 = vpop.f32.mrb[0].mxu0
        %v2408 = vadd.f32 %v2215, %v2407
        %v2409 = vpop.f32.mrb[0].mxu0
        %v2410 = vadd.f32 %v2217, %v2409
        %v2411 = vpop.f32.mrb[0].mxu0
        %v2412 = vadd.f32 %v2219, %v2411
        %v2413 = vpop.f32.mrb[0].mxu0
        %v2414 = vadd.f32 %v2221, %v2413
        %2415 = vmatprep.mubr.bf16.mxu0 %v521
        %2416 = vmatmul.mubr.bf16.gmra.mrb[0].mxu0 %v520
        %v2417 = vpop.f32.mrb[0].mxu0
        %v2418 = vadd.f32 %v2225, %v2417
        %v2419 = vpop.f32.mrb[0].mxu0
        %v2420 = vadd.f32 %v2227, %v2419
        %v2421 = vpop.f32.mrb[0].mxu0
        %v2422 = vadd.f32 %v2229, %v2421
        %v2423 = vpop.f32.mrb[0].mxu0
        %v2424 = vadd.f32 %v2231, %v2423
        %2425 = vmatprep.mubr.bf16.mxu0 %v525
        %2426 = vmatmul.mubr.bf16.gmra.mrb[0].mxu0 %v524
        %v2427 = vpop.f32.mrb[0].mxu0
        %v2428 = vadd.f32 %v2235, %v2427
        %v2429 = vpop.f32.mrb[0].mxu0
        %v2430 = vadd.f32 %v2237, %v2429
        %v2431 = vpop.f32.mrb[0].mxu0
        %v2432 = vadd.f32 %v2239, %v2431
        %v2433 = vpop.f32.mrb[0].mxu0
        %v2434 = vadd.f32 %v2241, %v2433
        %2435 = vmatprep.mubr.bf16.mxu0 %v529
        %2436 = vmatmul.mubr.bf16.gmra.mrb[0].mxu0 %v528
        %v2437 = vpop.f32.mrb[0].mxu0
        %v2438 = vadd.f32 %v2245, %v2437
        %v2439 = vpop.f32.mrb[0].mxu0
        %v2440 = vadd.f32 %v2247, %v2439
        %v2441 = vpop.f32.mrb[0].mxu0
        %v2442 = vadd.f32 %v2249, %v2441
        %v2443 = vpop.f32.mrb[0].mxu0
        %v2444 = vadd.f32 %v2251, %v2443
        %2445 = vmatprep.mubr.bf16.mxu0 %v533
        %2446 = vmatmul.mubr.bf16.gmra.mrb[0].mxu0 %v532
        %v2447 = vpop.f32.mrb[0].mxu0
        %v2448 = vadd.f32 %v2255, %v2447
        %v2449 = vpop.f32.mrb[0].mxu0
        %v2450 = vadd.f32 %v2257, %v2449
        %v2451 = vpop.f32.mrb[0].mxu0
        %v2452 = vadd.f32 %v2259, %v2451
        %v2453 = vpop.f32.mrb[0].mxu0
        %v2454 = vadd.f32 %v2261, %v2453
        %2455 = vmatprep.mubr.bf16.mxu0 %v537
        %2456 = vmatmul.mubr.bf16.gmra.mrb[0].mxu0 %v536
        %v2457 = vpop.f32.mrb[0].mxu0
        %v2458 = vadd.f32 %v2265, %v2457
        %v2459 = vpop.f32.mrb[0].mxu0
        %v2460 = vadd.f32 %v2267, %v2459
        %v2461 = vpop.f32.mrb[0].mxu0
        %v2462 = vadd.f32 %v2269, %v2461
        %v2463 = vpop.f32.mrb[0].mxu0
        %v2464 = vadd.f32 %v2271, %v2463
        %2465 = vmatprep.mubr.bf16.mxu0 %v541
        %2466 = vmatmul.mubr.bf16.gmra.mrb[0].mxu0 %v540
        %v2467 = vpop.f32.mrb[0].mxu0
        %v2468 = vadd.f32 %v2275, %v2467
        %v2469 = vpop.f32.mrb[0].mxu0
        %v2470 = vadd.f32 %v2277, %v2469
        %v2471 = vpop.f32.mrb[0].mxu0
        %v2472 = vadd.f32 %v2279, %v2471
        %v2473 = vpop.f32.mrb[0].mxu0
        %v2474 = vadd.f32 %v2281, %v2473
        %2475 = vmatprep.mubr.bf16.mxu0 %v545
        %2476 = vmatmul.mubr.bf16.gmra.mrb[0].mxu0 %v544
        %v2477 = vpop.f32.mrb[0].mxu0
        %v2478 = vadd.f32 %v2285, %v2477
        %v2479 = vpop.f32.mrb[0].mxu0
        %v2480 = vadd.f32 %v2287, %v2479
        %v2481 = vpop.f32.mrb[0].mxu0
        %v2482 = vadd.f32 %v2289, %v2481
        %v2483 = vpop.f32.mrb[0].mxu0
        %v2484 = vadd.f32 %v2291, %v2483
        %2485 = vmatprep.mubr.bf16.mxu0 %v549
        %2486 = vmatmul.mubr.bf16.gmra.mrb[0].mxu0 %v548
        %v2487 = vpop.f32.mrb[0].mxu0
        %v2488 = vadd.f32 %v2295, %v2487
        %v2489 = vpop.f32.mrb[0].mxu0
        %v2490 = vadd.f32 %v2297, %v2489
        %v2491 = vpop.f32.mrb[0].mxu0
        %v2492 = vadd.f32 %v2299, %v2491
        %v2493 = vpop.f32.mrb[0].mxu0
        %v2494 = vadd.f32 %v2301, %v2493
        %2495 = vmatprep.mubr.bf16.mxu0 %v553
        %2496 = vmatmul.mubr.bf16.gmra.mrb[0].mxu0 %v552
        %v2497 = vpop.f32.mrb[0].mxu0
        %v2498 = vadd.f32 %v2305, %v2497
        %v2499 = vpop.f32.mrb[0].mxu0
        %v2500 = vadd.f32 %v2307, %v2499
        %v2501 = vpop.f32.mrb[0].mxu0
        %v2502 = vadd.f32 %v2309, %v2501
        %v2503 = vpop.f32.mrb[0].mxu0
        %v2504 = vadd.f32 %v2311, %v2503
        %2505 = vmatprep.mubr.bf16.mxu0 %v557
        %2506 = vmatmul.mubr.bf16.gmra.mrb[0].mxu0 %v556
        %v2507 = vpop.f32.mrb[0].mxu0
        %v2508 = vadd.f32 %v2315, %v2507
        %v2509 = vpop.f32.mrb[0].mxu0
        %v2510 = vadd.f32 %v2317, %v2509
        %v2511 = vpop.f32.mrb[0].mxu0
        %v2512 = vadd.f32 %v2319, %v2511
        %v2513 = vpop.f32.mrb[0].mxu0
        %v2514 = vadd.f32 %v2321, %v2513
        %2515 = vmatprep.mubr.bf16.mxu0 %v561
        %2516 = vmatmul.mubr.bf16.gmra.mrb[0].mxu0 %v560
        %v2517 = vpop.f32.mrb[0].mxu0
        %v2518 = vadd.f32 %v2325, %v2517
        %v2519 = vpop.f32.mrb[0].mxu0
        %v2520 = vadd.f32 %v2327, %v2519
        %v2521 = vpop.f32.mrb[0].mxu0
        %v2522 = vadd.f32 %v2329, %v2521
        %v2523 = vpop.f32.mrb[0].mxu0
        %v2524 = vadd.f32 %v2331, %v2523
        %2525 = vdwg.mxu0
        %2526 = vmatprep.subr.bf16.mxu0 %v1631
        %2527 = vmatpush1.bf16.msra.mxu0 %v1630
        %2528 = vmatprep.subr.bf16.mxu0 %v1639
        %2529 = vmatpush1.bf16.msra.mxu0 %v1638
        %2530 = vmatprep.subr.bf16.mxu0 %v1647
        %2531 = vmatpush1.bf16.msra.mxu0 %v1646
        %2532 = vmatprep.subr.bf16.mxu0 %v1655
        %2533 = vmatpush1.bf16.msra.mxu0 %v1654
        %2534 = vmatprep.subr.bf16.mxu0 %v1663
        %2535 = vmatpush1.bf16.msra.mxu0 %v1662
        %2536 = vmatprep.subr.bf16.mxu0 %v1671
        %2537 = vmatpush1.bf16.msra.mxu0 %v1670
        %2538 = vmatprep.subr.bf16.mxu0 %v1679
        %2539 = vmatpush1.bf16.msra.mxu0 %v1678
        %2540 = vmatprep.subr.bf16.mxu0 %v1687
        %2541 = vmatpush1.bf16.msra.mxu0 %v1686
        %2542 = vmatprep.subr.bf16.mxu0 %v1695
        %2543 = vmatpush1.bf16.msra.mxu0 %v1694
        %2544 = vmatprep.subr.bf16.mxu0 %v1703
        %2545 = vmatpush1.bf16.msra.mxu0 %v1702
        %2546 = vmatprep.subr.bf16.mxu0 %v1711
        %2547 = vmatpush1.bf16.msra.mxu0 %v1710
        %2548 = vmatprep.subr.bf16.mxu0 %v1719
        %2549 = vmatpush1.bf16.msra.mxu0 %v1718
        %2550 = vmatprep.subr.bf16.mxu0 %v1727
        %2551 = vmatpush1.bf16.msra.mxu0 %v1726
        %2552 = vmatprep.subr.bf16.mxu0 %v1735
        %2553 = vmatpush1.bf16.msra.mxu0 %v1734
        %2554 = vmatprep.subr.bf16.mxu0 %v1743
        %2555 = vmatpush1.bf16.msra.mxu0 %v1742
        %2556 = vmatprep.subr.bf16.mxu0 %v1751
        %2557 = vmatpush1.bf16.msra.mxu0 %v1750
        %2558 = vmatprep.mubr.bf16.mxu0 %v499
        %2559 = vmatmul.mubr.bf16.gmra.mrb[0].mxu0 %v498
        %v2560 = vpop.f32.mrb[0].mxu0
        %v2561 = vadd.f32 %v831, %v2560
        %v2562 = vpop.f32.mrb[0].mxu0
        %v2563 = vadd.f32 %v835, %v2562
        %v2564 = vpop.f32.mrb[0].mxu0
        %v2565 = vadd.f32 %v831, %v2564
        %v2566 = vpop.f32.mrb[0].mxu0
        %v2567 = vadd.f32 %v835, %v2566
        %2568 = vmatprep.mubr.bf16.mxu0 %v503
        %2569 = vmatmul.mubr.bf16.gmra.mrb[0].mxu0 %v502
        %v2570 = vpop.f32.mrb[0].mxu0
        %v2571 = vadd.f32 %v831, %v2570
        %v2572 = vpop.f32.mrb[0].mxu0
        %v2573 = vadd.f32 %v835, %v2572
        %v2574 = vpop.f32.mrb[0].mxu0
        %v2575 = vadd.f32 %v831, %v2574
        %v2576 = vpop.f32.mrb[0].mxu0
        %v2577 = vadd.f32 %v835, %v2576
        %2578 = vmatprep.mubr.bf16.mxu0 %v507
        %2579 = vmatmul.mubr.bf16.gmra.mrb[0].mxu0 %v506
        %v2580 = vpop.f32.mrb[0].mxu0
        %v2581 = vadd.f32 %v831, %v2580
        %v2582 = vpop.f32.mrb[0].mxu0
        %v2583 = vadd.f32 %v835, %v2582
        %v2584 = vpop.f32.mrb[0].mxu0
        %v2585 = vadd.f32 %v831, %v2584
        %v2586 = vpop.f32.mrb[0].mxu0
        %v2587 = vadd.f32 %v835, %v2586
        %2588 = vmatprep.mubr.bf16.mxu0 %v511
        %2589 = vmatmul.mubr.bf16.gmra.mrb[0].mxu0 %v510
        %v2590 = vpop.f32.mrb[0].mxu0
        %v2591 = vadd.f32 %v831, %v2590
        %v2592 = vpop.f32.mrb[0].mxu0
        %v2593 = vadd.f32 %v835, %v2592
        %v2594 = vpop.f32.mrb[0].mxu0
        %v2595 = vadd.f32 %v831, %v2594
        %v2596 = vpop.f32.mrb[0].mxu0
        %v2597 = vadd.f32 %v835, %v2596
        %2598 = vmatprep.mubr.bf16.mxu0 %v515
        %2599 = vmatmul.mubr.bf16.gmra.mrb[0].mxu0 %v514
        %v2600 = vpop.f32.mrb[0].mxu0
        %v2601 = vadd.f32 %v831, %v2600
        %v2602 = vpop.f32.mrb[0].mxu0
        %v2603 = vadd.f32 %v835, %v2602
        %v2604 = vpop.f32.mrb[0].mxu0
        %v2605 = vadd.f32 %v831, %v2604
        %v2606 = vpop.f32.mrb[0].mxu0
        %v2607 = vadd.f32 %v835, %v2606
        %2608 = vmatprep.mubr.bf16.mxu0 %v519
        %2609 = vmatmul.mubr.bf16.gmra.mrb[0].mxu0 %v518
        %v2610 = vpop.f32.mrb[0].mxu0
        %v2611 = vadd.f32 %v831, %v2610
        %v2612 = vpop.f32.mrb[0].mxu0
        %v2613 = vadd.f32 %v835, %v2612
        %v2614 = vpop.f32.mrb[0].mxu0
        %v2615 = vadd.f32 %v831, %v2614
        %v2616 = vpop.f32.mrb[0].mxu0
        %v2617 = vadd.f32 %v835, %v2616
        %2618 = vmatprep.mubr.bf16.mxu0 %v523
        %2619 = vmatmul.mubr.bf16.gmra.mrb[0].mxu0 %v522
        %v2620 = vpop.f32.mrb[0].mxu0
        %v2621 = vadd.f32 %v831, %v2620
        %v2622 = vpop.f32.mrb[0].mxu0
        %v2623 = vadd.f32 %v835, %v2622
        %v2624 = vpop.f32.mrb[0].mxu0
        %v2625 = vadd.f32 %v831, %v2624
        %v2626 = vpop.f32.mrb[0].mxu0
        %v2627 = vadd.f32 %v835, %v2626
        %2628 = vmatprep.mubr.bf16.mxu0 %v527
        %2629 = vmatmul.mubr.bf16.gmra.mrb[0].mxu0 %v526
        %v2630 = vpop.f32.mrb[0].mxu0
        %v2631 = vadd.f32 %v831, %v2630
        %v2632 = vpop.f32.mrb[0].mxu0
        %v2633 = vadd.f32 %v835, %v2632
        %v2634 = vpop.f32.mrb[0].mxu0
        %v2635 = vadd.f32 %v831, %v2634
        %v2636 = vpop.f32.mrb[0].mxu0
        %v2637 = vadd.f32 %v835, %v2636
        %2638 = vmatprep.mubr.bf16.mxu0 %v531
        %2639 = vmatmul.mubr.bf16.gmra.mrb[0].mxu0 %v530
        %v2640 = vpop.f32.mrb[0].mxu0
        %v2641 = vadd.f32 %v831, %v2640
        %v2642 = vpop.f32.mrb[0].mxu0
        %v2643 = vadd.f32 %v835, %v2642
        %v2644 = vpop.f32.mrb[0].mxu0
        %v2645 = vadd.f32 %v831, %v2644
        %v2646 = vpop.f32.mrb[0].mxu0
        %v2647 = vadd.f32 %v835, %v2646
        %2648 = vmatprep.mubr.bf16.mxu0 %v535
        %2649 = vmatmul.mubr.bf16.gmra.mrb[0].mxu0 %v534
        %v2650 = vpop.f32.mrb[0].mxu0
        %v2651 = vadd.f32 %v831, %v2650
        %v2652 = vpop.f32.mrb[0].mxu0
        %v2653 = vadd.f32 %v835, %v2652
        %v2654 = vpop.f32.mrb[0].mxu0
        %v2655 = vadd.f32 %v831, %v2654
        %v2656 = vpop.f32.mrb[0].mxu0
        %v2657 = vadd.f32 %v835, %v2656
        %2658 = vmatprep.mubr.bf16.mxu0 %v539
        %2659 = vmatmul.mubr.bf16.gmra.mrb[0].mxu0 %v538
        %v2660 = vpop.f32.mrb[0].mxu0
        %v2661 = vadd.f32 %v831, %v2660
        %v2662 = vpop.f32.mrb[0].mxu0
        %v2663 = vadd.f32 %v835, %v2662
        %v2664 = vpop.f32.mrb[0].mxu0
        %v2665 = vadd.f32 %v831, %v2664
        %v2666 = vpop.f32.mrb[0].mxu0
        %v2667 = vadd.f32 %v835, %v2666
        %2668 = vmatprep.mubr.bf16.mxu0 %v543
        %2669 = vmatmul.mubr.bf16.gmra.mrb[0].mxu0 %v542
        %v2670 = vpop.f32.mrb[0].mxu0
        %v2671 = vadd.f32 %v831, %v2670
        %v2672 = vpop.f32.mrb[0].mxu0
        %v2673 = vadd.f32 %v835, %v2672
        %v2674 = vpop.f32.mrb[0].mxu0
        %v2675 = vadd.f32 %v831, %v2674
        %v2676 = vpop.f32.mrb[0].mxu0
        %v2677 = vadd.f32 %v835, %v2676
        %2678 = vmatprep.mubr.bf16.mxu0 %v547
        %2679 = vmatmul.mubr.bf16.gmra.mrb[0].mxu0 %v546
        %v2680 = vpop.f32.mrb[0].mxu0
        %v2681 = vadd.f32 %v831, %v2680
        %v2682 = vpop.f32.mrb[0].mxu0
        %v2683 = vadd.f32 %v835, %v2682
        %v2684 = vpop.f32.mrb[0].mxu0
        %v2685 = vadd.f32 %v831, %v2684
        %v2686 = vpop.f32.mrb[0].mxu0
        %v2687 = vadd.f32 %v835, %v2686
        %2688 = vmatprep.mubr.bf16.mxu0 %v551
        %2689 = vmatmul.mubr.bf16.gmra.mrb[0].mxu0 %v550
        %v2690 = vpop.f32.mrb[0].mxu0
        %v2691 = vadd.f32 %v831, %v2690
        %v2692 = vpop.f32.mrb[0].mxu0
        %v2693 = vadd.f32 %v835, %v2692
        %v2694 = vpop.f32.mrb[0].mxu0
        %v2695 = vadd.f32 %v831, %v2694
        %v2696 = vpop.f32.mrb[0].mxu0
        %v2697 = vadd.f32 %v835, %v2696
        %2698 = vmatprep.mubr.bf16.mxu0 %v555
        %2699 = vmatmul.mubr.bf16.gmra.mrb[0].mxu0 %v554
        %v2700 = vpop.f32.mrb[0].mxu0
        %v2701 = vadd.f32 %v831, %v2700
        %v2702 = vpop.f32.mrb[0].mxu0
        %v2703 = vadd.f32 %v835, %v2702
        %v2704 = vpop.f32.mrb[0].mxu0
        %v2705 = vadd.f32 %v831, %v2704
        %v2706 = vpop.f32.mrb[0].mxu0
        %v2707 = vadd.f32 %v835, %v2706
        %2708 = vmatprep.mubr.bf16.mxu0 %v559
        %2709 = vmatmul.mubr.bf16.gmra.mrb[0].mxu0 %v558
        %v2710 = vpop.f32.mrb[0].mxu0
        %v2711 = vadd.f32 %v831, %v2710
        %v2712 = vpop.f32.mrb[0].mxu0
        %v2713 = vadd.f32 %v835, %v2712
        %v2714 = vpop.f32.mrb[0].mxu0
        %v2715 = vadd.f32 %v831, %v2714
        %v2716 = vpop.f32.mrb[0].mxu0
        %v2717 = vadd.f32 %v835, %v2716
        %2718 = vdwg.mxu0
        %2719 = vmatprep.subr.bf16.mxu0 %v1759
        %2720 = vmatpush1.bf16.msra.mxu0 %v1758
        %2721 = vmatprep.subr.bf16.mxu0 %v1767
        %2722 = vmatpush1.bf16.msra.mxu0 %v1766
        %2723 = vmatprep.subr.bf16.mxu0 %v1775
        %2724 = vmatpush1.bf16.msra.mxu0 %v1774
        %2725 = vmatprep.subr.bf16.mxu0 %v1783
        %2726 = vmatpush1.bf16.msra.mxu0 %v1782
        %2727 = vmatprep.subr.bf16.mxu0 %v1791
        %2728 = vmatpush1.bf16.msra.mxu0 %v1790
        %2729 = vmatprep.subr.bf16.mxu0 %v1799
        %2730 = vmatpush1.bf16.msra.mxu0 %v1798
        %2731 = vmatprep.subr.bf16.mxu0 %v1807
        %2732 = vmatpush1.bf16.msra.mxu0 %v1806
        %2733 = vmatprep.subr.bf16.mxu0 %v1815
        %2734 = vmatpush1.bf16.msra.mxu0 %v1814
        %2735 = vmatprep.subr.bf16.mxu0 %v1823
        %2736 = vmatpush1.bf16.msra.mxu0 %v1822
        %2737 = vmatprep.subr.bf16.mxu0 %v1831
        %2738 = vmatpush1.bf16.msra.mxu0 %v1830
        %2739 = vmatprep.subr.bf16.mxu0 %v1839
        %2740 = vmatpush1.bf16.msra.mxu0 %v1838
        %2741 = vmatprep.subr.bf16.mxu0 %v1847
        %2742 = vmatpush1.bf16.msra.mxu0 %v1846
        %2743 = vmatprep.subr.bf16.mxu0 %v1855
        %2744 = vmatpush1.bf16.msra.mxu0 %v1854
        %2745 = vmatprep.subr.bf16.mxu0 %v1863
        %2746 = vmatpush1.bf16.msra.mxu0 %v1862
        %2747 = vmatprep.subr.bf16.mxu0 %v1871
        %2748 = vmatpush1.bf16.msra.mxu0 %v1870
        %2749 = vmatprep.subr.bf16.mxu0 %v1879
        %2750 = vmatpush1.bf16.msra.mxu0 %v1878
        %2751 = vmatprep.mubr.bf16.mxu0 %v501
        %2752 = vmatmul.mubr.bf16.gmra.mrb[0].mxu0 %v500
        %v2753 = vpop.f32.mrb[0].mxu0
        %v2754 = vadd.f32 %v2561, %v2753
        %v2755 = vpop.f32.mrb[0].mxu0
        %v2756 = vadd.f32 %v2563, %v2755
        %v2757 = vpop.f32.mrb[0].mxu0
        %v2758 = vadd.f32 %v2565, %v2757
        %v2759 = vpop.f32.mrb[0].mxu0
        %v2760 = vadd.f32 %v2567, %v2759
        %2761 = vmatprep.mubr.bf16.mxu0 %v505
        %2762 = vmatmul.mubr.bf16.gmra.mrb[0].mxu0 %v504
        %v2763 = vpop.f32.mrb[0].mxu0
        %v2764 = vadd.f32 %v2571, %v2763
        %v2765 = vpop.f32.mrb[0].mxu0
        %v2766 = vadd.f32 %v2573, %v2765
        %v2767 = vpop.f32.mrb[0].mxu0
        %v2768 = vadd.f32 %v2575, %v2767
        %v2769 = vpop.f32.mrb[0].mxu0
        %v2770 = vadd.f32 %v2577, %v2769
        %2771 = vmatprep.mubr.bf16.mxu0 %v509
        %2772 = vmatmul.mubr.bf16.gmra.mrb[0].mxu0 %v508
        %v2773 = vpop.f32.mrb[0].mxu0
        %v2774 = vadd.f32 %v2581, %v2773
        %v2775 = vpop.f32.mrb[0].mxu0
        %v2776 = vadd.f32 %v2583, %v2775
        %v2777 = vpop.f32.mrb[0].mxu0
        %v2778 = vadd.f32 %v2585, %v2777
        %v2779 = vpop.f32.mrb[0].mxu0
        %v2780 = vadd.f32 %v2587, %v2779
        %2781 = vmatprep.mubr.bf16.mxu0 %v513
        %2782 = vmatmul.mubr.bf16.gmra.mrb[0].mxu0 %v512
        %v2783 = vpop.f32.mrb[0].mxu0
        %v2784 = vadd.f32 %v2591, %v2783
        %v2785 = vpop.f32.mrb[0].mxu0
        %v2786 = vadd.f32 %v2593, %v2785
        %v2787 = vpop.f32.mrb[0].mxu0
        %v2788 = vadd.f32 %v2595, %v2787
        %v2789 = vpop.f32.mrb[0].mxu0
        %v2790 = vadd.f32 %v2597, %v2789
        %2791 = vmatprep.mubr.bf16.mxu0 %v517
        %2792 = vmatmul.mubr.bf16.gmra.mrb[0].mxu0 %v516
        %v2793 = vpop.f32.mrb[0].mxu0
        %v2794 = vadd.f32 %v2601, %v2793
        %v2795 = vpop.f32.mrb[0].mxu0
        %v2796 = vadd.f32 %v2603, %v2795
        %v2797 = vpop.f32.mrb[0].mxu0
        %v2798 = vadd.f32 %v2605, %v2797
        %v2799 = vpop.f32.mrb[0].mxu0
        %v2800 = vadd.f32 %v2607, %v2799
        %2801 = vmatprep.mubr.bf16.mxu0 %v521
        %2802 = vmatmul.mubr.bf16.gmra.mrb[0].mxu0 %v520
        %v2803 = vpop.f32.mrb[0].mxu0
        %v2804 = vadd.f32 %v2611, %v2803
        %v2805 = vpop.f32.mrb[0].mxu0
        %v2806 = vadd.f32 %v2613, %v2805
        %v2807 = vpop.f32.mrb[0].mxu0
        %v2808 = vadd.f32 %v2615, %v2807
        %v2809 = vpop.f32.mrb[0].mxu0
        %v2810 = vadd.f32 %v2617, %v2809
        %2811 = vmatprep.mubr.bf16.mxu0 %v525
        %2812 = vmatmul.mubr.bf16.gmra.mrb[0].mxu0 %v524
        %v2813 = vpop.f32.mrb[0].mxu0
        %v2814 = vadd.f32 %v2621, %v2813
        %v2815 = vpop.f32.mrb[0].mxu0
        %v2816 = vadd.f32 %v2623, %v2815
        %v2817 = vpop.f32.mrb[0].mxu0
        %v2818 = vadd.f32 %v2625, %v2817
        %v2819 = vpop.f32.mrb[0].mxu0
        %v2820 = vadd.f32 %v2627, %v2819
        %2821 = vmatprep.mubr.bf16.mxu0 %v529
        %2822 = vmatmul.mubr.bf16.gmra.mrb[0].mxu0 %v528
        %v2823 = vpop.f32.mrb[0].mxu0
        %v2824 = vadd.f32 %v2631, %v2823
        %v2825 = vpop.f32.mrb[0].mxu0
        %v2826 = vadd.f32 %v2633, %v2825
        %v2827 = vpop.f32.mrb[0].mxu0
        %v2828 = vadd.f32 %v2635, %v2827
        %v2829 = vpop.f32.mrb[0].mxu0
        %v2830 = vadd.f32 %v2637, %v2829
        %2831 = vmatprep.mubr.bf16.mxu0 %v533
        %2832 = vmatmul.mubr.bf16.gmra.mrb[0].mxu0 %v532
        %v2833 = vpop.f32.mrb[0].mxu0
        %v2834 = vadd.f32 %v2641, %v2833
        %v2835 = vpop.f32.mrb[0].mxu0
        %v2836 = vadd.f32 %v2643, %v2835
        %v2837 = vpop.f32.mrb[0].mxu0
        %v2838 = vadd.f32 %v2645, %v2837
        %v2839 = vpop.f32.mrb[0].mxu0
        %v2840 = vadd.f32 %v2647, %v2839
        %2841 = vmatprep.mubr.bf16.mxu0 %v537
        %2842 = vmatmul.mubr.bf16.gmra.mrb[0].mxu0 %v536
        %v2843 = vpop.f32.mrb[0].mxu0
        %v2844 = vadd.f32 %v2651, %v2843
        %v2845 = vpop.f32.mrb[0].mxu0
        %v2846 = vadd.f32 %v2653, %v2845
        %v2847 = vpop.f32.mrb[0].mxu0
        %v2848 = vadd.f32 %v2655, %v2847
        %v2849 = vpop.f32.mrb[0].mxu0
        %v2850 = vadd.f32 %v2657, %v2849
        %2851 = vmatprep.mubr.bf16.mxu0 %v541
        %2852 = vmatmul.mubr.bf16.gmra.mrb[0].mxu0 %v540
        %v2853 = vpop.f32.mrb[0].mxu0
        %v2854 = vadd.f32 %v2661, %v2853
        %v2855 = vpop.f32.mrb[0].mxu0
        %v2856 = vadd.f32 %v2663, %v2855
        %v2857 = vpop.f32.mrb[0].mxu0
        %v2858 = vadd.f32 %v2665, %v2857
        %v2859 = vpop.f32.mrb[0].mxu0
        %v2860 = vadd.f32 %v2667, %v2859
        %2861 = vmatprep.mubr.bf16.mxu0 %v545
        %2862 = vmatmul.mubr.bf16.gmra.mrb[0].mxu0 %v544
        %v2863 = vpop.f32.mrb[0].mxu0
        %v2864 = vadd.f32 %v2671, %v2863
        %v2865 = vpop.f32.mrb[0].mxu0
        %v2866 = vadd.f32 %v2673, %v2865
        %v2867 = vpop.f32.mrb[0].mxu0
        %v2868 = vadd.f32 %v2675, %v2867
        %v2869 = vpop.f32.mrb[0].mxu0
        %v2870 = vadd.f32 %v2677, %v2869
        %2871 = vmatprep.mubr.bf16.mxu0 %v549
        %2872 = vmatmul.mubr.bf16.gmra.mrb[0].mxu0 %v548
        %v2873 = vpop.f32.mrb[0].mxu0
        %v2874 = vadd.f32 %v2681, %v2873
        %v2875 = vpop.f32.mrb[0].mxu0
        %v2876 = vadd.f32 %v2683, %v2875
        %v2877 = vpop.f32.mrb[0].mxu0
        %v2878 = vadd.f32 %v2685, %v2877
        %v2879 = vpop.f32.mrb[0].mxu0
        %v2880 = vadd.f32 %v2687, %v2879
        %2881 = vmatprep.mubr.bf16.mxu0 %v553
        %2882 = vmatmul.mubr.bf16.gmra.mrb[0].mxu0 %v552
        %v2883 = vpop.f32.mrb[0].mxu0
        %v2884 = vadd.f32 %v2691, %v2883
        %v2885 = vpop.f32.mrb[0].mxu0
        %v2886 = vadd.f32 %v2693, %v2885
        %v2887 = vpop.f32.mrb[0].mxu0
        %v2888 = vadd.f32 %v2695, %v2887
        %v2889 = vpop.f32.mrb[0].mxu0
        %v2890 = vadd.f32 %v2697, %v2889
        %2891 = vmatprep.mubr.bf16.mxu0 %v557
        %2892 = vmatmul.mubr.bf16.gmra.mrb[0].mxu0 %v556
        %v2893 = vpop.f32.mrb[0].mxu0
        %v2894 = vadd.f32 %v2701, %v2893
        %v2895 = vpop.f32.mrb[0].mxu0
        %v2896 = vadd.f32 %v2703, %v2895
        %v2897 = vpop.f32.mrb[0].mxu0
        %v2898 = vadd.f32 %v2705, %v2897
        %v2899 = vpop.f32.mrb[0].mxu0
        %v2900 = vadd.f32 %v2707, %v2899
        %2901 = vmatprep.mubr.bf16.mxu0 %v561
        %2902 = vmatmul.mubr.bf16.gmra.mrb[0].mxu0 %v560
        %v2903 = vpop.f32.mrb[0].mxu0
        %v2904 = vadd.f32 %v2711, %v2903
        %v2905 = vpop.f32.mrb[0].mxu0
        %v2906 = vadd.f32 %v2713, %v2905
        %v2907 = vpop.f32.mrb[0].mxu0
        %v2908 = vadd.f32 %v2715, %v2907
        %v2909 = vpop.f32.mrb[0].mxu0
        %v2910 = vadd.f32 %v2717, %v2909
        %2911 = vdwg.mxu0
        %2912 = vmatprep.subr.bf16.mxu0 %v1633
        %2913 = vmatpush1.bf16.msra.mxu0 %v1632
        %2914 = vmatprep.subr.bf16.mxu0 %v1641
        %2915 = vmatpush1.bf16.msra.mxu0 %v1640
        %2916 = vmatprep.subr.bf16.mxu0 %v1649
        %2917 = vmatpush1.bf16.msra.mxu0 %v1648
        %2918 = vmatprep.subr.bf16.mxu0 %v1657
        %2919 = vmatpush1.bf16.msra.mxu0 %v1656
        %2920 = vmatprep.subr.bf16.mxu0 %v1665
        %2921 = vmatpush1.bf16.msra.mxu0 %v1664
        %2922 = vmatprep.subr.bf16.mxu0 %v1673
        %2923 = vmatpush1.bf16.msra.mxu0 %v1672
        %2924 = vmatprep.subr.bf16.mxu0 %v1681
        %2925 = vmatpush1.bf16.msra.mxu0 %v1680
        %2926 = vmatprep.subr.bf16.mxu0 %v1689
        %2927 = vmatpush1.bf16.msra.mxu0 %v1688
        %2928 = vmatprep.subr.bf16.mxu0 %v1697
        %2929 = vmatpush1.bf16.msra.mxu0 %v1696
        %2930 = vmatprep.subr.bf16.mxu0 %v1705
        %2931 = vmatpush1.bf16.msra.mxu0 %v1704
        %2932 = vmatprep.subr.bf16.mxu0 %v1713
        %2933 = vmatpush1.bf16.msra.mxu0 %v1712
        %2934 = vmatprep.subr.bf16.mxu0 %v1721
        %2935 = vmatpush1.bf16.msra.mxu0 %v1720
        %2936 = vmatprep.subr.bf16.mxu0 %v1729
        %2937 = vmatpush1.bf16.msra.mxu0 %v1728
        %2938 = vmatprep.subr.bf16.mxu0 %v1737
        %2939 = vmatpush1.bf16.msra.mxu0 %v1736
        %2940 = vmatprep.subr.bf16.mxu0 %v1745
        %2941 = vmatpush1.bf16.msra.mxu0 %v1744
        %2942 = vmatprep.subr.bf16.mxu0 %v1753
        %2943 = vmatpush1.bf16.msra.mxu0 %v1752
        %2944 = vmatprep.mubr.bf16.mxu0 %v499
        %2945 = vmatmul.mubr.bf16.gmra.mrb[0].mxu0 %v498
        %v2946 = vpop.f32.mrb[0].mxu0
        %v2947 = vadd.f32 %v839, %v2946
        %v2948 = vpop.f32.mrb[0].mxu0
        %v2949 = vadd.f32 %v843, %v2948
        %v2950 = vpop.f32.mrb[0].mxu0
        %v2951 = vadd.f32 %v839, %v2950
        %v2952 = vpop.f32.mrb[0].mxu0
        %v2953 = vadd.f32 %v843, %v2952
        %2954 = vmatprep.mubr.bf16.mxu0 %v503
        %2955 = vmatmul.mubr.bf16.gmra.mrb[0].mxu0 %v502
        %v2956 = vpop.f32.mrb[0].mxu0
        %v2957 = vadd.f32 %v839, %v2956
        %v2958 = vpop.f32.mrb[0].mxu0
        %v2959 = vadd.f32 %v843, %v2958
        %v2960 = vpop.f32.mrb[0].mxu0
        %v2961 = vadd.f32 %v839, %v2960
        %v2962 = vpop.f32.mrb[0].mxu0
        %v2963 = vadd.f32 %v843, %v2962
        %2964 = vmatprep.mubr.bf16.mxu0 %v507
        %2965 = vmatmul.mubr.bf16.gmra.mrb[0].mxu0 %v506
        %v2966 = vpop.f32.mrb[0].mxu0
        %v2967 = vadd.f32 %v839, %v2966
        %v2968 = vpop.f32.mrb[0].mxu0
        %v2969 = vadd.f32 %v843, %v2968
        %v2970 = vpop.f32.mrb[0].mxu0
        %v2971 = vadd.f32 %v839, %v2970
        %v2972 = vpop.f32.mrb[0].mxu0
        %v2973 = vadd.f32 %v843, %v2972
        %2974 = vmatprep.mubr.bf16.mxu0 %v511
        %2975 = vmatmul.mubr.bf16.gmra.mrb[0].mxu0 %v510
        %v2976 = vpop.f32.mrb[0].mxu0
        %v2977 = vadd.f32 %v839, %v2976
        %v2978 = vpop.f32.mrb[0].mxu0
        %v2979 = vadd.f32 %v843, %v2978
        %v2980 = vpop.f32.mrb[0].mxu0
        %v2981 = vadd.f32 %v839, %v2980
        %v2982 = vpop.f32.mrb[0].mxu0
        %v2983 = vadd.f32 %v843, %v2982
        %2984 = vmatprep.mubr.bf16.mxu0 %v515
        %2985 = vmatmul.mubr.bf16.gmra.mrb[0].mxu0 %v514
        %v2986 = vpop.f32.mrb[0].mxu0
        %v2987 = vadd.f32 %v839, %v2986
        %v2988 = vpop.f32.mrb[0].mxu0
        %v2989 = vadd.f32 %v843, %v2988
        %v2990 = vpop.f32.mrb[0].mxu0
        %v2991 = vadd.f32 %v839, %v2990
        %v2992 = vpop.f32.mrb[0].mxu0
        %v2993 = vadd.f32 %v843, %v2992
        %2994 = vmatprep.mubr.bf16.mxu0 %v519
        %2995 = vmatmul.mubr.bf16.gmra.mrb[0].mxu0 %v518
        %v2996 = vpop.f32.mrb[0].mxu0
        %v2997 = vadd.f32 %v839, %v2996
        %v2998 = vpop.f32.mrb[0].mxu0
        %v2999 = vadd.f32 %v843, %v2998
        %v3000 = vpop.f32.mrb[0].mxu0
        %v3001 = vadd.f32 %v839, %v3000
        %v3002 = vpop.f32.mrb[0].mxu0
        %v3003 = vadd.f32 %v843, %v3002
        %3004 = vmatprep.mubr.bf16.mxu0 %v523
        %3005 = vmatmul.mubr.bf16.gmra.mrb[0].mxu0 %v522
        %v3006 = vpop.f32.mrb[0].mxu0
        %v3007 = vadd.f32 %v839, %v3006
        %v3008 = vpop.f32.mrb[0].mxu0
        %v3009 = vadd.f32 %v843, %v3008
        %v3010 = vpop.f32.mrb[0].mxu0
        %v3011 = vadd.f32 %v839, %v3010
        %v3012 = vpop.f32.mrb[0].mxu0
        %v3013 = vadd.f32 %v843, %v3012
        %3014 = vmatprep.mubr.bf16.mxu0 %v527
        %3015 = vmatmul.mubr.bf16.gmra.mrb[0].mxu0 %v526
        %v3016 = vpop.f32.mrb[0].mxu0
        %v3017 = vadd.f32 %v839, %v3016
        %v3018 = vpop.f32.mrb[0].mxu0
        %v3019 = vadd.f32 %v843, %v3018
        %v3020 = vpop.f32.mrb[0].mxu0
        %v3021 = vadd.f32 %v839, %v3020
        %v3022 = vpop.f32.mrb[0].mxu0
        %v3023 = vadd.f32 %v843, %v3022
        %3024 = vmatprep.mubr.bf16.mxu0 %v531
        %3025 = vmatmul.mubr.bf16.gmra.mrb[0].mxu0 %v530
        %v3026 = vpop.f32.mrb[0].mxu0
        %v3027 = vadd.f32 %v839, %v3026
        %v3028 = vpop.f32.mrb[0].mxu0
        %v3029 = vadd.f32 %v843, %v3028
        %v3030 = vpop.f32.mrb[0].mxu0
        %v3031 = vadd.f32 %v839, %v3030
        %v3032 = vpop.f32.mrb[0].mxu0
        %v3033 = vadd.f32 %v843, %v3032
        %3034 = vmatprep.mubr.bf16.mxu0 %v535
        %3035 = vmatmul.mubr.bf16.gmra.mrb[0].mxu0 %v534
        %v3036 = vpop.f32.mrb[0].mxu0
        %v3037 = vadd.f32 %v839, %v3036
        %v3038 = vpop.f32.mrb[0].mxu0
        %v3039 = vadd.f32 %v843, %v3038
        %v3040 = vpop.f32.mrb[0].mxu0
        %v3041 = vadd.f32 %v839, %v3040
        %v3042 = vpop.f32.mrb[0].mxu0
        %v3043 = vadd.f32 %v843, %v3042
        %3044 = vmatprep.mubr.bf16.mxu0 %v539
        %3045 = vmatmul.mubr.bf16.gmra.mrb[0].mxu0 %v538
        %v3046 = vpop.f32.mrb[0].mxu0
        %v3047 = vadd.f32 %v839, %v3046
        %v3048 = vpop.f32.mrb[0].mxu0
        %v3049 = vadd.f32 %v843, %v3048
        %v3050 = vpop.f32.mrb[0].mxu0
        %v3051 = vadd.f32 %v839, %v3050
        %v3052 = vpop.f32.mrb[0].mxu0
        %v3053 = vadd.f32 %v843, %v3052
        %3054 = vmatprep.mubr.bf16.mxu0 %v543
        %3055 = vmatmul.mubr.bf16.gmra.mrb[0].mxu0 %v542
        %v3056 = vpop.f32.mrb[0].mxu0
        %v3057 = vadd.f32 %v839, %v3056
        %v3058 = vpop.f32.mrb[0].mxu0
        %v3059 = vadd.f32 %v843, %v3058
        %v3060 = vpop.f32.mrb[0].mxu0
        %v3061 = vadd.f32 %v839, %v3060
        %v3062 = vpop.f32.mrb[0].mxu0
        %v3063 = vadd.f32 %v843, %v3062
        %3064 = vmatprep.mubr.bf16.mxu0 %v547
        %3065 = vmatmul.mubr.bf16.gmra.mrb[0].mxu0 %v546
        %v3066 = vpop.f32.mrb[0].mxu0
        %v3067 = vadd.f32 %v839, %v3066
        %v3068 = vpop.f32.mrb[0].mxu0
        %v3069 = vadd.f32 %v843, %v3068
        %v3070 = vpop.f32.mrb[0].mxu0
        %v3071 = vadd.f32 %v839, %v3070
        %v3072 = vpop.f32.mrb[0].mxu0
        %v3073 = vadd.f32 %v843, %v3072
        %3074 = vmatprep.mubr.bf16.mxu0 %v551
        %3075 = vmatmul.mubr.bf16.gmra.mrb[0].mxu0 %v550
        %v3076 = vpop.f32.mrb[0].mxu0
        %v3077 = vadd.f32 %v839, %v3076
        %v3078 = vpop.f32.mrb[0].mxu0
        %v3079 = vadd.f32 %v843, %v3078
        %v3080 = vpop.f32.mrb[0].mxu0
        %v3081 = vadd.f32 %v839, %v3080
        %v3082 = vpop.f32.mrb[0].mxu0
        %v3083 = vadd.f32 %v843, %v3082
        %3084 = vmatprep.mubr.bf16.mxu0 %v555
        %3085 = vmatmul.mubr.bf16.gmra.mrb[0].mxu0 %v554
        %v3086 = vpop.f32.mrb[0].mxu0
        %v3087 = vadd.f32 %v839, %v3086
        %v3088 = vpop.f32.mrb[0].mxu0
        %v3089 = vadd.f32 %v843, %v3088
        %v3090 = vpop.f32.mrb[0].mxu0
        %v3091 = vadd.f32 %v839, %v3090
        %v3092 = vpop.f32.mrb[0].mxu0
        %v3093 = vadd.f32 %v843, %v3092
        %3094 = vmatprep.mubr.bf16.mxu0 %v559
        %3095 = vmatmul.mubr.bf16.gmra.mrb[0].mxu0 %v558
        %v3096 = vpop.f32.mrb[0].mxu0
        %v3097 = vadd.f32 %v839, %v3096
        %v3098 = vpop.f32.mrb[0].mxu0
        %v3099 = vadd.f32 %v843, %v3098
        %v3100 = vpop.f32.mrb[0].mxu0
        %v3101 = vadd.f32 %v839, %v3100
        %v3102 = vpop.f32.mrb[0].mxu0
        %v3103 = vadd.f32 %v843, %v3102
        %3104 = vdwg.mxu0
        %3105 = vmatprep.subr.bf16.mxu0 %v1761
        %3106 = vmatpush1.bf16.msra.mxu0 %v1760
        %3107 = vmatprep.subr.bf16.mxu0 %v1769
        %3108 = vmatpush1.bf16.msra.mxu0 %v1768
        %3109 = vmatprep.subr.bf16.mxu0 %v1777
        %3110 = vmatpush1.bf16.msra.mxu0 %v1776
        %3111 = vmatprep.subr.bf16.mxu0 %v1785
        %3112 = vmatpush1.bf16.msra.mxu0 %v1784
        %3113 = vmatprep.subr.bf16.mxu0 %v1793
        %3114 = vmatpush1.bf16.msra.mxu0 %v1792
        %3115 = vmatprep.subr.bf16.mxu0 %v1801
        %3116 = vmatpush1.bf16.msra.mxu0 %v1800
        %3117 = vmatprep.subr.bf16.mxu0 %v1809
        %3118 = vmatpush1.bf16.msra.mxu0 %v1808
        %3119 = vmatprep.subr.bf16.mxu0 %v1817
        %3120 = vmatpush1.bf16.msra.mxu0 %v1816
        %3121 = vmatprep.subr.bf16.mxu0 %v1825
        %3122 = vmatpush1.bf16.msra.mxu0 %v1824
        %3123 = vmatprep.subr.bf16.mxu0 %v1833
        %3124 = vmatpush1.bf16.msra.mxu0 %v1832
        %3125 = vmatprep.subr.bf16.mxu0 %v1841
        %3126 = vmatpush1.bf16.msra.mxu0 %v1840
        %3127 = vmatprep.subr.bf16.mxu0 %v1849
        %3128 = vmatpush1.bf16.msra.mxu0 %v1848
        %3129 = vmatprep.subr.bf16.mxu0 %v1857
        %3130 = vmatpush1.bf16.msra.mxu0 %v1856
        %3131 = vmatprep.subr.bf16.mxu0 %v1865
        %3132 = vmatpush1.bf16.msra.mxu0 %v1864
        %3133 = vmatprep.subr.bf16.mxu0 %v1873
        %3134 = vmatpush1.bf16.msra.mxu0 %v1872
        %3135 = vmatprep.subr.bf16.mxu0 %v1881
        %3136 = vmatpush1.bf16.msra.mxu0 %v1880
        %3137 = vmatprep.mubr.bf16.mxu0 %v501
        %3138 = vmatmul.mubr.bf16.gmra.mrb[0].mxu0 %v500
        %v3139 = vpop.f32.mrb[0].mxu0
        %v3140 = vadd.f32 %v2947, %v3139
        %v3141 = vpop.f32.mrb[0].mxu0
        %v3142 = vadd.f32 %v2949, %v3141
        %v3143 = vpop.f32.mrb[0].mxu0
        %v3144 = vadd.f32 %v2951, %v3143
        %v3145 = vpop.f32.mrb[0].mxu0
        %v3146 = vadd.f32 %v2953, %v3145
        %3147 = vmatprep.mubr.bf16.mxu0 %v505
        %3148 = vmatmul.mubr.bf16.gmra.mrb[0].mxu0 %v504
        %v3149 = vpop.f32.mrb[0].mxu0
        %v3150 = vadd.f32 %v2957, %v3149
        %v3151 = vpop.f32.mrb[0].mxu0
        %v3152 = vadd.f32 %v2959, %v3151
        %v3153 = vpop.f32.mrb[0].mxu0
        %v3154 = vadd.f32 %v2961, %v3153
        %v3155 = vpop.f32.mrb[0].mxu0
        %v3156 = vadd.f32 %v2963, %v3155
        %3157 = vmatprep.mubr.bf16.mxu0 %v509
        %3158 = vmatmul.mubr.bf16.gmra.mrb[0].mxu0 %v508
        %v3159 = vpop.f32.mrb[0].mxu0
        %v3160 = vadd.f32 %v2967, %v3159
        %v3161 = vpop.f32.mrb[0].mxu0
        %v3162 = vadd.f32 %v2969, %v3161
        %v3163 = vpop.f32.mrb[0].mxu0
        %v3164 = vadd.f32 %v2971, %v3163
        %v3165 = vpop.f32.mrb[0].mxu0
        %v3166 = vadd.f32 %v2973, %v3165
        %3167 = vmatprep.mubr.bf16.mxu0 %v513
        %3168 = vmatmul.mubr.bf16.gmra.mrb[0].mxu0 %v512
        %v3169 = vpop.f32.mrb[0].mxu0
        %v3170 = vadd.f32 %v2977, %v3169
        %v3171 = vpop.f32.mrb[0].mxu0
        %v3172 = vadd.f32 %v2979, %v3171
        %v3173 = vpop.f32.mrb[0].mxu0
        %v3174 = vadd.f32 %v2981, %v3173
        %v3175 = vpop.f32.mrb[0].mxu0
        %v3176 = vadd.f32 %v2983, %v3175
        %3177 = vmatprep.mubr.bf16.mxu0 %v517
        %3178 = vmatmul.mubr.bf16.gmra.mrb[0].mxu0 %v516
        %v3179 = vpop.f32.mrb[0].mxu0
        %v3180 = vadd.f32 %v2987, %v3179
        %v3181 = vpop.f32.mrb[0].mxu0
        %v3182 = vadd.f32 %v2989, %v3181
        %v3183 = vpop.f32.mrb[0].mxu0
        %v3184 = vadd.f32 %v2991, %v3183
        %v3185 = vpop.f32.mrb[0].mxu0
        %v3186 = vadd.f32 %v2993, %v3185
        %3187 = vmatprep.mubr.bf16.mxu0 %v521
        %3188 = vmatmul.mubr.bf16.gmra.mrb[0].mxu0 %v520
        %v3189 = vpop.f32.mrb[0].mxu0
        %v3190 = vadd.f32 %v2997, %v3189
        %v3191 = vpop.f32.mrb[0].mxu0
        %v3192 = vadd.f32 %v2999, %v3191
        %v3193 = vpop.f32.mrb[0].mxu0
        %v3194 = vadd.f32 %v3001, %v3193
        %v3195 = vpop.f32.mrb[0].mxu0
        %v3196 = vadd.f32 %v3003, %v3195
        %3197 = vmatprep.mubr.bf16.mxu0 %v525
        %3198 = vmatmul.mubr.bf16.gmra.mrb[0].mxu0 %v524
        %v3199 = vpop.f32.mrb[0].mxu0
        %v3200 = vadd.f32 %v3007, %v3199
        %v3201 = vpop.f32.mrb[0].mxu0
        %v3202 = vadd.f32 %v3009, %v3201
        %v3203 = vpop.f32.mrb[0].mxu0
        %v3204 = vadd.f32 %v3011, %v3203
        %v3205 = vpop.f32.mrb[0].mxu0
        %v3206 = vadd.f32 %v3013, %v3205
        %3207 = vmatprep.mubr.bf16.mxu0 %v529
        %3208 = vmatmul.mubr.bf16.gmra.mrb[0].mxu0 %v528
        %v3209 = vpop.f32.mrb[0].mxu0
        %v3210 = vadd.f32 %v3017, %v3209
        %v3211 = vpop.f32.mrb[0].mxu0
        %v3212 = vadd.f32 %v3019, %v3211
        %v3213 = vpop.f32.mrb[0].mxu0
        %v3214 = vadd.f32 %v3021, %v3213
        %v3215 = vpop.f32.mrb[0].mxu0
        %v3216 = vadd.f32 %v3023, %v3215
        %3217 = vmatprep.mubr.bf16.mxu0 %v533
        %3218 = vmatmul.mubr.bf16.gmra.mrb[0].mxu0 %v532
        %v3219 = vpop.f32.mrb[0].mxu0
        %v3220 = vadd.f32 %v3027, %v3219
        %v3221 = vpop.f32.mrb[0].mxu0
        %v3222 = vadd.f32 %v3029, %v3221
        %v3223 = vpop.f32.mrb[0].mxu0
        %v3224 = vadd.f32 %v3031, %v3223
        %v3225 = vpop.f32.mrb[0].mxu0
        %v3226 = vadd.f32 %v3033, %v3225
        %3227 = vmatprep.mubr.bf16.mxu0 %v537
        %3228 = vmatmul.mubr.bf16.gmra.mrb[0].mxu0 %v536
        %v3229 = vpop.f32.mrb[0].mxu0
        %v3230 = vadd.f32 %v3037, %v3229
        %v3231 = vpop.f32.mrb[0].mxu0
        %v3232 = vadd.f32 %v3039, %v3231
        %v3233 = vpop.f32.mrb[0].mxu0
        %v3234 = vadd.f32 %v3041, %v3233
        %v3235 = vpop.f32.mrb[0].mxu0
        %v3236 = vadd.f32 %v3043, %v3235
        %3237 = vmatprep.mubr.bf16.mxu0 %v541
        %3238 = vmatmul.mubr.bf16.gmra.mrb[0].mxu0 %v540
        %v3239 = vpop.f32.mrb[0].mxu0
        %v3240 = vadd.f32 %v3047, %v3239
        %v3241 = vpop.f32.mrb[0].mxu0
        %v3242 = vadd.f32 %v3049, %v3241
        %v3243 = vpop.f32.mrb[0].mxu0
        %v3244 = vadd.f32 %v3051, %v3243
        %v3245 = vpop.f32.mrb[0].mxu0
        %v3246 = vadd.f32 %v3053, %v3245
        %3247 = vmatprep.mubr.bf16.mxu0 %v545
        %3248 = vmatmul.mubr.bf16.gmra.mrb[0].mxu0 %v544
        %v3249 = vpop.f32.mrb[0].mxu0
        %v3250 = vadd.f32 %v3057, %v3249
        %v3251 = vpop.f32.mrb[0].mxu0
        %v3252 = vadd.f32 %v3059, %v3251
        %v3253 = vpop.f32.mrb[0].mxu0
        %v3254 = vadd.f32 %v3061, %v3253
        %v3255 = vpop.f32.mrb[0].mxu0
        %v3256 = vadd.f32 %v3063, %v3255
        %3257 = vmatprep.mubr.bf16.mxu0 %v549
        %3258 = vmatmul.mubr.bf16.gmra.mrb[0].mxu0 %v548
        %v3259 = vpop.f32.mrb[0].mxu0
        %v3260 = vadd.f32 %v3067, %v3259
        %v3261 = vpop.f32.mrb[0].mxu0
        %v3262 = vadd.f32 %v3069, %v3261
        %v3263 = vpop.f32.mrb[0].mxu0
        %v3264 = vadd.f32 %v3071, %v3263
        %v3265 = vpop.f32.mrb[0].mxu0
        %v3266 = vadd.f32 %v3073, %v3265
        %3267 = vmatprep.mubr.bf16.mxu0 %v553
        %3268 = vmatmul.mubr.bf16.gmra.mrb[0].mxu0 %v552
        %v3269 = vpop.f32.mrb[0].mxu0
        %v3270 = vadd.f32 %v3077, %v3269
        %v3271 = vpop.f32.mrb[0].mxu0
        %v3272 = vadd.f32 %v3079, %v3271
        %v3273 = vpop.f32.mrb[0].mxu0
        %v3274 = vadd.f32 %v3081, %v3273
        %v3275 = vpop.f32.mrb[0].mxu0
        %v3276 = vadd.f32 %v3083, %v3275
        %3277 = vmatprep.mubr.bf16.mxu0 %v557
        %3278 = vmatmul.mubr.bf16.gmra.mrb[0].mxu0 %v556
        %v3279 = vpop.f32.mrb[0].mxu0
        %v3280 = vadd.f32 %v3087, %v3279
        %v3281 = vpop.f32.mrb[0].mxu0
        %v3282 = vadd.f32 %v3089, %v3281
        %v3283 = vpop.f32.mrb[0].mxu0
        %v3284 = vadd.f32 %v3091, %v3283
        %v3285 = vpop.f32.mrb[0].mxu0
        %v3286 = vadd.f32 %v3093, %v3285
        %3287 = vmatprep.mubr.bf16.mxu0 %v561
        %3288 = vmatmul.mubr.bf16.gmra.mrb[0].mxu0 %v560
        %v3289 = vpop.f32.mrb[0].mxu0
        %v3290 = vadd.f32 %v3097, %v3289
        %v3291 = vpop.f32.mrb[0].mxu0
        %v3292 = vadd.f32 %v3099, %v3291
        %v3293 = vpop.f32.mrb[0].mxu0
        %v3294 = vadd.f32 %v3101, %v3293
        %v3295 = vpop.f32.mrb[0].mxu0
        %v3296 = vadd.f32 %v3103, %v3295
        %3297 = vdwg.mxu0
        %3298 = vmatprep.subr.bf16.mxu0 %v1635
        %3299 = vmatpush1.bf16.msra.mxu0 %v1634
        %3300 = vmatprep.subr.bf16.mxu0 %v1643
        %3301 = vmatpush1.bf16.msra.mxu0 %v1642
        %3302 = vmatprep.subr.bf16.mxu0 %v1651
        %3303 = vmatpush1.bf16.msra.mxu0 %v1650
        %3304 = vmatprep.subr.bf16.mxu0 %v1659
        %3305 = vmatpush1.bf16.msra.mxu0 %v1658
        %3306 = vmatprep.subr.bf16.mxu0 %v1667
        %3307 = vmatpush1.bf16.msra.mxu0 %v1666
        %3308 = vmatprep.subr.bf16.mxu0 %v1675
        %3309 = vmatpush1.bf16.msra.mxu0 %v1674
        %3310 = vmatprep.subr.bf16.mxu0 %v1683
        %3311 = vmatpush1.bf16.msra.mxu0 %v1682
        %3312 = vmatprep.subr.bf16.mxu0 %v1691
        %3313 = vmatpush1.bf16.msra.mxu0 %v1690
        %3314 = vmatprep.subr.bf16.mxu0 %v1699
        %3315 = vmatpush1.bf16.msra.mxu0 %v1698
        %3316 = vmatprep.subr.bf16.mxu0 %v1707
        %3317 = vmatpush1.bf16.msra.mxu0 %v1706
        %3318 = vmatprep.subr.bf16.mxu0 %v1715
        %3319 = vmatpush1.bf16.msra.mxu0 %v1714
        %3320 = vmatprep.subr.bf16.mxu0 %v1723
        %3321 = vmatpush1.bf16.msra.mxu0 %v1722
        %3322 = vmatprep.subr.bf16.mxu0 %v1731
        %3323 = vmatpush1.bf16.msra.mxu0 %v1730
        %3324 = vmatprep.subr.bf16.mxu0 %v1739
        %3325 = vmatpush1.bf16.msra.mxu0 %v1738
        %3326 = vmatprep.subr.bf16.mxu0 %v1747
        %3327 = vmatpush1.bf16.msra.mxu0 %v1746
        %3328 = vmatprep.subr.bf16.mxu0 %v1755
        %3329 = vmatpush1.bf16.msra.mxu0 %v1754
        %3330 = vmatprep.mubr.bf16.mxu0 %v499
        %3331 = vmatmul.mubr.bf16.gmra.mrb[0].mxu0 %v498
        %v3332 = vpop.f32.mrb[0].mxu0
        %v3333 = vadd.f32 %v847, %v3332
        %v3334 = vpop.f32.mrb[0].mxu0
        %v3335 = vadd.f32 %v851, %v3334
        %v3336 = vpop.f32.mrb[0].mxu0
        %v3337 = vadd.f32 %v847, %v3336
        %v3338 = vpop.f32.mrb[0].mxu0
        %v3339 = vadd.f32 %v851, %v3338
        %3340 = vmatprep.mubr.bf16.mxu0 %v503
        %3341 = vmatmul.mubr.bf16.gmra.mrb[0].mxu0 %v502
        %v3342 = vpop.f32.mrb[0].mxu0
        %v3343 = vadd.f32 %v847, %v3342
        %v3344 = vpop.f32.mrb[0].mxu0
        %v3345 = vadd.f32 %v851, %v3344
        %v3346 = vpop.f32.mrb[0].mxu0
        %v3347 = vadd.f32 %v847, %v3346
        %v3348 = vpop.f32.mrb[0].mxu0
        %v3349 = vadd.f32 %v851, %v3348
        %3350 = vmatprep.mubr.bf16.mxu0 %v507
        %3351 = vmatmul.mubr.bf16.gmra.mrb[0].mxu0 %v506
        %v3352 = vpop.f32.mrb[0].mxu0
        %v3353 = vadd.f32 %v847, %v3352
        %v3354 = vpop.f32.mrb[0].mxu0
        %v3355 = vadd.f32 %v851, %v3354
        %v3356 = vpop.f32.mrb[0].mxu0
        %v3357 = vadd.f32 %v847, %v3356
        %v3358 = vpop.f32.mrb[0].mxu0
        %v3359 = vadd.f32 %v851, %v3358
        %3360 = vmatprep.mubr.bf16.mxu0 %v511
        %3361 = vmatmul.mubr.bf16.gmra.mrb[0].mxu0 %v510
        %v3362 = vpop.f32.mrb[0].mxu0
        %v3363 = vadd.f32 %v847, %v3362
        %v3364 = vpop.f32.mrb[0].mxu0
        %v3365 = vadd.f32 %v851, %v3364
        %v3366 = vpop.f32.mrb[0].mxu0
        %v3367 = vadd.f32 %v847, %v3366
        %v3368 = vpop.f32.mrb[0].mxu0
        %v3369 = vadd.f32 %v851, %v3368
        %3370 = vmatprep.mubr.bf16.mxu0 %v515
        %3371 = vmatmul.mubr.bf16.gmra.mrb[0].mxu0 %v514
        %v3372 = vpop.f32.mrb[0].mxu0
        %v3373 = vadd.f32 %v847, %v3372
        %v3374 = vpop.f32.mrb[0].mxu0
        %v3375 = vadd.f32 %v851, %v3374
        %v3376 = vpop.f32.mrb[0].mxu0
        %v3377 = vadd.f32 %v847, %v3376
        %v3378 = vpop.f32.mrb[0].mxu0
        %v3379 = vadd.f32 %v851, %v3378
        %3380 = vmatprep.mubr.bf16.mxu0 %v519
        %3381 = vmatmul.mubr.bf16.gmra.mrb[0].mxu0 %v518
        %v3382 = vpop.f32.mrb[0].mxu0
        %v3383 = vadd.f32 %v847, %v3382
        %v3384 = vpop.f32.mrb[0].mxu0
        %v3385 = vadd.f32 %v851, %v3384
        %v3386 = vpop.f32.mrb[0].mxu0
        %v3387 = vadd.f32 %v847, %v3386
        %v3388 = vpop.f32.mrb[0].mxu0
        %v3389 = vadd.f32 %v851, %v3388
        %3390 = vmatprep.mubr.bf16.mxu0 %v523
        %3391 = vmatmul.mubr.bf16.gmra.mrb[0].mxu0 %v522
        %v3392 = vpop.f32.mrb[0].mxu0
        %v3393 = vadd.f32 %v847, %v3392
        %v3394 = vpop.f32.mrb[0].mxu0
        %v3395 = vadd.f32 %v851, %v3394
        %v3396 = vpop.f32.mrb[0].mxu0
        %v3397 = vadd.f32 %v847, %v3396
        %v3398 = vpop.f32.mrb[0].mxu0
        %v3399 = vadd.f32 %v851, %v3398
        %3400 = vmatprep.mubr.bf16.mxu0 %v527
        %3401 = vmatmul.mubr.bf16.gmra.mrb[0].mxu0 %v526
        %v3402 = vpop.f32.mrb[0].mxu0
        %v3403 = vadd.f32 %v847, %v3402
        %v3404 = vpop.f32.mrb[0].mxu0
        %v3405 = vadd.f32 %v851, %v3404
        %v3406 = vpop.f32.mrb[0].mxu0
        %v3407 = vadd.f32 %v847, %v3406
        %v3408 = vpop.f32.mrb[0].mxu0
        %v3409 = vadd.f32 %v851, %v3408
        %3410 = vmatprep.mubr.bf16.mxu0 %v531
        %3411 = vmatmul.mubr.bf16.gmra.mrb[0].mxu0 %v530
        %v3412 = vpop.f32.mrb[0].mxu0
        %v3413 = vadd.f32 %v847, %v3412
        %v3414 = vpop.f32.mrb[0].mxu0
        %v3415 = vadd.f32 %v851, %v3414
        %v3416 = vpop.f32.mrb[0].mxu0
        %v3417 = vadd.f32 %v847, %v3416
        %v3418 = vpop.f32.mrb[0].mxu0
        %v3419 = vadd.f32 %v851, %v3418
        %3420 = vmatprep.mubr.bf16.mxu0 %v535
        %3421 = vmatmul.mubr.bf16.gmra.mrb[0].mxu0 %v534
        %v3422 = vpop.f32.mrb[0].mxu0
        %v3423 = vadd.f32 %v847, %v3422
        %v3424 = vpop.f32.mrb[0].mxu0
        %v3425 = vadd.f32 %v851, %v3424
        %v3426 = vpop.f32.mrb[0].mxu0
        %v3427 = vadd.f32 %v847, %v3426
        %v3428 = vpop.f32.mrb[0].mxu0
        %v3429 = vadd.f32 %v851, %v3428
        %3430 = vmatprep.mubr.bf16.mxu0 %v539
        %3431 = vmatmul.mubr.bf16.gmra.mrb[0].mxu0 %v538
        %v3432 = vpop.f32.mrb[0].mxu0
        %v3433 = vadd.f32 %v847, %v3432
        %v3434 = vpop.f32.mrb[0].mxu0
        %v3435 = vadd.f32 %v851, %v3434
        %v3436 = vpop.f32.mrb[0].mxu0
        %v3437 = vadd.f32 %v847, %v3436
        %v3438 = vpop.f32.mrb[0].mxu0
        %v3439 = vadd.f32 %v851, %v3438
        %3440 = vmatprep.mubr.bf16.mxu0 %v543
        %3441 = vmatmul.mubr.bf16.gmra.mrb[0].mxu0 %v542
        %v3442 = vpop.f32.mrb[0].mxu0
        %v3443 = vadd.f32 %v847, %v3442
        %v3444 = vpop.f32.mrb[0].mxu0
        %v3445 = vadd.f32 %v851, %v3444
        %v3446 = vpop.f32.mrb[0].mxu0
        %v3447 = vadd.f32 %v847, %v3446
        %v3448 = vpop.f32.mrb[0].mxu0
        %v3449 = vadd.f32 %v851, %v3448
        %3450 = vmatprep.mubr.bf16.mxu0 %v547
        %3451 = vmatmul.mubr.bf16.gmra.mrb[0].mxu0 %v546
        %v3452 = vpop.f32.mrb[0].mxu0
        %v3453 = vadd.f32 %v847, %v3452
        %v3454 = vpop.f32.mrb[0].mxu0
        %v3455 = vadd.f32 %v851, %v3454
        %v3456 = vpop.f32.mrb[0].mxu0
        %v3457 = vadd.f32 %v847, %v3456
        %v3458 = vpop.f32.mrb[0].mxu0
        %v3459 = vadd.f32 %v851, %v3458
        %3460 = vmatprep.mubr.bf16.mxu0 %v551
        %3461 = vmatmul.mubr.bf16.gmra.mrb[0].mxu0 %v550
        %v3462 = vpop.f32.mrb[0].mxu0
        %v3463 = vadd.f32 %v847, %v3462
        %v3464 = vpop.f32.mrb[0].mxu0
        %v3465 = vadd.f32 %v851, %v3464
        %v3466 = vpop.f32.mrb[0].mxu0
        %v3467 = vadd.f32 %v847, %v3466
        %v3468 = vpop.f32.mrb[0].mxu0
        %v3469 = vadd.f32 %v851, %v3468
        %3470 = vmatprep.mubr.bf16.mxu0 %v555
        %3471 = vmatmul.mubr.bf16.gmra.mrb[0].mxu0 %v554
        %v3472 = vpop.f32.mrb[0].mxu0
        %v3473 = vadd.f32 %v847, %v3472
        %v3474 = vpop.f32.mrb[0].mxu0
        %v3475 = vadd.f32 %v851, %v3474
        %v3476 = vpop.f32.mrb[0].mxu0
        %v3477 = vadd.f32 %v847, %v3476
        %v3478 = vpop.f32.mrb[0].mxu0
        %v3479 = vadd.f32 %v851, %v3478
        %3480 = vmatprep.mubr.bf16.mxu0 %v559
        %3481 = vmatmul.mubr.bf16.gmra.mrb[0].mxu0 %v558
        %v3482 = vpop.f32.mrb[0].mxu0
        %v3483 = vadd.f32 %v847, %v3482
        %v3484 = vpop.f32.mrb[0].mxu0
        %v3485 = vadd.f32 %v851, %v3484
        %v3486 = vpop.f32.mrb[0].mxu0
        %v3487 = vadd.f32 %v847, %v3486
        %v3488 = vpop.f32.mrb[0].mxu0
        %v3489 = vadd.f32 %v851, %v3488
        %3490 = vdwg.mxu0
        %3491 = vmatprep.subr.bf16.mxu0 %v1763
        %3492 = vmatpush1.bf16.msra.mxu0 %v1762
        %3493 = vmatprep.subr.bf16.mxu0 %v1771
        %3494 = vmatpush1.bf16.msra.mxu0 %v1770
        %3495 = vmatprep.subr.bf16.mxu0 %v1779
        %3496 = vmatpush1.bf16.msra.mxu0 %v1778
        %3497 = vmatprep.subr.bf16.mxu0 %v1787
        %3498 = vmatpush1.bf16.msra.mxu0 %v1786
        %3499 = vmatprep.subr.bf16.mxu0 %v1795
        %3500 = vmatpush1.bf16.msra.mxu0 %v1794
        %3501 = vmatprep.subr.bf16.mxu0 %v1803
        %3502 = vmatpush1.bf16.msra.mxu0 %v1802
        %3503 = vmatprep.subr.bf16.mxu0 %v1811
        %3504 = vmatpush1.bf16.msra.mxu0 %v1810
        %3505 = vmatprep.subr.bf16.mxu0 %v1819
        %3506 = vmatpush1.bf16.msra.mxu0 %v1818
        %3507 = vmatprep.subr.bf16.mxu0 %v1827
        %3508 = vmatpush1.bf16.msra.mxu0 %v1826
        %3509 = vmatprep.subr.bf16.mxu0 %v1835
        %3510 = vmatpush1.bf16.msra.mxu0 %v1834
        %3511 = vmatprep.subr.bf16.mxu0 %v1843
        %3512 = vmatpush1.bf16.msra.mxu0 %v1842
        %3513 = vmatprep.subr.bf16.mxu0 %v1851
        %3514 = vmatpush1.bf16.msra.mxu0 %v1850
        %3515 = vmatprep.subr.bf16.mxu0 %v1859
        %3516 = vmatpush1.bf16.msra.mxu0 %v1858
        %3517 = vmatprep.subr.bf16.mxu0 %v1867
        %3518 = vmatpush1.bf16.msra.mxu0 %v1866
        %3519 = vmatprep.subr.bf16.mxu0 %v1875
        %3520 = vmatpush1.bf16.msra.mxu0 %v1874
        %3521 = vmatprep.subr.bf16.mxu0 %v1883
        %3522 = vmatpush1.bf16.msra.mxu0 %v1882
        %3523 = vmatprep.mubr.bf16.mxu0 %v501
        %3524 = vmatmul.mubr.bf16.gmra.mrb[0].mxu0 %v500
        %v3525 = vpop.f32.mrb[0].mxu0
        %v3526 = vadd.f32 %v3333, %v3525
        %v3527 = vpop.f32.mrb[0].mxu0
        %v3528 = vadd.f32 %v3335, %v3527
        %v3529 = vpop.f32.mrb[0].mxu0
        %v3530 = vadd.f32 %v3337, %v3529
        %v3531 = vpop.f32.mrb[0].mxu0
        %v3532 = vadd.f32 %v3339, %v3531
        %3533 = vmatprep.mubr.bf16.mxu0 %v505
        %3534 = vmatmul.mubr.bf16.gmra.mrb[0].mxu0 %v504
        %v3535 = vpop.f32.mrb[0].mxu0
        %v3536 = vadd.f32 %v3343, %v3535
        %v3537 = vpop.f32.mrb[0].mxu0
        %v3538 = vadd.f32 %v3345, %v3537
        %v3539 = vpop.f32.mrb[0].mxu0
        %v3540 = vadd.f32 %v3347, %v3539
        %v3541 = vpop.f32.mrb[0].mxu0
        %v3542 = vadd.f32 %v3349, %v3541
        %3543 = vmatprep.mubr.bf16.mxu0 %v509
        %3544 = vmatmul.mubr.bf16.gmra.mrb[0].mxu0 %v508
        %v3545 = vpop.f32.mrb[0].mxu0
        %v3546 = vadd.f32 %v3353, %v3545
        %v3547 = vpop.f32.mrb[0].mxu0
        %v3548 = vadd.f32 %v3355, %v3547
        %v3549 = vpop.f32.mrb[0].mxu0
        %v3550 = vadd.f32 %v3357, %v3549
        %v3551 = vpop.f32.mrb[0].mxu0
        %v3552 = vadd.f32 %v3359, %v3551
        %3553 = vmatprep.mubr.bf16.mxu0 %v513
        %3554 = vmatmul.mubr.bf16.gmra.mrb[0].mxu0 %v512
        %v3555 = vpop.f32.mrb[0].mxu0
        %v3556 = vadd.f32 %v3363, %v3555
        %v3557 = vpop.f32.mrb[0].mxu0
        %v3558 = vadd.f32 %v3365, %v3557
        %v3559 = vpop.f32.mrb[0].mxu0
        %v3560 = vadd.f32 %v3367, %v3559
        %v3561 = vpop.f32.mrb[0].mxu0
        %v3562 = vadd.f32 %v3369, %v3561
        %3563 = vmatprep.mubr.bf16.mxu0 %v517
        %3564 = vmatmul.mubr.bf16.gmra.mrb[0].mxu0 %v516
        %v3565 = vpop.f32.mrb[0].mxu0
        %v3566 = vadd.f32 %v3373, %v3565
        %v3567 = vpop.f32.mrb[0].mxu0
        %v3568 = vadd.f32 %v3375, %v3567
        %v3569 = vpop.f32.mrb[0].mxu0
        %v3570 = vadd.f32 %v3377, %v3569
        %v3571 = vpop.f32.mrb[0].mxu0
        %v3572 = vadd.f32 %v3379, %v3571
        %3573 = vmatprep.mubr.bf16.mxu0 %v521
        %3574 = vmatmul.mubr.bf16.gmra.mrb[0].mxu0 %v520
        %v3575 = vpop.f32.mrb[0].mxu0
        %v3576 = vadd.f32 %v3383, %v3575
        %v3577 = vpop.f32.mrb[0].mxu0
        %v3578 = vadd.f32 %v3385, %v3577
        %v3579 = vpop.f32.mrb[0].mxu0
        %v3580 = vadd.f32 %v3387, %v3579
        %v3581 = vpop.f32.mrb[0].mxu0
        %v3582 = vadd.f32 %v3389, %v3581
        %3583 = vmatprep.mubr.bf16.mxu0 %v525
        %3584 = vmatmul.mubr.bf16.gmra.mrb[0].mxu0 %v524
        %v3585 = vpop.f32.mrb[0].mxu0
        %v3586 = vadd.f32 %v3393, %v3585
        %v3587 = vpop.f32.mrb[0].mxu0
        %v3588 = vadd.f32 %v3395, %v3587
        %v3589 = vpop.f32.mrb[0].mxu0
        %v3590 = vadd.f32 %v3397, %v3589
        %v3591 = vpop.f32.mrb[0].mxu0
        %v3592 = vadd.f32 %v3399, %v3591
        %3593 = vmatprep.mubr.bf16.mxu0 %v529
        %3594 = vmatmul.mubr.bf16.gmra.mrb[0].mxu0 %v528
        %v3595 = vpop.f32.mrb[0].mxu0
        %v3596 = vadd.f32 %v3403, %v3595
        %v3597 = vpop.f32.mrb[0].mxu0
        %v3598 = vadd.f32 %v3405, %v3597
        %v3599 = vpop.f32.mrb[0].mxu0
        %v3600 = vadd.f32 %v3407, %v3599
        %v3601 = vpop.f32.mrb[0].mxu0
        %v3602 = vadd.f32 %v3409, %v3601
        %3603 = vmatprep.mubr.bf16.mxu0 %v533
        %3604 = vmatmul.mubr.bf16.gmra.mrb[0].mxu0 %v532
        %v3605 = vpop.f32.mrb[0].mxu0
        %v3606 = vadd.f32 %v3413, %v3605
        %v3607 = vpop.f32.mrb[0].mxu0
        %v3608 = vadd.f32 %v3415, %v3607
        %v3609 = vpop.f32.mrb[0].mxu0
        %v3610 = vadd.f32 %v3417, %v3609
        %v3611 = vpop.f32.mrb[0].mxu0
        %v3612 = vadd.f32 %v3419, %v3611
        %3613 = vmatprep.mubr.bf16.mxu0 %v537
        %3614 = vmatmul.mubr.bf16.gmra.mrb[0].mxu0 %v536
        %v3615 = vpop.f32.mrb[0].mxu0
        %v3616 = vadd.f32 %v3423, %v3615
        %v3617 = vpop.f32.mrb[0].mxu0
        %v3618 = vadd.f32 %v3425, %v3617
        %v3619 = vpop.f32.mrb[0].mxu0
        %v3620 = vadd.f32 %v3427, %v3619
        %v3621 = vpop.f32.mrb[0].mxu0
        %v3622 = vadd.f32 %v3429, %v3621
        %3623 = vmatprep.mubr.bf16.mxu0 %v541
        %3624 = vmatmul.mubr.bf16.gmra.mrb[0].mxu0 %v540
        %v3625 = vpop.f32.mrb[0].mxu0
        %v3626 = vadd.f32 %v3433, %v3625
        %v3627 = vpop.f32.mrb[0].mxu0
        %v3628 = vadd.f32 %v3435, %v3627
        %v3629 = vpop.f32.mrb[0].mxu0
        %v3630 = vadd.f32 %v3437, %v3629
        %v3631 = vpop.f32.mrb[0].mxu0
        %v3632 = vadd.f32 %v3439, %v3631
        %3633 = vmatprep.mubr.bf16.mxu0 %v545
        %3634 = vmatmul.mubr.bf16.gmra.mrb[0].mxu0 %v544
        %v3635 = vpop.f32.mrb[0].mxu0
        %v3636 = vadd.f32 %v3443, %v3635
        %v3637 = vpop.f32.mrb[0].mxu0
        %v3638 = vadd.f32 %v3445, %v3637
        %v3639 = vpop.f32.mrb[0].mxu0
        %v3640 = vadd.f32 %v3447, %v3639
        %v3641 = vpop.f32.mrb[0].mxu0
        %v3642 = vadd.f32 %v3449, %v3641
        %3643 = vmatprep.mubr.bf16.mxu0 %v549
        %3644 = vmatmul.mubr.bf16.gmra.mrb[0].mxu0 %v548
        %v3645 = vpop.f32.mrb[0].mxu0
        %v3646 = vadd.f32 %v3453, %v3645
        %v3647 = vpop.f32.mrb[0].mxu0
        %v3648 = vadd.f32 %v3455, %v3647
        %v3649 = vpop.f32.mrb[0].mxu0
        %v3650 = vadd.f32 %v3457, %v3649
        %v3651 = vpop.f32.mrb[0].mxu0
        %v3652 = vadd.f32 %v3459, %v3651
        %3653 = vmatprep.mubr.bf16.mxu0 %v553
        %3654 = vmatmul.mubr.bf16.gmra.mrb[0].mxu0 %v552
        %v3655 = vpop.f32.mrb[0].mxu0
        %v3656 = vadd.f32 %v3463, %v3655
        %v3657 = vpop.f32.mrb[0].mxu0
        %v3658 = vadd.f32 %v3465, %v3657
        %v3659 = vpop.f32.mrb[0].mxu0
        %v3660 = vadd.f32 %v3467, %v3659
        %v3661 = vpop.f32.mrb[0].mxu0
        %v3662 = vadd.f32 %v3469, %v3661
        %3663 = vmatprep.mubr.bf16.mxu0 %v557
        %3664 = vmatmul.mubr.bf16.gmra.mrb[0].mxu0 %v556
        %v3665 = vpop.f32.mrb[0].mxu0
        %v3666 = vadd.f32 %v3473, %v3665
        %v3667 = vpop.f32.mrb[0].mxu0
        %v3668 = vadd.f32 %v3475, %v3667
        %v3669 = vpop.f32.mrb[0].mxu0
        %v3670 = vadd.f32 %v3477, %v3669
        %v3671 = vpop.f32.mrb[0].mxu0
        %v3672 = vadd.f32 %v3479, %v3671
        %3673 = vmatprep.mubr.bf16.mxu0 %v561
        %3674 = vmatmul.mubr.bf16.gmra.mrb[0].mxu0 %v560
        %v3675 = vpop.f32.mrb[0].mxu0
        %v3676 = vadd.f32 %v3483, %v3675
        %v3677 = vpop.f32.mrb[0].mxu0
        %v3678 = vadd.f32 %v3485, %v3677
        %v3679 = vpop.f32.mrb[0].mxu0
        %v3680 = vadd.f32 %v3487, %v3679
        %v3681 = vpop.f32.mrb[0].mxu0
        %v3682 = vadd.f32 %v3489, %v3681
        %3683 = vdwg.mxu0
        %v3684 = vmax.f32 %v2368, 0.0
        %v3685 = vmax.f32 %v2370, 0.0
        %v3686 = vmax.f32 %v2754, 0.0
        %v3687 = vmax.f32 %v2756, 0.0
        %v3688 = vmax.f32 %v3140, 0.0
        %v3689 = vmax.f32 %v3142, 0.0
        %v3690 = vmax.f32 %v3526, 0.0
        %v3691 = vmax.f32 %v3528, 0.0
        %v3692 = vmax.f32 %v2372, 0.0
        %v3693 = vmax.f32 %v2374, 0.0
        %v3694 = vmax.f32 %v2758, 0.0
        %v3695 = vmax.f32 %v2760, 0.0
        %v3696 = vmax.f32 %v3144, 0.0
        %v3697 = vmax.f32 %v3146, 0.0
        %v3698 = vmax.f32 %v3530, 0.0
        %v3699 = vmax.f32 %v3532, 0.0
        %v3700 = vmax.f32 %v2378, 0.0
        %v3701 = vmax.f32 %v2380, 0.0
        %v3702 = vmax.f32 %v2764, 0.0
        %v3703 = vmax.f32 %v2766, 0.0
        %v3704 = vmax.f32 %v3150, 0.0
        %v3705 = vmax.f32 %v3152, 0.0
        %v3706 = vmax.f32 %v3536, 0.0
        %v3707 = vmax.f32 %v3538, 0.0
        %v3708 = vmax.f32 %v2382, 0.0
        %v3709 = vmax.f32 %v2384, 0.0
        %v3710 = vmax.f32 %v2768, 0.0
        %v3711 = vmax.f32 %v2770, 0.0
        %v3712 = vmax.f32 %v3154, 0.0
        %v3713 = vmax.f32 %v3156, 0.0
        %v3714 = vmax.f32 %v3540, 0.0
        %v3715 = vmax.f32 %v3542, 0.0
        %v3716 = vmax.f32 %v2388, 0.0
        %v3717 = vmax.f32 %v2390, 0.0
        %v3718 = vmax.f32 %v2774, 0.0
        %v3719 = vmax.f32 %v2776, 0.0
        %v3720 = vmax.f32 %v3160, 0.0
        %v3721 = vmax.f32 %v3162, 0.0
        %v3722 = vmax.f32 %v3546, 0.0
        %v3723 = vmax.f32 %v3548, 0.0
        %v3724 = vmax.f32 %v2392, 0.0
        %v3725 = vmax.f32 %v2394, 0.0
        %v3726 = vmax.f32 %v2778, 0.0
        %v3727 = vmax.f32 %v2780, 0.0
        %v3728 = vmax.f32 %v3164, 0.0
        %v3729 = vmax.f32 %v3166, 0.0
        %v3730 = vmax.f32 %v3550, 0.0
        %v3731 = vmax.f32 %v3552, 0.0
        %v3732 = vmax.f32 %v2398, 0.0
        %v3733 = vmax.f32 %v2400, 0.0
        %v3734 = vmax.f32 %v2784, 0.0
        %v3735 = vmax.f32 %v2786, 0.0
        %v3736 = vmax.f32 %v3170, 0.0
        %v3737 = vmax.f32 %v3172, 0.0
        %v3738 = vmax.f32 %v3556, 0.0
        %v3739 = vmax.f32 %v3558, 0.0
        %v3740 = vmax.f32 %v2402, 0.0
        %v3741 = vmax.f32 %v2404, 0.0
        %v3742 = vmax.f32 %v2788, 0.0
        %v3743 = vmax.f32 %v2790, 0.0
        %v3744 = vmax.f32 %v3174, 0.0
        %v3745 = vmax.f32 %v3176, 0.0
        %v3746 = vmax.f32 %v3560, 0.0
        %v3747 = vmax.f32 %v3562, 0.0
        %v3748 = vmax.f32 %v2408, 0.0
        %v3749 = vmax.f32 %v2410, 0.0
        %v3750 = vmax.f32 %v2794, 0.0
        %v3751 = vmax.f32 %v2796, 0.0
        %v3752 = vmax.f32 %v3180, 0.0
        %v3753 = vmax.f32 %v3182, 0.0
        %v3754 = vmax.f32 %v3566, 0.0
        %v3755 = vmax.f32 %v3568, 0.0
        %v3756 = vmax.f32 %v2412, 0.0
        %v3757 = vmax.f32 %v2414, 0.0
        %v3758 = vmax.f32 %v2798, 0.0
        %v3759 = vmax.f32 %v2800, 0.0
        %v3760 = vmax.f32 %v3184, 0.0
        %v3761 = vmax.f32 %v3186, 0.0
        %v3762 = vmax.f32 %v3570, 0.0
        %v3763 = vmax.f32 %v3572, 0.0
        %v3764 = vmax.f32 %v2418, 0.0
        %v3765 = vmax.f32 %v2420, 0.0
        %v3766 = vmax.f32 %v2804, 0.0
        %v3767 = vmax.f32 %v2806, 0.0
        %v3768 = vmax.f32 %v3190, 0.0
        %v3769 = vmax.f32 %v3192, 0.0
        %v3770 = vmax.f32 %v3576, 0.0
        %v3771 = vmax.f32 %v3578, 0.0
        %v3772 = vmax.f32 %v2422, 0.0
        %v3773 = vmax.f32 %v2424, 0.0
        %v3774 = vmax.f32 %v2808, 0.0
        %v3775 = vmax.f32 %v2810, 0.0
        %v3776 = vmax.f32 %v3194, 0.0
        %v3777 = vmax.f32 %v3196, 0.0
        %v3778 = vmax.f32 %v3580, 0.0
        %v3779 = vmax.f32 %v3582, 0.0
        %v3780 = vmax.f32 %v2428, 0.0
        %v3781 = vmax.f32 %v2430, 0.0
        %v3782 = vmax.f32 %v2814, 0.0
        %v3783 = vmax.f32 %v2816, 0.0
        %v3784 = vmax.f32 %v3200, 0.0
        %v3785 = vmax.f32 %v3202, 0.0
        %v3786 = vmax.f32 %v3586, 0.0
        %v3787 = vmax.f32 %v3588, 0.0
        %v3788 = vmax.f32 %v2432, 0.0
        %v3789 = vmax.f32 %v2434, 0.0
        %v3790 = vmax.f32 %v2818, 0.0
        %v3791 = vmax.f32 %v2820, 0.0
        %v3792 = vmax.f32 %v3204, 0.0
        %v3793 = vmax.f32 %v3206, 0.0
        %v3794 = vmax.f32 %v3590, 0.0
        %v3795 = vmax.f32 %v3592, 0.0
        %v3796 = vmax.f32 %v2438, 0.0
        %v3797 = vmax.f32 %v2440, 0.0
        %v3798 = vmax.f32 %v2824, 0.0
        %v3799 = vmax.f32 %v2826, 0.0
        %v3800 = vmax.f32 %v3210, 0.0
        %v3801 = vmax.f32 %v3212, 0.0
        %v3802 = vmax.f32 %v3596, 0.0
        %v3803 = vmax.f32 %v3598, 0.0
        %v3804 = vmax.f32 %v2442, 0.0
        %v3805 = vmax.f32 %v2444, 0.0
        %v3806 = vmax.f32 %v2828, 0.0
        %v3807 = vmax.f32 %v2830, 0.0
        %v3808 = vmax.f32 %v3214, 0.0
        %v3809 = vmax.f32 %v3216, 0.0
        %v3810 = vmax.f32 %v3600, 0.0
        %v3811 = vmax.f32 %v3602, 0.0
        %v3812 = vmax.f32 %v2448, 0.0
        %v3813 = vmax.f32 %v2450, 0.0
        %v3814 = vmax.f32 %v2834, 0.0
        %v3815 = vmax.f32 %v2836, 0.0
        %v3816 = vmax.f32 %v3220, 0.0
        %v3817 = vmax.f32 %v3222, 0.0
        %v3818 = vmax.f32 %v3606, 0.0
        %v3819 = vmax.f32 %v3608, 0.0
        %v3820 = vmax.f32 %v2452, 0.0
        %v3821 = vmax.f32 %v2454, 0.0
        %v3822 = vmax.f32 %v2838, 0.0
        %v3823 = vmax.f32 %v2840, 0.0
        %v3824 = vmax.f32 %v3224, 0.0
        %v3825 = vmax.f32 %v3226, 0.0
        %v3826 = vmax.f32 %v3610, 0.0
        %v3827 = vmax.f32 %v3612, 0.0
        %v3828 = vmax.f32 %v2458, 0.0
        %v3829 = vmax.f32 %v2460, 0.0
        %v3830 = vmax.f32 %v2844, 0.0
        %v3831 = vmax.f32 %v2846, 0.0
        %v3832 = vmax.f32 %v3230, 0.0
        %v3833 = vmax.f32 %v3232, 0.0
        %v3834 = vmax.f32 %v3616, 0.0
        %v3835 = vmax.f32 %v3618, 0.0
        %v3836 = vmax.f32 %v2462, 0.0
        %v3837 = vmax.f32 %v2464, 0.0
        %v3838 = vmax.f32 %v2848, 0.0
        %v3839 = vmax.f32 %v2850, 0.0
        %v3840 = vmax.f32 %v3234, 0.0
        %v3841 = vmax.f32 %v3236, 0.0
        %v3842 = vmax.f32 %v3620, 0.0
        %v3843 = vmax.f32 %v3622, 0.0
        %v3844 = vmax.f32 %v2468, 0.0
        %v3845 = vmax.f32 %v2470, 0.0
        %v3846 = vmax.f32 %v2854, 0.0
        %v3847 = vmax.f32 %v2856, 0.0
        %v3848 = vmax.f32 %v3240, 0.0
        %v3849 = vmax.f32 %v3242, 0.0
        %v3850 = vmax.f32 %v3626, 0.0
        %v3851 = vmax.f32 %v3628, 0.0
        %v3852 = vmax.f32 %v2472, 0.0
        %v3853 = vmax.f32 %v2474, 0.0
        %v3854 = vmax.f32 %v2858, 0.0
        %v3855 = vmax.f32 %v2860, 0.0
        %v3856 = vmax.f32 %v3244, 0.0
        %v3857 = vmax.f32 %v3246, 0.0
        %v3858 = vmax.f32 %v3630, 0.0
        %v3859 = vmax.f32 %v3632, 0.0
        %v3860 = vmax.f32 %v2478, 0.0
        %v3861 = vmax.f32 %v2480, 0.0
        %v3862 = vmax.f32 %v2864, 0.0
        %v3863 = vmax.f32 %v2866, 0.0
        %v3864 = vmax.f32 %v3250, 0.0
        %v3865 = vmax.f32 %v3252, 0.0
        %v3866 = vmax.f32 %v3636, 0.0
        %v3867 = vmax.f32 %v3638, 0.0
        %v3868 = vmax.f32 %v2482, 0.0
        %v3869 = vmax.f32 %v2484, 0.0
        %v3870 = vmax.f32 %v2868, 0.0
        %v3871 = vmax.f32 %v2870, 0.0
        %v3872 = vmax.f32 %v3254, 0.0
        %v3873 = vmax.f32 %v3256, 0.0
        %v3874 = vmax.f32 %v3640, 0.0
        %v3875 = vmax.f32 %v3642, 0.0
        %v3876 = vmax.f32 %v2488, 0.0
        %v3877 = vmax.f32 %v2490, 0.0
        %v3878 = vmax.f32 %v2874, 0.0
        %v3879 = vmax.f32 %v2876, 0.0
        %v3880 = vmax.f32 %v3260, 0.0
        %v3881 = vmax.f32 %v3262, 0.0
        %v3882 = vmax.f32 %v3646, 0.0
        %v3883 = vmax.f32 %v3648, 0.0
        %v3884 = vmax.f32 %v2492, 0.0
        %v3885 = vmax.f32 %v2494, 0.0
        %v3886 = vmax.f32 %v2878, 0.0
        %v3887 = vmax.f32 %v2880, 0.0
        %v3888 = vmax.f32 %v3264, 0.0
        %v3889 = vmax.f32 %v3266, 0.0
        %v3890 = vmax.f32 %v3650, 0.0
        %v3891 = vmax.f32 %v3652, 0.0
        %v3892 = vmax.f32 %v2498, 0.0
        %v3893 = vmax.f32 %v2500, 0.0
        %v3894 = vmax.f32 %v2884, 0.0
        %v3895 = vmax.f32 %v2886, 0.0
        %v3896 = vmax.f32 %v3270, 0.0
        %v3897 = vmax.f32 %v3272, 0.0
        %v3898 = vmax.f32 %v3656, 0.0
        %v3899 = vmax.f32 %v3658, 0.0
        %v3900 = vmax.f32 %v2502, 0.0
        %v3901 = vmax.f32 %v2504, 0.0
        %v3902 = vmax.f32 %v2888, 0.0
        %v3903 = vmax.f32 %v2890, 0.0
        %v3904 = vmax.f32 %v3274, 0.0
        %v3905 = vmax.f32 %v3276, 0.0
        %v3906 = vmax.f32 %v3660, 0.0
        %v3907 = vmax.f32 %v3662, 0.0
        %v3908 = vmax.f32 %v2508, 0.0
        %v3909 = vmax.f32 %v2510, 0.0
        %v3910 = vmax.f32 %v2894, 0.0
        %v3911 = vmax.f32 %v2896, 0.0
        %v3912 = vmax.f32 %v3280, 0.0
        %v3913 = vmax.f32 %v3282, 0.0
        %v3914 = vmax.f32 %v3666, 0.0
        %v3915 = vmax.f32 %v3668, 0.0
        %v3916 = vmax.f32 %v2512, 0.0
        %v3917 = vmax.f32 %v2514, 0.0
        %v3918 = vmax.f32 %v2898, 0.0
        %v3919 = vmax.f32 %v2900, 0.0
        %v3920 = vmax.f32 %v3284, 0.0
        %v3921 = vmax.f32 %v3286, 0.0
        %v3922 = vmax.f32 %v3670, 0.0
        %v3923 = vmax.f32 %v3672, 0.0
        %v3924 = vmax.f32 %v2518, 0.0
        %v3925 = vmax.f32 %v2520, 0.0
        %v3926 = vmax.f32 %v2904, 0.0
        %v3927 = vmax.f32 %v2906, 0.0
        %v3928 = vmax.f32 %v3290, 0.0
        %v3929 = vmax.f32 %v3292, 0.0
        %v3930 = vmax.f32 %v3676, 0.0
        %v3931 = vmax.f32 %v3678, 0.0
        %v3932 = vmax.f32 %v2522, 0.0
        %v3933 = vmax.f32 %v2524, 0.0
        %v3934 = vmax.f32 %v2908, 0.0
        %v3935 = vmax.f32 %v2910, 0.0
        %v3936 = vmax.f32 %v3294, 0.0
        %v3937 = vmax.f32 %v3296, 0.0
        %v3938 = vmax.f32 %v3680, 0.0
        %v3939 = vmax.f32 %v3682, 0.0
        %v3940 = vpack.c.bf16 %v3692, %v3684
        %v3941 = vpack.c.bf16 %v3693, %v3685
        %v3942 = vpack.c.bf16 %v3694, %v3686
        %v3943 = vpack.c.bf16 %v3695, %v3687
        %v3944 = vpack.c.bf16 %v3696, %v3688
        %v3945 = vpack.c.bf16 %v3697, %v3689
        %v3946 = vpack.c.bf16 %v3698, %v3690
        %v3947 = vpack.c.bf16 %v3699, %v3691
        %v3948 = vpack.c.bf16 %v3708, %v3700
        %v3949 = vpack.c.bf16 %v3709, %v3701
        %v3950 = vpack.c.bf16 %v3710, %v3702
        %v3951 = vpack.c.bf16 %v3711, %v3703
        %v3952 = vpack.c.bf16 %v3712, %v3704
        %v3953 = vpack.c.bf16 %v3713, %v3705
        %v3954 = vpack.c.bf16 %v3714, %v3706
        %v3955 = vpack.c.bf16 %v3715, %v3707
        %v3956 = vpack.c.bf16 %v3724, %v3716
        %v3957 = vpack.c.bf16 %v3725, %v3717
        %v3958 = vpack.c.bf16 %v3726, %v3718
        %v3959 = vpack.c.bf16 %v3727, %v3719
        %v3960 = vpack.c.bf16 %v3728, %v3720
        %v3961 = vpack.c.bf16 %v3729, %v3721
        %v3962 = vpack.c.bf16 %v3730, %v3722
        %v3963 = vpack.c.bf16 %v3731, %v3723
        %v3964 = vpack.c.bf16 %v3740, %v3732
        %v3965 = vpack.c.bf16 %v3741, %v3733
        %v3966 = vpack.c.bf16 %v3742, %v3734
        %v3967 = vpack.c.bf16 %v3743, %v3735
        %v3968 = vpack.c.bf16 %v3744, %v3736
        %v3969 = vpack.c.bf16 %v3745, %v3737
        %v3970 = vpack.c.bf16 %v3746, %v3738
        %v3971 = vpack.c.bf16 %v3747, %v3739
        %v3972 = vpack.c.bf16 %v3756, %v3748
        %v3973 = vpack.c.bf16 %v3757, %v3749
        %v3974 = vpack.c.bf16 %v3758, %v3750
        %v3975 = vpack.c.bf16 %v3759, %v3751
        %v3976 = vpack.c.bf16 %v3760, %v3752
        %v3977 = vpack.c.bf16 %v3761, %v3753
        %v3978 = vpack.c.bf16 %v3762, %v3754
        %v3979 = vpack.c.bf16 %v3763, %v3755
        %v3980 = vpack.c.bf16 %v3772, %v3764
        %v3981 = vpack.c.bf16 %v3773, %v3765
        %v3982 = vpack.c.bf16 %v3774, %v3766
        %v3983 = vpack.c.bf16 %v3775, %v3767
        %v3984 = vpack.c.bf16 %v3776, %v3768
        %v3985 = vpack.c.bf16 %v3777, %v3769
        %v3986 = vpack.c.bf16 %v3778, %v3770
        %v3987 = vpack.c.bf16 %v3779, %v3771
        %v3988 = vpack.c.bf16 %v3788, %v3780
        %v3989 = vpack.c.bf16 %v3789, %v3781
        %v3990 = vpack.c.bf16 %v3790, %v3782
        %v3991 = vpack.c.bf16 %v3791, %v3783
        %v3992 = vpack.c.bf16 %v3792, %v3784
        %v3993 = vpack.c.bf16 %v3793, %v3785
        %v3994 = vpack.c.bf16 %v3794, %v3786
        %v3995 = vpack.c.bf16 %v3795, %v3787
        %v3996 = vpack.c.bf16 %v3804, %v3796
        %v3997 = vpack.c.bf16 %v3805, %v3797
        %v3998 = vpack.c.bf16 %v3806, %v3798
        %v3999 = vpack.c.bf16 %v3807, %v3799
        %v4000 = vpack.c.bf16 %v3808, %v3800
        %v4001 = vpack.c.bf16 %v3809, %v3801
        %v4002 = vpack.c.bf16 %v3810, %v3802
        %v4003 = vpack.c.bf16 %v3811, %v3803
        %v4004 = vpack.c.bf16 %v3820, %v3812
        %v4005 = vpack.c.bf16 %v3821, %v3813
        %v4006 = vpack.c.bf16 %v3822, %v3814
        %v4007 = vpack.c.bf16 %v3823, %v3815
        %v4008 = vpack.c.bf16 %v3824, %v3816
        %v4009 = vpack.c.bf16 %v3825, %v3817
        %v4010 = vpack.c.bf16 %v3826, %v3818
        %v4011 = vpack.c.bf16 %v3827, %v3819
        %v4012 = vpack.c.bf16 %v3836, %v3828
        %v4013 = vpack.c.bf16 %v3837, %v3829
        %v4014 = vpack.c.bf16 %v3838, %v3830
        %v4015 = vpack.c.bf16 %v3839, %v3831
        %v4016 = vpack.c.bf16 %v3840, %v3832
        %v4017 = vpack.c.bf16 %v3841, %v3833
        %v4018 = vpack.c.bf16 %v3842, %v3834
        %v4019 = vpack.c.bf16 %v3843, %v3835
        %v4020 = vpack.c.bf16 %v3852, %v3844
        %v4021 = vpack.c.bf16 %v3853, %v3845
        %v4022 = vpack.c.bf16 %v3854, %v3846
        %v4023 = vpack.c.bf16 %v3855, %v3847
        %v4024 = vpack.c.bf16 %v3856, %v3848
        %v4025 = vpack.c.bf16 %v3857, %v3849
        %v4026 = vpack.c.bf16 %v3858, %v3850
        %v4027 = vpack.c.bf16 %v3859, %v3851
        %v4028 = vpack.c.bf16 %v3868, %v3860
        %v4029 = vpack.c.bf16 %v3869, %v3861
        %v4030 = vpack.c.bf16 %v3870, %v3862
        %v4031 = vpack.c.bf16 %v3871, %v3863
        %v4032 = vpack.c.bf16 %v3872, %v3864
        %v4033 = vpack.c.bf16 %v3873, %v3865
        %v4034 = vpack.c.bf16 %v3874, %v3866
        %v4035 = vpack.c.bf16 %v3875, %v3867
        %v4036 = vpack.c.bf16 %v3884, %v3876
        %v4037 = vpack.c.bf16 %v3885, %v3877
        %v4038 = vpack.c.bf16 %v3886, %v3878
        %v4039 = vpack.c.bf16 %v3887, %v3879
        %v4040 = vpack.c.bf16 %v3888, %v3880
        %v4041 = vpack.c.bf16 %v3889, %v3881
        %v4042 = vpack.c.bf16 %v3890, %v3882
        %v4043 = vpack.c.bf16 %v3891, %v3883
        %v4044 = vpack.c.bf16 %v3900, %v3892
        %v4045 = vpack.c.bf16 %v3901, %v3893
        %v4046 = vpack.c.bf16 %v3902, %v3894
        %v4047 = vpack.c.bf16 %v3903, %v3895
        %v4048 = vpack.c.bf16 %v3904, %v3896
        %v4049 = vpack.c.bf16 %v3905, %v3897
        %v4050 = vpack.c.bf16 %v3906, %v3898
        %v4051 = vpack.c.bf16 %v3907, %v3899
        %v4052 = vpack.c.bf16 %v3916, %v3908
        %v4053 = vpack.c.bf16 %v3917, %v3909
        %v4054 = vpack.c.bf16 %v3918, %v3910
        %v4055 = vpack.c.bf16 %v3919, %v3911
        %v4056 = vpack.c.bf16 %v3920, %v3912
        %v4057 = vpack.c.bf16 %v3921, %v3913
        %v4058 = vpack.c.bf16 %v3922, %v3914
        %v4059 = vpack.c.bf16 %v3923, %v3915
        %v4060 = vpack.c.bf16 %v3932, %v3924
        %v4061 = vpack.c.bf16 %v3933, %v3925
        %v4062 = vpack.c.bf16 %v3934, %v3926
        %v4063 = vpack.c.bf16 %v3935, %v3927
        %v4064 = vpack.c.bf16 %v3936, %v3928
        %v4065 = vpack.c.bf16 %v3937, %v3929
        %v4066 = vpack.c.bf16 %v3938, %v3930
        %v4067 = vpack.c.bf16 %v3939, %v3931
        %v4068 = vld [vmem:[#allocation8] sm:$0xff]
        %v4069 = vld [vmem:[#allocation8 + $0x8] sm:$0xff]
        %v4070 = vld [vmem:[#allocation8 + $0x10] sm:$0xff]
        %v4071 = vld [vmem:[#allocation8 + $0x18] sm:$0xff]
        %v4072 = vld [vmem:[#allocation8 + $0x20] sm:$0xff]
        %v4073 = vld [vmem:[#allocation8 + $0x28] sm:$0xff]
        %v4074 = vld [vmem:[#allocation8 + $0x30] sm:$0xff]
        %v4075 = vld [vmem:[#allocation8 + $0x38] sm:$0xff]
        %v4076 = vld [vmem:[#allocation8 + $0x40] sm:$0xff]
        %v4077 = vld [vmem:[#allocation8 + $0x48] sm:$0xff]
        %v4078 = vld [vmem:[#allocation8 + $0x50] sm:$0xff]
        %v4079 = vld [vmem:[#allocation8 + $0x58] sm:$0xff]
        %v4080 = vld [vmem:[#allocation8 + $0x60] sm:$0xff]
        %v4081 = vld [vmem:[#allocation8 + $0x68] sm:$0xff]
        %v4082 = vld [vmem:[#allocation8 + $0x70] sm:$0xff]
        %v4083 = vld [vmem:[#allocation8 + $0x78] sm:$0xff]
        %v4084 = vld [vmem:[#allocation8 + $0x80] sm:$0xff]
        %v4085 = vld [vmem:[#allocation8 + $0x88] sm:$0xff]
        %v4086 = vld [vmem:[#allocation8 + $0x90] sm:$0xff]
        %v4087 = vld [vmem:[#allocation8 + $0x98] sm:$0xff]
        %v4088 = vld [vmem:[#allocation8 + $0xa0] sm:$0xff]
        %v4089 = vld [vmem:[#allocation8 + $0xa8] sm:$0xff]
        %v4090 = vld [vmem:[#allocation8 + $0xb0] sm:$0xff]
        %v4091 = vld [vmem:[#allocation8 + $0xb8] sm:$0xff]
        %v4092 = vld [vmem:[#allocation8 + $0xc0] sm:$0xff]
        %v4093 = vld [vmem:[#allocation8 + $0xc8] sm:$0xff]
        %v4094 = vld [vmem:[#allocation8 + $0xd0] sm:$0xff]
        %v4095 = vld [vmem:[#allocation8 + $0xd8] sm:$0xff]
        %v4096 = vld [vmem:[#allocation8 + $0xe0] sm:$0xff]
        %v4097 = vld [vmem:[#allocation8 + $0xe8] sm:$0xff]
        %v4098 = vld [vmem:[#allocation8 + $0xf0] sm:$0xff]
        %v4099 = vld [vmem:[#allocation8 + $0xf8] sm:$0xff]
        %v4100 = vld [vmem:[#allocation8 + $0x100] sm:$0xff]
        %v4101 = vld [vmem:[#allocation8 + $0x108] sm:$0xff]
        %v4102 = vld [vmem:[#allocation8 + $0x110] sm:$0xff]
        %v4103 = vld [vmem:[#allocation8 + $0x118] sm:$0xff]
        %v4104 = vld [vmem:[#allocation8 + $0x120] sm:$0xff]
        %v4105 = vld [vmem:[#allocation8 + $0x128] sm:$0xff]
        %v4106 = vld [vmem:[#allocation8 + $0x130] sm:$0xff]
        %v4107 = vld [vmem:[#allocation8 + $0x138] sm:$0xff]
        %v4108 = vld [vmem:[#allocation8 + $0x140] sm:$0xff]
        %v4109 = vld [vmem:[#allocation8 + $0x148] sm:$0xff]
        %v4110 = vld [vmem:[#allocation8 + $0x150] sm:$0xff]
        %v4111 = vld [vmem:[#allocation8 + $0x158] sm:$0xff]
        %v4112 = vld [vmem:[#allocation8 + $0x160] sm:$0xff]
        %v4113 = vld [vmem:[#allocation8 + $0x168] sm:$0xff]
        %v4114 = vld [vmem:[#allocation8 + $0x170] sm:$0xff]
        %v4115 = vld [vmem:[#allocation8 + $0x178] sm:$0xff]
        %v4116 = vld [vmem:[#allocation8 + $0x180] sm:$0xff]
        %v4117 = vld [vmem:[#allocation8 + $0x188] sm:$0xff]
        %v4118 = vld [vmem:[#allocation8 + $0x190] sm:$0xff]
        %v4119 = vld [vmem:[#allocation8 + $0x198] sm:$0xff]
        %v4120 = vld [vmem:[#allocation8 + $0x1a0] sm:$0xff]
        %v4121 = vld [vmem:[#allocation8 + $0x1a8] sm:$0xff]
        %v4122 = vld [vmem:[#allocation8 + $0x1b0] sm:$0xff]
        %v4123 = vld [vmem:[#allocation8 + $0x1b8] sm:$0xff]
        %v4124 = vld [vmem:[#allocation8 + $0x1c0] sm:$0xff]
        %v4125 = vld [vmem:[#allocation8 + $0x1c8] sm:$0xff]
        %v4126 = vld [vmem:[#allocation8 + $0x1d0] sm:$0xff]
        %v4127 = vld [vmem:[#allocation8 + $0x1d8] sm:$0xff]
        %v4128 = vld [vmem:[#allocation8 + $0x1e0] sm:$0xff]
        %v4129 = vld [vmem:[#allocation8 + $0x1e8] sm:$0xff]
        %v4130 = vld [vmem:[#allocation8 + $0x1f0] sm:$0xff]
        %v4131 = vld [vmem:[#allocation8 + $0x1f8] sm:$0xff]
        %v4132 = vld [vmem:[#allocation8 + $0x200] sm:$0xff]
        %v4133 = vld [vmem:[#allocation8 + $0x208] sm:$0xff]
        %v4134 = vld [vmem:[#allocation8 + $0x210] sm:$0xff]
        %v4135 = vld [vmem:[#allocation8 + $0x218] sm:$0xff]
        %v4136 = vld [vmem:[#allocation8 + $0x220] sm:$0xff]
        %v4137 = vld [vmem:[#allocation8 + $0x228] sm:$0xff]
        %v4138 = vld [vmem:[#allocation8 + $0x230] sm:$0xff]
        %v4139 = vld [vmem:[#allocation8 + $0x238] sm:$0xff]
        %v4140 = vld [vmem:[#allocation8 + $0x240] sm:$0xff]
        %v4141 = vld [vmem:[#allocation8 + $0x248] sm:$0xff]
        %v4142 = vld [vmem:[#allocation8 + $0x250] sm:$0xff]
        %v4143 = vld [vmem:[#allocation8 + $0x258] sm:$0xff]
        %v4144 = vld [vmem:[#allocation8 + $0x260] sm:$0xff]
        %v4145 = vld [vmem:[#allocation8 + $0x268] sm:$0xff]
        %v4146 = vld [vmem:[#allocation8 + $0x270] sm:$0xff]
        %v4147 = vld [vmem:[#allocation8 + $0x278] sm:$0xff]
        %v4148 = vld [vmem:[#allocation8 + $0x280] sm:$0xff]
        %v4149 = vld [vmem:[#allocation8 + $0x288] sm:$0xff]
        %v4150 = vld [vmem:[#allocation8 + $0x290] sm:$0xff]
        %v4151 = vld [vmem:[#allocation8 + $0x298] sm:$0xff]
        %v4152 = vld [vmem:[#allocation8 + $0x2a0] sm:$0xff]
        %v4153 = vld [vmem:[#allocation8 + $0x2a8] sm:$0xff]
        %v4154 = vld [vmem:[#allocation8 + $0x2b0] sm:$0xff]
        %v4155 = vld [vmem:[#allocation8 + $0x2b8] sm:$0xff]
        %v4156 = vld [vmem:[#allocation8 + $0x2c0] sm:$0xff]
        %v4157 = vld [vmem:[#allocation8 + $0x2c8] sm:$0xff]
        %v4158 = vld [vmem:[#allocation8 + $0x2d0] sm:$0xff]
        %v4159 = vld [vmem:[#allocation8 + $0x2d8] sm:$0xff]
        %v4160 = vld [vmem:[#allocation8 + $0x2e0] sm:$0xff]
        %v4161 = vld [vmem:[#allocation8 + $0x2e8] sm:$0xff]
        %v4162 = vld [vmem:[#allocation8 + $0x2f0] sm:$0xff]
        %v4163 = vld [vmem:[#allocation8 + $0x2f8] sm:$0xff]
        %v4164 = vld [vmem:[#allocation8 + $0x300] sm:$0xff]
        %v4165 = vld [vmem:[#allocation8 + $0x308] sm:$0xff]
        %v4166 = vld [vmem:[#allocation8 + $0x310] sm:$0xff]
        %v4167 = vld [vmem:[#allocation8 + $0x318] sm:$0xff]
        %v4168 = vld [vmem:[#allocation8 + $0x320] sm:$0xff]
        %v4169 = vld [vmem:[#allocation8 + $0x328] sm:$0xff]
        %v4170 = vld [vmem:[#allocation8 + $0x330] sm:$0xff]
        %v4171 = vld [vmem:[#allocation8 + $0x338] sm:$0xff]
        %v4172 = vld [vmem:[#allocation8 + $0x340] sm:$0xff]
        %v4173 = vld [vmem:[#allocation8 + $0x348] sm:$0xff]
        %v4174 = vld [vmem:[#allocation8 + $0x350] sm:$0xff]
        %v4175 = vld [vmem:[#allocation8 + $0x358] sm:$0xff]
        %v4176 = vld [vmem:[#allocation8 + $0x360] sm:$0xff]
        %v4177 = vld [vmem:[#allocation8 + $0x368] sm:$0xff]
        %v4178 = vld [vmem:[#allocation8 + $0x370] sm:$0xff]
        %v4179 = vld [vmem:[#allocation8 + $0x378] sm:$0xff]
        %v4180 = vld [vmem:[#allocation8 + $0x380] sm:$0xff]
        %v4181 = vld [vmem:[#allocation8 + $0x388] sm:$0xff]
        %v4182 = vld [vmem:[#allocation8 + $0x390] sm:$0xff]
        %v4183 = vld [vmem:[#allocation8 + $0x398] sm:$0xff]
        %v4184 = vld [vmem:[#allocation8 + $0x3a0] sm:$0xff]
        %v4185 = vld [vmem:[#allocation8 + $0x3a8] sm:$0xff]
        %v4186 = vld [vmem:[#allocation8 + $0x3b0] sm:$0xff]
        %v4187 = vld [vmem:[#allocation8 + $0x3b8] sm:$0xff]
        %v4188 = vld [vmem:[#allocation8 + $0x3c0] sm:$0xff]
        %v4189 = vld [vmem:[#allocation8 + $0x3c8] sm:$0xff]
        %v4190 = vld [vmem:[#allocation8 + $0x3d0] sm:$0xff]
        %v4191 = vld [vmem:[#allocation8 + $0x3d8] sm:$0xff]
        %v4192 = vld [vmem:[#allocation8 + $0x3e0] sm:$0xff]
        %v4193 = vld [vmem:[#allocation8 + $0x3e8] sm:$0xff]
        %v4194 = vld [vmem:[#allocation8 + $0x3f0] sm:$0xff]
        %v4195 = vld [vmem:[#allocation8 + $0x3f8] sm:$0xff]
        %v4196 = vld [vmem:[#allocation8 + $0x400] sm:$0xff]
        %v4197 = vld [vmem:[#allocation8 + $0x408] sm:$0xff]
        %v4198 = vld [vmem:[#allocation8 + $0x410] sm:$0xff]
        %v4199 = vld [vmem:[#allocation8 + $0x418] sm:$0xff]
        %v4200 = vld [vmem:[#allocation8 + $0x420] sm:$0xff]
        %v4201 = vld [vmem:[#allocation8 + $0x428] sm:$0xff]
        %v4202 = vld [vmem:[#allocation8 + $0x430] sm:$0xff]
        %v4203 = vld [vmem:[#allocation8 + $0x438] sm:$0xff]
        %v4204 = vld [vmem:[#allocation8 + $0x440] sm:$0xff]
        %v4205 = vld [vmem:[#allocation8 + $0x448] sm:$0xff]
        %v4206 = vld [vmem:[#allocation8 + $0x450] sm:$0xff]
        %v4207 = vld [vmem:[#allocation8 + $0x458] sm:$0xff]
        %v4208 = vld [vmem:[#allocation8 + $0x460] sm:$0xff]
        %v4209 = vld [vmem:[#allocation8 + $0x468] sm:$0xff]
        %v4210 = vld [vmem:[#allocation8 + $0x470] sm:$0xff]
        %v4211 = vld [vmem:[#allocation8 + $0x478] sm:$0xff]
        %v4212 = vld [vmem:[#allocation8 + $0x480] sm:$0xff]
        %v4213 = vld [vmem:[#allocation8 + $0x488] sm:$0xff]
        %v4214 = vld [vmem:[#allocation8 + $0x490] sm:$0xff]
        %v4215 = vld [vmem:[#allocation8 + $0x498] sm:$0xff]
        %v4216 = vld [vmem:[#allocation8 + $0x4a0] sm:$0xff]
        %v4217 = vld [vmem:[#allocation8 + $0x4a8] sm:$0xff]
        %v4218 = vld [vmem:[#allocation8 + $0x4b0] sm:$0xff]
        %v4219 = vld [vmem:[#allocation8 + $0x4b8] sm:$0xff]
        %v4220 = vld [vmem:[#allocation8 + $0x4c0] sm:$0xff]
        %v4221 = vld [vmem:[#allocation8 + $0x4c8] sm:$0xff]
        %v4222 = vld [vmem:[#allocation8 + $0x4d0] sm:$0xff]
        %v4223 = vld [vmem:[#allocation8 + $0x4d8] sm:$0xff]
        %v4224 = vld [vmem:[#allocation8 + $0x4e0] sm:$0xff]
        %v4225 = vld [vmem:[#allocation8 + $0x4e8] sm:$0xff]
        %v4226 = vld [vmem:[#allocation8 + $0x4f0] sm:$0xff]
        %v4227 = vld [vmem:[#allocation8 + $0x4f8] sm:$0xff]
        %v4228 = vld [vmem:[#allocation8 + $0x500] sm:$0xff]
        %v4229 = vld [vmem:[#allocation8 + $0x508] sm:$0xff]
        %v4230 = vld [vmem:[#allocation8 + $0x510] sm:$0xff]
        %v4231 = vld [vmem:[#allocation8 + $0x518] sm:$0xff]
        %v4232 = vld [vmem:[#allocation8 + $0x520] sm:$0xff]
        %v4233 = vld [vmem:[#allocation8 + $0x528] sm:$0xff]
        %v4234 = vld [vmem:[#allocation8 + $0x530] sm:$0xff]
        %v4235 = vld [vmem:[#allocation8 + $0x538] sm:$0xff]
        %v4236 = vld [vmem:[#allocation8 + $0x540] sm:$0xff]
        %v4237 = vld [vmem:[#allocation8 + $0x548] sm:$0xff]
        %v4238 = vld [vmem:[#allocation8 + $0x550] sm:$0xff]
        %v4239 = vld [vmem:[#allocation8 + $0x558] sm:$0xff]
        %v4240 = vld [vmem:[#allocation8 + $0x560] sm:$0xff]
        %v4241 = vld [vmem:[#allocation8 + $0x568] sm:$0xff]
        %v4242 = vld [vmem:[#allocation8 + $0x570] sm:$0xff]
        %v4243 = vld [vmem:[#allocation8 + $0x578] sm:$0xff]
        %v4244 = vld [vmem:[#allocation8 + $0x580] sm:$0xff]
        %v4245 = vld [vmem:[#allocation8 + $0x588] sm:$0xff]
        %v4246 = vld [vmem:[#allocation8 + $0x590] sm:$0xff]
        %v4247 = vld [vmem:[#allocation8 + $0x598] sm:$0xff]
        %v4248 = vld [vmem:[#allocation8 + $0x5a0] sm:$0xff]
        %v4249 = vld [vmem:[#allocation8 + $0x5a8] sm:$0xff]
        %v4250 = vld [vmem:[#allocation8 + $0x5b0] sm:$0xff]
        %v4251 = vld [vmem:[#allocation8 + $0x5b8] sm:$0xff]
        %v4252 = vld [vmem:[#allocation8 + $0x5c0] sm:$0xff]
        %v4253 = vld [vmem:[#allocation8 + $0x5c8] sm:$0xff]
        %v4254 = vld [vmem:[#allocation8 + $0x5d0] sm:$0xff]
        %v4255 = vld [vmem:[#allocation8 + $0x5d8] sm:$0xff]
        %v4256 = vld [vmem:[#allocation8 + $0x5e0] sm:$0xff]
        %v4257 = vld [vmem:[#allocation8 + $0x5e8] sm:$0xff]
        %v4258 = vld [vmem:[#allocation8 + $0x5f0] sm:$0xff]
        %v4259 = vld [vmem:[#allocation8 + $0x5f8] sm:$0xff]
        %v4260 = vld [vmem:[#allocation8 + $0x600] sm:$0xff]
        %v4261 = vld [vmem:[#allocation8 + $0x608] sm:$0xff]
        %v4262 = vld [vmem:[#allocation8 + $0x610] sm:$0xff]
        %v4263 = vld [vmem:[#allocation8 + $0x618] sm:$0xff]
        %v4264 = vld [vmem:[#allocation8 + $0x620] sm:$0xff]
        %v4265 = vld [vmem:[#allocation8 + $0x628] sm:$0xff]
        %v4266 = vld [vmem:[#allocation8 + $0x630] sm:$0xff]
        %v4267 = vld [vmem:[#allocation8 + $0x638] sm:$0xff]
        %v4268 = vld [vmem:[#allocation8 + $0x640] sm:$0xff]
        %v4269 = vld [vmem:[#allocation8 + $0x648] sm:$0xff]
        %v4270 = vld [vmem:[#allocation8 + $0x650] sm:$0xff]
        %v4271 = vld [vmem:[#allocation8 + $0x658] sm:$0xff]
        %v4272 = vld [vmem:[#allocation8 + $0x660] sm:$0xff]
        %v4273 = vld [vmem:[#allocation8 + $0x668] sm:$0xff]
        %v4274 = vld [vmem:[#allocation8 + $0x670] sm:$0xff]
        %v4275 = vld [vmem:[#allocation8 + $0x678] sm:$0xff]
        %v4276 = vld [vmem:[#allocation8 + $0x680] sm:$0xff]
        %v4277 = vld [vmem:[#allocation8 + $0x688] sm:$0xff]
        %v4278 = vld [vmem:[#allocation8 + $0x690] sm:$0xff]
        %v4279 = vld [vmem:[#allocation8 + $0x698] sm:$0xff]
        %v4280 = vld [vmem:[#allocation8 + $0x6a0] sm:$0xff]
        %v4281 = vld [vmem:[#allocation8 + $0x6a8] sm:$0xff]
        %v4282 = vld [vmem:[#allocation8 + $0x6b0] sm:$0xff]
        %v4283 = vld [vmem:[#allocation8 + $0x6b8] sm:$0xff]
        %v4284 = vld [vmem:[#allocation8 + $0x6c0] sm:$0xff]
        %v4285 = vld [vmem:[#allocation8 + $0x6c8] sm:$0xff]
        %v4286 = vld [vmem:[#allocation8 + $0x6d0] sm:$0xff]
        %v4287 = vld [vmem:[#allocation8 + $0x6d8] sm:$0xff]
        %v4288 = vld [vmem:[#allocation8 + $0x6e0] sm:$0xff]
        %v4289 = vld [vmem:[#allocation8 + $0x6e8] sm:$0xff]
        %v4290 = vld [vmem:[#allocation8 + $0x6f0] sm:$0xff]
        %v4291 = vld [vmem:[#allocation8 + $0x6f8] sm:$0xff]
        %v4292 = vld [vmem:[#allocation8 + $0x700] sm:$0xff]
        %v4293 = vld [vmem:[#allocation8 + $0x708] sm:$0xff]
        %v4294 = vld [vmem:[#allocation8 + $0x710] sm:$0xff]
        %v4295 = vld [vmem:[#allocation8 + $0x718] sm:$0xff]
        %v4296 = vld [vmem:[#allocation8 + $0x720] sm:$0xff]
        %v4297 = vld [vmem:[#allocation8 + $0x728] sm:$0xff]
        %v4298 = vld [vmem:[#allocation8 + $0x730] sm:$0xff]
        %v4299 = vld [vmem:[#allocation8 + $0x738] sm:$0xff]
        %v4300 = vld [vmem:[#allocation8 + $0x740] sm:$0xff]
        %v4301 = vld [vmem:[#allocation8 + $0x748] sm:$0xff]
        %v4302 = vld [vmem:[#allocation8 + $0x750] sm:$0xff]
        %v4303 = vld [vmem:[#allocation8 + $0x758] sm:$0xff]
        %v4304 = vld [vmem:[#allocation8 + $0x760] sm:$0xff]
        %v4305 = vld [vmem:[#allocation8 + $0x768] sm:$0xff]
        %v4306 = vld [vmem:[#allocation8 + $0x770] sm:$0xff]
        %v4307 = vld [vmem:[#allocation8 + $0x778] sm:$0xff]
        %v4308 = vld [vmem:[#allocation8 + $0x780] sm:$0xff]
        %v4309 = vld [vmem:[#allocation8 + $0x788] sm:$0xff]
        %v4310 = vld [vmem:[#allocation8 + $0x790] sm:$0xff]
        %v4311 = vld [vmem:[#allocation8 + $0x798] sm:$0xff]
        %v4312 = vld [vmem:[#allocation8 + $0x7a0] sm:$0xff]
        %v4313 = vld [vmem:[#allocation8 + $0x7a8] sm:$0xff]
        %v4314 = vld [vmem:[#allocation8 + $0x7b0] sm:$0xff]
        %v4315 = vld [vmem:[#allocation8 + $0x7b8] sm:$0xff]
        %v4316 = vld [vmem:[#allocation8 + $0x7c0] sm:$0xff]
        %v4317 = vld [vmem:[#allocation8 + $0x7c8] sm:$0xff]
        %v4318 = vld [vmem:[#allocation8 + $0x7d0] sm:$0xff]
        %v4319 = vld [vmem:[#allocation8 + $0x7d8] sm:$0xff]
        %v4320 = vld [vmem:[#allocation8 + $0x7e0] sm:$0xff]
        %v4321 = vld [vmem:[#allocation8 + $0x7e8] sm:$0xff]
        %v4322 = vld [vmem:[#allocation8 + $0x7f0] sm:$0xff]
        %v4323 = vld [vmem:[#allocation8 + $0x7f8] sm:$0xff]
        %v4324 = vld [vmem:[#allocation8 + $0x800] sm:$0xff]
        %v4325 = vld [vmem:[#allocation8 + $0x808] sm:$0xff]
        %v4326 = vld [vmem:[#allocation8 + $0x810] sm:$0xff]
        %v4327 = vld [vmem:[#allocation8 + $0x818] sm:$0xff]
        %v4328 = vld [vmem:[#allocation8 + $0x820] sm:$0xff]
        %v4329 = vld [vmem:[#allocation8 + $0x828] sm:$0xff]
        %v4330 = vld [vmem:[#allocation8 + $0x830] sm:$0xff]
        %v4331 = vld [vmem:[#allocation8 + $0x838] sm:$0xff]
        %v4332 = vld [vmem:[#allocation8 + $0x840] sm:$0xff]
        %v4333 = vld [vmem:[#allocation8 + $0x848] sm:$0xff]
        %v4334 = vld [vmem:[#allocation8 + $0x850] sm:$0xff]
        %v4335 = vld [vmem:[#allocation8 + $0x858] sm:$0xff]
        %v4336 = vld [vmem:[#allocation8 + $0x860] sm:$0xff]
        %v4337 = vld [vmem:[#allocation8 + $0x868] sm:$0xff]
        %v4338 = vld [vmem:[#allocation8 + $0x870] sm:$0xff]
        %v4339 = vld [vmem:[#allocation8 + $0x878] sm:$0xff]
        %v4340 = vld [vmem:[#allocation8 + $0x880] sm:$0xff]
        %v4341 = vld [vmem:[#allocation8 + $0x888] sm:$0xff]
        %v4342 = vld [vmem:[#allocation8 + $0x890] sm:$0xff]
        %v4343 = vld [vmem:[#allocation8 + $0x898] sm:$0xff]
        %v4344 = vld [vmem:[#allocation8 + $0x8a0] sm:$0xff]
        %v4345 = vld [vmem:[#allocation8 + $0x8a8] sm:$0xff]
        %v4346 = vld [vmem:[#allocation8 + $0x8b0] sm:$0xff]
        %v4347 = vld [vmem:[#allocation8 + $0x8b8] sm:$0xff]
        %v4348 = vld [vmem:[#allocation8 + $0x8c0] sm:$0xff]
        %v4349 = vld [vmem:[#allocation8 + $0x8c8] sm:$0xff]
        %v4350 = vld [vmem:[#allocation8 + $0x8d0] sm:$0xff]
        %v4351 = vld [vmem:[#allocation8 + $0x8d8] sm:$0xff]
        %v4352 = vld [vmem:[#allocation8 + $0x8e0] sm:$0xff]
        %v4353 = vld [vmem:[#allocation8 + $0x8e8] sm:$0xff]
        %v4354 = vld [vmem:[#allocation8 + $0x8f0] sm:$0xff]
        %v4355 = vld [vmem:[#allocation8 + $0x8f8] sm:$0xff]
        %v4356 = vld [vmem:[#allocation8 + $0x900] sm:$0xff]
        %v4357 = vld [vmem:[#allocation8 + $0x908] sm:$0xff]
        %v4358 = vld [vmem:[#allocation8 + $0x910] sm:$0xff]
        %v4359 = vld [vmem:[#allocation8 + $0x918] sm:$0xff]
        %v4360 = vld [vmem:[#allocation8 + $0x920] sm:$0xff]
        %v4361 = vld [vmem:[#allocation8 + $0x928] sm:$0xff]
        %v4362 = vld [vmem:[#allocation8 + $0x930] sm:$0xff]
        %v4363 = vld [vmem:[#allocation8 + $0x938] sm:$0xff]
        %v4364 = vld [vmem:[#allocation8 + $0x940] sm:$0xff]
        %v4365 = vld [vmem:[#allocation8 + $0x948] sm:$0xff]
        %v4366 = vld [vmem:[#allocation8 + $0x950] sm:$0xff]
        %v4367 = vld [vmem:[#allocation8 + $0x958] sm:$0xff]
        %v4368 = vld [vmem:[#allocation8 + $0x960] sm:$0xff]
        %v4369 = vld [vmem:[#allocation8 + $0x968] sm:$0xff]
        %v4370 = vld [vmem:[#allocation8 + $0x970] sm:$0xff]
        %v4371 = vld [vmem:[#allocation8 + $0x978] sm:$0xff]
        %v4372 = vld [vmem:[#allocation8 + $0x980] sm:$0xff]
        %v4373 = vld [vmem:[#allocation8 + $0x988] sm:$0xff]
        %v4374 = vld [vmem:[#allocation8 + $0x990] sm:$0xff]
        %v4375 = vld [vmem:[#allocation8 + $0x998] sm:$0xff]
        %v4376 = vld [vmem:[#allocation8 + $0x9a0] sm:$0xff]
        %v4377 = vld [vmem:[#allocation8 + $0x9a8] sm:$0xff]
        %v4378 = vld [vmem:[#allocation8 + $0x9b0] sm:$0xff]
        %v4379 = vld [vmem:[#allocation8 + $0x9b8] sm:$0xff]
        %v4380 = vld [vmem:[#allocation8 + $0x9c0] sm:$0xff]
        %v4381 = vld [vmem:[#allocation8 + $0x9c8] sm:$0xff]
        %v4382 = vld [vmem:[#allocation8 + $0x9d0] sm:$0xff]
        %v4383 = vld [vmem:[#allocation8 + $0x9d8] sm:$0xff]
        %v4384 = vld [vmem:[#allocation8 + $0x9e0] sm:$0xff]
        %v4385 = vld [vmem:[#allocation8 + $0x9e8] sm:$0xff]
        %v4386 = vld [vmem:[#allocation8 + $0x9f0] sm:$0xff]
        %v4387 = vld [vmem:[#allocation8 + $0x9f8] sm:$0xff]
        %v4388 = vld [vmem:[#allocation8 + $0xa00] sm:$0xff]
        %v4389 = vld [vmem:[#allocation8 + $0xa08] sm:$0xff]
        %v4390 = vld [vmem:[#allocation8 + $0xa10] sm:$0xff]
        %v4391 = vld [vmem:[#allocation8 + $0xa18] sm:$0xff]
        %v4392 = vld [vmem:[#allocation8 + $0xa20] sm:$0xff]
        %v4393 = vld [vmem:[#allocation8 + $0xa28] sm:$0xff]
        %v4394 = vld [vmem:[#allocation8 + $0xa30] sm:$0xff]
        %v4395 = vld [vmem:[#allocation8 + $0xa38] sm:$0xff]
        %v4396 = vld [vmem:[#allocation8 + $0xa40] sm:$0xff]
        %v4397 = vld [vmem:[#allocation8 + $0xa48] sm:$0xff]
        %v4398 = vld [vmem:[#allocation8 + $0xa50] sm:$0xff]
        %v4399 = vld [vmem:[#allocation8 + $0xa58] sm:$0xff]
        %v4400 = vld [vmem:[#allocation8 + $0xa60] sm:$0xff]
        %v4401 = vld [vmem:[#allocation8 + $0xa68] sm:$0xff]
        %v4402 = vld [vmem:[#allocation8 + $0xa70] sm:$0xff]
        %v4403 = vld [vmem:[#allocation8 + $0xa78] sm:$0xff]
        %v4404 = vld [vmem:[#allocation8 + $0xa80] sm:$0xff]
        %v4405 = vld [vmem:[#allocation8 + $0xa88] sm:$0xff]
        %v4406 = vld [vmem:[#allocation8 + $0xa90] sm:$0xff]
        %v4407 = vld [vmem:[#allocation8 + $0xa98] sm:$0xff]
        %v4408 = vld [vmem:[#allocation8 + $0xaa0] sm:$0xff]
        %v4409 = vld [vmem:[#allocation8 + $0xaa8] sm:$0xff]
        %v4410 = vld [vmem:[#allocation8 + $0xab0] sm:$0xff]
        %v4411 = vld [vmem:[#allocation8 + $0xab8] sm:$0xff]
        %v4412 = vld [vmem:[#allocation8 + $0xac0] sm:$0xff]
        %v4413 = vld [vmem:[#allocation8 + $0xac8] sm:$0xff]
        %v4414 = vld [vmem:[#allocation8 + $0xad0] sm:$0xff]
        %v4415 = vld [vmem:[#allocation8 + $0xad8] sm:$0xff]
        %v4416 = vld [vmem:[#allocation8 + $0xae0] sm:$0xff]
        %v4417 = vld [vmem:[#allocation8 + $0xae8] sm:$0xff]
        %v4418 = vld [vmem:[#allocation8 + $0xaf0] sm:$0xff]
        %v4419 = vld [vmem:[#allocation8 + $0xaf8] sm:$0xff]
        %v4420 = vld [vmem:[#allocation8 + $0xb00] sm:$0xff]
        %v4421 = vld [vmem:[#allocation8 + $0xb08] sm:$0xff]
        %v4422 = vld [vmem:[#allocation8 + $0xb10] sm:$0xff]
        %v4423 = vld [vmem:[#allocation8 + $0xb18] sm:$0xff]
        %v4424 = vld [vmem:[#allocation8 + $0xb20] sm:$0xff]
        %v4425 = vld [vmem:[#allocation8 + $0xb28] sm:$0xff]
        %v4426 = vld [vmem:[#allocation8 + $0xb30] sm:$0xff]
        %v4427 = vld [vmem:[#allocation8 + $0xb38] sm:$0xff]
        %v4428 = vld [vmem:[#allocation8 + $0xb40] sm:$0xff]
        %v4429 = vld [vmem:[#allocation8 + $0xb48] sm:$0xff]
        %v4430 = vld [vmem:[#allocation8 + $0xb50] sm:$0xff]
        %v4431 = vld [vmem:[#allocation8 + $0xb58] sm:$0xff]
        %v4432 = vld [vmem:[#allocation8 + $0xb60] sm:$0xff]
        %v4433 = vld [vmem:[#allocation8 + $0xb68] sm:$0xff]
        %v4434 = vld [vmem:[#allocation8 + $0xb70] sm:$0xff]
        %v4435 = vld [vmem:[#allocation8 + $0xb78] sm:$0xff]
        %v4436 = vld [vmem:[#allocation8 + $0xb80] sm:$0xff]
        %v4437 = vld [vmem:[#allocation8 + $0xb88] sm:$0xff]
        %v4438 = vld [vmem:[#allocation8 + $0xb90] sm:$0xff]
        %v4439 = vld [vmem:[#allocation8 + $0xb98] sm:$0xff]
        %v4440 = vld [vmem:[#allocation8 + $0xba0] sm:$0xff]
        %v4441 = vld [vmem:[#allocation8 + $0xba8] sm:$0xff]
        %v4442 = vld [vmem:[#allocation8 + $0xbb0] sm:$0xff]
        %v4443 = vld [vmem:[#allocation8 + $0xbb8] sm:$0xff]
        %v4444 = vld [vmem:[#allocation8 + $0xbc0] sm:$0xff]
        %v4445 = vld [vmem:[#allocation8 + $0xbc8] sm:$0xff]
        %v4446 = vld [vmem:[#allocation8 + $0xbd0] sm:$0xff]
        %v4447 = vld [vmem:[#allocation8 + $0xbd8] sm:$0xff]
        %v4448 = vld [vmem:[#allocation8 + $0xbe0] sm:$0xff]
        %v4449 = vld [vmem:[#allocation8 + $0xbe8] sm:$0xff]
        %v4450 = vld [vmem:[#allocation8 + $0xbf0] sm:$0xff]
        %v4451 = vld [vmem:[#allocation8 + $0xbf8] sm:$0xff]
        %v4452 = vld [vmem:[#allocation8 + $0xc00] sm:$0xff]
        %v4453 = vld [vmem:[#allocation8 + $0xc08] sm:$0xff]
        %v4454 = vld [vmem:[#allocation8 + $0xc10] sm:$0xff]
        %v4455 = vld [vmem:[#allocation8 + $0xc18] sm:$0xff]
        %v4456 = vld [vmem:[#allocation8 + $0xc20] sm:$0xff]
        %v4457 = vld [vmem:[#allocation8 + $0xc28] sm:$0xff]
        %v4458 = vld [vmem:[#allocation8 + $0xc30] sm:$0xff]
        %v4459 = vld [vmem:[#allocation8 + $0xc38] sm:$0xff]
        %v4460 = vld [vmem:[#allocation8 + $0xc40] sm:$0xff]
        %v4461 = vld [vmem:[#allocation8 + $0xc48] sm:$0xff]
        %v4462 = vld [vmem:[#allocation8 + $0xc50] sm:$0xff]
        %v4463 = vld [vmem:[#allocation8 + $0xc58] sm:$0xff]
        %v4464 = vld [vmem:[#allocation8 + $0xc60] sm:$0xff]
        %v4465 = vld [vmem:[#allocation8 + $0xc68] sm:$0xff]
        %v4466 = vld [vmem:[#allocation8 + $0xc70] sm:$0xff]
        %v4467 = vld [vmem:[#allocation8 + $0xc78] sm:$0xff]
        %v4468 = vld [vmem:[#allocation8 + $0xc80] sm:$0xff]
        %v4469 = vld [vmem:[#allocation8 + $0xc88] sm:$0xff]
        %v4470 = vld [vmem:[#allocation8 + $0xc90] sm:$0xff]
        %v4471 = vld [vmem:[#allocation8 + $0xc98] sm:$0xff]
        %v4472 = vld [vmem:[#allocation8 + $0xca0] sm:$0xff]
        %v4473 = vld [vmem:[#allocation8 + $0xca8] sm:$0xff]
        %v4474 = vld [vmem:[#allocation8 + $0xcb0] sm:$0xff]
        %v4475 = vld [vmem:[#allocation8 + $0xcb8] sm:$0xff]
        %v4476 = vld [vmem:[#allocation8 + $0xcc0] sm:$0xff]
        %v4477 = vld [vmem:[#allocation8 + $0xcc8] sm:$0xff]
        %v4478 = vld [vmem:[#allocation8 + $0xcd0] sm:$0xff]
        %v4479 = vld [vmem:[#allocation8 + $0xcd8] sm:$0xff]
        %v4480 = vld [vmem:[#allocation8 + $0xce0] sm:$0xff]
        %v4481 = vld [vmem:[#allocation8 + $0xce8] sm:$0xff]
        %v4482 = vld [vmem:[#allocation8 + $0xcf0] sm:$0xff]
        %v4483 = vld [vmem:[#allocation8 + $0xcf8] sm:$0xff]
        %v4484 = vld [vmem:[#allocation8 + $0xd00] sm:$0xff]
        %v4485 = vld [vmem:[#allocation8 + $0xd08] sm:$0xff]
        %v4486 = vld [vmem:[#allocation8 + $0xd10] sm:$0xff]
        %v4487 = vld [vmem:[#allocation8 + $0xd18] sm:$0xff]
        %v4488 = vld [vmem:[#allocation8 + $0xd20] sm:$0xff]
        %v4489 = vld [vmem:[#allocation8 + $0xd28] sm:$0xff]
        %v4490 = vld [vmem:[#allocation8 + $0xd30] sm:$0xff]
        %v4491 = vld [vmem:[#allocation8 + $0xd38] sm:$0xff]
        %v4492 = vld [vmem:[#allocation8 + $0xd40] sm:$0xff]
        %v4493 = vld [vmem:[#allocation8 + $0xd48] sm:$0xff]
        %v4494 = vld [vmem:[#allocation8 + $0xd50] sm:$0xff]
        %v4495 = vld [vmem:[#allocation8 + $0xd58] sm:$0xff]
        %v4496 = vld [vmem:[#allocation8 + $0xd60] sm:$0xff]
        %v4497 = vld [vmem:[#allocation8 + $0xd68] sm:$0xff]
        %v4498 = vld [vmem:[#allocation8 + $0xd70] sm:$0xff]
        %v4499 = vld [vmem:[#allocation8 + $0xd78] sm:$0xff]
        %v4500 = vld [vmem:[#allocation8 + $0xd80] sm:$0xff]
        %v4501 = vld [vmem:[#allocation8 + $0xd88] sm:$0xff]
        %v4502 = vld [vmem:[#allocation8 + $0xd90] sm:$0xff]
        %v4503 = vld [vmem:[#allocation8 + $0xd98] sm:$0xff]
        %v4504 = vld [vmem:[#allocation8 + $0xda0] sm:$0xff]
        %v4505 = vld [vmem:[#allocation8 + $0xda8] sm:$0xff]
        %v4506 = vld [vmem:[#allocation8 + $0xdb0] sm:$0xff]
        %v4507 = vld [vmem:[#allocation8 + $0xdb8] sm:$0xff]
        %v4508 = vld [vmem:[#allocation8 + $0xdc0] sm:$0xff]
        %v4509 = vld [vmem:[#allocation8 + $0xdc8] sm:$0xff]
        %v4510 = vld [vmem:[#allocation8 + $0xdd0] sm:$0xff]
        %v4511 = vld [vmem:[#allocation8 + $0xdd8] sm:$0xff]
        %v4512 = vld [vmem:[#allocation8 + $0xde0] sm:$0xff]
        %v4513 = vld [vmem:[#allocation8 + $0xde8] sm:$0xff]
        %v4514 = vld [vmem:[#allocation8 + $0xdf0] sm:$0xff]
        %v4515 = vld [vmem:[#allocation8 + $0xdf8] sm:$0xff]
        %v4516 = vld [vmem:[#allocation8 + $0xe00] sm:$0xff]
        %v4517 = vld [vmem:[#allocation8 + $0xe08] sm:$0xff]
        %v4518 = vld [vmem:[#allocation8 + $0xe10] sm:$0xff]
        %v4519 = vld [vmem:[#allocation8 + $0xe18] sm:$0xff]
        %v4520 = vld [vmem:[#allocation8 + $0xe20] sm:$0xff]
        %v4521 = vld [vmem:[#allocation8 + $0xe28] sm:$0xff]
        %v4522 = vld [vmem:[#allocation8 + $0xe30] sm:$0xff]
        %v4523 = vld [vmem:[#allocation8 + $0xe38] sm:$0xff]
        %v4524 = vld [vmem:[#allocation8 + $0xe40] sm:$0xff]
        %v4525 = vld [vmem:[#allocation8 + $0xe48] sm:$0xff]
        %v4526 = vld [vmem:[#allocation8 + $0xe50] sm:$0xff]
        %v4527 = vld [vmem:[#allocation8 + $0xe58] sm:$0xff]
        %v4528 = vld [vmem:[#allocation8 + $0xe60] sm:$0xff]
        %v4529 = vld [vmem:[#allocation8 + $0xe68] sm:$0xff]
        %v4530 = vld [vmem:[#allocation8 + $0xe70] sm:$0xff]
        %v4531 = vld [vmem:[#allocation8 + $0xe78] sm:$0xff]
        %v4532 = vld [vmem:[#allocation8 + $0xe80] sm:$0xff]
        %v4533 = vld [vmem:[#allocation8 + $0xe88] sm:$0xff]
        %v4534 = vld [vmem:[#allocation8 + $0xe90] sm:$0xff]
        %v4535 = vld [vmem:[#allocation8 + $0xe98] sm:$0xff]
        %v4536 = vld [vmem:[#allocation8 + $0xea0] sm:$0xff]
        %v4537 = vld [vmem:[#allocation8 + $0xea8] sm:$0xff]
        %v4538 = vld [vmem:[#allocation8 + $0xeb0] sm:$0xff]
        %v4539 = vld [vmem:[#allocation8 + $0xeb8] sm:$0xff]
        %v4540 = vld [vmem:[#allocation8 + $0xec0] sm:$0xff]
        %v4541 = vld [vmem:[#allocation8 + $0xec8] sm:$0xff]
        %v4542 = vld [vmem:[#allocation8 + $0xed0] sm:$0xff]
        %v4543 = vld [vmem:[#allocation8 + $0xed8] sm:$0xff]
        %v4544 = vld [vmem:[#allocation8 + $0xee0] sm:$0xff]
        %v4545 = vld [vmem:[#allocation8 + $0xee8] sm:$0xff]
        %v4546 = vld [vmem:[#allocation8 + $0xef0] sm:$0xff]
        %v4547 = vld [vmem:[#allocation8 + $0xef8] sm:$0xff]
        %v4548 = vld [vmem:[#allocation8 + $0xf00] sm:$0xff]
        %v4549 = vld [vmem:[#allocation8 + $0xf08] sm:$0xff]
        %v4550 = vld [vmem:[#allocation8 + $0xf10] sm:$0xff]
        %v4551 = vld [vmem:[#allocation8 + $0xf18] sm:$0xff]
        %v4552 = vld [vmem:[#allocation8 + $0xf20] sm:$0xff]
        %v4553 = vld [vmem:[#allocation8 + $0xf28] sm:$0xff]
        %v4554 = vld [vmem:[#allocation8 + $0xf30] sm:$0xff]
        %v4555 = vld [vmem:[#allocation8 + $0xf38] sm:$0xff]
        %v4556 = vld [vmem:[#allocation8 + $0xf40] sm:$0xff]
        %v4557 = vld [vmem:[#allocation8 + $0xf48] sm:$0xff]
        %v4558 = vld [vmem:[#allocation8 + $0xf50] sm:$0xff]
        %v4559 = vld [vmem:[#allocation8 + $0xf58] sm:$0xff]
        %v4560 = vld [vmem:[#allocation8 + $0xf60] sm:$0xff]
        %v4561 = vld [vmem:[#allocation8 + $0xf68] sm:$0xff]
        %v4562 = vld [vmem:[#allocation8 + $0xf70] sm:$0xff]
        %v4563 = vld [vmem:[#allocation8 + $0xf78] sm:$0xff]
        %v4564 = vld [vmem:[#allocation8 + $0xf80] sm:$0xff]
        %v4565 = vld [vmem:[#allocation8 + $0xf88] sm:$0xff]
        %v4566 = vld [vmem:[#allocation8 + $0xf90] sm:$0xff]
        %v4567 = vld [vmem:[#allocation8 + $0xf98] sm:$0xff]
        %v4568 = vld [vmem:[#allocation8 + $0xfa0] sm:$0xff]
        %v4569 = vld [vmem:[#allocation8 + $0xfa8] sm:$0xff]
        %v4570 = vld [vmem:[#allocation8 + $0xfb0] sm:$0xff]
        %v4571 = vld [vmem:[#allocation8 + $0xfb8] sm:$0xff]
        %v4572 = vld [vmem:[#allocation8 + $0xfc0] sm:$0xff]
        %v4573 = vld [vmem:[#allocation8 + $0xfc8] sm:$0xff]
        %v4574 = vld [vmem:[#allocation8 + $0xfd0] sm:$0xff]
        %v4575 = vld [vmem:[#allocation8 + $0xfd8] sm:$0xff]
        %v4576 = vld [vmem:[#allocation8 + $0xfe0] sm:$0xff]
        %v4577 = vld [vmem:[#allocation8 + $0xfe8] sm:$0xff]
        %v4578 = vld [vmem:[#allocation8 + $0xff0] sm:$0xff]
        %v4579 = vld [vmem:[#allocation8 + $0xff8] sm:$0xff]
        %v4580 = vld [vmem:[#allocation10] sm:$0xff]
        %v4582 = vlaneseq
        %v4583 = vshrl.u32 %v4582, 7
        %v4584 = vsub.s32 0, %v4583
        %v4585 = vrot.slane %v4580, %v4584
        %v4586 = vlaneseq
        %v4587 = vshrl.u32 %v4586, 7
        %v4588 = vsub.s32 1, %v4587
        %v4589 = vrot.slane %v4580, %v4588
        %v4590 = vlaneseq
        %v4591 = vshrl.u32 %v4590, 7
        %v4592 = vsub.s32 2, %v4591
        %v4593 = vrot.slane %v4580, %v4592
        %v4594 = vlaneseq
        %v4595 = vshrl.u32 %v4594, 7
        %v4596 = vsub.s32 3, %v4595
        %v4597 = vrot.slane %v4580, %v4596
        %v4598 = vlaneseq
        %v4599 = vshrl.u32 %v4598, 7
        %v4600 = vsub.s32 4, %v4599
        %v4601 = vrot.slane %v4580, %v4600
        %v4602 = vlaneseq
        %v4603 = vshrl.u32 %v4602, 7
        %v4604 = vsub.s32 5, %v4603
        %v4605 = vrot.slane %v4580, %v4604
        %v4606 = vlaneseq
        %v4607 = vshrl.u32 %v4606, 7
        %v4608 = vsub.s32 6, %v4607
        %v4609 = vrot.slane %v4580, %v4608
        %v4610 = vlaneseq
        %v4611 = vshrl.u32 %v4610, 7
        %v4612 = vsub.s32 7, %v4611
        %v4613 = vrot.slane %v4580, %v4612
        %v5134 = vunpack.c.l.b16 %v4068
        %v5135 = vunpack.c.h.b16 %v4068
        %v5136 = vunpack.c.l.b16 %v4069
        %v5137 = vunpack.c.h.b16 %v4069
        %v5138 = vunpack.c.l.b16 %v4070
        %v5139 = vunpack.c.h.b16 %v4070
        %v5140 = vunpack.c.l.b16 %v4071
        %v5141 = vunpack.c.h.b16 %v4071
        %v5142 = vunpack.c.l.b16 %v4072
        %v5143 = vunpack.c.h.b16 %v4072
        %v5144 = vunpack.c.l.b16 %v4073
        %v5145 = vunpack.c.h.b16 %v4073
        %v5146 = vunpack.c.l.b16 %v4074
        %v5147 = vunpack.c.h.b16 %v4074
        %v5148 = vunpack.c.l.b16 %v4075
        %v5149 = vunpack.c.h.b16 %v4075
        %v5150 = vunpack.c.l.b16 %v4076
        %v5151 = vunpack.c.h.b16 %v4076
        %v5152 = vunpack.c.l.b16 %v4077
        %v5153 = vunpack.c.h.b16 %v4077
        %v5154 = vunpack.c.l.b16 %v4078
        %v5155 = vunpack.c.h.b16 %v4078
        %v5156 = vunpack.c.l.b16 %v4079
        %v5157 = vunpack.c.h.b16 %v4079
        %v5158 = vunpack.c.l.b16 %v4080
        %v5159 = vunpack.c.h.b16 %v4080
        %v5160 = vunpack.c.l.b16 %v4081
        %v5161 = vunpack.c.h.b16 %v4081
        %v5162 = vunpack.c.l.b16 %v4082
        %v5163 = vunpack.c.h.b16 %v4082
        %v5164 = vunpack.c.l.b16 %v4083
        %v5165 = vunpack.c.h.b16 %v4083
        %v5166 = vunpack.c.l.b16 %v4084
        %v5167 = vunpack.c.h.b16 %v4084
        %v5168 = vunpack.c.l.b16 %v4085
        %v5169 = vunpack.c.h.b16 %v4085
        %v5170 = vunpack.c.l.b16 %v4086
        %v5171 = vunpack.c.h.b16 %v4086
        %v5172 = vunpack.c.l.b16 %v4087
        %v5173 = vunpack.c.h.b16 %v4087
        %v5174 = vunpack.c.l.b16 %v4088
        %v5175 = vunpack.c.h.b16 %v4088
        %v5176 = vunpack.c.l.b16 %v4089
        %v5177 = vunpack.c.h.b16 %v4089
        %v5178 = vunpack.c.l.b16 %v4090
        %v5179 = vunpack.c.h.b16 %v4090
        %v5180 = vunpack.c.l.b16 %v4091
        %v5181 = vunpack.c.h.b16 %v4091
        %v5182 = vunpack.c.l.b16 %v4092
        %v5183 = vunpack.c.h.b16 %v4092
        %v5184 = vunpack.c.l.b16 %v4093
        %v5185 = vunpack.c.h.b16 %v4093
        %v5186 = vunpack.c.l.b16 %v4094
        %v5187 = vunpack.c.h.b16 %v4094
        %v5188 = vunpack.c.l.b16 %v4095
        %v5189 = vunpack.c.h.b16 %v4095
        %v5190 = vunpack.c.l.b16 %v4096
        %v5191 = vunpack.c.h.b16 %v4096
        %v5192 = vunpack.c.l.b16 %v4097
        %v5193 = vunpack.c.h.b16 %v4097
        %v5194 = vunpack.c.l.b16 %v4098
        %v5195 = vunpack.c.h.b16 %v4098
        %v5196 = vunpack.c.l.b16 %v4099
        %v5197 = vunpack.c.h.b16 %v4099
        %v5198 = vunpack.c.l.b16 %v4100
        %v5199 = vunpack.c.h.b16 %v4100
        %v5200 = vunpack.c.l.b16 %v4101
        %v5201 = vunpack.c.h.b16 %v4101
        %v5202 = vunpack.c.l.b16 %v4102
        %v5203 = vunpack.c.h.b16 %v4102
        %v5204 = vunpack.c.l.b16 %v4103
        %v5205 = vunpack.c.h.b16 %v4103
        %v5206 = vunpack.c.l.b16 %v4104
        %v5207 = vunpack.c.h.b16 %v4104
        %v5208 = vunpack.c.l.b16 %v4105
        %v5209 = vunpack.c.h.b16 %v4105
        %v5210 = vunpack.c.l.b16 %v4106
        %v5211 = vunpack.c.h.b16 %v4106
        %v5212 = vunpack.c.l.b16 %v4107
        %v5213 = vunpack.c.h.b16 %v4107
        %v5214 = vunpack.c.l.b16 %v4108
        %v5215 = vunpack.c.h.b16 %v4108
        %v5216 = vunpack.c.l.b16 %v4109
        %v5217 = vunpack.c.h.b16 %v4109
        %v5218 = vunpack.c.l.b16 %v4110
        %v5219 = vunpack.c.h.b16 %v4110
        %v5220 = vunpack.c.l.b16 %v4111
        %v5221 = vunpack.c.h.b16 %v4111
        %v5222 = vunpack.c.l.b16 %v4112
        %v5223 = vunpack.c.h.b16 %v4112
        %v5224 = vunpack.c.l.b16 %v4113
        %v5225 = vunpack.c.h.b16 %v4113
        %v5226 = vunpack.c.l.b16 %v4114
        %v5227 = vunpack.c.h.b16 %v4114
        %v5228 = vunpack.c.l.b16 %v4115
        %v5229 = vunpack.c.h.b16 %v4115
        %v5230 = vunpack.c.l.b16 %v4116
        %v5231 = vunpack.c.h.b16 %v4116
        %v5232 = vunpack.c.l.b16 %v4117
        %v5233 = vunpack.c.h.b16 %v4117
        %v5234 = vunpack.c.l.b16 %v4118
        %v5235 = vunpack.c.h.b16 %v4118
        %v5236 = vunpack.c.l.b16 %v4119
        %v5237 = vunpack.c.h.b16 %v4119
        %v5238 = vunpack.c.l.b16 %v4120
        %v5239 = vunpack.c.h.b16 %v4120
        %v5240 = vunpack.c.l.b16 %v4121
        %v5241 = vunpack.c.h.b16 %v4121
        %v5242 = vunpack.c.l.b16 %v4122
        %v5243 = vunpack.c.h.b16 %v4122
        %v5244 = vunpack.c.l.b16 %v4123
        %v5245 = vunpack.c.h.b16 %v4123
        %v5246 = vunpack.c.l.b16 %v4124
        %v5247 = vunpack.c.h.b16 %v4124
        %v5248 = vunpack.c.l.b16 %v4125
        %v5249 = vunpack.c.h.b16 %v4125
        %v5250 = vunpack.c.l.b16 %v4126
        %v5251 = vunpack.c.h.b16 %v4126
        %v5252 = vunpack.c.l.b16 %v4127
        %v5253 = vunpack.c.h.b16 %v4127
        %v5254 = vunpack.c.l.b16 %v4128
        %v5255 = vunpack.c.h.b16 %v4128
        %v5256 = vunpack.c.l.b16 %v4129
        %v5257 = vunpack.c.h.b16 %v4129
        %v5258 = vunpack.c.l.b16 %v4130
        %v5259 = vunpack.c.h.b16 %v4130
        %v5260 = vunpack.c.l.b16 %v4131
        %v5261 = vunpack.c.h.b16 %v4131
        %v5262 = vunpack.c.l.b16 %v4132
        %v5263 = vunpack.c.h.b16 %v4132
        %v5264 = vunpack.c.l.b16 %v4133
        %v5265 = vunpack.c.h.b16 %v4133
        %v5266 = vunpack.c.l.b16 %v4134
        %v5267 = vunpack.c.h.b16 %v4134
        %v5268 = vunpack.c.l.b16 %v4135
        %v5269 = vunpack.c.h.b16 %v4135
        %v5270 = vunpack.c.l.b16 %v4136
        %v5271 = vunpack.c.h.b16 %v4136
        %v5272 = vunpack.c.l.b16 %v4137
        %v5273 = vunpack.c.h.b16 %v4137
        %v5274 = vunpack.c.l.b16 %v4138
        %v5275 = vunpack.c.h.b16 %v4138
        %v5276 = vunpack.c.l.b16 %v4139
        %v5277 = vunpack.c.h.b16 %v4139
        %v5278 = vunpack.c.l.b16 %v4140
        %v5279 = vunpack.c.h.b16 %v4140
        %v5280 = vunpack.c.l.b16 %v4141
        %v5281 = vunpack.c.h.b16 %v4141
        %v5282 = vunpack.c.l.b16 %v4142
        %v5283 = vunpack.c.h.b16 %v4142
        %v5284 = vunpack.c.l.b16 %v4143
        %v5285 = vunpack.c.h.b16 %v4143
        %v5286 = vunpack.c.l.b16 %v4144
        %v5287 = vunpack.c.h.b16 %v4144
        %v5288 = vunpack.c.l.b16 %v4145
        %v5289 = vunpack.c.h.b16 %v4145
        %v5290 = vunpack.c.l.b16 %v4146
        %v5291 = vunpack.c.h.b16 %v4146
        %v5292 = vunpack.c.l.b16 %v4147
        %v5293 = vunpack.c.h.b16 %v4147
        %v5294 = vunpack.c.l.b16 %v4148
        %v5295 = vunpack.c.h.b16 %v4148
        %v5296 = vunpack.c.l.b16 %v4149
        %v5297 = vunpack.c.h.b16 %v4149
        %v5298 = vunpack.c.l.b16 %v4150
        %v5299 = vunpack.c.h.b16 %v4150
        %v5300 = vunpack.c.l.b16 %v4151
        %v5301 = vunpack.c.h.b16 %v4151
        %v5302 = vunpack.c.l.b16 %v4152
        %v5303 = vunpack.c.h.b16 %v4152
        %v5304 = vunpack.c.l.b16 %v4153
        %v5305 = vunpack.c.h.b16 %v4153
        %v5306 = vunpack.c.l.b16 %v4154
        %v5307 = vunpack.c.h.b16 %v4154
        %v5308 = vunpack.c.l.b16 %v4155
        %v5309 = vunpack.c.h.b16 %v4155
        %v5310 = vunpack.c.l.b16 %v4156
        %v5311 = vunpack.c.h.b16 %v4156
        %v5312 = vunpack.c.l.b16 %v4157
        %v5313 = vunpack.c.h.b16 %v4157
        %v5314 = vunpack.c.l.b16 %v4158
        %v5315 = vunpack.c.h.b16 %v4158
        %v5316 = vunpack.c.l.b16 %v4159
        %v5317 = vunpack.c.h.b16 %v4159
        %v5318 = vunpack.c.l.b16 %v4160
        %v5319 = vunpack.c.h.b16 %v4160
        %v5320 = vunpack.c.l.b16 %v4161
        %v5321 = vunpack.c.h.b16 %v4161
        %v5322 = vunpack.c.l.b16 %v4162
        %v5323 = vunpack.c.h.b16 %v4162
        %v5324 = vunpack.c.l.b16 %v4163
        %v5325 = vunpack.c.h.b16 %v4163
        %v5326 = vunpack.c.l.b16 %v4164
        %v5327 = vunpack.c.h.b16 %v4164
        %v5328 = vunpack.c.l.b16 %v4165
        %v5329 = vunpack.c.h.b16 %v4165
        %v5330 = vunpack.c.l.b16 %v4166
        %v5331 = vunpack.c.h.b16 %v4166
        %v5332 = vunpack.c.l.b16 %v4167
        %v5333 = vunpack.c.h.b16 %v4167
        %v5334 = vunpack.c.l.b16 %v4168
        %v5335 = vunpack.c.h.b16 %v4168
        %v5336 = vunpack.c.l.b16 %v4169
        %v5337 = vunpack.c.h.b16 %v4169
        %v5338 = vunpack.c.l.b16 %v4170
        %v5339 = vunpack.c.h.b16 %v4170
        %v5340 = vunpack.c.l.b16 %v4171
        %v5341 = vunpack.c.h.b16 %v4171
        %v5342 = vunpack.c.l.b16 %v4172
        %v5343 = vunpack.c.h.b16 %v4172
        %v5344 = vunpack.c.l.b16 %v4173
        %v5345 = vunpack.c.h.b16 %v4173
        %v5346 = vunpack.c.l.b16 %v4174
        %v5347 = vunpack.c.h.b16 %v4174
        %v5348 = vunpack.c.l.b16 %v4175
        %v5349 = vunpack.c.h.b16 %v4175
        %v5350 = vunpack.c.l.b16 %v4176
        %v5351 = vunpack.c.h.b16 %v4176
        %v5352 = vunpack.c.l.b16 %v4177
        %v5353 = vunpack.c.h.b16 %v4177
        %v5354 = vunpack.c.l.b16 %v4178
        %v5355 = vunpack.c.h.b16 %v4178
        %v5356 = vunpack.c.l.b16 %v4179
        %v5357 = vunpack.c.h.b16 %v4179
        %v5358 = vunpack.c.l.b16 %v4180
        %v5359 = vunpack.c.h.b16 %v4180
        %v5360 = vunpack.c.l.b16 %v4181
        %v5361 = vunpack.c.h.b16 %v4181
        %v5362 = vunpack.c.l.b16 %v4182
        %v5363 = vunpack.c.h.b16 %v4182
        %v5364 = vunpack.c.l.b16 %v4183
        %v5365 = vunpack.c.h.b16 %v4183
        %v5366 = vunpack.c.l.b16 %v4184
        %v5367 = vunpack.c.h.b16 %v4184
        %v5368 = vunpack.c.l.b16 %v4185
        %v5369 = vunpack.c.h.b16 %v4185
        %v5370 = vunpack.c.l.b16 %v4186
        %v5371 = vunpack.c.h.b16 %v4186
        %v5372 = vunpack.c.l.b16 %v4187
        %v5373 = vunpack.c.h.b16 %v4187
        %v5374 = vunpack.c.l.b16 %v4188
        %v5375 = vunpack.c.h.b16 %v4188
        %v5376 = vunpack.c.l.b16 %v4189
        %v5377 = vunpack.c.h.b16 %v4189
        %v5378 = vunpack.c.l.b16 %v4190
        %v5379 = vunpack.c.h.b16 %v4190
        %v5380 = vunpack.c.l.b16 %v4191
        %v5381 = vunpack.c.h.b16 %v4191
        %v5382 = vunpack.c.l.b16 %v4192
        %v5383 = vunpack.c.h.b16 %v4192
        %v5384 = vunpack.c.l.b16 %v4193
        %v5385 = vunpack.c.h.b16 %v4193
        %v5386 = vunpack.c.l.b16 %v4194
        %v5387 = vunpack.c.h.b16 %v4194
        %v5388 = vunpack.c.l.b16 %v4195
        %v5389 = vunpack.c.h.b16 %v4195
        %v5390 = vunpack.c.l.b16 %v4196
        %v5391 = vunpack.c.h.b16 %v4196
        %v5392 = vunpack.c.l.b16 %v4197
        %v5393 = vunpack.c.h.b16 %v4197
        %v5394 = vunpack.c.l.b16 %v4198
        %v5395 = vunpack.c.h.b16 %v4198
        %v5396 = vunpack.c.l.b16 %v4199
        %v5397 = vunpack.c.h.b16 %v4199
        %v5398 = vunpack.c.l.b16 %v4200
        %v5399 = vunpack.c.h.b16 %v4200
        %v5400 = vunpack.c.l.b16 %v4201
        %v5401 = vunpack.c.h.b16 %v4201
        %v5402 = vunpack.c.l.b16 %v4202
        %v5403 = vunpack.c.h.b16 %v4202
        %v5404 = vunpack.c.l.b16 %v4203
        %v5405 = vunpack.c.h.b16 %v4203
        %v5406 = vunpack.c.l.b16 %v4204
        %v5407 = vunpack.c.h.b16 %v4204
        %v5408 = vunpack.c.l.b16 %v4205
        %v5409 = vunpack.c.h.b16 %v4205
        %v5410 = vunpack.c.l.b16 %v4206
        %v5411 = vunpack.c.h.b16 %v4206
        %v5412 = vunpack.c.l.b16 %v4207
        %v5413 = vunpack.c.h.b16 %v4207
        %v5414 = vunpack.c.l.b16 %v4208
        %v5415 = vunpack.c.h.b16 %v4208
        %v5416 = vunpack.c.l.b16 %v4209
        %v5417 = vunpack.c.h.b16 %v4209
        %v5418 = vunpack.c.l.b16 %v4210
        %v5419 = vunpack.c.h.b16 %v4210
        %v5420 = vunpack.c.l.b16 %v4211
        %v5421 = vunpack.c.h.b16 %v4211
        %v5422 = vunpack.c.l.b16 %v4212
        %v5423 = vunpack.c.h.b16 %v4212
        %v5424 = vunpack.c.l.b16 %v4213
        %v5425 = vunpack.c.h.b16 %v4213
        %v5426 = vunpack.c.l.b16 %v4214
        %v5427 = vunpack.c.h.b16 %v4214
        %v5428 = vunpack.c.l.b16 %v4215
        %v5429 = vunpack.c.h.b16 %v4215
        %v5430 = vunpack.c.l.b16 %v4216
        %v5431 = vunpack.c.h.b16 %v4216
        %v5432 = vunpack.c.l.b16 %v4217
        %v5433 = vunpack.c.h.b16 %v4217
        %v5434 = vunpack.c.l.b16 %v4218
        %v5435 = vunpack.c.h.b16 %v4218
        %v5436 = vunpack.c.l.b16 %v4219
        %v5437 = vunpack.c.h.b16 %v4219
        %v5438 = vunpack.c.l.b16 %v4220
        %v5439 = vunpack.c.h.b16 %v4220
        %v5440 = vunpack.c.l.b16 %v4221
        %v5441 = vunpack.c.h.b16 %v4221
        %v5442 = vunpack.c.l.b16 %v4222
        %v5443 = vunpack.c.h.b16 %v4222
        %v5444 = vunpack.c.l.b16 %v4223
        %v5445 = vunpack.c.h.b16 %v4223
        %v5446 = vunpack.c.l.b16 %v4224
        %v5447 = vunpack.c.h.b16 %v4224
        %v5448 = vunpack.c.l.b16 %v4225
        %v5449 = vunpack.c.h.b16 %v4225
        %v5450 = vunpack.c.l.b16 %v4226
        %v5451 = vunpack.c.h.b16 %v4226
        %v5452 = vunpack.c.l.b16 %v4227
        %v5453 = vunpack.c.h.b16 %v4227
        %v5454 = vunpack.c.l.b16 %v4228
        %v5455 = vunpack.c.h.b16 %v4228
        %v5456 = vunpack.c.l.b16 %v4229
        %v5457 = vunpack.c.h.b16 %v4229
        %v5458 = vunpack.c.l.b16 %v4230
        %v5459 = vunpack.c.h.b16 %v4230
        %v5460 = vunpack.c.l.b16 %v4231
        %v5461 = vunpack.c.h.b16 %v4231
        %v5462 = vunpack.c.l.b16 %v4232
        %v5463 = vunpack.c.h.b16 %v4232
        %v5464 = vunpack.c.l.b16 %v4233
        %v5465 = vunpack.c.h.b16 %v4233
        %v5466 = vunpack.c.l.b16 %v4234
        %v5467 = vunpack.c.h.b16 %v4234
        %v5468 = vunpack.c.l.b16 %v4235
        %v5469 = vunpack.c.h.b16 %v4235
        %v5470 = vunpack.c.l.b16 %v4236
        %v5471 = vunpack.c.h.b16 %v4236
        %v5472 = vunpack.c.l.b16 %v4237
        %v5473 = vunpack.c.h.b16 %v4237
        %v5474 = vunpack.c.l.b16 %v4238
        %v5475 = vunpack.c.h.b16 %v4238
        %v5476 = vunpack.c.l.b16 %v4239
        %v5477 = vunpack.c.h.b16 %v4239
        %v5478 = vunpack.c.l.b16 %v4240
        %v5479 = vunpack.c.h.b16 %v4240
        %v5480 = vunpack.c.l.b16 %v4241
        %v5481 = vunpack.c.h.b16 %v4241
        %v5482 = vunpack.c.l.b16 %v4242
        %v5483 = vunpack.c.h.b16 %v4242
        %v5484 = vunpack.c.l.b16 %v4243
        %v5485 = vunpack.c.h.b16 %v4243
        %v5486 = vunpack.c.l.b16 %v4244
        %v5487 = vunpack.c.h.b16 %v4244
        %v5488 = vunpack.c.l.b16 %v4245
        %v5489 = vunpack.c.h.b16 %v4245
        %v5490 = vunpack.c.l.b16 %v4246
        %v5491 = vunpack.c.h.b16 %v4246
        %v5492 = vunpack.c.l.b16 %v4247
        %v5493 = vunpack.c.h.b16 %v4247
        %v5494 = vunpack.c.l.b16 %v4248
        %v5495 = vunpack.c.h.b16 %v4248
        %v5496 = vunpack.c.l.b16 %v4249
        %v5497 = vunpack.c.h.b16 %v4249
        %v5498 = vunpack.c.l.b16 %v4250
        %v5499 = vunpack.c.h.b16 %v4250
        %v5500 = vunpack.c.l.b16 %v4251
        %v5501 = vunpack.c.h.b16 %v4251
        %v5502 = vunpack.c.l.b16 %v4252
        %v5503 = vunpack.c.h.b16 %v4252
        %v5504 = vunpack.c.l.b16 %v4253
        %v5505 = vunpack.c.h.b16 %v4253
        %v5506 = vunpack.c.l.b16 %v4254
        %v5507 = vunpack.c.h.b16 %v4254
        %v5508 = vunpack.c.l.b16 %v4255
        %v5509 = vunpack.c.h.b16 %v4255
        %v5510 = vunpack.c.l.b16 %v4256
        %v5511 = vunpack.c.h.b16 %v4256
        %v5512 = vunpack.c.l.b16 %v4257
        %v5513 = vunpack.c.h.b16 %v4257
        %v5514 = vunpack.c.l.b16 %v4258
        %v5515 = vunpack.c.h.b16 %v4258
        %v5516 = vunpack.c.l.b16 %v4259
        %v5517 = vunpack.c.h.b16 %v4259
        %v5518 = vunpack.c.l.b16 %v4260
        %v5519 = vunpack.c.h.b16 %v4260
        %v5520 = vunpack.c.l.b16 %v4261
        %v5521 = vunpack.c.h.b16 %v4261
        %v5522 = vunpack.c.l.b16 %v4262
        %v5523 = vunpack.c.h.b16 %v4262
        %v5524 = vunpack.c.l.b16 %v4263
        %v5525 = vunpack.c.h.b16 %v4263
        %v5526 = vunpack.c.l.b16 %v4264
        %v5527 = vunpack.c.h.b16 %v4264
        %v5528 = vunpack.c.l.b16 %v4265
        %v5529 = vunpack.c.h.b16 %v4265
        %v5530 = vunpack.c.l.b16 %v4266
        %v5531 = vunpack.c.h.b16 %v4266
        %v5532 = vunpack.c.l.b16 %v4267
        %v5533 = vunpack.c.h.b16 %v4267
        %v5534 = vunpack.c.l.b16 %v4268
        %v5535 = vunpack.c.h.b16 %v4268
        %v5536 = vunpack.c.l.b16 %v4269
        %v5537 = vunpack.c.h.b16 %v4269
        %v5538 = vunpack.c.l.b16 %v4270
        %v5539 = vunpack.c.h.b16 %v4270
        %v5540 = vunpack.c.l.b16 %v4271
        %v5541 = vunpack.c.h.b16 %v4271
        %v5542 = vunpack.c.l.b16 %v4272
        %v5543 = vunpack.c.h.b16 %v4272
        %v5544 = vunpack.c.l.b16 %v4273
        %v5545 = vunpack.c.h.b16 %v4273
        %v5546 = vunpack.c.l.b16 %v4274
        %v5547 = vunpack.c.h.b16 %v4274
        %v5548 = vunpack.c.l.b16 %v4275
        %v5549 = vunpack.c.h.b16 %v4275
        %v5550 = vunpack.c.l.b16 %v4276
        %v5551 = vunpack.c.h.b16 %v4276
        %v5552 = vunpack.c.l.b16 %v4277
        %v5553 = vunpack.c.h.b16 %v4277
        %v5554 = vunpack.c.l.b16 %v4278
        %v5555 = vunpack.c.h.b16 %v4278
        %v5556 = vunpack.c.l.b16 %v4279
        %v5557 = vunpack.c.h.b16 %v4279
        %v5558 = vunpack.c.l.b16 %v4280
        %v5559 = vunpack.c.h.b16 %v4280
        %v5560 = vunpack.c.l.b16 %v4281
        %v5561 = vunpack.c.h.b16 %v4281
        %v5562 = vunpack.c.l.b16 %v4282
        %v5563 = vunpack.c.h.b16 %v4282
        %v5564 = vunpack.c.l.b16 %v4283
        %v5565 = vunpack.c.h.b16 %v4283
        %v5566 = vunpack.c.l.b16 %v4284
        %v5567 = vunpack.c.h.b16 %v4284
        %v5568 = vunpack.c.l.b16 %v4285
        %v5569 = vunpack.c.h.b16 %v4285
        %v5570 = vunpack.c.l.b16 %v4286
        %v5571 = vunpack.c.h.b16 %v4286
        %v5572 = vunpack.c.l.b16 %v4287
        %v5573 = vunpack.c.h.b16 %v4287
        %v5574 = vunpack.c.l.b16 %v4288
        %v5575 = vunpack.c.h.b16 %v4288
        %v5576 = vunpack.c.l.b16 %v4289
        %v5577 = vunpack.c.h.b16 %v4289
        %v5578 = vunpack.c.l.b16 %v4290
        %v5579 = vunpack.c.h.b16 %v4290
        %v5580 = vunpack.c.l.b16 %v4291
        %v5581 = vunpack.c.h.b16 %v4291
        %v5582 = vunpack.c.l.b16 %v4292
        %v5583 = vunpack.c.h.b16 %v4292
        %v5584 = vunpack.c.l.b16 %v4293
        %v5585 = vunpack.c.h.b16 %v4293
        %v5586 = vunpack.c.l.b16 %v4294
        %v5587 = vunpack.c.h.b16 %v4294
        %v5588 = vunpack.c.l.b16 %v4295
        %v5589 = vunpack.c.h.b16 %v4295
        %v5590 = vunpack.c.l.b16 %v4296
        %v5591 = vunpack.c.h.b16 %v4296
        %v5592 = vunpack.c.l.b16 %v4297
        %v5593 = vunpack.c.h.b16 %v4297
        %v5594 = vunpack.c.l.b16 %v4298
        %v5595 = vunpack.c.h.b16 %v4298
        %v5596 = vunpack.c.l.b16 %v4299
        %v5597 = vunpack.c.h.b16 %v4299
        %v5598 = vunpack.c.l.b16 %v4300
        %v5599 = vunpack.c.h.b16 %v4300
        %v5600 = vunpack.c.l.b16 %v4301
        %v5601 = vunpack.c.h.b16 %v4301
        %v5602 = vunpack.c.l.b16 %v4302
        %v5603 = vunpack.c.h.b16 %v4302
        %v5604 = vunpack.c.l.b16 %v4303
        %v5605 = vunpack.c.h.b16 %v4303
        %v5606 = vunpack.c.l.b16 %v4304
        %v5607 = vunpack.c.h.b16 %v4304
        %v5608 = vunpack.c.l.b16 %v4305
        %v5609 = vunpack.c.h.b16 %v4305
        %v5610 = vunpack.c.l.b16 %v4306
        %v5611 = vunpack.c.h.b16 %v4306
        %v5612 = vunpack.c.l.b16 %v4307
        %v5613 = vunpack.c.h.b16 %v4307
        %v5614 = vunpack.c.l.b16 %v4308
        %v5615 = vunpack.c.h.b16 %v4308
        %v5616 = vunpack.c.l.b16 %v4309
        %v5617 = vunpack.c.h.b16 %v4309
        %v5618 = vunpack.c.l.b16 %v4310
        %v5619 = vunpack.c.h.b16 %v4310
        %v5620 = vunpack.c.l.b16 %v4311
        %v5621 = vunpack.c.h.b16 %v4311
        %v5622 = vunpack.c.l.b16 %v4312
        %v5623 = vunpack.c.h.b16 %v4312
        %v5624 = vunpack.c.l.b16 %v4313
        %v5625 = vunpack.c.h.b16 %v4313
        %v5626 = vunpack.c.l.b16 %v4314
        %v5627 = vunpack.c.h.b16 %v4314
        %v5628 = vunpack.c.l.b16 %v4315
        %v5629 = vunpack.c.h.b16 %v4315
        %v5630 = vunpack.c.l.b16 %v4316
        %v5631 = vunpack.c.h.b16 %v4316
        %v5632 = vunpack.c.l.b16 %v4317
        %v5633 = vunpack.c.h.b16 %v4317
        %v5634 = vunpack.c.l.b16 %v4318
        %v5635 = vunpack.c.h.b16 %v4318
        %v5636 = vunpack.c.l.b16 %v4319
        %v5637 = vunpack.c.h.b16 %v4319
        %v5638 = vunpack.c.l.b16 %v4320
        %v5639 = vunpack.c.h.b16 %v4320
        %v5640 = vunpack.c.l.b16 %v4321
        %v5641 = vunpack.c.h.b16 %v4321
        %v5642 = vunpack.c.l.b16 %v4322
        %v5643 = vunpack.c.h.b16 %v4322
        %v5644 = vunpack.c.l.b16 %v4323
        %v5645 = vunpack.c.h.b16 %v4323
        %v5646 = vunpack.c.l.b16 %v4324
        %v5647 = vunpack.c.h.b16 %v4324
        %v5648 = vunpack.c.l.b16 %v4325
        %v5649 = vunpack.c.h.b16 %v4325
        %v5650 = vunpack.c.l.b16 %v4326
        %v5651 = vunpack.c.h.b16 %v4326
        %v5652 = vunpack.c.l.b16 %v4327
        %v5653 = vunpack.c.h.b16 %v4327
        %v5654 = vunpack.c.l.b16 %v4328
        %v5655 = vunpack.c.h.b16 %v4328
        %v5656 = vunpack.c.l.b16 %v4329
        %v5657 = vunpack.c.h.b16 %v4329
        %v5658 = vunpack.c.l.b16 %v4330
        %v5659 = vunpack.c.h.b16 %v4330
        %v5660 = vunpack.c.l.b16 %v4331
        %v5661 = vunpack.c.h.b16 %v4331
        %v5662 = vunpack.c.l.b16 %v4332
        %v5663 = vunpack.c.h.b16 %v4332
        %v5664 = vunpack.c.l.b16 %v4333
        %v5665 = vunpack.c.h.b16 %v4333
        %v5666 = vunpack.c.l.b16 %v4334
        %v5667 = vunpack.c.h.b16 %v4334
        %v5668 = vunpack.c.l.b16 %v4335
        %v5669 = vunpack.c.h.b16 %v4335
        %v5670 = vunpack.c.l.b16 %v4336
        %v5671 = vunpack.c.h.b16 %v4336
        %v5672 = vunpack.c.l.b16 %v4337
        %v5673 = vunpack.c.h.b16 %v4337
        %v5674 = vunpack.c.l.b16 %v4338
        %v5675 = vunpack.c.h.b16 %v4338
        %v5676 = vunpack.c.l.b16 %v4339
        %v5677 = vunpack.c.h.b16 %v4339
        %v5678 = vunpack.c.l.b16 %v4340
        %v5679 = vunpack.c.h.b16 %v4340
        %v5680 = vunpack.c.l.b16 %v4341
        %v5681 = vunpack.c.h.b16 %v4341
        %v5682 = vunpack.c.l.b16 %v4342
        %v5683 = vunpack.c.h.b16 %v4342
        %v5684 = vunpack.c.l.b16 %v4343
        %v5685 = vunpack.c.h.b16 %v4343
        %v5686 = vunpack.c.l.b16 %v4344
        %v5687 = vunpack.c.h.b16 %v4344
        %v5688 = vunpack.c.l.b16 %v4345
        %v5689 = vunpack.c.h.b16 %v4345
        %v5690 = vunpack.c.l.b16 %v4346
        %v5691 = vunpack.c.h.b16 %v4346
        %v5692 = vunpack.c.l.b16 %v4347
        %v5693 = vunpack.c.h.b16 %v4347
        %v5694 = vunpack.c.l.b16 %v4348
        %v5695 = vunpack.c.h.b16 %v4348
        %v5696 = vunpack.c.l.b16 %v4349
        %v5697 = vunpack.c.h.b16 %v4349
        %v5698 = vunpack.c.l.b16 %v4350
        %v5699 = vunpack.c.h.b16 %v4350
        %v5700 = vunpack.c.l.b16 %v4351
        %v5701 = vunpack.c.h.b16 %v4351
        %v5702 = vunpack.c.l.b16 %v4352
        %v5703 = vunpack.c.h.b16 %v4352
        %v5704 = vunpack.c.l.b16 %v4353
        %v5705 = vunpack.c.h.b16 %v4353
        %v5706 = vunpack.c.l.b16 %v4354
        %v5707 = vunpack.c.h.b16 %v4354
        %v5708 = vunpack.c.l.b16 %v4355
        %v5709 = vunpack.c.h.b16 %v4355
        %v5710 = vunpack.c.l.b16 %v4356
        %v5711 = vunpack.c.h.b16 %v4356
        %v5712 = vunpack.c.l.b16 %v4357
        %v5713 = vunpack.c.h.b16 %v4357
        %v5714 = vunpack.c.l.b16 %v4358
        %v5715 = vunpack.c.h.b16 %v4358
        %v5716 = vunpack.c.l.b16 %v4359
        %v5717 = vunpack.c.h.b16 %v4359
        %v5718 = vunpack.c.l.b16 %v4360
        %v5719 = vunpack.c.h.b16 %v4360
        %v5720 = vunpack.c.l.b16 %v4361
        %v5721 = vunpack.c.h.b16 %v4361
        %v5722 = vunpack.c.l.b16 %v4362
        %v5723 = vunpack.c.h.b16 %v4362
        %v5724 = vunpack.c.l.b16 %v4363
        %v5725 = vunpack.c.h.b16 %v4363
        %v5726 = vunpack.c.l.b16 %v4364
        %v5727 = vunpack.c.h.b16 %v4364
        %v5728 = vunpack.c.l.b16 %v4365
        %v5729 = vunpack.c.h.b16 %v4365
        %v5730 = vunpack.c.l.b16 %v4366
        %v5731 = vunpack.c.h.b16 %v4366
        %v5732 = vunpack.c.l.b16 %v4367
        %v5733 = vunpack.c.h.b16 %v4367
        %v5734 = vunpack.c.l.b16 %v4368
        %v5735 = vunpack.c.h.b16 %v4368
        %v5736 = vunpack.c.l.b16 %v4369
        %v5737 = vunpack.c.h.b16 %v4369
        %v5738 = vunpack.c.l.b16 %v4370
        %v5739 = vunpack.c.h.b16 %v4370
        %v5740 = vunpack.c.l.b16 %v4371
        %v5741 = vunpack.c.h.b16 %v4371
        %v5742 = vunpack.c.l.b16 %v4372
        %v5743 = vunpack.c.h.b16 %v4372
        %v5744 = vunpack.c.l.b16 %v4373
        %v5745 = vunpack.c.h.b16 %v4373
        %v5746 = vunpack.c.l.b16 %v4374
        %v5747 = vunpack.c.h.b16 %v4374
        %v5748 = vunpack.c.l.b16 %v4375
        %v5749 = vunpack.c.h.b16 %v4375
        %v5750 = vunpack.c.l.b16 %v4376
        %v5751 = vunpack.c.h.b16 %v4376
        %v5752 = vunpack.c.l.b16 %v4377
        %v5753 = vunpack.c.h.b16 %v4377
        %v5754 = vunpack.c.l.b16 %v4378
        %v5755 = vunpack.c.h.b16 %v4378
        %v5756 = vunpack.c.l.b16 %v4379
        %v5757 = vunpack.c.h.b16 %v4379
        %v5758 = vunpack.c.l.b16 %v4380
        %v5759 = vunpack.c.h.b16 %v4380
        %v5760 = vunpack.c.l.b16 %v4381
        %v5761 = vunpack.c.h.b16 %v4381
        %v5762 = vunpack.c.l.b16 %v4382
        %v5763 = vunpack.c.h.b16 %v4382
        %v5764 = vunpack.c.l.b16 %v4383
        %v5765 = vunpack.c.h.b16 %v4383
        %v5766 = vunpack.c.l.b16 %v4384
        %v5767 = vunpack.c.h.b16 %v4384
        %v5768 = vunpack.c.l.b16 %v4385
        %v5769 = vunpack.c.h.b16 %v4385
        %v5770 = vunpack.c.l.b16 %v4386
        %v5771 = vunpack.c.h.b16 %v4386
        %v5772 = vunpack.c.l.b16 %v4387
        %v5773 = vunpack.c.h.b16 %v4387
        %v5774 = vunpack.c.l.b16 %v4388
        %v5775 = vunpack.c.h.b16 %v4388
        %v5776 = vunpack.c.l.b16 %v4389
        %v5777 = vunpack.c.h.b16 %v4389
        %v5778 = vunpack.c.l.b16 %v4390
        %v5779 = vunpack.c.h.b16 %v4390
        %v5780 = vunpack.c.l.b16 %v4391
        %v5781 = vunpack.c.h.b16 %v4391
        %v5782 = vunpack.c.l.b16 %v4392
        %v5783 = vunpack.c.h.b16 %v4392
        %v5784 = vunpack.c.l.b16 %v4393
        %v5785 = vunpack.c.h.b16 %v4393
        %v5786 = vunpack.c.l.b16 %v4394
        %v5787 = vunpack.c.h.b16 %v4394
        %v5788 = vunpack.c.l.b16 %v4395
        %v5789 = vunpack.c.h.b16 %v4395
        %v5790 = vunpack.c.l.b16 %v4396
        %v5791 = vunpack.c.h.b16 %v4396
        %v5792 = vunpack.c.l.b16 %v4397
        %v5793 = vunpack.c.h.b16 %v4397
        %v5794 = vunpack.c.l.b16 %v4398
        %v5795 = vunpack.c.h.b16 %v4398
        %v5796 = vunpack.c.l.b16 %v4399
        %v5797 = vunpack.c.h.b16 %v4399
        %v5798 = vunpack.c.l.b16 %v4400
        %v5799 = vunpack.c.h.b16 %v4400
        %v5800 = vunpack.c.l.b16 %v4401
        %v5801 = vunpack.c.h.b16 %v4401
        %v5802 = vunpack.c.l.b16 %v4402
        %v5803 = vunpack.c.h.b16 %v4402
        %v5804 = vunpack.c.l.b16 %v4403
        %v5805 = vunpack.c.h.b16 %v4403
        %v5806 = vunpack.c.l.b16 %v4404
        %v5807 = vunpack.c.h.b16 %v4404
        %v5808 = vunpack.c.l.b16 %v4405
        %v5809 = vunpack.c.h.b16 %v4405
        %v5810 = vunpack.c.l.b16 %v4406
        %v5811 = vunpack.c.h.b16 %v4406
        %v5812 = vunpack.c.l.b16 %v4407
        %v5813 = vunpack.c.h.b16 %v4407
        %v5814 = vunpack.c.l.b16 %v4408
        %v5815 = vunpack.c.h.b16 %v4408
        %v5816 = vunpack.c.l.b16 %v4409
        %v5817 = vunpack.c.h.b16 %v4409
        %v5818 = vunpack.c.l.b16 %v4410
        %v5819 = vunpack.c.h.b16 %v4410
        %v5820 = vunpack.c.l.b16 %v4411
        %v5821 = vunpack.c.h.b16 %v4411
        %v5822 = vunpack.c.l.b16 %v4412
        %v5823 = vunpack.c.h.b16 %v4412
        %v5824 = vunpack.c.l.b16 %v4413
        %v5825 = vunpack.c.h.b16 %v4413
        %v5826 = vunpack.c.l.b16 %v4414
        %v5827 = vunpack.c.h.b16 %v4414
        %v5828 = vunpack.c.l.b16 %v4415
        %v5829 = vunpack.c.h.b16 %v4415
        %v5830 = vunpack.c.l.b16 %v4416
        %v5831 = vunpack.c.h.b16 %v4416
        %v5832 = vunpack.c.l.b16 %v4417
        %v5833 = vunpack.c.h.b16 %v4417
        %v5834 = vunpack.c.l.b16 %v4418
        %v5835 = vunpack.c.h.b16 %v4418
        %v5836 = vunpack.c.l.b16 %v4419
        %v5837 = vunpack.c.h.b16 %v4419
        %v5838 = vunpack.c.l.b16 %v4420
        %v5839 = vunpack.c.h.b16 %v4420
        %v5840 = vunpack.c.l.b16 %v4421
        %v5841 = vunpack.c.h.b16 %v4421
        %v5842 = vunpack.c.l.b16 %v4422
        %v5843 = vunpack.c.h.b16 %v4422
        %v5844 = vunpack.c.l.b16 %v4423
        %v5845 = vunpack.c.h.b16 %v4423
        %v5846 = vunpack.c.l.b16 %v4424
        %v5847 = vunpack.c.h.b16 %v4424
        %v5848 = vunpack.c.l.b16 %v4425
        %v5849 = vunpack.c.h.b16 %v4425
        %v5850 = vunpack.c.l.b16 %v4426
        %v5851 = vunpack.c.h.b16 %v4426
        %v5852 = vunpack.c.l.b16 %v4427
        %v5853 = vunpack.c.h.b16 %v4427
        %v5854 = vunpack.c.l.b16 %v4428
        %v5855 = vunpack.c.h.b16 %v4428
        %v5856 = vunpack.c.l.b16 %v4429
        %v5857 = vunpack.c.h.b16 %v4429
        %v5858 = vunpack.c.l.b16 %v4430
        %v5859 = vunpack.c.h.b16 %v4430
        %v5860 = vunpack.c.l.b16 %v4431
        %v5861 = vunpack.c.h.b16 %v4431
        %v5862 = vunpack.c.l.b16 %v4432
        %v5863 = vunpack.c.h.b16 %v4432
        %v5864 = vunpack.c.l.b16 %v4433
        %v5865 = vunpack.c.h.b16 %v4433
        %v5866 = vunpack.c.l.b16 %v4434
        %v5867 = vunpack.c.h.b16 %v4434
        %v5868 = vunpack.c.l.b16 %v4435
        %v5869 = vunpack.c.h.b16 %v4435
        %v5870 = vunpack.c.l.b16 %v4436
        %v5871 = vunpack.c.h.b16 %v4436
        %v5872 = vunpack.c.l.b16 %v4437
        %v5873 = vunpack.c.h.b16 %v4437
        %v5874 = vunpack.c.l.b16 %v4438
        %v5875 = vunpack.c.h.b16 %v4438
        %v5876 = vunpack.c.l.b16 %v4439
        %v5877 = vunpack.c.h.b16 %v4439
        %v5878 = vunpack.c.l.b16 %v4440
        %v5879 = vunpack.c.h.b16 %v4440
        %v5880 = vunpack.c.l.b16 %v4441
        %v5881 = vunpack.c.h.b16 %v4441
        %v5882 = vunpack.c.l.b16 %v4442
        %v5883 = vunpack.c.h.b16 %v4442
        %v5884 = vunpack.c.l.b16 %v4443
        %v5885 = vunpack.c.h.b16 %v4443
        %v5886 = vunpack.c.l.b16 %v4444
        %v5887 = vunpack.c.h.b16 %v4444
        %v5888 = vunpack.c.l.b16 %v4445
        %v5889 = vunpack.c.h.b16 %v4445
        %v5890 = vunpack.c.l.b16 %v4446
        %v5891 = vunpack.c.h.b16 %v4446
        %v5892 = vunpack.c.l.b16 %v4447
        %v5893 = vunpack.c.h.b16 %v4447
        %v5894 = vunpack.c.l.b16 %v4448
        %v5895 = vunpack.c.h.b16 %v4448
        %v5896 = vunpack.c.l.b16 %v4449
        %v5897 = vunpack.c.h.b16 %v4449
        %v5898 = vunpack.c.l.b16 %v4450
        %v5899 = vunpack.c.h.b16 %v4450
        %v5900 = vunpack.c.l.b16 %v4451
        %v5901 = vunpack.c.h.b16 %v4451
        %v5902 = vunpack.c.l.b16 %v4452
        %v5903 = vunpack.c.h.b16 %v4452
        %v5904 = vunpack.c.l.b16 %v4453
        %v5905 = vunpack.c.h.b16 %v4453
        %v5906 = vunpack.c.l.b16 %v4454
        %v5907 = vunpack.c.h.b16 %v4454
        %v5908 = vunpack.c.l.b16 %v4455
        %v5909 = vunpack.c.h.b16 %v4455
        %v5910 = vunpack.c.l.b16 %v4456
        %v5911 = vunpack.c.h.b16 %v4456
        %v5912 = vunpack.c.l.b16 %v4457
        %v5913 = vunpack.c.h.b16 %v4457
        %v5914 = vunpack.c.l.b16 %v4458
        %v5915 = vunpack.c.h.b16 %v4458
        %v5916 = vunpack.c.l.b16 %v4459
        %v5917 = vunpack.c.h.b16 %v4459
        %v5918 = vunpack.c.l.b16 %v4460
        %v5919 = vunpack.c.h.b16 %v4460
        %v5920 = vunpack.c.l.b16 %v4461
        %v5921 = vunpack.c.h.b16 %v4461
        %v5922 = vunpack.c.l.b16 %v4462
        %v5923 = vunpack.c.h.b16 %v4462
        %v5924 = vunpack.c.l.b16 %v4463
        %v5925 = vunpack.c.h.b16 %v4463
        %v5926 = vunpack.c.l.b16 %v4464
        %v5927 = vunpack.c.h.b16 %v4464
        %v5928 = vunpack.c.l.b16 %v4465
        %v5929 = vunpack.c.h.b16 %v4465
        %v5930 = vunpack.c.l.b16 %v4466
        %v5931 = vunpack.c.h.b16 %v4466
        %v5932 = vunpack.c.l.b16 %v4467
        %v5933 = vunpack.c.h.b16 %v4467
        %v5934 = vunpack.c.l.b16 %v4468
        %v5935 = vunpack.c.h.b16 %v4468
        %v5936 = vunpack.c.l.b16 %v4469
        %v5937 = vunpack.c.h.b16 %v4469
        %v5938 = vunpack.c.l.b16 %v4470
        %v5939 = vunpack.c.h.b16 %v4470
        %v5940 = vunpack.c.l.b16 %v4471
        %v5941 = vunpack.c.h.b16 %v4471
        %v5942 = vunpack.c.l.b16 %v4472
        %v5943 = vunpack.c.h.b16 %v4472
        %v5944 = vunpack.c.l.b16 %v4473
        %v5945 = vunpack.c.h.b16 %v4473
        %v5946 = vunpack.c.l.b16 %v4474
        %v5947 = vunpack.c.h.b16 %v4474
        %v5948 = vunpack.c.l.b16 %v4475
        %v5949 = vunpack.c.h.b16 %v4475
        %v5950 = vunpack.c.l.b16 %v4476
        %v5951 = vunpack.c.h.b16 %v4476
        %v5952 = vunpack.c.l.b16 %v4477
        %v5953 = vunpack.c.h.b16 %v4477
        %v5954 = vunpack.c.l.b16 %v4478
        %v5955 = vunpack.c.h.b16 %v4478
        %v5956 = vunpack.c.l.b16 %v4479
        %v5957 = vunpack.c.h.b16 %v4479
        %v5958 = vunpack.c.l.b16 %v4480
        %v5959 = vunpack.c.h.b16 %v4480
        %v5960 = vunpack.c.l.b16 %v4481
        %v5961 = vunpack.c.h.b16 %v4481
        %v5962 = vunpack.c.l.b16 %v4482
        %v5963 = vunpack.c.h.b16 %v4482
        %v5964 = vunpack.c.l.b16 %v4483
        %v5965 = vunpack.c.h.b16 %v4483
        %v5966 = vunpack.c.l.b16 %v4484
        %v5967 = vunpack.c.h.b16 %v4484
        %v5968 = vunpack.c.l.b16 %v4485
        %v5969 = vunpack.c.h.b16 %v4485
        %v5970 = vunpack.c.l.b16 %v4486
        %v5971 = vunpack.c.h.b16 %v4486
        %v5972 = vunpack.c.l.b16 %v4487
        %v5973 = vunpack.c.h.b16 %v4487
        %v5974 = vunpack.c.l.b16 %v4488
        %v5975 = vunpack.c.h.b16 %v4488
        %v5976 = vunpack.c.l.b16 %v4489
        %v5977 = vunpack.c.h.b16 %v4489
        %v5978 = vunpack.c.l.b16 %v4490
        %v5979 = vunpack.c.h.b16 %v4490
        %v5980 = vunpack.c.l.b16 %v4491
        %v5981 = vunpack.c.h.b16 %v4491
        %v5982 = vunpack.c.l.b16 %v4492
        %v5983 = vunpack.c.h.b16 %v4492
        %v5984 = vunpack.c.l.b16 %v4493
        %v5985 = vunpack.c.h.b16 %v4493
        %v5986 = vunpack.c.l.b16 %v4494
        %v5987 = vunpack.c.h.b16 %v4494
        %v5988 = vunpack.c.l.b16 %v4495
        %v5989 = vunpack.c.h.b16 %v4495
        %v5990 = vunpack.c.l.b16 %v4496
        %v5991 = vunpack.c.h.b16 %v4496
        %v5992 = vunpack.c.l.b16 %v4497
        %v5993 = vunpack.c.h.b16 %v4497
        %v5994 = vunpack.c.l.b16 %v4498
        %v5995 = vunpack.c.h.b16 %v4498
        %v5996 = vunpack.c.l.b16 %v4499
        %v5997 = vunpack.c.h.b16 %v4499
        %v5998 = vunpack.c.l.b16 %v4500
        %v5999 = vunpack.c.h.b16 %v4500
        %v6000 = vunpack.c.l.b16 %v4501
        %v6001 = vunpack.c.h.b16 %v4501
        %v6002 = vunpack.c.l.b16 %v4502
        %v6003 = vunpack.c.h.b16 %v4502
        %v6004 = vunpack.c.l.b16 %v4503
        %v6005 = vunpack.c.h.b16 %v4503
        %v6006 = vunpack.c.l.b16 %v4504
        %v6007 = vunpack.c.h.b16 %v4504
        %v6008 = vunpack.c.l.b16 %v4505
        %v6009 = vunpack.c.h.b16 %v4505
        %v6010 = vunpack.c.l.b16 %v4506
        %v6011 = vunpack.c.h.b16 %v4506
        %v6012 = vunpack.c.l.b16 %v4507
        %v6013 = vunpack.c.h.b16 %v4507
        %v6014 = vunpack.c.l.b16 %v4508
        %v6015 = vunpack.c.h.b16 %v4508
        %v6016 = vunpack.c.l.b16 %v4509
        %v6017 = vunpack.c.h.b16 %v4509
        %v6018 = vunpack.c.l.b16 %v4510
        %v6019 = vunpack.c.h.b16 %v4510
        %v6020 = vunpack.c.l.b16 %v4511
        %v6021 = vunpack.c.h.b16 %v4511
        %v6022 = vunpack.c.l.b16 %v4512
        %v6023 = vunpack.c.h.b16 %v4512
        %v6024 = vunpack.c.l.b16 %v4513
        %v6025 = vunpack.c.h.b16 %v4513
        %v6026 = vunpack.c.l.b16 %v4514
        %v6027 = vunpack.c.h.b16 %v4514
        %v6028 = vunpack.c.l.b16 %v4515
        %v6029 = vunpack.c.h.b16 %v4515
        %v6030 = vunpack.c.l.b16 %v4516
        %v6031 = vunpack.c.h.b16 %v4516
        %v6032 = vunpack.c.l.b16 %v4517
        %v6033 = vunpack.c.h.b16 %v4517
        %v6034 = vunpack.c.l.b16 %v4518
        %v6035 = vunpack.c.h.b16 %v4518
        %v6036 = vunpack.c.l.b16 %v4519
        %v6037 = vunpack.c.h.b16 %v4519
        %v6038 = vunpack.c.l.b16 %v4520
        %v6039 = vunpack.c.h.b16 %v4520
        %v6040 = vunpack.c.l.b16 %v4521
        %v6041 = vunpack.c.h.b16 %v4521
        %v6042 = vunpack.c.l.b16 %v4522
        %v6043 = vunpack.c.h.b16 %v4522
        %v6044 = vunpack.c.l.b16 %v4523
        %v6045 = vunpack.c.h.b16 %v4523
        %v6046 = vunpack.c.l.b16 %v4524
        %v6047 = vunpack.c.h.b16 %v4524
        %v6048 = vunpack.c.l.b16 %v4525
        %v6049 = vunpack.c.h.b16 %v4525
        %v6050 = vunpack.c.l.b16 %v4526
        %v6051 = vunpack.c.h.b16 %v4526
        %v6052 = vunpack.c.l.b16 %v4527
        %v6053 = vunpack.c.h.b16 %v4527
        %v6054 = vunpack.c.l.b16 %v4528
        %v6055 = vunpack.c.h.b16 %v4528
        %v6056 = vunpack.c.l.b16 %v4529
        %v6057 = vunpack.c.h.b16 %v4529
        %v6058 = vunpack.c.l.b16 %v4530
        %v6059 = vunpack.c.h.b16 %v4530
        %v6060 = vunpack.c.l.b16 %v4531
        %v6061 = vunpack.c.h.b16 %v4531
        %v6062 = vunpack.c.l.b16 %v4532
        %v6063 = vunpack.c.h.b16 %v4532
        %v6064 = vunpack.c.l.b16 %v4533
        %v6065 = vunpack.c.h.b16 %v4533
        %v6066 = vunpack.c.l.b16 %v4534
        %v6067 = vunpack.c.h.b16 %v4534
        %v6068 = vunpack.c.l.b16 %v4535
        %v6069 = vunpack.c.h.b16 %v4535
        %v6070 = vunpack.c.l.b16 %v4536
        %v6071 = vunpack.c.h.b16 %v4536
        %v6072 = vunpack.c.l.b16 %v4537
        %v6073 = vunpack.c.h.b16 %v4537
        %v6074 = vunpack.c.l.b16 %v4538
        %v6075 = vunpack.c.h.b16 %v4538
        %v6076 = vunpack.c.l.b16 %v4539
        %v6077 = vunpack.c.h.b16 %v4539
        %v6078 = vunpack.c.l.b16 %v4540
        %v6079 = vunpack.c.h.b16 %v4540
        %v6080 = vunpack.c.l.b16 %v4541
        %v6081 = vunpack.c.h.b16 %v4541
        %v6082 = vunpack.c.l.b16 %v4542
        %v6083 = vunpack.c.h.b16 %v4542
        %v6084 = vunpack.c.l.b16 %v4543
        %v6085 = vunpack.c.h.b16 %v4543
        %v6086 = vunpack.c.l.b16 %v4544
        %v6087 = vunpack.c.h.b16 %v4544
        %v6088 = vunpack.c.l.b16 %v4545
        %v6089 = vunpack.c.h.b16 %v4545
        %v6090 = vunpack.c.l.b16 %v4546
        %v6091 = vunpack.c.h.b16 %v4546
        %v6092 = vunpack.c.l.b16 %v4547
        %v6093 = vunpack.c.h.b16 %v4547
        %v6094 = vunpack.c.l.b16 %v4548
        %v6095 = vunpack.c.h.b16 %v4548
        %v6096 = vunpack.c.l.b16 %v4549
        %v6097 = vunpack.c.h.b16 %v4549
        %v6098 = vunpack.c.l.b16 %v4550
        %v6099 = vunpack.c.h.b16 %v4550
        %v6100 = vunpack.c.l.b16 %v4551
        %v6101 = vunpack.c.h.b16 %v4551
        %v6102 = vunpack.c.l.b16 %v4552
        %v6103 = vunpack.c.h.b16 %v4552
        %v6104 = vunpack.c.l.b16 %v4553
        %v6105 = vunpack.c.h.b16 %v4553
        %v6106 = vunpack.c.l.b16 %v4554
        %v6107 = vunpack.c.h.b16 %v4554
        %v6108 = vunpack.c.l.b16 %v4555
        %v6109 = vunpack.c.h.b16 %v4555
        %v6110 = vunpack.c.l.b16 %v4556
        %v6111 = vunpack.c.h.b16 %v4556
        %v6112 = vunpack.c.l.b16 %v4557
        %v6113 = vunpack.c.h.b16 %v4557
        %v6114 = vunpack.c.l.b16 %v4558
        %v6115 = vunpack.c.h.b16 %v4558
        %v6116 = vunpack.c.l.b16 %v4559
        %v6117 = vunpack.c.h.b16 %v4559
        %v6118 = vunpack.c.l.b16 %v4560
        %v6119 = vunpack.c.h.b16 %v4560
        %v6120 = vunpack.c.l.b16 %v4561
        %v6121 = vunpack.c.h.b16 %v4561
        %v6122 = vunpack.c.l.b16 %v4562
        %v6123 = vunpack.c.h.b16 %v4562
        %v6124 = vunpack.c.l.b16 %v4563
        %v6125 = vunpack.c.h.b16 %v4563
        %v6126 = vunpack.c.l.b16 %v4564
        %v6127 = vunpack.c.h.b16 %v4564
        %v6128 = vunpack.c.l.b16 %v4565
        %v6129 = vunpack.c.h.b16 %v4565
        %v6130 = vunpack.c.l.b16 %v4566
        %v6131 = vunpack.c.h.b16 %v4566
        %v6132 = vunpack.c.l.b16 %v4567
        %v6133 = vunpack.c.h.b16 %v4567
        %v6134 = vunpack.c.l.b16 %v4568
        %v6135 = vunpack.c.h.b16 %v4568
        %v6136 = vunpack.c.l.b16 %v4569
        %v6137 = vunpack.c.h.b16 %v4569
        %v6138 = vunpack.c.l.b16 %v4570
        %v6139 = vunpack.c.h.b16 %v4570
        %v6140 = vunpack.c.l.b16 %v4571
        %v6141 = vunpack.c.h.b16 %v4571
        %v6142 = vunpack.c.l.b16 %v4572
        %v6143 = vunpack.c.h.b16 %v4572
        %v6144 = vunpack.c.l.b16 %v4573
        %v6145 = vunpack.c.h.b16 %v4573
        %v6146 = vunpack.c.l.b16 %v4574
        %v6147 = vunpack.c.h.b16 %v4574
        %v6148 = vunpack.c.l.b16 %v4575
        %v6149 = vunpack.c.h.b16 %v4575
        %v6150 = vunpack.c.l.b16 %v4576
        %v6151 = vunpack.c.h.b16 %v4576
        %v6152 = vunpack.c.l.b16 %v4577
        %v6153 = vunpack.c.h.b16 %v4577
        %v6154 = vunpack.c.l.b16 %v4578
        %v6155 = vunpack.c.h.b16 %v4578
        %v6156 = vunpack.c.l.b16 %v4579
        %v6157 = vunpack.c.h.b16 %v4579
        %v6158 = vpack.c.b16 %v5142, %v5134
        %v6159 = vpack.c.b16 %v5143, %v5135
        %v6160 = vpack.c.b16 %v5144, %v5136
        %v6161 = vpack.c.b16 %v5145, %v5137
        %v6162 = vpack.c.b16 %v5146, %v5138
        %v6163 = vpack.c.b16 %v5147, %v5139
        %v6164 = vpack.c.b16 %v5148, %v5140
        %v6165 = vpack.c.b16 %v5149, %v5141
        %v6166 = vpack.c.b16 %v5158, %v5150
        %v6167 = vpack.c.b16 %v5159, %v5151
        %v6168 = vpack.c.b16 %v5160, %v5152
        %v6169 = vpack.c.b16 %v5161, %v5153
        %v6170 = vpack.c.b16 %v5162, %v5154
        %v6171 = vpack.c.b16 %v5163, %v5155
        %v6172 = vpack.c.b16 %v5164, %v5156
        %v6173 = vpack.c.b16 %v5165, %v5157
        %v6174 = vpack.c.b16 %v5174, %v5166
        %v6175 = vpack.c.b16 %v5175, %v5167
        %v6176 = vpack.c.b16 %v5176, %v5168
        %v6177 = vpack.c.b16 %v5177, %v5169
        %v6178 = vpack.c.b16 %v5178, %v5170
        %v6179 = vpack.c.b16 %v5179, %v5171
        %v6180 = vpack.c.b16 %v5180, %v5172
        %v6181 = vpack.c.b16 %v5181, %v5173
        %v6182 = vpack.c.b16 %v5190, %v5182
        %v6183 = vpack.c.b16 %v5191, %v5183
        %v6184 = vpack.c.b16 %v5192, %v5184
        %v6185 = vpack.c.b16 %v5193, %v5185
        %v6186 = vpack.c.b16 %v5194, %v5186
        %v6187 = vpack.c.b16 %v5195, %v5187
        %v6188 = vpack.c.b16 %v5196, %v5188
        %v6189 = vpack.c.b16 %v5197, %v5189
        %v6190 = vpack.c.b16 %v5206, %v5198
        %v6191 = vpack.c.b16 %v5207, %v5199
        %v6192 = vpack.c.b16 %v5208, %v5200
        %v6193 = vpack.c.b16 %v5209, %v5201
        %v6194 = vpack.c.b16 %v5210, %v5202
        %v6195 = vpack.c.b16 %v5211, %v5203
        %v6196 = vpack.c.b16 %v5212, %v5204
        %v6197 = vpack.c.b16 %v5213, %v5205
        %v6198 = vpack.c.b16 %v5222, %v5214
        %v6199 = vpack.c.b16 %v5223, %v5215
        %v6200 = vpack.c.b16 %v5224, %v5216
        %v6201 = vpack.c.b16 %v5225, %v5217
        %v6202 = vpack.c.b16 %v5226, %v5218
        %v6203 = vpack.c.b16 %v5227, %v5219
        %v6204 = vpack.c.b16 %v5228, %v5220
        %v6205 = vpack.c.b16 %v5229, %v5221
        %v6206 = vpack.c.b16 %v5238, %v5230
        %v6207 = vpack.c.b16 %v5239, %v5231
        %v6208 = vpack.c.b16 %v5240, %v5232
        %v6209 = vpack.c.b16 %v5241, %v5233
        %v6210 = vpack.c.b16 %v5242, %v5234
        %v6211 = vpack.c.b16 %v5243, %v5235
        %v6212 = vpack.c.b16 %v5244, %v5236
        %v6213 = vpack.c.b16 %v5245, %v5237
        %v6214 = vpack.c.b16 %v5254, %v5246
        %v6215 = vpack.c.b16 %v5255, %v5247
        %v6216 = vpack.c.b16 %v5256, %v5248
        %v6217 = vpack.c.b16 %v5257, %v5249
        %v6218 = vpack.c.b16 %v5258, %v5250
        %v6219 = vpack.c.b16 %v5259, %v5251
        %v6220 = vpack.c.b16 %v5260, %v5252
        %v6221 = vpack.c.b16 %v5261, %v5253
        %v6222 = vpack.c.b16 %v5270, %v5262
        %v6223 = vpack.c.b16 %v5271, %v5263
        %v6224 = vpack.c.b16 %v5272, %v5264
        %v6225 = vpack.c.b16 %v5273, %v5265
        %v6226 = vpack.c.b16 %v5274, %v5266
        %v6227 = vpack.c.b16 %v5275, %v5267
        %v6228 = vpack.c.b16 %v5276, %v5268
        %v6229 = vpack.c.b16 %v5277, %v5269
        %v6230 = vpack.c.b16 %v5286, %v5278
        %v6231 = vpack.c.b16 %v5287, %v5279
        %v6232 = vpack.c.b16 %v5288, %v5280
        %v6233 = vpack.c.b16 %v5289, %v5281
        %v6234 = vpack.c.b16 %v5290, %v5282
        %v6235 = vpack.c.b16 %v5291, %v5283
        %v6236 = vpack.c.b16 %v5292, %v5284
        %v6237 = vpack.c.b16 %v5293, %v5285
        %v6238 = vpack.c.b16 %v5302, %v5294
        %v6239 = vpack.c.b16 %v5303, %v5295
        %v6240 = vpack.c.b16 %v5304, %v5296
        %v6241 = vpack.c.b16 %v5305, %v5297
        %v6242 = vpack.c.b16 %v5306, %v5298
        %v6243 = vpack.c.b16 %v5307, %v5299
        %v6244 = vpack.c.b16 %v5308, %v5300
        %v6245 = vpack.c.b16 %v5309, %v5301
        %v6246 = vpack.c.b16 %v5318, %v5310
        %v6247 = vpack.c.b16 %v5319, %v5311
        %v6248 = vpack.c.b16 %v5320, %v5312
        %v6249 = vpack.c.b16 %v5321, %v5313
        %v6250 = vpack.c.b16 %v5322, %v5314
        %v6251 = vpack.c.b16 %v5323, %v5315
        %v6252 = vpack.c.b16 %v5324, %v5316
        %v6253 = vpack.c.b16 %v5325, %v5317
        %v6254 = vpack.c.b16 %v5334, %v5326
        %v6255 = vpack.c.b16 %v5335, %v5327
        %v6256 = vpack.c.b16 %v5336, %v5328
        %v6257 = vpack.c.b16 %v5337, %v5329
        %v6258 = vpack.c.b16 %v5338, %v5330
        %v6259 = vpack.c.b16 %v5339, %v5331
        %v6260 = vpack.c.b16 %v5340, %v5332
        %v6261 = vpack.c.b16 %v5341, %v5333
        %v6262 = vpack.c.b16 %v5350, %v5342
        %v6263 = vpack.c.b16 %v5351, %v5343
        %v6264 = vpack.c.b16 %v5352, %v5344
        %v6265 = vpack.c.b16 %v5353, %v5345
        %v6266 = vpack.c.b16 %v5354, %v5346
        %v6267 = vpack.c.b16 %v5355, %v5347
        %v6268 = vpack.c.b16 %v5356, %v5348
        %v6269 = vpack.c.b16 %v5357, %v5349
        %v6270 = vpack.c.b16 %v5366, %v5358
        %v6271 = vpack.c.b16 %v5367, %v5359
        %v6272 = vpack.c.b16 %v5368, %v5360
        %v6273 = vpack.c.b16 %v5369, %v5361
        %v6274 = vpack.c.b16 %v5370, %v5362
        %v6275 = vpack.c.b16 %v5371, %v5363
        %v6276 = vpack.c.b16 %v5372, %v5364
        %v6277 = vpack.c.b16 %v5373, %v5365
        %v6278 = vpack.c.b16 %v5382, %v5374
        %v6279 = vpack.c.b16 %v5383, %v5375
        %v6280 = vpack.c.b16 %v5384, %v5376
        %v6281 = vpack.c.b16 %v5385, %v5377
        %v6282 = vpack.c.b16 %v5386, %v5378
        %v6283 = vpack.c.b16 %v5387, %v5379
        %v6284 = vpack.c.b16 %v5388, %v5380
        %v6285 = vpack.c.b16 %v5389, %v5381
        %v6286 = vpack.c.b16 %v5398, %v5390
        %v6287 = vpack.c.b16 %v5399, %v5391
        %v6288 = vpack.c.b16 %v5400, %v5392
        %v6289 = vpack.c.b16 %v5401, %v5393
        %v6290 = vpack.c.b16 %v5402, %v5394
        %v6291 = vpack.c.b16 %v5403, %v5395
        %v6292 = vpack.c.b16 %v5404, %v5396
        %v6293 = vpack.c.b16 %v5405, %v5397
        %v6294 = vpack.c.b16 %v5414, %v5406
        %v6295 = vpack.c.b16 %v5415, %v5407
        %v6296 = vpack.c.b16 %v5416, %v5408
        %v6297 = vpack.c.b16 %v5417, %v5409
        %v6298 = vpack.c.b16 %v5418, %v5410
        %v6299 = vpack.c.b16 %v5419, %v5411
        %v6300 = vpack.c.b16 %v5420, %v5412
        %v6301 = vpack.c.b16 %v5421, %v5413
        %v6302 = vpack.c.b16 %v5430, %v5422
        %v6303 = vpack.c.b16 %v5431, %v5423
        %v6304 = vpack.c.b16 %v5432, %v5424
        %v6305 = vpack.c.b16 %v5433, %v5425
        %v6306 = vpack.c.b16 %v5434, %v5426
        %v6307 = vpack.c.b16 %v5435, %v5427
        %v6308 = vpack.c.b16 %v5436, %v5428
        %v6309 = vpack.c.b16 %v5437, %v5429
        %v6310 = vpack.c.b16 %v5446, %v5438
        %v6311 = vpack.c.b16 %v5447, %v5439
        %v6312 = vpack.c.b16 %v5448, %v5440
        %v6313 = vpack.c.b16 %v5449, %v5441
        %v6314 = vpack.c.b16 %v5450, %v5442
        %v6315 = vpack.c.b16 %v5451, %v5443
        %v6316 = vpack.c.b16 %v5452, %v5444
        %v6317 = vpack.c.b16 %v5453, %v5445
        %v6318 = vpack.c.b16 %v5462, %v5454
        %v6319 = vpack.c.b16 %v5463, %v5455
        %v6320 = vpack.c.b16 %v5464, %v5456
        %v6321 = vpack.c.b16 %v5465, %v5457
        %v6322 = vpack.c.b16 %v5466, %v5458
        %v6323 = vpack.c.b16 %v5467, %v5459
        %v6324 = vpack.c.b16 %v5468, %v5460
        %v6325 = vpack.c.b16 %v5469, %v5461
        %v6326 = vpack.c.b16 %v5478, %v5470
        %v6327 = vpack.c.b16 %v5479, %v5471
        %v6328 = vpack.c.b16 %v5480, %v5472
        %v6329 = vpack.c.b16 %v5481, %v5473
        %v6330 = vpack.c.b16 %v5482, %v5474
        %v6331 = vpack.c.b16 %v5483, %v5475
        %v6332 = vpack.c.b16 %v5484, %v5476
        %v6333 = vpack.c.b16 %v5485, %v5477
        %v6334 = vpack.c.b16 %v5494, %v5486
        %v6335 = vpack.c.b16 %v5495, %v5487
        %v6336 = vpack.c.b16 %v5496, %v5488
        %v6337 = vpack.c.b16 %v5497, %v5489
        %v6338 = vpack.c.b16 %v5498, %v5490
        %v6339 = vpack.c.b16 %v5499, %v5491
        %v6340 = vpack.c.b16 %v5500, %v5492
        %v6341 = vpack.c.b16 %v5501, %v5493
        %v6342 = vpack.c.b16 %v5510, %v5502
        %v6343 = vpack.c.b16 %v5511, %v5503
        %v6344 = vpack.c.b16 %v5512, %v5504
        %v6345 = vpack.c.b16 %v5513, %v5505
        %v6346 = vpack.c.b16 %v5514, %v5506
        %v6347 = vpack.c.b16 %v5515, %v5507
        %v6348 = vpack.c.b16 %v5516, %v5508
        %v6349 = vpack.c.b16 %v5517, %v5509
        %v6350 = vpack.c.b16 %v5526, %v5518
        %v6351 = vpack.c.b16 %v5527, %v5519
        %v6352 = vpack.c.b16 %v5528, %v5520
        %v6353 = vpack.c.b16 %v5529, %v5521
        %v6354 = vpack.c.b16 %v5530, %v5522
        %v6355 = vpack.c.b16 %v5531, %v5523
        %v6356 = vpack.c.b16 %v5532, %v5524
        %v6357 = vpack.c.b16 %v5533, %v5525
        %v6358 = vpack.c.b16 %v5542, %v5534
        %v6359 = vpack.c.b16 %v5543, %v5535
        %v6360 = vpack.c.b16 %v5544, %v5536
        %v6361 = vpack.c.b16 %v5545, %v5537
        %v6362 = vpack.c.b16 %v5546, %v5538
        %v6363 = vpack.c.b16 %v5547, %v5539
        %v6364 = vpack.c.b16 %v5548, %v5540
        %v6365 = vpack.c.b16 %v5549, %v5541
        %v6366 = vpack.c.b16 %v5558, %v5550
        %v6367 = vpack.c.b16 %v5559, %v5551
        %v6368 = vpack.c.b16 %v5560, %v5552
        %v6369 = vpack.c.b16 %v5561, %v5553
        %v6370 = vpack.c.b16 %v5562, %v5554
        %v6371 = vpack.c.b16 %v5563, %v5555
        %v6372 = vpack.c.b16 %v5564, %v5556
        %v6373 = vpack.c.b16 %v5565, %v5557
        %v6374 = vpack.c.b16 %v5574, %v5566
        %v6375 = vpack.c.b16 %v5575, %v5567
        %v6376 = vpack.c.b16 %v5576, %v5568
        %v6377 = vpack.c.b16 %v5577, %v5569
        %v6378 = vpack.c.b16 %v5578, %v5570
        %v6379 = vpack.c.b16 %v5579, %v5571
        %v6380 = vpack.c.b16 %v5580, %v5572
        %v6381 = vpack.c.b16 %v5581, %v5573
        %v6382 = vpack.c.b16 %v5590, %v5582
        %v6383 = vpack.c.b16 %v5591, %v5583
        %v6384 = vpack.c.b16 %v5592, %v5584
        %v6385 = vpack.c.b16 %v5593, %v5585
        %v6386 = vpack.c.b16 %v5594, %v5586
        %v6387 = vpack.c.b16 %v5595, %v5587
        %v6388 = vpack.c.b16 %v5596, %v5588
        %v6389 = vpack.c.b16 %v5597, %v5589
        %v6390 = vpack.c.b16 %v5606, %v5598
        %v6391 = vpack.c.b16 %v5607, %v5599
        %v6392 = vpack.c.b16 %v5608, %v5600
        %v6393 = vpack.c.b16 %v5609, %v5601
        %v6394 = vpack.c.b16 %v5610, %v5602
        %v6395 = vpack.c.b16 %v5611, %v5603
        %v6396 = vpack.c.b16 %v5612, %v5604
        %v6397 = vpack.c.b16 %v5613, %v5605
        %v6398 = vpack.c.b16 %v5622, %v5614
        %v6399 = vpack.c.b16 %v5623, %v5615
        %v6400 = vpack.c.b16 %v5624, %v5616
        %v6401 = vpack.c.b16 %v5625, %v5617
        %v6402 = vpack.c.b16 %v5626, %v5618
        %v6403 = vpack.c.b16 %v5627, %v5619
        %v6404 = vpack.c.b16 %v5628, %v5620
        %v6405 = vpack.c.b16 %v5629, %v5621
        %v6406 = vpack.c.b16 %v5638, %v5630
        %v6407 = vpack.c.b16 %v5639, %v5631
        %v6408 = vpack.c.b16 %v5640, %v5632
        %v6409 = vpack.c.b16 %v5641, %v5633
        %v6410 = vpack.c.b16 %v5642, %v5634
        %v6411 = vpack.c.b16 %v5643, %v5635
        %v6412 = vpack.c.b16 %v5644, %v5636
        %v6413 = vpack.c.b16 %v5645, %v5637
        %v6414 = vpack.c.b16 %v5654, %v5646
        %v6415 = vpack.c.b16 %v5655, %v5647
        %v6416 = vpack.c.b16 %v5656, %v5648
        %v6417 = vpack.c.b16 %v5657, %v5649
        %v6418 = vpack.c.b16 %v5658, %v5650
        %v6419 = vpack.c.b16 %v5659, %v5651
        %v6420 = vpack.c.b16 %v5660, %v5652
        %v6421 = vpack.c.b16 %v5661, %v5653
        %v6422 = vpack.c.b16 %v5670, %v5662
        %v6423 = vpack.c.b16 %v5671, %v5663
        %v6424 = vpack.c.b16 %v5672, %v5664
        %v6425 = vpack.c.b16 %v5673, %v5665
        %v6426 = vpack.c.b16 %v5674, %v5666
        %v6427 = vpack.c.b16 %v5675, %v5667
        %v6428 = vpack.c.b16 %v5676, %v5668
        %v6429 = vpack.c.b16 %v5677, %v5669
        %v6430 = vpack.c.b16 %v5686, %v5678
        %v6431 = vpack.c.b16 %v5687, %v5679
        %v6432 = vpack.c.b16 %v5688, %v5680
        %v6433 = vpack.c.b16 %v5689, %v5681
        %v6434 = vpack.c.b16 %v5690, %v5682
        %v6435 = vpack.c.b16 %v5691, %v5683
        %v6436 = vpack.c.b16 %v5692, %v5684
        %v6437 = vpack.c.b16 %v5693, %v5685
        %v6438 = vpack.c.b16 %v5702, %v5694
        %v6439 = vpack.c.b16 %v5703, %v5695
        %v6440 = vpack.c.b16 %v5704, %v5696
        %v6441 = vpack.c.b16 %v5705, %v5697
        %v6442 = vpack.c.b16 %v5706, %v5698
        %v6443 = vpack.c.b16 %v5707, %v5699
        %v6444 = vpack.c.b16 %v5708, %v5700
        %v6445 = vpack.c.b16 %v5709, %v5701
        %v6446 = vpack.c.b16 %v5718, %v5710
        %v6447 = vpack.c.b16 %v5719, %v5711
        %v6448 = vpack.c.b16 %v5720, %v5712
        %v6449 = vpack.c.b16 %v5721, %v5713
        %v6450 = vpack.c.b16 %v5722, %v5714
        %v6451 = vpack.c.b16 %v5723, %v5715
        %v6452 = vpack.c.b16 %v5724, %v5716
        %v6453 = vpack.c.b16 %v5725, %v5717
        %v6454 = vpack.c.b16 %v5734, %v5726
        %v6455 = vpack.c.b16 %v5735, %v5727
        %v6456 = vpack.c.b16 %v5736, %v5728
        %v6457 = vpack.c.b16 %v5737, %v5729
        %v6458 = vpack.c.b16 %v5738, %v5730
        %v6459 = vpack.c.b16 %v5739, %v5731
        %v6460 = vpack.c.b16 %v5740, %v5732
        %v6461 = vpack.c.b16 %v5741, %v5733
        %v6462 = vpack.c.b16 %v5750, %v5742
        %v6463 = vpack.c.b16 %v5751, %v5743
        %v6464 = vpack.c.b16 %v5752, %v5744
        %v6465 = vpack.c.b16 %v5753, %v5745
        %v6466 = vpack.c.b16 %v5754, %v5746
        %v6467 = vpack.c.b16 %v5755, %v5747
        %v6468 = vpack.c.b16 %v5756, %v5748
        %v6469 = vpack.c.b16 %v5757, %v5749
        %v6470 = vpack.c.b16 %v5766, %v5758
        %v6471 = vpack.c.b16 %v5767, %v5759
        %v6472 = vpack.c.b16 %v5768, %v5760
        %v6473 = vpack.c.b16 %v5769, %v5761
        %v6474 = vpack.c.b16 %v5770, %v5762
        %v6475 = vpack.c.b16 %v5771, %v5763
        %v6476 = vpack.c.b16 %v5772, %v5764
        %v6477 = vpack.c.b16 %v5773, %v5765
        %v6478 = vpack.c.b16 %v5782, %v5774
        %v6479 = vpack.c.b16 %v5783, %v5775
        %v6480 = vpack.c.b16 %v5784, %v5776
        %v6481 = vpack.c.b16 %v5785, %v5777
        %v6482 = vpack.c.b16 %v5786, %v5778
        %v6483 = vpack.c.b16 %v5787, %v5779
        %v6484 = vpack.c.b16 %v5788, %v5780
        %v6485 = vpack.c.b16 %v5789, %v5781
        %v6486 = vpack.c.b16 %v5798, %v5790
        %v6487 = vpack.c.b16 %v5799, %v5791
        %v6488 = vpack.c.b16 %v5800, %v5792
        %v6489 = vpack.c.b16 %v5801, %v5793
        %v6490 = vpack.c.b16 %v5802, %v5794
        %v6491 = vpack.c.b16 %v5803, %v5795
        %v6492 = vpack.c.b16 %v5804, %v5796
        %v6493 = vpack.c.b16 %v5805, %v5797
        %v6494 = vpack.c.b16 %v5814, %v5806
        %v6495 = vpack.c.b16 %v5815, %v5807
        %v6496 = vpack.c.b16 %v5816, %v5808
        %v6497 = vpack.c.b16 %v5817, %v5809
        %v6498 = vpack.c.b16 %v5818, %v5810
        %v6499 = vpack.c.b16 %v5819, %v5811
        %v6500 = vpack.c.b16 %v5820, %v5812
        %v6501 = vpack.c.b16 %v5821, %v5813
        %v6502 = vpack.c.b16 %v5830, %v5822
        %v6503 = vpack.c.b16 %v5831, %v5823
        %v6504 = vpack.c.b16 %v5832, %v5824
        %v6505 = vpack.c.b16 %v5833, %v5825
        %v6506 = vpack.c.b16 %v5834, %v5826
        %v6507 = vpack.c.b16 %v5835, %v5827
        %v6508 = vpack.c.b16 %v5836, %v5828
        %v6509 = vpack.c.b16 %v5837, %v5829
        %v6510 = vpack.c.b16 %v5846, %v5838
        %v6511 = vpack.c.b16 %v5847, %v5839
        %v6512 = vpack.c.b16 %v5848, %v5840
        %v6513 = vpack.c.b16 %v5849, %v5841
        %v6514 = vpack.c.b16 %v5850, %v5842
        %v6515 = vpack.c.b16 %v5851, %v5843
        %v6516 = vpack.c.b16 %v5852, %v5844
        %v6517 = vpack.c.b16 %v5853, %v5845
        %v6518 = vpack.c.b16 %v5862, %v5854
        %v6519 = vpack.c.b16 %v5863, %v5855
        %v6520 = vpack.c.b16 %v5864, %v5856
        %v6521 = vpack.c.b16 %v5865, %v5857
        %v6522 = vpack.c.b16 %v5866, %v5858
        %v6523 = vpack.c.b16 %v5867, %v5859
        %v6524 = vpack.c.b16 %v5868, %v5860
        %v6525 = vpack.c.b16 %v5869, %v5861
        %v6526 = vpack.c.b16 %v5878, %v5870
        %v6527 = vpack.c.b16 %v5879, %v5871
        %v6528 = vpack.c.b16 %v5880, %v5872
        %v6529 = vpack.c.b16 %v5881, %v5873
        %v6530 = vpack.c.b16 %v5882, %v5874
        %v6531 = vpack.c.b16 %v5883, %v5875
        %v6532 = vpack.c.b16 %v5884, %v5876
        %v6533 = vpack.c.b16 %v5885, %v5877
        %v6534 = vpack.c.b16 %v5894, %v5886
        %v6535 = vpack.c.b16 %v5895, %v5887
        %v6536 = vpack.c.b16 %v5896, %v5888
        %v6537 = vpack.c.b16 %v5897, %v5889
        %v6538 = vpack.c.b16 %v5898, %v5890
        %v6539 = vpack.c.b16 %v5899, %v5891
        %v6540 = vpack.c.b16 %v5900, %v5892
        %v6541 = vpack.c.b16 %v5901, %v5893
        %v6542 = vpack.c.b16 %v5910, %v5902
        %v6543 = vpack.c.b16 %v5911, %v5903
        %v6544 = vpack.c.b16 %v5912, %v5904
        %v6545 = vpack.c.b16 %v5913, %v5905
        %v6546 = vpack.c.b16 %v5914, %v5906
        %v6547 = vpack.c.b16 %v5915, %v5907
        %v6548 = vpack.c.b16 %v5916, %v5908
        %v6549 = vpack.c.b16 %v5917, %v5909
        %v6550 = vpack.c.b16 %v5926, %v5918
        %v6551 = vpack.c.b16 %v5927, %v5919
        %v6552 = vpack.c.b16 %v5928, %v5920
        %v6553 = vpack.c.b16 %v5929, %v5921
        %v6554 = vpack.c.b16 %v5930, %v5922
        %v6555 = vpack.c.b16 %v5931, %v5923
        %v6556 = vpack.c.b16 %v5932, %v5924
        %v6557 = vpack.c.b16 %v5933, %v5925
        %v6558 = vpack.c.b16 %v5942, %v5934
        %v6559 = vpack.c.b16 %v5943, %v5935
        %v6560 = vpack.c.b16 %v5944, %v5936
        %v6561 = vpack.c.b16 %v5945, %v5937
        %v6562 = vpack.c.b16 %v5946, %v5938
        %v6563 = vpack.c.b16 %v5947, %v5939
        %v6564 = vpack.c.b16 %v5948, %v5940
        %v6565 = vpack.c.b16 %v5949, %v5941
        %v6566 = vpack.c.b16 %v5958, %v5950
        %v6567 = vpack.c.b16 %v5959, %v5951
        %v6568 = vpack.c.b16 %v5960, %v5952
        %v6569 = vpack.c.b16 %v5961, %v5953
        %v6570 = vpack.c.b16 %v5962, %v5954
        %v6571 = vpack.c.b16 %v5963, %v5955
        %v6572 = vpack.c.b16 %v5964, %v5956
        %v6573 = vpack.c.b16 %v5965, %v5957
        %v6574 = vpack.c.b16 %v5974, %v5966
        %v6575 = vpack.c.b16 %v5975, %v5967
        %v6576 = vpack.c.b16 %v5976, %v5968
        %v6577 = vpack.c.b16 %v5977, %v5969
        %v6578 = vpack.c.b16 %v5978, %v5970
        %v6579 = vpack.c.b16 %v5979, %v5971
        %v6580 = vpack.c.b16 %v5980, %v5972
        %v6581 = vpack.c.b16 %v5981, %v5973
        %v6582 = vpack.c.b16 %v5990, %v5982
        %v6583 = vpack.c.b16 %v5991, %v5983
        %v6584 = vpack.c.b16 %v5992, %v5984
        %v6585 = vpack.c.b16 %v5993, %v5985
        %v6586 = vpack.c.b16 %v5994, %v5986
        %v6587 = vpack.c.b16 %v5995, %v5987
        %v6588 = vpack.c.b16 %v5996, %v5988
        %v6589 = vpack.c.b16 %v5997, %v5989
        %v6590 = vpack.c.b16 %v6006, %v5998
        %v6591 = vpack.c.b16 %v6007, %v5999
        %v6592 = vpack.c.b16 %v6008, %v6000
        %v6593 = vpack.c.b16 %v6009, %v6001
        %v6594 = vpack.c.b16 %v6010, %v6002
        %v6595 = vpack.c.b16 %v6011, %v6003
        %v6596 = vpack.c.b16 %v6012, %v6004
        %v6597 = vpack.c.b16 %v6013, %v6005
        %v6598 = vpack.c.b16 %v6022, %v6014
        %v6599 = vpack.c.b16 %v6023, %v6015
        %v6600 = vpack.c.b16 %v6024, %v6016
        %v6601 = vpack.c.b16 %v6025, %v6017
        %v6602 = vpack.c.b16 %v6026, %v6018
        %v6603 = vpack.c.b16 %v6027, %v6019
        %v6604 = vpack.c.b16 %v6028, %v6020
        %v6605 = vpack.c.b16 %v6029, %v6021
        %v6606 = vpack.c.b16 %v6038, %v6030
        %v6607 = vpack.c.b16 %v6039, %v6031
        %v6608 = vpack.c.b16 %v6040, %v6032
        %v6609 = vpack.c.b16 %v6041, %v6033
        %v6610 = vpack.c.b16 %v6042, %v6034
        %v6611 = vpack.c.b16 %v6043, %v6035
        %v6612 = vpack.c.b16 %v6044, %v6036
        %v6613 = vpack.c.b16 %v6045, %v6037
        %v6614 = vpack.c.b16 %v6054, %v6046
        %v6615 = vpack.c.b16 %v6055, %v6047
        %v6616 = vpack.c.b16 %v6056, %v6048
        %v6617 = vpack.c.b16 %v6057, %v6049
        %v6618 = vpack.c.b16 %v6058, %v6050
        %v6619 = vpack.c.b16 %v6059, %v6051
        %v6620 = vpack.c.b16 %v6060, %v6052
        %v6621 = vpack.c.b16 %v6061, %v6053
        %v6622 = vpack.c.b16 %v6070, %v6062
        %v6623 = vpack.c.b16 %v6071, %v6063
        %v6624 = vpack.c.b16 %v6072, %v6064
        %v6625 = vpack.c.b16 %v6073, %v6065
        %v6626 = vpack.c.b16 %v6074, %v6066
        %v6627 = vpack.c.b16 %v6075, %v6067
        %v6628 = vpack.c.b16 %v6076, %v6068
        %v6629 = vpack.c.b16 %v6077, %v6069
        %v6630 = vpack.c.b16 %v6086, %v6078
        %v6631 = vpack.c.b16 %v6087, %v6079
        %v6632 = vpack.c.b16 %v6088, %v6080
        %v6633 = vpack.c.b16 %v6089, %v6081
        %v6634 = vpack.c.b16 %v6090, %v6082
        %v6635 = vpack.c.b16 %v6091, %v6083
        %v6636 = vpack.c.b16 %v6092, %v6084
        %v6637 = vpack.c.b16 %v6093, %v6085
        %v6638 = vpack.c.b16 %v6102, %v6094
        %v6639 = vpack.c.b16 %v6103, %v6095
        %v6640 = vpack.c.b16 %v6104, %v6096
        %v6641 = vpack.c.b16 %v6105, %v6097
        %v6642 = vpack.c.b16 %v6106, %v6098
        %v6643 = vpack.c.b16 %v6107, %v6099
        %v6644 = vpack.c.b16 %v6108, %v6100
        %v6645 = vpack.c.b16 %v6109, %v6101
        %v6646 = vpack.c.b16 %v6118, %v6110
        %v6647 = vpack.c.b16 %v6119, %v6111
        %v6648 = vpack.c.b16 %v6120, %v6112
        %v6649 = vpack.c.b16 %v6121, %v6113
        %v6650 = vpack.c.b16 %v6122, %v6114
        %v6651 = vpack.c.b16 %v6123, %v6115
        %v6652 = vpack.c.b16 %v6124, %v6116
        %v6653 = vpack.c.b16 %v6125, %v6117
        %v6654 = vpack.c.b16 %v6134, %v6126
        %v6655 = vpack.c.b16 %v6135, %v6127
        %v6656 = vpack.c.b16 %v6136, %v6128
        %v6657 = vpack.c.b16 %v6137, %v6129
        %v6658 = vpack.c.b16 %v6138, %v6130
        %v6659 = vpack.c.b16 %v6139, %v6131
        %v6660 = vpack.c.b16 %v6140, %v6132
        %v6661 = vpack.c.b16 %v6141, %v6133
        %v6662 = vpack.c.b16 %v6150, %v6142
        %v6663 = vpack.c.b16 %v6151, %v6143
        %v6664 = vpack.c.b16 %v6152, %v6144
        %v6665 = vpack.c.b16 %v6153, %v6145
        %v6666 = vpack.c.b16 %v6154, %v6146
        %v6667 = vpack.c.b16 %v6155, %v6147
        %v6668 = vpack.c.b16 %v6156, %v6148
        %v6669 = vpack.c.b16 %v6157, %v6149
        %7182 = vmatprep.subr.bf16.mxu0 %v6159
        %7183 = vmatpush1.bf16.msra.mxu0 %v6158
        %7184 = vmatprep.subr.bf16.mxu0 %v6167
        %7185 = vmatpush1.bf16.msra.mxu0 %v6166
        %7186 = vmatprep.subr.bf16.mxu0 %v6175
        %7187 = vmatpush1.bf16.msra.mxu0 %v6174
        %7188 = vmatprep.subr.bf16.mxu0 %v6183
        %7189 = vmatpush1.bf16.msra.mxu0 %v6182
        %7190 = vmatprep.subr.bf16.mxu0 %v6191
        %7191 = vmatpush1.bf16.msra.mxu0 %v6190
        %7192 = vmatprep.subr.bf16.mxu0 %v6199
        %7193 = vmatpush1.bf16.msra.mxu0 %v6198
        %7194 = vmatprep.subr.bf16.mxu0 %v6207
        %7195 = vmatpush1.bf16.msra.mxu0 %v6206
        %7196 = vmatprep.subr.bf16.mxu0 %v6215
        %7197 = vmatpush1.bf16.msra.mxu0 %v6214
        %7198 = vmatprep.subr.bf16.mxu0 %v6223
        %7199 = vmatpush1.bf16.msra.mxu0 %v6222
        %7200 = vmatprep.subr.bf16.mxu0 %v6231
        %7201 = vmatpush1.bf16.msra.mxu0 %v6230
        %7202 = vmatprep.subr.bf16.mxu0 %v6239
        %7203 = vmatpush1.bf16.msra.mxu0 %v6238
        %7204 = vmatprep.subr.bf16.mxu0 %v6247
        %7205 = vmatpush1.bf16.msra.mxu0 %v6246
        %7206 = vmatprep.subr.bf16.mxu0 %v6255
        %7207 = vmatpush1.bf16.msra.mxu0 %v6254
        %7208 = vmatprep.subr.bf16.mxu0 %v6263
        %7209 = vmatpush1.bf16.msra.mxu0 %v6262
        %7210 = vmatprep.subr.bf16.mxu0 %v6271
        %7211 = vmatpush1.bf16.msra.mxu0 %v6270
        %7212 = vmatprep.subr.bf16.mxu0 %v6279
        %7213 = vmatpush1.bf16.msra.mxu0 %v6278
        %7214 = vmatprep.mubr.bf16.mxu0 %v3941
        %7215 = vmatmul.mubr.bf16.gmra.mrb[0].mxu0 %v3940
        %v7216 = vpop.f32.mrb[0].mxu0
        %v7217 = vadd.f32 %v4585, %v7216
        %v7218 = vpop.f32.mrb[0].mxu0
        %v7219 = vadd.f32 %v4589, %v7218
        %v7220 = vpop.f32.mrb[0].mxu0
        %v7221 = vadd.f32 %v4585, %v7220
        %v7222 = vpop.f32.mrb[0].mxu0
        %v7223 = vadd.f32 %v4589, %v7222
        %7224 = vmatprep.mubr.bf16.mxu0 %v3949
        %7225 = vmatmul.mubr.bf16.gmra.mrb[0].mxu0 %v3948
        %v7226 = vpop.f32.mrb[0].mxu0
        %v7227 = vadd.f32 %v4585, %v7226
        %v7228 = vpop.f32.mrb[0].mxu0
        %v7229 = vadd.f32 %v4589, %v7228
        %v7230 = vpop.f32.mrb[0].mxu0
        %v7231 = vadd.f32 %v4585, %v7230
        %v7232 = vpop.f32.mrb[0].mxu0
        %v7233 = vadd.f32 %v4589, %v7232
        %7234 = vmatprep.mubr.bf16.mxu0 %v3957
        %7235 = vmatmul.mubr.bf16.gmra.mrb[0].mxu0 %v3956
        %v7236 = vpop.f32.mrb[0].mxu0
        %v7237 = vadd.f32 %v4585, %v7236
        %v7238 = vpop.f32.mrb[0].mxu0
        %v7239 = vadd.f32 %v4589, %v7238
        %v7240 = vpop.f32.mrb[0].mxu0
        %v7241 = vadd.f32 %v4585, %v7240
        %v7242 = vpop.f32.mrb[0].mxu0
        %v7243 = vadd.f32 %v4589, %v7242
        %7244 = vmatprep.mubr.bf16.mxu0 %v3965
        %7245 = vmatmul.mubr.bf16.gmra.mrb[0].mxu0 %v3964
        %v7246 = vpop.f32.mrb[0].mxu0
        %v7247 = vadd.f32 %v4585, %v7246
        %v7248 = vpop.f32.mrb[0].mxu0
        %v7249 = vadd.f32 %v4589, %v7248
        %v7250 = vpop.f32.mrb[0].mxu0
        %v7251 = vadd.f32 %v4585, %v7250
        %v7252 = vpop.f32.mrb[0].mxu0
        %v7253 = vadd.f32 %v4589, %v7252
        %7254 = vmatprep.mubr.bf16.mxu0 %v3973
        %7255 = vmatmul.mubr.bf16.gmra.mrb[0].mxu0 %v3972
        %v7256 = vpop.f32.mrb[0].mxu0
        %v7257 = vadd.f32 %v4585, %v7256
        %v7258 = vpop.f32.mrb[0].mxu0
        %v7259 = vadd.f32 %v4589, %v7258
        %v7260 = vpop.f32.mrb[0].mxu0
        %v7261 = vadd.f32 %v4585, %v7260
        %v7262 = vpop.f32.mrb[0].mxu0
        %v7263 = vadd.f32 %v4589, %v7262
        %7264 = vmatprep.mubr.bf16.mxu0 %v3981
        %7265 = vmatmul.mubr.bf16.gmra.mrb[0].mxu0 %v3980
        %v7266 = vpop.f32.mrb[0].mxu0
        %v7267 = vadd.f32 %v4585, %v7266
        %v7268 = vpop.f32.mrb[0].mxu0
        %v7269 = vadd.f32 %v4589, %v7268
        %v7270 = vpop.f32.mrb[0].mxu0
        %v7271 = vadd.f32 %v4585, %v7270
        %v7272 = vpop.f32.mrb[0].mxu0
        %v7273 = vadd.f32 %v4589, %v7272
        %7274 = vmatprep.mubr.bf16.mxu0 %v3989
        %7275 = vmatmul.mubr.bf16.gmra.mrb[0].mxu0 %v3988
        %v7276 = vpop.f32.mrb[0].mxu0
        %v7277 = vadd.f32 %v4585, %v7276
        %v7278 = vpop.f32.mrb[0].mxu0
        %v7279 = vadd.f32 %v4589, %v7278
        %v7280 = vpop.f32.mrb[0].mxu0
        %v7281 = vadd.f32 %v4585, %v7280
        %v7282 = vpop.f32.mrb[0].mxu0
        %v7283 = vadd.f32 %v4589, %v7282
        %7284 = vmatprep.mubr.bf16.mxu0 %v3997
        %7285 = vmatmul.mubr.bf16.gmra.mrb[0].mxu0 %v3996
        %v7286 = vpop.f32.mrb[0].mxu0
        %v7287 = vadd.f32 %v4585, %v7286
        %v7288 = vpop.f32.mrb[0].mxu0
        %v7289 = vadd.f32 %v4589, %v7288
        %v7290 = vpop.f32.mrb[0].mxu0
        %v7291 = vadd.f32 %v4585, %v7290
        %v7292 = vpop.f32.mrb[0].mxu0
        %v7293 = vadd.f32 %v4589, %v7292
        %7294 = vmatprep.mubr.bf16.mxu0 %v4005
        %7295 = vmatmul.mubr.bf16.gmra.mrb[0].mxu0 %v4004
        %v7296 = vpop.f32.mrb[0].mxu0
        %v7297 = vadd.f32 %v4585, %v7296
        %v7298 = vpop.f32.mrb[0].mxu0
        %v7299 = vadd.f32 %v4589, %v7298
        %v7300 = vpop.f32.mrb[0].mxu0
        %v7301 = vadd.f32 %v4585, %v7300
        %v7302 = vpop.f32.mrb[0].mxu0
        %v7303 = vadd.f32 %v4589, %v7302
        %7304 = vmatprep.mubr.bf16.mxu0 %v4013
        %7305 = vmatmul.mubr.bf16.gmra.mrb[0].mxu0 %v4012
        %v7306 = vpop.f32.mrb[0].mxu0
        %v7307 = vadd.f32 %v4585, %v7306
        %v7308 = vpop.f32.mrb[0].mxu0
        %v7309 = vadd.f32 %v4589, %v7308
        %v7310 = vpop.f32.mrb[0].mxu0
        %v7311 = vadd.f32 %v4585, %v7310
        %v7312 = vpop.f32.mrb[0].mxu0
        %v7313 = vadd.f32 %v4589, %v7312
        %7314 = vmatprep.mubr.bf16.mxu0 %v4021
        %7315 = vmatmul.mubr.bf16.gmra.mrb[0].mxu0 %v4020
        %v7316 = vpop.f32.mrb[0].mxu0
        %v7317 = vadd.f32 %v4585, %v7316
        %v7318 = vpop.f32.mrb[0].mxu0
        %v7319 = vadd.f32 %v4589, %v7318
        %v7320 = vpop.f32.mrb[0].mxu0
        %v7321 = vadd.f32 %v4585, %v7320
        %v7322 = vpop.f32.mrb[0].mxu0
        %v7323 = vadd.f32 %v4589, %v7322
        %7324 = vmatprep.mubr.bf16.mxu0 %v4029
        %7325 = vmatmul.mubr.bf16.gmra.mrb[0].mxu0 %v4028
        %v7326 = vpop.f32.mrb[0].mxu0
        %v7327 = vadd.f32 %v4585, %v7326
        %v7328 = vpop.f32.mrb[0].mxu0
        %v7329 = vadd.f32 %v4589, %v7328
        %v7330 = vpop.f32.mrb[0].mxu0
        %v7331 = vadd.f32 %v4585, %v7330
        %v7332 = vpop.f32.mrb[0].mxu0
        %v7333 = vadd.f32 %v4589, %v7332
        %7334 = vmatprep.mubr.bf16.mxu0 %v4037
        %7335 = vmatmul.mubr.bf16.gmra.mrb[0].mxu0 %v4036
        %v7336 = vpop.f32.mrb[0].mxu0
        %v7337 = vadd.f32 %v4585, %v7336
        %v7338 = vpop.f32.mrb[0].mxu0
        %v7339 = vadd.f32 %v4589, %v7338
        %v7340 = vpop.f32.mrb[0].mxu0
        %v7341 = vadd.f32 %v4585, %v7340
        %v7342 = vpop.f32.mrb[0].mxu0
        %v7343 = vadd.f32 %v4589, %v7342
        %7344 = vmatprep.mubr.bf16.mxu0 %v4045
        %7345 = vmatmul.mubr.bf16.gmra.mrb[0].mxu0 %v4044
        %v7346 = vpop.f32.mrb[0].mxu0
        %v7347 = vadd.f32 %v4585, %v7346
        %v7348 = vpop.f32.mrb[0].mxu0
        %v7349 = vadd.f32 %v4589, %v7348
        %v7350 = vpop.f32.mrb[0].mxu0
        %v7351 = vadd.f32 %v4585, %v7350
        %v7352 = vpop.f32.mrb[0].mxu0
        %v7353 = vadd.f32 %v4589, %v7352
        %7354 = vmatprep.mubr.bf16.mxu0 %v4053
        %7355 = vmatmul.mubr.bf16.gmra.mrb[0].mxu0 %v4052
        %v7356 = vpop.f32.mrb[0].mxu0
        %v7357 = vadd.f32 %v4585, %v7356
        %v7358 = vpop.f32.mrb[0].mxu0
        %v7359 = vadd.f32 %v4589, %v7358
        %v7360 = vpop.f32.mrb[0].mxu0
        %v7361 = vadd.f32 %v4585, %v7360
        %v7362 = vpop.f32.mrb[0].mxu0
        %v7363 = vadd.f32 %v4589, %v7362
        %7364 = vmatprep.mubr.bf16.mxu0 %v4061
        %7365 = vmatmul.mubr.bf16.gmra.mrb[0].mxu0 %v4060
        %v7366 = vpop.f32.mrb[0].mxu0
        %v7367 = vadd.f32 %v4585, %v7366
        %v7368 = vpop.f32.mrb[0].mxu0
        %v7369 = vadd.f32 %v4589, %v7368
        %v7370 = vpop.f32.mrb[0].mxu0
        %v7371 = vadd.f32 %v4585, %v7370
        %v7372 = vpop.f32.mrb[0].mxu0
        %v7373 = vadd.f32 %v4589, %v7372
        %7374 = vdwg.mxu0
        %7375 = vmatprep.subr.bf16.mxu0 %v6287
        %7376 = vmatpush1.bf16.msra.mxu0 %v6286
        %7377 = vmatprep.subr.bf16.mxu0 %v6295
        %7378 = vmatpush1.bf16.msra.mxu0 %v6294
        %7379 = vmatprep.subr.bf16.mxu0 %v6303
        %7380 = vmatpush1.bf16.msra.mxu0 %v6302
        %7381 = vmatprep.subr.bf16.mxu0 %v6311
        %7382 = vmatpush1.bf16.msra.mxu0 %v6310
        %7383 = vmatprep.subr.bf16.mxu0 %v6319
        %7384 = vmatpush1.bf16.msra.mxu0 %v6318
        %7385 = vmatprep.subr.bf16.mxu0 %v6327
        %7386 = vmatpush1.bf16.msra.mxu0 %v6326
        %7387 = vmatprep.subr.bf16.mxu0 %v6335
        %7388 = vmatpush1.bf16.msra.mxu0 %v6334
        %7389 = vmatprep.subr.bf16.mxu0 %v6343
        %7390 = vmatpush1.bf16.msra.mxu0 %v6342
        %7391 = vmatprep.subr.bf16.mxu0 %v6351
        %7392 = vmatpush1.bf16.msra.mxu0 %v6350
        %7393 = vmatprep.subr.bf16.mxu0 %v6359
        %7394 = vmatpush1.bf16.msra.mxu0 %v6358
        %7395 = vmatprep.subr.bf16.mxu0 %v6367
        %7396 = vmatpush1.bf16.msra.mxu0 %v6366
        %7397 = vmatprep.subr.bf16.mxu0 %v6375
        %7398 = vmatpush1.bf16.msra.mxu0 %v6374
        %7399 = vmatprep.subr.bf16.mxu0 %v6383
        %7400 = vmatpush1.bf16.msra.mxu0 %v6382
        %7401 = vmatprep.subr.bf16.mxu0 %v6391
        %7402 = vmatpush1.bf16.msra.mxu0 %v6390
        %7403 = vmatprep.subr.bf16.mxu0 %v6399
        %7404 = vmatpush1.bf16.msra.mxu0 %v6398
        %7405 = vmatprep.subr.bf16.mxu0 %v6407
        %7406 = vmatpush1.bf16.msra.mxu0 %v6406
        %7407 = vmatprep.mubr.bf16.mxu0 %v3943
        %7408 = vmatmul.mubr.bf16.gmra.mrb[0].mxu0 %v3942
        %v7409 = vpop.f32.mrb[0].mxu0
        %v7410 = vadd.f32 %v7217, %v7409
        %v7411 = vpop.f32.mrb[0].mxu0
        %v7412 = vadd.f32 %v7219, %v7411
        %v7413 = vpop.f32.mrb[0].mxu0
        %v7414 = vadd.f32 %v7221, %v7413
        %v7415 = vpop.f32.mrb[0].mxu0
        %v7416 = vadd.f32 %v7223, %v7415
        %7417 = vmatprep.mubr.bf16.mxu0 %v3951
        %7418 = vmatmul.mubr.bf16.gmra.mrb[0].mxu0 %v3950
        %v7419 = vpop.f32.mrb[0].mxu0
        %v7420 = vadd.f32 %v7227, %v7419
        %v7421 = vpop.f32.mrb[0].mxu0
        %v7422 = vadd.f32 %v7229, %v7421
        %v7423 = vpop.f32.mrb[0].mxu0
        %v7424 = vadd.f32 %v7231, %v7423
        %v7425 = vpop.f32.mrb[0].mxu0
        %v7426 = vadd.f32 %v7233, %v7425
        %7427 = vmatprep.mubr.bf16.mxu0 %v3959
        %7428 = vmatmul.mubr.bf16.gmra.mrb[0].mxu0 %v3958
        %v7429 = vpop.f32.mrb[0].mxu0
        %v7430 = vadd.f32 %v7237, %v7429
        %v7431 = vpop.f32.mrb[0].mxu0
        %v7432 = vadd.f32 %v7239, %v7431
        %v7433 = vpop.f32.mrb[0].mxu0
        %v7434 = vadd.f32 %v7241, %v7433
        %v7435 = vpop.f32.mrb[0].mxu0
        %v7436 = vadd.f32 %v7243, %v7435
        %7437 = vmatprep.mubr.bf16.mxu0 %v3967
        %7438 = vmatmul.mubr.bf16.gmra.mrb[0].mxu0 %v3966
        %v7439 = vpop.f32.mrb[0].mxu0
        %v7440 = vadd.f32 %v7247, %v7439
        %v7441 = vpop.f32.mrb[0].mxu0
        %v7442 = vadd.f32 %v7249, %v7441
        %v7443 = vpop.f32.mrb[0].mxu0
        %v7444 = vadd.f32 %v7251, %v7443
        %v7445 = vpop.f32.mrb[0].mxu0
        %v7446 = vadd.f32 %v7253, %v7445
        %7447 = vmatprep.mubr.bf16.mxu0 %v3975
        %7448 = vmatmul.mubr.bf16.gmra.mrb[0].mxu0 %v3974
        %v7449 = vpop.f32.mrb[0].mxu0
        %v7450 = vadd.f32 %v7257, %v7449
        %v7451 = vpop.f32.mrb[0].mxu0
        %v7452 = vadd.f32 %v7259, %v7451
        %v7453 = vpop.f32.mrb[0].mxu0
        %v7454 = vadd.f32 %v7261, %v7453
        %v7455 = vpop.f32.mrb[0].mxu0
        %v7456 = vadd.f32 %v7263, %v7455
        %7457 = vmatprep.mubr.bf16.mxu0 %v3983
        %7458 = vmatmul.mubr.bf16.gmra.mrb[0].mxu0 %v3982
        %v7459 = vpop.f32.mrb[0].mxu0
        %v7460 = vadd.f32 %v7267, %v7459
        %v7461 = vpop.f32.mrb[0].mxu0
        %v7462 = vadd.f32 %v7269, %v7461
        %v7463 = vpop.f32.mrb[0].mxu0
        %v7464 = vadd.f32 %v7271, %v7463
        %v7465 = vpop.f32.mrb[0].mxu0
        %v7466 = vadd.f32 %v7273, %v7465
        %7467 = vmatprep.mubr.bf16.mxu0 %v3991
        %7468 = vmatmul.mubr.bf16.gmra.mrb[0].mxu0 %v3990
        %v7469 = vpop.f32.mrb[0].mxu0
        %v7470 = vadd.f32 %v7277, %v7469
        %v7471 = vpop.f32.mrb[0].mxu0
        %v7472 = vadd.f32 %v7279, %v7471
        %v7473 = vpop.f32.mrb[0].mxu0
        %v7474 = vadd.f32 %v7281, %v7473
        %v7475 = vpop.f32.mrb[0].mxu0
        %v7476 = vadd.f32 %v7283, %v7475
        %7477 = vmatprep.mubr.bf16.mxu0 %v3999
        %7478 = vmatmul.mubr.bf16.gmra.mrb[0].mxu0 %v3998
        %v7479 = vpop.f32.mrb[0].mxu0
        %v7480 = vadd.f32 %v7287, %v7479
        %v7481 = vpop.f32.mrb[0].mxu0
        %v7482 = vadd.f32 %v7289, %v7481
        %v7483 = vpop.f32.mrb[0].mxu0
        %v7484 = vadd.f32 %v7291, %v7483
        %v7485 = vpop.f32.mrb[0].mxu0
        %v7486 = vadd.f32 %v7293, %v7485
        %7487 = vmatprep.mubr.bf16.mxu0 %v4007
        %7488 = vmatmul.mubr.bf16.gmra.mrb[0].mxu0 %v4006
        %v7489 = vpop.f32.mrb[0].mxu0
        %v7490 = vadd.f32 %v7297, %v7489
        %v7491 = vpop.f32.mrb[0].mxu0
        %v7492 = vadd.f32 %v7299, %v7491
        %v7493 = vpop.f32.mrb[0].mxu0
        %v7494 = vadd.f32 %v7301, %v7493
        %v7495 = vpop.f32.mrb[0].mxu0
        %v7496 = vadd.f32 %v7303, %v7495
        %7497 = vmatprep.mubr.bf16.mxu0 %v4015
        %7498 = vmatmul.mubr.bf16.gmra.mrb[0].mxu0 %v4014
        %v7499 = vpop.f32.mrb[0].mxu0
        %v7500 = vadd.f32 %v7307, %v7499
        %v7501 = vpop.f32.mrb[0].mxu0
        %v7502 = vadd.f32 %v7309, %v7501
        %v7503 = vpop.f32.mrb[0].mxu0
        %v7504 = vadd.f32 %v7311, %v7503
        %v7505 = vpop.f32.mrb[0].mxu0
        %v7506 = vadd.f32 %v7313, %v7505
        %7507 = vmatprep.mubr.bf16.mxu0 %v4023
        %7508 = vmatmul.mubr.bf16.gmra.mrb[0].mxu0 %v4022
        %v7509 = vpop.f32.mrb[0].mxu0
        %v7510 = vadd.f32 %v7317, %v7509
        %v7511 = vpop.f32.mrb[0].mxu0
        %v7512 = vadd.f32 %v7319, %v7511
        %v7513 = vpop.f32.mrb[0].mxu0
        %v7514 = vadd.f32 %v7321, %v7513
        %v7515 = vpop.f32.mrb[0].mxu0
        %v7516 = vadd.f32 %v7323, %v7515
        %7517 = vmatprep.mubr.bf16.mxu0 %v4031
        %7518 = vmatmul.mubr.bf16.gmra.mrb[0].mxu0 %v4030
        %v7519 = vpop.f32.mrb[0].mxu0
        %v7520 = vadd.f32 %v7327, %v7519
        %v7521 = vpop.f32.mrb[0].mxu0
        %v7522 = vadd.f32 %v7329, %v7521
        %v7523 = vpop.f32.mrb[0].mxu0
        %v7524 = vadd.f32 %v7331, %v7523
        %v7525 = vpop.f32.mrb[0].mxu0
        %v7526 = vadd.f32 %v7333, %v7525
        %7527 = vmatprep.mubr.bf16.mxu0 %v4039
        %7528 = vmatmul.mubr.bf16.gmra.mrb[0].mxu0 %v4038
        %v7529 = vpop.f32.mrb[0].mxu0
        %v7530 = vadd.f32 %v7337, %v7529
        %v7531 = vpop.f32.mrb[0].mxu0
        %v7532 = vadd.f32 %v7339, %v7531
        %v7533 = vpop.f32.mrb[0].mxu0
        %v7534 = vadd.f32 %v7341, %v7533
        %v7535 = vpop.f32.mrb[0].mxu0
        %v7536 = vadd.f32 %v7343, %v7535
        %7537 = vmatprep.mubr.bf16.mxu0 %v4047
        %7538 = vmatmul.mubr.bf16.gmra.mrb[0].mxu0 %v4046
        %v7539 = vpop.f32.mrb[0].mxu0
        %v7540 = vadd.f32 %v7347, %v7539
        %v7541 = vpop.f32.mrb[0].mxu0
        %v7542 = vadd.f32 %v7349, %v7541
        %v7543 = vpop.f32.mrb[0].mxu0
        %v7544 = vadd.f32 %v7351, %v7543
        %v7545 = vpop.f32.mrb[0].mxu0
        %v7546 = vadd.f32 %v7353, %v7545
        %7547 = vmatprep.mubr.bf16.mxu0 %v4055
        %7548 = vmatmul.mubr.bf16.gmra.mrb[0].mxu0 %v4054
        %v7549 = vpop.f32.mrb[0].mxu0
        %v7550 = vadd.f32 %v7357, %v7549
        %v7551 = vpop.f32.mrb[0].mxu0
        %v7552 = vadd.f32 %v7359, %v7551
        %v7553 = vpop.f32.mrb[0].mxu0
        %v7554 = vadd.f32 %v7361, %v7553
        %v7555 = vpop.f32.mrb[0].mxu0
        %v7556 = vadd.f32 %v7363, %v7555
        %7557 = vmatprep.mubr.bf16.mxu0 %v4063
        %7558 = vmatmul.mubr.bf16.gmra.mrb[0].mxu0 %v4062
        %v7559 = vpop.f32.mrb[0].mxu0
        %v7560 = vadd.f32 %v7367, %v7559
        %v7561 = vpop.f32.mrb[0].mxu0
        %v7562 = vadd.f32 %v7369, %v7561
        %v7563 = vpop.f32.mrb[0].mxu0
        %v7564 = vadd.f32 %v7371, %v7563
        %v7565 = vpop.f32.mrb[0].mxu0
        %v7566 = vadd.f32 %v7373, %v7565
        %7567 = vdwg.mxu0
        %7568 = vmatprep.subr.bf16.mxu0 %v6415
        %7569 = vmatpush1.bf16.msra.mxu0 %v6414
        %7570 = vmatprep.subr.bf16.mxu0 %v6423
        %7571 = vmatpush1.bf16.msra.mxu0 %v6422
        %7572 = vmatprep.subr.bf16.mxu0 %v6431
        %7573 = vmatpush1.bf16.msra.mxu0 %v6430
        %7574 = vmatprep.subr.bf16.mxu0 %v6439
        %7575 = vmatpush1.bf16.msra.mxu0 %v6438
        %7576 = vmatprep.subr.bf16.mxu0 %v6447
        %7577 = vmatpush1.bf16.msra.mxu0 %v6446
        %7578 = vmatprep.subr.bf16.mxu0 %v6455
        %7579 = vmatpush1.bf16.msra.mxu0 %v6454
        %7580 = vmatprep.subr.bf16.mxu0 %v6463
        %7581 = vmatpush1.bf16.msra.mxu0 %v6462
        %7582 = vmatprep.subr.bf16.mxu0 %v6471
        %7583 = vmatpush1.bf16.msra.mxu0 %v6470
        %7584 = vmatprep.subr.bf16.mxu0 %v6479
        %7585 = vmatpush1.bf16.msra.mxu0 %v6478
        %7586 = vmatprep.subr.bf16.mxu0 %v6487
        %7587 = vmatpush1.bf16.msra.mxu0 %v6486
        %7588 = vmatprep.subr.bf16.mxu0 %v6495
        %7589 = vmatpush1.bf16.msra.mxu0 %v6494
        %7590 = vmatprep.subr.bf16.mxu0 %v6503
        %7591 = vmatpush1.bf16.msra.mxu0 %v6502
        %7592 = vmatprep.subr.bf16.mxu0 %v6511
        %7593 = vmatpush1.bf16.msra.mxu0 %v6510
        %7594 = vmatprep.subr.bf16.mxu0 %v6519
        %7595 = vmatpush1.bf16.msra.mxu0 %v6518
        %7596 = vmatprep.subr.bf16.mxu0 %v6527
        %7597 = vmatpush1.bf16.msra.mxu0 %v6526
        %7598 = vmatprep.subr.bf16.mxu0 %v6535
        %7599 = vmatpush1.bf16.msra.mxu0 %v6534
        %7600 = vmatprep.mubr.bf16.mxu0 %v3945
        %7601 = vmatmul.mubr.bf16.gmra.mrb[0].mxu0 %v3944
        %v7602 = vpop.f32.mrb[0].mxu0
        %v7603 = vadd.f32 %v7410, %v7602
        %v7604 = vpop.f32.mrb[0].mxu0
        %v7605 = vadd.f32 %v7412, %v7604
        %v7606 = vpop.f32.mrb[0].mxu0
        %v7607 = vadd.f32 %v7414, %v7606
        %v7608 = vpop.f32.mrb[0].mxu0
        %v7609 = vadd.f32 %v7416, %v7608
        %7610 = vmatprep.mubr.bf16.mxu0 %v3953
        %7611 = vmatmul.mubr.bf16.gmra.mrb[0].mxu0 %v3952
        %v7612 = vpop.f32.mrb[0].mxu0
        %v7613 = vadd.f32 %v7420, %v7612
        %v7614 = vpop.f32.mrb[0].mxu0
        %v7615 = vadd.f32 %v7422, %v7614
        %v7616 = vpop.f32.mrb[0].mxu0
        %v7617 = vadd.f32 %v7424, %v7616
        %v7618 = vpop.f32.mrb[0].mxu0
        %v7619 = vadd.f32 %v7426, %v7618
        %7620 = vmatprep.mubr.bf16.mxu0 %v3961
        %7621 = vmatmul.mubr.bf16.gmra.mrb[0].mxu0 %v3960
        %v7622 = vpop.f32.mrb[0].mxu0
        %v7623 = vadd.f32 %v7430, %v7622
        %v7624 = vpop.f32.mrb[0].mxu0
        %v7625 = vadd.f32 %v7432, %v7624
        %v7626 = vpop.f32.mrb[0].mxu0
        %v7627 = vadd.f32 %v7434, %v7626
        %v7628 = vpop.f32.mrb[0].mxu0
        %v7629 = vadd.f32 %v7436, %v7628
        %7630 = vmatprep.mubr.bf16.mxu0 %v3969
        %7631 = vmatmul.mubr.bf16.gmra.mrb[0].mxu0 %v3968
        %v7632 = vpop.f32.mrb[0].mxu0
        %v7633 = vadd.f32 %v7440, %v7632
        %v7634 = vpop.f32.mrb[0].mxu0
        %v7635 = vadd.f32 %v7442, %v7634
        %v7636 = vpop.f32.mrb[0].mxu0
        %v7637 = vadd.f32 %v7444, %v7636
        %v7638 = vpop.f32.mrb[0].mxu0
        %v7639 = vadd.f32 %v7446, %v7638
        %7640 = vmatprep.mubr.bf16.mxu0 %v3977
        %7641 = vmatmul.mubr.bf16.gmra.mrb[0].mxu0 %v3976
        %v7642 = vpop.f32.mrb[0].mxu0
        %v7643 = vadd.f32 %v7450, %v7642
        %v7644 = vpop.f32.mrb[0].mxu0
        %v7645 = vadd.f32 %v7452, %v7644
        %v7646 = vpop.f32.mrb[0].mxu0
        %v7647 = vadd.f32 %v7454, %v7646
        %v7648 = vpop.f32.mrb[0].mxu0
        %v7649 = vadd.f32 %v7456, %v7648
        %7650 = vmatprep.mubr.bf16.mxu0 %v3985
        %7651 = vmatmul.mubr.bf16.gmra.mrb[0].mxu0 %v3984
        %v7652 = vpop.f32.mrb[0].mxu0
        %v7653 = vadd.f32 %v7460, %v7652
        %v7654 = vpop.f32.mrb[0].mxu0
        %v7655 = vadd.f32 %v7462, %v7654
        %v7656 = vpop.f32.mrb[0].mxu0
        %v7657 = vadd.f32 %v7464, %v7656
        %v7658 = vpop.f32.mrb[0].mxu0
        %v7659 = vadd.f32 %v7466, %v7658
        %7660 = vmatprep.mubr.bf16.mxu0 %v3993
        %7661 = vmatmul.mubr.bf16.gmra.mrb[0].mxu0 %v3992
        %v7662 = vpop.f32.mrb[0].mxu0
        %v7663 = vadd.f32 %v7470, %v7662
        %v7664 = vpop.f32.mrb[0].mxu0
        %v7665 = vadd.f32 %v7472, %v7664
        %v7666 = vpop.f32.mrb[0].mxu0
        %v7667 = vadd.f32 %v7474, %v7666
        %v7668 = vpop.f32.mrb[0].mxu0
        %v7669 = vadd.f32 %v7476, %v7668
        %7670 = vmatprep.mubr.bf16.mxu0 %v4001
        %7671 = vmatmul.mubr.bf16.gmra.mrb[0].mxu0 %v4000
        %v7672 = vpop.f32.mrb[0].mxu0
        %v7673 = vadd.f32 %v7480, %v7672
        %v7674 = vpop.f32.mrb[0].mxu0
        %v7675 = vadd.f32 %v7482, %v7674
        %v7676 = vpop.f32.mrb[0].mxu0
        %v7677 = vadd.f32 %v7484, %v7676
        %v7678 = vpop.f32.mrb[0].mxu0
        %v7679 = vadd.f32 %v7486, %v7678
        %7680 = vmatprep.mubr.bf16.mxu0 %v4009
        %7681 = vmatmul.mubr.bf16.gmra.mrb[0].mxu0 %v4008
        %v7682 = vpop.f32.mrb[0].mxu0
        %v7683 = vadd.f32 %v7490, %v7682
        %v7684 = vpop.f32.mrb[0].mxu0
        %v7685 = vadd.f32 %v7492, %v7684
        %v7686 = vpop.f32.mrb[0].mxu0
        %v7687 = vadd.f32 %v7494, %v7686
        %v7688 = vpop.f32.mrb[0].mxu0
        %v7689 = vadd.f32 %v7496, %v7688
        %7690 = vmatprep.mubr.bf16.mxu0 %v4017
        %7691 = vmatmul.mubr.bf16.gmra.mrb[0].mxu0 %v4016
        %v7692 = vpop.f32.mrb[0].mxu0
        %v7693 = vadd.f32 %v7500, %v7692
        %v7694 = vpop.f32.mrb[0].mxu0
        %v7695 = vadd.f32 %v7502, %v7694
        %v7696 = vpop.f32.mrb[0].mxu0
        %v7697 = vadd.f32 %v7504, %v7696
        %v7698 = vpop.f32.mrb[0].mxu0
        %v7699 = vadd.f32 %v7506, %v7698
        %7700 = vmatprep.mubr.bf16.mxu0 %v4025
        %7701 = vmatmul.mubr.bf16.gmra.mrb[0].mxu0 %v4024
        %v7702 = vpop.f32.mrb[0].mxu0
        %v7703 = vadd.f32 %v7510, %v7702
        %v7704 = vpop.f32.mrb[0].mxu0
        %v7705 = vadd.f32 %v7512, %v7704
        %v7706 = vpop.f32.mrb[0].mxu0
        %v7707 = vadd.f32 %v7514, %v7706
        %v7708 = vpop.f32.mrb[0].mxu0
        %v7709 = vadd.f32 %v7516, %v7708
        %7710 = vmatprep.mubr.bf16.mxu0 %v4033
        %7711 = vmatmul.mubr.bf16.gmra.mrb[0].mxu0 %v4032
        %v7712 = vpop.f32.mrb[0].mxu0
        %v7713 = vadd.f32 %v7520, %v7712
        %v7714 = vpop.f32.mrb[0].mxu0
        %v7715 = vadd.f32 %v7522, %v7714
        %v7716 = vpop.f32.mrb[0].mxu0
        %v7717 = vadd.f32 %v7524, %v7716
        %v7718 = vpop.f32.mrb[0].mxu0
        %v7719 = vadd.f32 %v7526, %v7718
        %7720 = vmatprep.mubr.bf16.mxu0 %v4041
        %7721 = vmatmul.mubr.bf16.gmra.mrb[0].mxu0 %v4040
        %v7722 = vpop.f32.mrb[0].mxu0
        %v7723 = vadd.f32 %v7530, %v7722
        %v7724 = vpop.f32.mrb[0].mxu0
        %v7725 = vadd.f32 %v7532, %v7724
        %v7726 = vpop.f32.mrb[0].mxu0
        %v7727 = vadd.f32 %v7534, %v7726
        %v7728 = vpop.f32.mrb[0].mxu0
        %v7729 = vadd.f32 %v7536, %v7728
        %7730 = vmatprep.mubr.bf16.mxu0 %v4049
        %7731 = vmatmul.mubr.bf16.gmra.mrb[0].mxu0 %v4048
        %v7732 = vpop.f32.mrb[0].mxu0
        %v7733 = vadd.f32 %v7540, %v7732
        %v7734 = vpop.f32.mrb[0].mxu0
        %v7735 = vadd.f32 %v7542, %v7734
        %v7736 = vpop.f32.mrb[0].mxu0
        %v7737 = vadd.f32 %v7544, %v7736
        %v7738 = vpop.f32.mrb[0].mxu0
        %v7739 = vadd.f32 %v7546, %v7738
        %7740 = vmatprep.mubr.bf16.mxu0 %v4057
        %7741 = vmatmul.mubr.bf16.gmra.mrb[0].mxu0 %v4056
        %v7742 = vpop.f32.mrb[0].mxu0
        %v7743 = vadd.f32 %v7550, %v7742
        %v7744 = vpop.f32.mrb[0].mxu0
        %v7745 = vadd.f32 %v7552, %v7744
        %v7746 = vpop.f32.mrb[0].mxu0
        %v7747 = vadd.f32 %v7554, %v7746
        %v7748 = vpop.f32.mrb[0].mxu0
        %v7749 = vadd.f32 %v7556, %v7748
        %7750 = vmatprep.mubr.bf16.mxu0 %v4065
        %7751 = vmatmul.mubr.bf16.gmra.mrb[0].mxu0 %v4064
        %v7752 = vpop.f32.mrb[0].mxu0
        %v7753 = vadd.f32 %v7560, %v7752
        %v7754 = vpop.f32.mrb[0].mxu0
        %v7755 = vadd.f32 %v7562, %v7754
        %v7756 = vpop.f32.mrb[0].mxu0
        %v7757 = vadd.f32 %v7564, %v7756
        %v7758 = vpop.f32.mrb[0].mxu0
        %v7759 = vadd.f32 %v7566, %v7758
        %7760 = vdwg.mxu0
        %7761 = vmatprep.subr.bf16.mxu0 %v6543
        %7762 = vmatpush1.bf16.msra.mxu0 %v6542
        %7763 = vmatprep.subr.bf16.mxu0 %v6551
        %7764 = vmatpush1.bf16.msra.mxu0 %v6550
        %7765 = vmatprep.subr.bf16.mxu0 %v6559
        %7766 = vmatpush1.bf16.msra.mxu0 %v6558
        %7767 = vmatprep.subr.bf16.mxu0 %v6567
        %7768 = vmatpush1.bf16.msra.mxu0 %v6566
        %7769 = vmatprep.subr.bf16.mxu0 %v6575
        %7770 = vmatpush1.bf16.msra.mxu0 %v6574
        %7771 = vmatprep.subr.bf16.mxu0 %v6583
        %7772 = vmatpush1.bf16.msra.mxu0 %v6582
        %7773 = vmatprep.subr.bf16.mxu0 %v6591
        %7774 = vmatpush1.bf16.msra.mxu0 %v6590
        %7775 = vmatprep.subr.bf16.mxu0 %v6599
        %7776 = vmatpush1.bf16.msra.mxu0 %v6598
        %7777 = vmatprep.subr.bf16.mxu0 %v6607
        %7778 = vmatpush1.bf16.msra.mxu0 %v6606
        %7779 = vmatprep.subr.bf16.mxu0 %v6615
        %7780 = vmatpush1.bf16.msra.mxu0 %v6614
        %7781 = vmatprep.subr.bf16.mxu0 %v6623
        %7782 = vmatpush1.bf16.msra.mxu0 %v6622
        %7783 = vmatprep.subr.bf16.mxu0 %v6631
        %7784 = vmatpush1.bf16.msra.mxu0 %v6630
        %7785 = vmatprep.subr.bf16.mxu0 %v6639
        %7786 = vmatpush1.bf16.msra.mxu0 %v6638
        %7787 = vmatprep.subr.bf16.mxu0 %v6647
        %7788 = vmatpush1.bf16.msra.mxu0 %v6646
        %7789 = vmatprep.subr.bf16.mxu0 %v6655
        %7790 = vmatpush1.bf16.msra.mxu0 %v6654
        %7791 = vmatprep.subr.bf16.mxu0 %v6663
        %7792 = vmatpush1.bf16.msra.mxu0 %v6662
        %7793 = vmatprep.mubr.bf16.mxu0 %v3947
        %7794 = vmatmul.mubr.bf16.gmra.mrb[0].mxu0 %v3946
        %v7795 = vpop.f32.mrb[0].mxu0
        %v7796 = vadd.f32 %v7603, %v7795
        %v7797 = vpop.f32.mrb[0].mxu0
        %v7798 = vadd.f32 %v7605, %v7797
        %v7799 = vpop.f32.mrb[0].mxu0
        %v7800 = vadd.f32 %v7607, %v7799
        %v7801 = vpop.f32.mrb[0].mxu0
        %v7802 = vadd.f32 %v7609, %v7801
        %7803 = vmatprep.mubr.bf16.mxu0 %v3955
        %7804 = vmatmul.mubr.bf16.gmra.mrb[0].mxu0 %v3954
        %v7805 = vpop.f32.mrb[0].mxu0
        %v7806 = vadd.f32 %v7613, %v7805
        %v7807 = vpop.f32.mrb[0].mxu0
        %v7808 = vadd.f32 %v7615, %v7807
        %v7809 = vpop.f32.mrb[0].mxu0
        %v7810 = vadd.f32 %v7617, %v7809
        %v7811 = vpop.f32.mrb[0].mxu0
        %v7812 = vadd.f32 %v7619, %v7811
        %7813 = vmatprep.mubr.bf16.mxu0 %v3963
        %7814 = vmatmul.mubr.bf16.gmra.mrb[0].mxu0 %v3962
        %v7815 = vpop.f32.mrb[0].mxu0
        %v7816 = vadd.f32 %v7623, %v7815
        %v7817 = vpop.f32.mrb[0].mxu0
        %v7818 = vadd.f32 %v7625, %v7817
        %v7819 = vpop.f32.mrb[0].mxu0
        %v7820 = vadd.f32 %v7627, %v7819
        %v7821 = vpop.f32.mrb[0].mxu0
        %v7822 = vadd.f32 %v7629, %v7821
        %7823 = vmatprep.mubr.bf16.mxu0 %v3971
        %7824 = vmatmul.mubr.bf16.gmra.mrb[0].mxu0 %v3970
        %v7825 = vpop.f32.mrb[0].mxu0
        %v7826 = vadd.f32 %v7633, %v7825
        %v7827 = vpop.f32.mrb[0].mxu0
        %v7828 = vadd.f32 %v7635, %v7827
        %v7829 = vpop.f32.mrb[0].mxu0
        %v7830 = vadd.f32 %v7637, %v7829
        %v7831 = vpop.f32.mrb[0].mxu0
        %v7832 = vadd.f32 %v7639, %v7831
        %7833 = vmatprep.mubr.bf16.mxu0 %v3979
        %7834 = vmatmul.mubr.bf16.gmra.mrb[0].mxu0 %v3978
        %v7835 = vpop.f32.mrb[0].mxu0
        %v7836 = vadd.f32 %v7643, %v7835
        %v7837 = vpop.f32.mrb[0].mxu0
        %v7838 = vadd.f32 %v7645, %v7837
        %v7839 = vpop.f32.mrb[0].mxu0
        %v7840 = vadd.f32 %v7647, %v7839
        %v7841 = vpop.f32.mrb[0].mxu0
        %v7842 = vadd.f32 %v7649, %v7841
        %7843 = vmatprep.mubr.bf16.mxu0 %v3987
        %7844 = vmatmul.mubr.bf16.gmra.mrb[0].mxu0 %v3986
        %v7845 = vpop.f32.mrb[0].mxu0
        %v7846 = vadd.f32 %v7653, %v7845
        %v7847 = vpop.f32.mrb[0].mxu0
        %v7848 = vadd.f32 %v7655, %v7847
        %v7849 = vpop.f32.mrb[0].mxu0
        %v7850 = vadd.f32 %v7657, %v7849
        %v7851 = vpop.f32.mrb[0].mxu0
        %v7852 = vadd.f32 %v7659, %v7851
        %7853 = vmatprep.mubr.bf16.mxu0 %v3995
        %7854 = vmatmul.mubr.bf16.gmra.mrb[0].mxu0 %v3994
        %v7855 = vpop.f32.mrb[0].mxu0
        %v7856 = vadd.f32 %v7663, %v7855
        %v7857 = vpop.f32.mrb[0].mxu0
        %v7858 = vadd.f32 %v7665, %v7857
        %v7859 = vpop.f32.mrb[0].mxu0
        %v7860 = vadd.f32 %v7667, %v7859
        %v7861 = vpop.f32.mrb[0].mxu0
        %v7862 = vadd.f32 %v7669, %v7861
        %7863 = vmatprep.mubr.bf16.mxu0 %v4003
        %7864 = vmatmul.mubr.bf16.gmra.mrb[0].mxu0 %v4002
        %v7865 = vpop.f32.mrb[0].mxu0
        %v7866 = vadd.f32 %v7673, %v7865
        %v7867 = vpop.f32.mrb[0].mxu0
        %v7868 = vadd.f32 %v7675, %v7867
        %v7869 = vpop.f32.mrb[0].mxu0
        %v7870 = vadd.f32 %v7677, %v7869
        %v7871 = vpop.f32.mrb[0].mxu0
        %v7872 = vadd.f32 %v7679, %v7871
        %7873 = vmatprep.mubr.bf16.mxu0 %v4011
        %7874 = vmatmul.mubr.bf16.gmra.mrb[0].mxu0 %v4010
        %v7875 = vpop.f32.mrb[0].mxu0
        %v7876 = vadd.f32 %v7683, %v7875
        %v7877 = vpop.f32.mrb[0].mxu0
        %v7878 = vadd.f32 %v7685, %v7877
        %v7879 = vpop.f32.mrb[0].mxu0
        %v7880 = vadd.f32 %v7687, %v7879
        %v7881 = vpop.f32.mrb[0].mxu0
        %v7882 = vadd.f32 %v7689, %v7881
        %7883 = vmatprep.mubr.bf16.mxu0 %v4019
        %7884 = vmatmul.mubr.bf16.gmra.mrb[0].mxu0 %v4018
        %v7885 = vpop.f32.mrb[0].mxu0
        %v7886 = vadd.f32 %v7693, %v7885
        %v7887 = vpop.f32.mrb[0].mxu0
        %v7888 = vadd.f32 %v7695, %v7887
        %v7889 = vpop.f32.mrb[0].mxu0
        %v7890 = vadd.f32 %v7697, %v7889
        %v7891 = vpop.f32.mrb[0].mxu0
        %v7892 = vadd.f32 %v7699, %v7891
        %7893 = vmatprep.mubr.bf16.mxu0 %v4027
        %7894 = vmatmul.mubr.bf16.gmra.mrb[0].mxu0 %v4026
        %v7895 = vpop.f32.mrb[0].mxu0
        %v7896 = vadd.f32 %v7703, %v7895
        %v7897 = vpop.f32.mrb[0].mxu0
        %v7898 = vadd.f32 %v7705, %v7897
        %v7899 = vpop.f32.mrb[0].mxu0
        %v7900 = vadd.f32 %v7707, %v7899
        %v7901 = vpop.f32.mrb[0].mxu0
        %v7902 = vadd.f32 %v7709, %v7901
        %7903 = vmatprep.mubr.bf16.mxu0 %v4035
        %7904 = vmatmul.mubr.bf16.gmra.mrb[0].mxu0 %v4034
        %v7905 = vpop.f32.mrb[0].mxu0
        %v7906 = vadd.f32 %v7713, %v7905
        %v7907 = vpop.f32.mrb[0].mxu0
        %v7908 = vadd.f32 %v7715, %v7907
        %v7909 = vpop.f32.mrb[0].mxu0
        %v7910 = vadd.f32 %v7717, %v7909
        %v7911 = vpop.f32.mrb[0].mxu0
        %v7912 = vadd.f32 %v7719, %v7911
        %7913 = vmatprep.mubr.bf16.mxu0 %v4043
        %7914 = vmatmul.mubr.bf16.gmra.mrb[0].mxu0 %v4042
        %v7915 = vpop.f32.mrb[0].mxu0
        %v7916 = vadd.f32 %v7723, %v7915
        %v7917 = vpop.f32.mrb[0].mxu0
        %v7918 = vadd.f32 %v7725, %v7917
        %v7919 = vpop.f32.mrb[0].mxu0
        %v7920 = vadd.f32 %v7727, %v7919
        %v7921 = vpop.f32.mrb[0].mxu0
        %v7922 = vadd.f32 %v7729, %v7921
        %7923 = vmatprep.mubr.bf16.mxu0 %v4051
        %7924 = vmatmul.mubr.bf16.gmra.mrb[0].mxu0 %v4050
        %v7925 = vpop.f32.mrb[0].mxu0
        %v7926 = vadd.f32 %v7733, %v7925
        %v7927 = vpop.f32.mrb[0].mxu0
        %v7928 = vadd.f32 %v7735, %v7927
        %v7929 = vpop.f32.mrb[0].mxu0
        %v7930 = vadd.f32 %v7737, %v7929
        %v7931 = vpop.f32.mrb[0].mxu0
        %v7932 = vadd.f32 %v7739, %v7931
        %7933 = vmatprep.mubr.bf16.mxu0 %v4059
        %7934 = vmatmul.mubr.bf16.gmra.mrb[0].mxu0 %v4058
        %v7935 = vpop.f32.mrb[0].mxu0
        %v7936 = vadd.f32 %v7743, %v7935
        %v7937 = vpop.f32.mrb[0].mxu0
        %v7938 = vadd.f32 %v7745, %v7937
        %v7939 = vpop.f32.mrb[0].mxu0
        %v7940 = vadd.f32 %v7747, %v7939
        %v7941 = vpop.f32.mrb[0].mxu0
        %v7942 = vadd.f32 %v7749, %v7941
        %7943 = vmatprep.mubr.bf16.mxu0 %v4067
        %7944 = vmatmul.mubr.bf16.gmra.mrb[0].mxu0 %v4066
        %v7945 = vpop.f32.mrb[0].mxu0
        %v7946 = vadd.f32 %v7753, %v7945
        %v7947 = vpop.f32.mrb[0].mxu0
        %v7948 = vadd.f32 %v7755, %v7947
        %v7949 = vpop.f32.mrb[0].mxu0
        %v7950 = vadd.f32 %v7757, %v7949
        %v7951 = vpop.f32.mrb[0].mxu0
        %v7952 = vadd.f32 %v7759, %v7951
        %7953 = vdwg.mxu0
        %7954 = vmatprep.subr.bf16.mxu0 %v6161
        %7955 = vmatpush1.bf16.msra.mxu0 %v6160
        %7956 = vmatprep.subr.bf16.mxu0 %v6169
        %7957 = vmatpush1.bf16.msra.mxu0 %v6168
        %7958 = vmatprep.subr.bf16.mxu0 %v6177
        %7959 = vmatpush1.bf16.msra.mxu0 %v6176
        %7960 = vmatprep.subr.bf16.mxu0 %v6185
        %7961 = vmatpush1.bf16.msra.mxu0 %v6184
        %7962 = vmatprep.subr.bf16.mxu0 %v6193
        %7963 = vmatpush1.bf16.msra.mxu0 %v6192
        %7964 = vmatprep.subr.bf16.mxu0 %v6201
        %7965 = vmatpush1.bf16.msra.mxu0 %v6200
        %7966 = vmatprep.subr.bf16.mxu0 %v6209
        %7967 = vmatpush1.bf16.msra.mxu0 %v6208
        %7968 = vmatprep.subr.bf16.mxu0 %v6217
        %7969 = vmatpush1.bf16.msra.mxu0 %v6216
        %7970 = vmatprep.subr.bf16.mxu0 %v6225
        %7971 = vmatpush1.bf16.msra.mxu0 %v6224
        %7972 = vmatprep.subr.bf16.mxu0 %v6233
        %7973 = vmatpush1.bf16.msra.mxu0 %v6232
        %7974 = vmatprep.subr.bf16.mxu0 %v6241
        %7975 = vmatpush1.bf16.msra.mxu0 %v6240
        %7976 = vmatprep.subr.bf16.mxu0 %v6249
        %7977 = vmatpush1.bf16.msra.mxu0 %v6248
        %7978 = vmatprep.subr.bf16.mxu0 %v6257
        %7979 = vmatpush1.bf16.msra.mxu0 %v6256
        %7980 = vmatprep.subr.bf16.mxu0 %v6265
        %7981 = vmatpush1.bf16.msra.mxu0 %v6264
        %7982 = vmatprep.subr.bf16.mxu0 %v6273
        %7983 = vmatpush1.bf16.msra.mxu0 %v6272
        %7984 = vmatprep.subr.bf16.mxu0 %v6281
        %7985 = vmatpush1.bf16.msra.mxu0 %v6280
        %7986 = vmatprep.mubr.bf16.mxu0 %v3941
        %7987 = vmatmul.mubr.bf16.gmra.mrb[0].mxu0 %v3940
        %v7988 = vpop.f32.mrb[0].mxu0
        %v7989 = vadd.f32 %v4593, %v7988
        %v7990 = vpop.f32.mrb[0].mxu0
        %v7991 = vadd.f32 %v4597, %v7990
        %v7992 = vpop.f32.mrb[0].mxu0
        %v7993 = vadd.f32 %v4593, %v7992
        %v7994 = vpop.f32.mrb[0].mxu0
        %v7995 = vadd.f32 %v4597, %v7994
        %7996 = vmatprep.mubr.bf16.mxu0 %v3949
        %7997 = vmatmul.mubr.bf16.gmra.mrb[0].mxu0 %v3948
        %v7998 = vpop.f32.mrb[0].mxu0
        %v7999 = vadd.f32 %v4593, %v7998
        %v8000 = vpop.f32.mrb[0].mxu0
        %v8001 = vadd.f32 %v4597, %v8000
        %v8002 = vpop.f32.mrb[0].mxu0
        %v8003 = vadd.f32 %v4593, %v8002
        %v8004 = vpop.f32.mrb[0].mxu0
        %v8005 = vadd.f32 %v4597, %v8004
        %8006 = vmatprep.mubr.bf16.mxu0 %v3957
        %8007 = vmatmul.mubr.bf16.gmra.mrb[0].mxu0 %v3956
        %v8008 = vpop.f32.mrb[0].mxu0
        %v8009 = vadd.f32 %v4593, %v8008
        %v8010 = vpop.f32.mrb[0].mxu0
        %v8011 = vadd.f32 %v4597, %v8010
        %v8012 = vpop.f32.mrb[0].mxu0
        %v8013 = vadd.f32 %v4593, %v8012
        %v8014 = vpop.f32.mrb[0].mxu0
        %v8015 = vadd.f32 %v4597, %v8014
        %8016 = vmatprep.mubr.bf16.mxu0 %v3965
        %8017 = vmatmul.mubr.bf16.gmra.mrb[0].mxu0 %v3964
        %v8018 = vpop.f32.mrb[0].mxu0
        %v8019 = vadd.f32 %v4593, %v8018
        %v8020 = vpop.f32.mrb[0].mxu0
        %v8021 = vadd.f32 %v4597, %v8020
        %v8022 = vpop.f32.mrb[0].mxu0
        %v8023 = vadd.f32 %v4593, %v8022
        %v8024 = vpop.f32.mrb[0].mxu0
        %v8025 = vadd.f32 %v4597, %v8024
        %8026 = vmatprep.mubr.bf16.mxu0 %v3973
        %8027 = vmatmul.mubr.bf16.gmra.mrb[0].mxu0 %v3972
        %v8028 = vpop.f32.mrb[0].mxu0
        %v8029 = vadd.f32 %v4593, %v8028
        %v8030 = vpop.f32.mrb[0].mxu0
        %v8031 = vadd.f32 %v4597, %v8030
        %v8032 = vpop.f32.mrb[0].mxu0
        %v8033 = vadd.f32 %v4593, %v8032
        %v8034 = vpop.f32.mrb[0].mxu0
        %v8035 = vadd.f32 %v4597, %v8034
        %8036 = vmatprep.mubr.bf16.mxu0 %v3981
        %8037 = vmatmul.mubr.bf16.gmra.mrb[0].mxu0 %v3980
        %v8038 = vpop.f32.mrb[0].mxu0
        %v8039 = vadd.f32 %v4593, %v8038
        %v8040 = vpop.f32.mrb[0].mxu0
        %v8041 = vadd.f32 %v4597, %v8040
        %v8042 = vpop.f32.mrb[0].mxu0
        %v8043 = vadd.f32 %v4593, %v8042
        %v8044 = vpop.f32.mrb[0].mxu0
        %v8045 = vadd.f32 %v4597, %v8044
        %8046 = vmatprep.mubr.bf16.mxu0 %v3989
        %8047 = vmatmul.mubr.bf16.gmra.mrb[0].mxu0 %v3988
        %v8048 = vpop.f32.mrb[0].mxu0
        %v8049 = vadd.f32 %v4593, %v8048
        %v8050 = vpop.f32.mrb[0].mxu0
        %v8051 = vadd.f32 %v4597, %v8050
        %v8052 = vpop.f32.mrb[0].mxu0
        %v8053 = vadd.f32 %v4593, %v8052
        %v8054 = vpop.f32.mrb[0].mxu0
        %v8055 = vadd.f32 %v4597, %v8054
        %8056 = vmatprep.mubr.bf16.mxu0 %v3997
        %8057 = vmatmul.mubr.bf16.gmra.mrb[0].mxu0 %v3996
        %v8058 = vpop.f32.mrb[0].mxu0
        %v8059 = vadd.f32 %v4593, %v8058
        %v8060 = vpop.f32.mrb[0].mxu0
        %v8061 = vadd.f32 %v4597, %v8060
        %v8062 = vpop.f32.mrb[0].mxu0
        %v8063 = vadd.f32 %v4593, %v8062
        %v8064 = vpop.f32.mrb[0].mxu0
        %v8065 = vadd.f32 %v4597, %v8064
        %8066 = vmatprep.mubr.bf16.mxu0 %v4005
        %8067 = vmatmul.mubr.bf16.gmra.mrb[0].mxu0 %v4004
        %v8068 = vpop.f32.mrb[0].mxu0
        %v8069 = vadd.f32 %v4593, %v8068
        %v8070 = vpop.f32.mrb[0].mxu0
        %v8071 = vadd.f32 %v4597, %v8070
        %v8072 = vpop.f32.mrb[0].mxu0
        %v8073 = vadd.f32 %v4593, %v8072
        %v8074 = vpop.f32.mrb[0].mxu0
        %v8075 = vadd.f32 %v4597, %v8074
        %8076 = vmatprep.mubr.bf16.mxu0 %v4013
        %8077 = vmatmul.mubr.bf16.gmra.mrb[0].mxu0 %v4012
        %v8078 = vpop.f32.mrb[0].mxu0
        %v8079 = vadd.f32 %v4593, %v8078
        %v8080 = vpop.f32.mrb[0].mxu0
        %v8081 = vadd.f32 %v4597, %v8080
        %v8082 = vpop.f32.mrb[0].mxu0
        %v8083 = vadd.f32 %v4593, %v8082
        %v8084 = vpop.f32.mrb[0].mxu0
        %v8085 = vadd.f32 %v4597, %v8084
        %8086 = vmatprep.mubr.bf16.mxu0 %v4021
        %8087 = vmatmul.mubr.bf16.gmra.mrb[0].mxu0 %v4020
        %v8088 = vpop.f32.mrb[0].mxu0
        %v8089 = vadd.f32 %v4593, %v8088
        %v8090 = vpop.f32.mrb[0].mxu0
        %v8091 = vadd.f32 %v4597, %v8090
        %v8092 = vpop.f32.mrb[0].mxu0
        %v8093 = vadd.f32 %v4593, %v8092
        %v8094 = vpop.f32.mrb[0].mxu0
        %v8095 = vadd.f32 %v4597, %v8094
        %8096 = vmatprep.mubr.bf16.mxu0 %v4029
        %8097 = vmatmul.mubr.bf16.gmra.mrb[0].mxu0 %v4028
        %v8098 = vpop.f32.mrb[0].mxu0
        %v8099 = vadd.f32 %v4593, %v8098
        %v8100 = vpop.f32.mrb[0].mxu0
        %v8101 = vadd.f32 %v4597, %v8100
        %v8102 = vpop.f32.mrb[0].mxu0
        %v8103 = vadd.f32 %v4593, %v8102
        %v8104 = vpop.f32.mrb[0].mxu0
        %v8105 = vadd.f32 %v4597, %v8104
        %8106 = vmatprep.mubr.bf16.mxu0 %v4037
        %8107 = vmatmul.mubr.bf16.gmra.mrb[0].mxu0 %v4036
        %v8108 = vpop.f32.mrb[0].mxu0
        %v8109 = vadd.f32 %v4593, %v8108
        %v8110 = vpop.f32.mrb[0].mxu0
        %v8111 = vadd.f32 %v4597, %v8110
        %v8112 = vpop.f32.mrb[0].mxu0
        %v8113 = vadd.f32 %v4593, %v8112
        %v8114 = vpop.f32.mrb[0].mxu0
        %v8115 = vadd.f32 %v4597, %v8114
        %8116 = vmatprep.mubr.bf16.mxu0 %v4045
        %8117 = vmatmul.mubr.bf16.gmra.mrb[0].mxu0 %v4044
        %v8118 = vpop.f32.mrb[0].mxu0
        %v8119 = vadd.f32 %v4593, %v8118
        %v8120 = vpop.f32.mrb[0].mxu0
        %v8121 = vadd.f32 %v4597, %v8120
        %v8122 = vpop.f32.mrb[0].mxu0
        %v8123 = vadd.f32 %v4593, %v8122
        %v8124 = vpop.f32.mrb[0].mxu0
        %v8125 = vadd.f32 %v4597, %v8124
        %8126 = vmatprep.mubr.bf16.mxu0 %v4053
        %8127 = vmatmul.mubr.bf16.gmra.mrb[0].mxu0 %v4052
        %v8128 = vpop.f32.mrb[0].mxu0
        %v8129 = vadd.f32 %v4593, %v8128
        %v8130 = vpop.f32.mrb[0].mxu0
        %v8131 = vadd.f32 %v4597, %v8130
        %v8132 = vpop.f32.mrb[0].mxu0
        %v8133 = vadd.f32 %v4593, %v8132
        %v8134 = vpop.f32.mrb[0].mxu0
        %v8135 = vadd.f32 %v4597, %v8134
        %8136 = vmatprep.mubr.bf16.mxu0 %v4061
        %8137 = vmatmul.mubr.bf16.gmra.mrb[0].mxu0 %v4060
        %v8138 = vpop.f32.mrb[0].mxu0
        %v8139 = vadd.f32 %v4593, %v8138
        %v8140 = vpop.f32.mrb[0].mxu0
        %v8141 = vadd.f32 %v4597, %v8140
        %v8142 = vpop.f32.mrb[0].mxu0
        %v8143 = vadd.f32 %v4593, %v8142
        %v8144 = vpop.f32.mrb[0].mxu0
        %v8145 = vadd.f32 %v4597, %v8144
        %8146 = vdwg.mxu0
        %8147 = vmatprep.subr.bf16.mxu0 %v6289
        %8148 = vmatpush1.bf16.msra.mxu0 %v6288
        %8149 = vmatprep.subr.bf16.mxu0 %v6297
        %8150 = vmatpush1.bf16.msra.mxu0 %v6296
        %8151 = vmatprep.subr.bf16.mxu0 %v6305
        %8152 = vmatpush1.bf16.msra.mxu0 %v6304
        %8153 = vmatprep.subr.bf16.mxu0 %v6313
        %8154 = vmatpush1.bf16.msra.mxu0 %v6312
        %8155 = vmatprep.subr.bf16.mxu0 %v6321
        %8156 = vmatpush1.bf16.msra.mxu0 %v6320
        %8157 = vmatprep.subr.bf16.mxu0 %v6329
        %8158 = vmatpush1.bf16.msra.mxu0 %v6328
        %8159 = vmatprep.subr.bf16.mxu0 %v6337
        %8160 = vmatpush1.bf16.msra.mxu0 %v6336
        %8161 = vmatprep.subr.bf16.mxu0 %v6345
        %8162 = vmatpush1.bf16.msra.mxu0 %v6344
        %8163 = vmatprep.subr.bf16.mxu0 %v6353
        %8164 = vmatpush1.bf16.msra.mxu0 %v6352
        %8165 = vmatprep.subr.bf16.mxu0 %v6361
        %8166 = vmatpush1.bf16.msra.mxu0 %v6360
        %8167 = vmatprep.subr.bf16.mxu0 %v6369
        %8168 = vmatpush1.bf16.msra.mxu0 %v6368
        %8169 = vmatprep.subr.bf16.mxu0 %v6377
        %8170 = vmatpush1.bf16.msra.mxu0 %v6376
        %8171 = vmatprep.subr.bf16.mxu0 %v6385
        %8172 = vmatpush1.bf16.msra.mxu0 %v6384
        %8173 = vmatprep.subr.bf16.mxu0 %v6393
        %8174 = vmatpush1.bf16.msra.mxu0 %v6392
        %8175 = vmatprep.subr.bf16.mxu0 %v6401
        %8176 = vmatpush1.bf16.msra.mxu0 %v6400
        %8177 = vmatprep.subr.bf16.mxu0 %v6409
        %8178 = vmatpush1.bf16.msra.mxu0 %v6408
        %8179 = vmatprep.mubr.bf16.mxu0 %v3943
        %8180 = vmatmul.mubr.bf16.gmra.mrb[0].mxu0 %v3942
        %v8181 = vpop.f32.mrb[0].mxu0
        %v8182 = vadd.f32 %v7989, %v8181
        %v8183 = vpop.f32.mrb[0].mxu0
        %v8184 = vadd.f32 %v7991, %v8183
        %v8185 = vpop.f32.mrb[0].mxu0
        %v8186 = vadd.f32 %v7993, %v8185
        %v8187 = vpop.f32.mrb[0].mxu0
        %v8188 = vadd.f32 %v7995, %v8187
        %8189 = vmatprep.mubr.bf16.mxu0 %v3951
        %8190 = vmatmul.mubr.bf16.gmra.mrb[0].mxu0 %v3950
        %v8191 = vpop.f32.mrb[0].mxu0
        %v8192 = vadd.f32 %v7999, %v8191
        %v8193 = vpop.f32.mrb[0].mxu0
        %v8194 = vadd.f32 %v8001, %v8193
        %v8195 = vpop.f32.mrb[0].mxu0
        %v8196 = vadd.f32 %v8003, %v8195
        %v8197 = vpop.f32.mrb[0].mxu0
        %v8198 = vadd.f32 %v8005, %v8197
        %8199 = vmatprep.mubr.bf16.mxu0 %v3959
        %8200 = vmatmul.mubr.bf16.gmra.mrb[0].mxu0 %v3958
        %v8201 = vpop.f32.mrb[0].mxu0
        %v8202 = vadd.f32 %v8009, %v8201
        %v8203 = vpop.f32.mrb[0].mxu0
        %v8204 = vadd.f32 %v8011, %v8203
        %v8205 = vpop.f32.mrb[0].mxu0
        %v8206 = vadd.f32 %v8013, %v8205
        %v8207 = vpop.f32.mrb[0].mxu0
        %v8208 = vadd.f32 %v8015, %v8207
        %8209 = vmatprep.mubr.bf16.mxu0 %v3967
        %8210 = vmatmul.mubr.bf16.gmra.mrb[0].mxu0 %v3966
        %v8211 = vpop.f32.mrb[0].mxu0
        %v8212 = vadd.f32 %v8019, %v8211
        %v8213 = vpop.f32.mrb[0].mxu0
        %v8214 = vadd.f32 %v8021, %v8213
        %v8215 = vpop.f32.mrb[0].mxu0
        %v8216 = vadd.f32 %v8023, %v8215
        %v8217 = vpop.f32.mrb[0].mxu0
        %v8218 = vadd.f32 %v8025, %v8217
        %8219 = vmatprep.mubr.bf16.mxu0 %v3975
        %8220 = vmatmul.mubr.bf16.gmra.mrb[0].mxu0 %v3974
        %v8221 = vpop.f32.mrb[0].mxu0
        %v8222 = vadd.f32 %v8029, %v8221
        %v8223 = vpop.f32.mrb[0].mxu0
        %v8224 = vadd.f32 %v8031, %v8223
        %v8225 = vpop.f32.mrb[0].mxu0
        %v8226 = vadd.f32 %v8033, %v8225
        %v8227 = vpop.f32.mrb[0].mxu0
        %v8228 = vadd.f32 %v8035, %v8227
        %8229 = vmatprep.mubr.bf16.mxu0 %v3983
        %8230 = vmatmul.mubr.bf16.gmra.mrb[0].mxu0 %v3982
        %v8231 = vpop.f32.mrb[0].mxu0
        %v8232 = vadd.f32 %v8039, %v8231
        %v8233 = vpop.f32.mrb[0].mxu0
        %v8234 = vadd.f32 %v8041, %v8233
        %v8235 = vpop.f32.mrb[0].mxu0
        %v8236 = vadd.f32 %v8043, %v8235
        %v8237 = vpop.f32.mrb[0].mxu0
        %v8238 = vadd.f32 %v8045, %v8237
        %8239 = vmatprep.mubr.bf16.mxu0 %v3991
        %8240 = vmatmul.mubr.bf16.gmra.mrb[0].mxu0 %v3990
        %v8241 = vpop.f32.mrb[0].mxu0
        %v8242 = vadd.f32 %v8049, %v8241
        %v8243 = vpop.f32.mrb[0].mxu0
        %v8244 = vadd.f32 %v8051, %v8243
        %v8245 = vpop.f32.mrb[0].mxu0
        %v8246 = vadd.f32 %v8053, %v8245
        %v8247 = vpop.f32.mrb[0].mxu0
        %v8248 = vadd.f32 %v8055, %v8247
        %8249 = vmatprep.mubr.bf16.mxu0 %v3999
        %8250 = vmatmul.mubr.bf16.gmra.mrb[0].mxu0 %v3998
        %v8251 = vpop.f32.mrb[0].mxu0
        %v8252 = vadd.f32 %v8059, %v8251
        %v8253 = vpop.f32.mrb[0].mxu0
        %v8254 = vadd.f32 %v8061, %v8253
        %v8255 = vpop.f32.mrb[0].mxu0
        %v8256 = vadd.f32 %v8063, %v8255
        %v8257 = vpop.f32.mrb[0].mxu0
        %v8258 = vadd.f32 %v8065, %v8257
        %8259 = vmatprep.mubr.bf16.mxu0 %v4007
        %8260 = vmatmul.mubr.bf16.gmra.mrb[0].mxu0 %v4006
        %v8261 = vpop.f32.mrb[0].mxu0
        %v8262 = vadd.f32 %v8069, %v8261
        %v8263 = vpop.f32.mrb[0].mxu0
        %v8264 = vadd.f32 %v8071, %v8263
        %v8265 = vpop.f32.mrb[0].mxu0
        %v8266 = vadd.f32 %v8073, %v8265
        %v8267 = vpop.f32.mrb[0].mxu0
        %v8268 = vadd.f32 %v8075, %v8267
        %8269 = vmatprep.mubr.bf16.mxu0 %v4015
        %8270 = vmatmul.mubr.bf16.gmra.mrb[0].mxu0 %v4014
        %v8271 = vpop.f32.mrb[0].mxu0
        %v8272 = vadd.f32 %v8079, %v8271
        %v8273 = vpop.f32.mrb[0].mxu0
        %v8274 = vadd.f32 %v8081, %v8273
        %v8275 = vpop.f32.mrb[0].mxu0
        %v8276 = vadd.f32 %v8083, %v8275
        %v8277 = vpop.f32.mrb[0].mxu0
        %v8278 = vadd.f32 %v8085, %v8277
        %8279 = vmatprep.mubr.bf16.mxu0 %v4023
        %8280 = vmatmul.mubr.bf16.gmra.mrb[0].mxu0 %v4022
        %v8281 = vpop.f32.mrb[0].mxu0
        %v8282 = vadd.f32 %v8089, %v8281
        %v8283 = vpop.f32.mrb[0].mxu0
        %v8284 = vadd.f32 %v8091, %v8283
        %v8285 = vpop.f32.mrb[0].mxu0
        %v8286 = vadd.f32 %v8093, %v8285
        %v8287 = vpop.f32.mrb[0].mxu0
        %v8288 = vadd.f32 %v8095, %v8287
        %8289 = vmatprep.mubr.bf16.mxu0 %v4031
        %8290 = vmatmul.mubr.bf16.gmra.mrb[0].mxu0 %v4030
        %v8291 = vpop.f32.mrb[0].mxu0
        %v8292 = vadd.f32 %v8099, %v8291
        %v8293 = vpop.f32.mrb[0].mxu0
        %v8294 = vadd.f32 %v8101, %v8293
        %v8295 = vpop.f32.mrb[0].mxu0
        %v8296 = vadd.f32 %v8103, %v8295
        %v8297 = vpop.f32.mrb[0].mxu0
        %v8298 = vadd.f32 %v8105, %v8297
        %8299 = vmatprep.mubr.bf16.mxu0 %v4039
        %8300 = vmatmul.mubr.bf16.gmra.mrb[0].mxu0 %v4038
        %v8301 = vpop.f32.mrb[0].mxu0
        %v8302 = vadd.f32 %v8109, %v8301
        %v8303 = vpop.f32.mrb[0].mxu0
        %v8304 = vadd.f32 %v8111, %v8303
        %v8305 = vpop.f32.mrb[0].mxu0
        %v8306 = vadd.f32 %v8113, %v8305
        %v8307 = vpop.f32.mrb[0].mxu0
        %v8308 = vadd.f32 %v8115, %v8307
        %8309 = vmatprep.mubr.bf16.mxu0 %v4047
        %8310 = vmatmul.mubr.bf16.gmra.mrb[0].mxu0 %v4046
        %v8311 = vpop.f32.mrb[0].mxu0
        %v8312 = vadd.f32 %v8119, %v8311
        %v8313 = vpop.f32.mrb[0].mxu0
        %v8314 = vadd.f32 %v8121, %v8313
        %v8315 = vpop.f32.mrb[0].mxu0
        %v8316 = vadd.f32 %v8123, %v8315
        %v8317 = vpop.f32.mrb[0].mxu0
        %v8318 = vadd.f32 %v8125, %v8317
        %8319 = vmatprep.mubr.bf16.mxu0 %v4055
        %8320 = vmatmul.mubr.bf16.gmra.mrb[0].mxu0 %v4054
        %v8321 = vpop.f32.mrb[0].mxu0
        %v8322 = vadd.f32 %v8129, %v8321
        %v8323 = vpop.f32.mrb[0].mxu0
        %v8324 = vadd.f32 %v8131, %v8323
        %v8325 = vpop.f32.mrb[0].mxu0
        %v8326 = vadd.f32 %v8133, %v8325
        %v8327 = vpop.f32.mrb[0].mxu0
        %v8328 = vadd.f32 %v8135, %v8327
        %8329 = vmatprep.mubr.bf16.mxu0 %v4063
        %8330 = vmatmul.mubr.bf16.gmra.mrb[0].mxu0 %v4062
        %v8331 = vpop.f32.mrb[0].mxu0
        %v8332 = vadd.f32 %v8139, %v8331
        %v8333 = vpop.f32.mrb[0].mxu0
        %v8334 = vadd.f32 %v8141, %v8333
        %v8335 = vpop.f32.mrb[0].mxu0
        %v8336 = vadd.f32 %v8143, %v8335
        %v8337 = vpop.f32.mrb[0].mxu0
        %v8338 = vadd.f32 %v8145, %v8337
        %8339 = vdwg.mxu0
        %8340 = vmatprep.subr.bf16.mxu0 %v6417
        %8341 = vmatpush1.bf16.msra.mxu0 %v6416
        %8342 = vmatprep.subr.bf16.mxu0 %v6425
        %8343 = vmatpush1.bf16.msra.mxu0 %v6424
        %8344 = vmatprep.subr.bf16.mxu0 %v6433
        %8345 = vmatpush1.bf16.msra.mxu0 %v6432
        %8346 = vmatprep.subr.bf16.mxu0 %v6441
        %8347 = vmatpush1.bf16.msra.mxu0 %v6440
        %8348 = vmatprep.subr.bf16.mxu0 %v6449
        %8349 = vmatpush1.bf16.msra.mxu0 %v6448
        %8350 = vmatprep.subr.bf16.mxu0 %v6457
        %8351 = vmatpush1.bf16.msra.mxu0 %v6456
        %8352 = vmatprep.subr.bf16.mxu0 %v6465
        %8353 = vmatpush1.bf16.msra.mxu0 %v6464
        %8354 = vmatprep.subr.bf16.mxu0 %v6473
        %8355 = vmatpush1.bf16.msra.mxu0 %v6472
        %8356 = vmatprep.subr.bf16.mxu0 %v6481
        %8357 = vmatpush1.bf16.msra.mxu0 %v6480
        %8358 = vmatprep.subr.bf16.mxu0 %v6489
        %8359 = vmatpush1.bf16.msra.mxu0 %v6488
        %8360 = vmatprep.subr.bf16.mxu0 %v6497
        %8361 = vmatpush1.bf16.msra.mxu0 %v6496
        %8362 = vmatprep.subr.bf16.mxu0 %v6505
        %8363 = vmatpush1.bf16.msra.mxu0 %v6504
        %8364 = vmatprep.subr.bf16.mxu0 %v6513
        %8365 = vmatpush1.bf16.msra.mxu0 %v6512
        %8366 = vmatprep.subr.bf16.mxu0 %v6521
        %8367 = vmatpush1.bf16.msra.mxu0 %v6520
        %8368 = vmatprep.subr.bf16.mxu0 %v6529
        %8369 = vmatpush1.bf16.msra.mxu0 %v6528
        %8370 = vmatprep.subr.bf16.mxu0 %v6537
        %8371 = vmatpush1.bf16.msra.mxu0 %v6536
        %8372 = vmatprep.mubr.bf16.mxu0 %v3945
        %8373 = vmatmul.mubr.bf16.gmra.mrb[0].mxu0 %v3944
        %v8374 = vpop.f32.mrb[0].mxu0
        %v8375 = vadd.f32 %v8182, %v8374
        %v8376 = vpop.f32.mrb[0].mxu0
        %v8377 = vadd.f32 %v8184, %v8376
        %v8378 = vpop.f32.mrb[0].mxu0
        %v8379 = vadd.f32 %v8186, %v8378
        %v8380 = vpop.f32.mrb[0].mxu0
        %v8381 = vadd.f32 %v8188, %v8380
        %8382 = vmatprep.mubr.bf16.mxu0 %v3953
        %8383 = vmatmul.mubr.bf16.gmra.mrb[0].mxu0 %v3952
        %v8384 = vpop.f32.mrb[0].mxu0
        %v8385 = vadd.f32 %v8192, %v8384
        %v8386 = vpop.f32.mrb[0].mxu0
        %v8387 = vadd.f32 %v8194, %v8386
        %v8388 = vpop.f32.mrb[0].mxu0
        %v8389 = vadd.f32 %v8196, %v8388
        %v8390 = vpop.f32.mrb[0].mxu0
        %v8391 = vadd.f32 %v8198, %v8390
        %8392 = vmatprep.mubr.bf16.mxu0 %v3961
        %8393 = vmatmul.mubr.bf16.gmra.mrb[0].mxu0 %v3960
        %v8394 = vpop.f32.mrb[0].mxu0
        %v8395 = vadd.f32 %v8202, %v8394
        %v8396 = vpop.f32.mrb[0].mxu0
        %v8397 = vadd.f32 %v8204, %v8396
        %v8398 = vpop.f32.mrb[0].mxu0
        %v8399 = vadd.f32 %v8206, %v8398
        %v8400 = vpop.f32.mrb[0].mxu0
        %v8401 = vadd.f32 %v8208, %v8400
        %8402 = vmatprep.mubr.bf16.mxu0 %v3969
        %8403 = vmatmul.mubr.bf16.gmra.mrb[0].mxu0 %v3968
        %v8404 = vpop.f32.mrb[0].mxu0
        %v8405 = vadd.f32 %v8212, %v8404
        %v8406 = vpop.f32.mrb[0].mxu0
        %v8407 = vadd.f32 %v8214, %v8406
        %v8408 = vpop.f32.mrb[0].mxu0
        %v8409 = vadd.f32 %v8216, %v8408
        %v8410 = vpop.f32.mrb[0].mxu0
        %v8411 = vadd.f32 %v8218, %v8410
        %8412 = vmatprep.mubr.bf16.mxu0 %v3977
        %8413 = vmatmul.mubr.bf16.gmra.mrb[0].mxu0 %v3976
        %v8414 = vpop.f32.mrb[0].mxu0
        %v8415 = vadd.f32 %v8222, %v8414
        %v8416 = vpop.f32.mrb[0].mxu0
        %v8417 = vadd.f32 %v8224, %v8416
        %v8418 = vpop.f32.mrb[0].mxu0
        %v8419 = vadd.f32 %v8226, %v8418
        %v8420 = vpop.f32.mrb[0].mxu0
        %v8421 = vadd.f32 %v8228, %v8420
        %8422 = vmatprep.mubr.bf16.mxu0 %v3985
        %8423 = vmatmul.mubr.bf16.gmra.mrb[0].mxu0 %v3984
        %v8424 = vpop.f32.mrb[0].mxu0
        %v8425 = vadd.f32 %v8232, %v8424
        %v8426 = vpop.f32.mrb[0].mxu0
        %v8427 = vadd.f32 %v8234, %v8426
        %v8428 = vpop.f32.mrb[0].mxu0
        %v8429 = vadd.f32 %v8236, %v8428
        %v8430 = vpop.f32.mrb[0].mxu0
        %v8431 = vadd.f32 %v8238, %v8430
        %8432 = vmatprep.mubr.bf16.mxu0 %v3993
        %8433 = vmatmul.mubr.bf16.gmra.mrb[0].mxu0 %v3992
        %v8434 = vpop.f32.mrb[0].mxu0
        %v8435 = vadd.f32 %v8242, %v8434
        %v8436 = vpop.f32.mrb[0].mxu0
        %v8437 = vadd.f32 %v8244, %v8436
        %v8438 = vpop.f32.mrb[0].mxu0
        %v8439 = vadd.f32 %v8246, %v8438
        %v8440 = vpop.f32.mrb[0].mxu0
        %v8441 = vadd.f32 %v8248, %v8440
        %8442 = vmatprep.mubr.bf16.mxu0 %v4001
        %8443 = vmatmul.mubr.bf16.gmra.mrb[0].mxu0 %v4000
        %v8444 = vpop.f32.mrb[0].mxu0
        %v8445 = vadd.f32 %v8252, %v8444
        %v8446 = vpop.f32.mrb[0].mxu0
        %v8447 = vadd.f32 %v8254, %v8446
        %v8448 = vpop.f32.mrb[0].mxu0
        %v8449 = vadd.f32 %v8256, %v8448
        %v8450 = vpop.f32.mrb[0].mxu0
        %v8451 = vadd.f32 %v8258, %v8450
        %8452 = vmatprep.mubr.bf16.mxu0 %v4009
        %8453 = vmatmul.mubr.bf16.gmra.mrb[0].mxu0 %v4008
        %v8454 = vpop.f32.mrb[0].mxu0
        %v8455 = vadd.f32 %v8262, %v8454
        %v8456 = vpop.f32.mrb[0].mxu0
        %v8457 = vadd.f32 %v8264, %v8456
        %v8458 = vpop.f32.mrb[0].mxu0
        %v8459 = vadd.f32 %v8266, %v8458
        %v8460 = vpop.f32.mrb[0].mxu0
        %v8461 = vadd.f32 %v8268, %v8460
        %8462 = vmatprep.mubr.bf16.mxu0 %v4017
        %8463 = vmatmul.mubr.bf16.gmra.mrb[0].mxu0 %v4016
        %v8464 = vpop.f32.mrb[0].mxu0
        %v8465 = vadd.f32 %v8272, %v8464
        %v8466 = vpop.f32.mrb[0].mxu0
        %v8467 = vadd.f32 %v8274, %v8466
        %v8468 = vpop.f32.mrb[0].mxu0
        %v8469 = vadd.f32 %v8276, %v8468
        %v8470 = vpop.f32.mrb[0].mxu0
        %v8471 = vadd.f32 %v8278, %v8470
        %8472 = vmatprep.mubr.bf16.mxu0 %v4025
        %8473 = vmatmul.mubr.bf16.gmra.mrb[0].mxu0 %v4024
        %v8474 = vpop.f32.mrb[0].mxu0
        %v8475 = vadd.f32 %v8282, %v8474
        %v8476 = vpop.f32.mrb[0].mxu0
        %v8477 = vadd.f32 %v8284, %v8476
        %v8478 = vpop.f32.mrb[0].mxu0
        %v8479 = vadd.f32 %v8286, %v8478
        %v8480 = vpop.f32.mrb[0].mxu0
        %v8481 = vadd.f32 %v8288, %v8480
        %8482 = vmatprep.mubr.bf16.mxu0 %v4033
        %8483 = vmatmul.mubr.bf16.gmra.mrb[0].mxu0 %v4032
        %v8484 = vpop.f32.mrb[0].mxu0
        %v8485 = vadd.f32 %v8292, %v8484
        %v8486 = vpop.f32.mrb[0].mxu0
        %v8487 = vadd.f32 %v8294, %v8486
        %v8488 = vpop.f32.mrb[0].mxu0
        %v8489 = vadd.f32 %v8296, %v8488
        %v8490 = vpop.f32.mrb[0].mxu0
        %v8491 = vadd.f32 %v8298, %v8490
        %8492 = vmatprep.mubr.bf16.mxu0 %v4041
        %8493 = vmatmul.mubr.bf16.gmra.mrb[0].mxu0 %v4040
        %v8494 = vpop.f32.mrb[0].mxu0
        %v8495 = vadd.f32 %v8302, %v8494
        %v8496 = vpop.f32.mrb[0].mxu0
        %v8497 = vadd.f32 %v8304, %v8496
        %v8498 = vpop.f32.mrb[0].mxu0
        %v8499 = vadd.f32 %v8306, %v8498
        %v8500 = vpop.f32.mrb[0].mxu0
        %v8501 = vadd.f32 %v8308, %v8500
        %8502 = vmatprep.mubr.bf16.mxu0 %v4049
        %8503 = vmatmul.mubr.bf16.gmra.mrb[0].mxu0 %v4048
        %v8504 = vpop.f32.mrb[0].mxu0
        %v8505 = vadd.f32 %v8312, %v8504
        %v8506 = vpop.f32.mrb[0].mxu0
        %v8507 = vadd.f32 %v8314, %v8506
        %v8508 = vpop.f32.mrb[0].mxu0
        %v8509 = vadd.f32 %v8316, %v8508
        %v8510 = vpop.f32.mrb[0].mxu0
        %v8511 = vadd.f32 %v8318, %v8510
        %8512 = vmatprep.mubr.bf16.mxu0 %v4057
        %8513 = vmatmul.mubr.bf16.gmra.mrb[0].mxu0 %v4056
        %v8514 = vpop.f32.mrb[0].mxu0
        %v8515 = vadd.f32 %v8322, %v8514
        %v8516 = vpop.f32.mrb[0].mxu0
        %v8517 = vadd.f32 %v8324, %v8516
        %v8518 = vpop.f32.mrb[0].mxu0
        %v8519 = vadd.f32 %v8326, %v8518
        %v8520 = vpop.f32.mrb[0].mxu0
        %v8521 = vadd.f32 %v8328, %v8520
        %8522 = vmatprep.mubr.bf16.mxu0 %v4065
        %8523 = vmatmul.mubr.bf16.gmra.mrb[0].mxu0 %v4064
        %v8524 = vpop.f32.mrb[0].mxu0
        %v8525 = vadd.f32 %v8332, %v8524
        %v8526 = vpop.f32.mrb[0].mxu0
        %v8527 = vadd.f32 %v8334, %v8526
        %v8528 = vpop.f32.mrb[0].mxu0
        %v8529 = vadd.f32 %v8336, %v8528
        %v8530 = vpop.f32.mrb[0].mxu0
        %v8531 = vadd.f32 %v8338, %v8530
        %8532 = vdwg.mxu0
        %8533 = vmatprep.subr.bf16.mxu0 %v6545
        %8534 = vmatpush1.bf16.msra.mxu0 %v6544
        %8535 = vmatprep.subr.bf16.mxu0 %v6553
        %8536 = vmatpush1.bf16.msra.mxu0 %v6552
        %8537 = vmatprep.subr.bf16.mxu0 %v6561
        %8538 = vmatpush1.bf16.msra.mxu0 %v6560
        %8539 = vmatprep.subr.bf16.mxu0 %v6569
        %8540 = vmatpush1.bf16.msra.mxu0 %v6568
        %8541 = vmatprep.subr.bf16.mxu0 %v6577
        %8542 = vmatpush1.bf16.msra.mxu0 %v6576
        %8543 = vmatprep.subr.bf16.mxu0 %v6585
        %8544 = vmatpush1.bf16.msra.mxu0 %v6584
        %8545 = vmatprep.subr.bf16.mxu0 %v6593
        %8546 = vmatpush1.bf16.msra.mxu0 %v6592
        %8547 = vmatprep.subr.bf16.mxu0 %v6601
        %8548 = vmatpush1.bf16.msra.mxu0 %v6600
        %8549 = vmatprep.subr.bf16.mxu0 %v6609
        %8550 = vmatpush1.bf16.msra.mxu0 %v6608
        %8551 = vmatprep.subr.bf16.mxu0 %v6617
        %8552 = vmatpush1.bf16.msra.mxu0 %v6616
        %8553 = vmatprep.subr.bf16.mxu0 %v6625
        %8554 = vmatpush1.bf16.msra.mxu0 %v6624
        %8555 = vmatprep.subr.bf16.mxu0 %v6633
        %8556 = vmatpush1.bf16.msra.mxu0 %v6632
        %8557 = vmatprep.subr.bf16.mxu0 %v6641
        %8558 = vmatpush1.bf16.msra.mxu0 %v6640
        %8559 = vmatprep.subr.bf16.mxu0 %v6649
        %8560 = vmatpush1.bf16.msra.mxu0 %v6648
        %8561 = vmatprep.subr.bf16.mxu0 %v6657
        %8562 = vmatpush1.bf16.msra.mxu0 %v6656
        %8563 = vmatprep.subr.bf16.mxu0 %v6665
        %8564 = vmatpush1.bf16.msra.mxu0 %v6664
        %8565 = vmatprep.mubr.bf16.mxu0 %v3947
        %8566 = vmatmul.mubr.bf16.gmra.mrb[0].mxu0 %v3946
        %v8567 = vpop.f32.mrb[0].mxu0
        %v8568 = vadd.f32 %v8375, %v8567
        %v8569 = vpop.f32.mrb[0].mxu0
        %v8570 = vadd.f32 %v8377, %v8569
        %v8571 = vpop.f32.mrb[0].mxu0
        %v8572 = vadd.f32 %v8379, %v8571
        %v8573 = vpop.f32.mrb[0].mxu0
        %v8574 = vadd.f32 %v8381, %v8573
        %8575 = vmatprep.mubr.bf16.mxu0 %v3955
        %8576 = vmatmul.mubr.bf16.gmra.mrb[0].mxu0 %v3954
        %v8577 = vpop.f32.mrb[0].mxu0
        %v8578 = vadd.f32 %v8385, %v8577
        %v8579 = vpop.f32.mrb[0].mxu0
        %v8580 = vadd.f32 %v8387, %v8579
        %v8581 = vpop.f32.mrb[0].mxu0
        %v8582 = vadd.f32 %v8389, %v8581
        %v8583 = vpop.f32.mrb[0].mxu0
        %v8584 = vadd.f32 %v8391, %v8583
        %8585 = vmatprep.mubr.bf16.mxu0 %v3963
        %8586 = vmatmul.mubr.bf16.gmra.mrb[0].mxu0 %v3962
        %v8587 = vpop.f32.mrb[0].mxu0
        %v8588 = vadd.f32 %v8395, %v8587
        %v8589 = vpop.f32.mrb[0].mxu0
        %v8590 = vadd.f32 %v8397, %v8589
        %v8591 = vpop.f32.mrb[0].mxu0
        %v8592 = vadd.f32 %v8399, %v8591
        %v8593 = vpop.f32.mrb[0].mxu0
        %v8594 = vadd.f32 %v8401, %v8593
        %8595 = vmatprep.mubr.bf16.mxu0 %v3971
        %8596 = vmatmul.mubr.bf16.gmra.mrb[0].mxu0 %v3970
        %v8597 = vpop.f32.mrb[0].mxu0
        %v8598 = vadd.f32 %v8405, %v8597
        %v8599 = vpop.f32.mrb[0].mxu0
        %v8600 = vadd.f32 %v8407, %v8599
        %v8601 = vpop.f32.mrb[0].mxu0
        %v8602 = vadd.f32 %v8409, %v8601
        %v8603 = vpop.f32.mrb[0].mxu0
        %v8604 = vadd.f32 %v8411, %v8603
        %8605 = vmatprep.mubr.bf16.mxu0 %v3979
        %8606 = vmatmul.mubr.bf16.gmra.mrb[0].mxu0 %v3978
        %v8607 = vpop.f32.mrb[0].mxu0
        %v8608 = vadd.f32 %v8415, %v8607
        %v8609 = vpop.f32.mrb[0].mxu0
        %v8610 = vadd.f32 %v8417, %v8609
        %v8611 = vpop.f32.mrb[0].mxu0
        %v8612 = vadd.f32 %v8419, %v8611
        %v8613 = vpop.f32.mrb[0].mxu0
        %v8614 = vadd.f32 %v8421, %v8613
        %8615 = vmatprep.mubr.bf16.mxu0 %v3987
        %8616 = vmatmul.mubr.bf16.gmra.mrb[0].mxu0 %v3986
        %v8617 = vpop.f32.mrb[0].mxu0
        %v8618 = vadd.f32 %v8425, %v8617
        %v8619 = vpop.f32.mrb[0].mxu0
        %v8620 = vadd.f32 %v8427, %v8619
        %v8621 = vpop.f32.mrb[0].mxu0
        %v8622 = vadd.f32 %v8429, %v8621
        %v8623 = vpop.f32.mrb[0].mxu0
        %v8624 = vadd.f32 %v8431, %v8623
        %8625 = vmatprep.mubr.bf16.mxu0 %v3995
        %8626 = vmatmul.mubr.bf16.gmra.mrb[0].mxu0 %v3994
        %v8627 = vpop.f32.mrb[0].mxu0
        %v8628 = vadd.f32 %v8435, %v8627
        %v8629 = vpop.f32.mrb[0].mxu0
        %v8630 = vadd.f32 %v8437, %v8629
        %v8631 = vpop.f32.mrb[0].mxu0
        %v8632 = vadd.f32 %v8439, %v8631
        %v8633 = vpop.f32.mrb[0].mxu0
        %v8634 = vadd.f32 %v8441, %v8633
        %8635 = vmatprep.mubr.bf16.mxu0 %v4003
        %8636 = vmatmul.mubr.bf16.gmra.mrb[0].mxu0 %v4002
        %v8637 = vpop.f32.mrb[0].mxu0
        %v8638 = vadd.f32 %v8445, %v8637
        %v8639 = vpop.f32.mrb[0].mxu0
        %v8640 = vadd.f32 %v8447, %v8639
        %v8641 = vpop.f32.mrb[0].mxu0
        %v8642 = vadd.f32 %v8449, %v8641
        %v8643 = vpop.f32.mrb[0].mxu0
        %v8644 = vadd.f32 %v8451, %v8643
        %8645 = vmatprep.mubr.bf16.mxu0 %v4011
        %8646 = vmatmul.mubr.bf16.gmra.mrb[0].mxu0 %v4010
        %v8647 = vpop.f32.mrb[0].mxu0
        %v8648 = vadd.f32 %v8455, %v8647
        %v8649 = vpop.f32.mrb[0].mxu0
        %v8650 = vadd.f32 %v8457, %v8649
        %v8651 = vpop.f32.mrb[0].mxu0
        %v8652 = vadd.f32 %v8459, %v8651
        %v8653 = vpop.f32.mrb[0].mxu0
        %v8654 = vadd.f32 %v8461, %v8653
        %8655 = vmatprep.mubr.bf16.mxu0 %v4019
        %8656 = vmatmul.mubr.bf16.gmra.mrb[0].mxu0 %v4018
        %v8657 = vpop.f32.mrb[0].mxu0
        %v8658 = vadd.f32 %v8465, %v8657
        %v8659 = vpop.f32.mrb[0].mxu0
        %v8660 = vadd.f32 %v8467, %v8659
        %v8661 = vpop.f32.mrb[0].mxu0
        %v8662 = vadd.f32 %v8469, %v8661
        %v8663 = vpop.f32.mrb[0].mxu0
        %v8664 = vadd.f32 %v8471, %v8663
        %8665 = vmatprep.mubr.bf16.mxu0 %v4027
        %8666 = vmatmul.mubr.bf16.gmra.mrb[0].mxu0 %v4026
        %v8667 = vpop.f32.mrb[0].mxu0
        %v8668 = vadd.f32 %v8475, %v8667
        %v8669 = vpop.f32.mrb[0].mxu0
        %v8670 = vadd.f32 %v8477, %v8669
        %v8671 = vpop.f32.mrb[0].mxu0
        %v8672 = vadd.f32 %v8479, %v8671
        %v8673 = vpop.f32.mrb[0].mxu0
        %v8674 = vadd.f32 %v8481, %v8673
        %8675 = vmatprep.mubr.bf16.mxu0 %v4035
        %8676 = vmatmul.mubr.bf16.gmra.mrb[0].mxu0 %v4034
        %v8677 = vpop.f32.mrb[0].mxu0
        %v8678 = vadd.f32 %v8485, %v8677
        %v8679 = vpop.f32.mrb[0].mxu0
        %v8680 = vadd.f32 %v8487, %v8679
        %v8681 = vpop.f32.mrb[0].mxu0
        %v8682 = vadd.f32 %v8489, %v8681
        %v8683 = vpop.f32.mrb[0].mxu0
        %v8684 = vadd.f32 %v8491, %v8683
        %8685 = vmatprep.mubr.bf16.mxu0 %v4043
        %8686 = vmatmul.mubr.bf16.gmra.mrb[0].mxu0 %v4042
        %v8687 = vpop.f32.mrb[0].mxu0
        %v8688 = vadd.f32 %v8495, %v8687
        %v8689 = vpop.f32.mrb[0].mxu0
        %v8690 = vadd.f32 %v8497, %v8689
        %v8691 = vpop.f32.mrb[0].mxu0
        %v8692 = vadd.f32 %v8499, %v8691
        %v8693 = vpop.f32.mrb[0].mxu0
        %v8694 = vadd.f32 %v8501, %v8693
        %8695 = vmatprep.mubr.bf16.mxu0 %v4051
        %8696 = vmatmul.mubr.bf16.gmra.mrb[0].mxu0 %v4050
        %v8697 = vpop.f32.mrb[0].mxu0
        %v8698 = vadd.f32 %v8505, %v8697
        %v8699 = vpop.f32.mrb[0].mxu0
        %v8700 = vadd.f32 %v8507, %v8699
        %v8701 = vpop.f32.mrb[0].mxu0
        %v8702 = vadd.f32 %v8509, %v8701
        %v8703 = vpop.f32.mrb[0].mxu0
        %v8704 = vadd.f32 %v8511, %v8703
        %8705 = vmatprep.mubr.bf16.mxu0 %v4059
        %8706 = vmatmul.mubr.bf16.gmra.mrb[0].mxu0 %v4058
        %v8707 = vpop.f32.mrb[0].mxu0
        %v8708 = vadd.f32 %v8515, %v8707
        %v8709 = vpop.f32.mrb[0].mxu0
        %v8710 = vadd.f32 %v8517, %v8709
        %v8711 = vpop.f32.mrb[0].mxu0
        %v8712 = vadd.f32 %v8519, %v8711
        %v8713 = vpop.f32.mrb[0].mxu0
        %v8714 = vadd.f32 %v8521, %v8713
        %8715 = vmatprep.mubr.bf16.mxu0 %v4067
        %8716 = vmatmul.mubr.bf16.gmra.mrb[0].mxu0 %v4066
        %v8717 = vpop.f32.mrb[0].mxu0
        %v8718 = vadd.f32 %v8525, %v8717
        %v8719 = vpop.f32.mrb[0].mxu0
        %v8720 = vadd.f32 %v8527, %v8719
        %v8721 = vpop.f32.mrb[0].mxu0
        %v8722 = vadd.f32 %v8529, %v8721
        %v8723 = vpop.f32.mrb[0].mxu0
        %v8724 = vadd.f32 %v8531, %v8723
        %8725 = vdwg.mxu0
        %8726 = vmatprep.subr.bf16.mxu0 %v6163
        %8727 = vmatpush1.bf16.msra.mxu0 %v6162
        %8728 = vmatprep.subr.bf16.mxu0 %v6171
        %8729 = vmatpush1.bf16.msra.mxu0 %v6170
        %8730 = vmatprep.subr.bf16.mxu0 %v6179
        %8731 = vmatpush1.bf16.msra.mxu0 %v6178
        %8732 = vmatprep.subr.bf16.mxu0 %v6187
        %8733 = vmatpush1.bf16.msra.mxu0 %v6186
        %8734 = vmatprep.subr.bf16.mxu0 %v6195
        %8735 = vmatpush1.bf16.msra.mxu0 %v6194
        %8736 = vmatprep.subr.bf16.mxu0 %v6203
        %8737 = vmatpush1.bf16.msra.mxu0 %v6202
        %8738 = vmatprep.subr.bf16.mxu0 %v6211
        %8739 = vmatpush1.bf16.msra.mxu0 %v6210
        %8740 = vmatprep.subr.bf16.mxu0 %v6219
        %8741 = vmatpush1.bf16.msra.mxu0 %v6218
        %8742 = vmatprep.subr.bf16.mxu0 %v6227
        %8743 = vmatpush1.bf16.msra.mxu0 %v6226
        %8744 = vmatprep.subr.bf16.mxu0 %v6235
        %8745 = vmatpush1.bf16.msra.mxu0 %v6234
        %8746 = vmatprep.subr.bf16.mxu0 %v6243
        %8747 = vmatpush1.bf16.msra.mxu0 %v6242
        %8748 = vmatprep.subr.bf16.mxu0 %v6251
        %8749 = vmatpush1.bf16.msra.mxu0 %v6250
        %8750 = vmatprep.subr.bf16.mxu0 %v6259
        %8751 = vmatpush1.bf16.msra.mxu0 %v6258
        %8752 = vmatprep.subr.bf16.mxu0 %v6267
        %8753 = vmatpush1.bf16.msra.mxu0 %v6266
        %8754 = vmatprep.subr.bf16.mxu0 %v6275
        %8755 = vmatpush1.bf16.msra.mxu0 %v6274
        %8756 = vmatprep.subr.bf16.mxu0 %v6283
        %8757 = vmatpush1.bf16.msra.mxu0 %v6282
        %8758 = vmatprep.mubr.bf16.mxu0 %v3941
        %8759 = vmatmul.mubr.bf16.gmra.mrb[0].mxu0 %v3940
        %v8760 = vpop.f32.mrb[0].mxu0
        %v8761 = vadd.f32 %v4601, %v8760
        %v8762 = vpop.f32.mrb[0].mxu0
        %v8763 = vadd.f32 %v4605, %v8762
        %v8764 = vpop.f32.mrb[0].mxu0
        %v8765 = vadd.f32 %v4601, %v8764
        %v8766 = vpop.f32.mrb[0].mxu0
        %v8767 = vadd.f32 %v4605, %v8766
        %8768 = vmatprep.mubr.bf16.mxu0 %v3949
        %8769 = vmatmul.mubr.bf16.gmra.mrb[0].mxu0 %v3948
        %v8770 = vpop.f32.mrb[0].mxu0
        %v8771 = vadd.f32 %v4601, %v8770
        %v8772 = vpop.f32.mrb[0].mxu0
        %v8773 = vadd.f32 %v4605, %v8772
        %v8774 = vpop.f32.mrb[0].mxu0
        %v8775 = vadd.f32 %v4601, %v8774
        %v8776 = vpop.f32.mrb[0].mxu0
        %v8777 = vadd.f32 %v4605, %v8776
        %8778 = vmatprep.mubr.bf16.mxu0 %v3957
        %8779 = vmatmul.mubr.bf16.gmra.mrb[0].mxu0 %v3956
        %v8780 = vpop.f32.mrb[0].mxu0
        %v8781 = vadd.f32 %v4601, %v8780
        %v8782 = vpop.f32.mrb[0].mxu0
        %v8783 = vadd.f32 %v4605, %v8782
        %v8784 = vpop.f32.mrb[0].mxu0
        %v8785 = vadd.f32 %v4601, %v8784
        %v8786 = vpop.f32.mrb[0].mxu0
        %v8787 = vadd.f32 %v4605, %v8786
        %8788 = vmatprep.mubr.bf16.mxu0 %v3965
        %8789 = vmatmul.mubr.bf16.gmra.mrb[0].mxu0 %v3964
        %v8790 = vpop.f32.mrb[0].mxu0
        %v8791 = vadd.f32 %v4601, %v8790
        %v8792 = vpop.f32.mrb[0].mxu0
        %v8793 = vadd.f32 %v4605, %v8792
        %v8794 = vpop.f32.mrb[0].mxu0
        %v8795 = vadd.f32 %v4601, %v8794
        %v8796 = vpop.f32.mrb[0].mxu0
        %v8797 = vadd.f32 %v4605, %v8796
        %8798 = vmatprep.mubr.bf16.mxu0 %v3973
        %8799 = vmatmul.mubr.bf16.gmra.mrb[0].mxu0 %v3972
        %v8800 = vpop.f32.mrb[0].mxu0
        %v8801 = vadd.f32 %v4601, %v8800
        %v8802 = vpop.f32.mrb[0].mxu0
        %v8803 = vadd.f32 %v4605, %v8802
        %v8804 = vpop.f32.mrb[0].mxu0
        %v8805 = vadd.f32 %v4601, %v8804
        %v8806 = vpop.f32.mrb[0].mxu0
        %v8807 = vadd.f32 %v4605, %v8806
        %8808 = vmatprep.mubr.bf16.mxu0 %v3981
        %8809 = vmatmul.mubr.bf16.gmra.mrb[0].mxu0 %v3980
        %v8810 = vpop.f32.mrb[0].mxu0
        %v8811 = vadd.f32 %v4601, %v8810
        %v8812 = vpop.f32.mrb[0].mxu0
        %v8813 = vadd.f32 %v4605, %v8812
        %v8814 = vpop.f32.mrb[0].mxu0
        %v8815 = vadd.f32 %v4601, %v8814
        %v8816 = vpop.f32.mrb[0].mxu0
        %v8817 = vadd.f32 %v4605, %v8816
        %8818 = vmatprep.mubr.bf16.mxu0 %v3989
        %8819 = vmatmul.mubr.bf16.gmra.mrb[0].mxu0 %v3988
        %v8820 = vpop.f32.mrb[0].mxu0
        %v8821 = vadd.f32 %v4601, %v8820
        %v8822 = vpop.f32.mrb[0].mxu0
        %v8823 = vadd.f32 %v4605, %v8822
        %v8824 = vpop.f32.mrb[0].mxu0
        %v8825 = vadd.f32 %v4601, %v8824
        %v8826 = vpop.f32.mrb[0].mxu0
        %v8827 = vadd.f32 %v4605, %v8826
        %8828 = vmatprep.mubr.bf16.mxu0 %v3997
        %8829 = vmatmul.mubr.bf16.gmra.mrb[0].mxu0 %v3996
        %v8830 = vpop.f32.mrb[0].mxu0
        %v8831 = vadd.f32 %v4601, %v8830
        %v8832 = vpop.f32.mrb[0].mxu0
        %v8833 = vadd.f32 %v4605, %v8832
        %v8834 = vpop.f32.mrb[0].mxu0
        %v8835 = vadd.f32 %v4601, %v8834
        %v8836 = vpop.f32.mrb[0].mxu0
        %v8837 = vadd.f32 %v4605, %v8836
        %8838 = vmatprep.mubr.bf16.mxu0 %v4005
        %8839 = vmatmul.mubr.bf16.gmra.mrb[0].mxu0 %v4004
        %v8840 = vpop.f32.mrb[0].mxu0
        %v8841 = vadd.f32 %v4601, %v8840
        %v8842 = vpop.f32.mrb[0].mxu0
        %v8843 = vadd.f32 %v4605, %v8842
        %v8844 = vpop.f32.mrb[0].mxu0
        %v8845 = vadd.f32 %v4601, %v8844
        %v8846 = vpop.f32.mrb[0].mxu0
        %v8847 = vadd.f32 %v4605, %v8846
        %8848 = vmatprep.mubr.bf16.mxu0 %v4013
        %8849 = vmatmul.mubr.bf16.gmra.mrb[0].mxu0 %v4012
        %v8850 = vpop.f32.mrb[0].mxu0
        %v8851 = vadd.f32 %v4601, %v8850
        %v8852 = vpop.f32.mrb[0].mxu0
        %v8853 = vadd.f32 %v4605, %v8852
        %v8854 = vpop.f32.mrb[0].mxu0
        %v8855 = vadd.f32 %v4601, %v8854
        %v8856 = vpop.f32.mrb[0].mxu0
        %v8857 = vadd.f32 %v4605, %v8856
        %8858 = vmatprep.mubr.bf16.mxu0 %v4021
        %8859 = vmatmul.mubr.bf16.gmra.mrb[0].mxu0 %v4020
        %v8860 = vpop.f32.mrb[0].mxu0
        %v8861 = vadd.f32 %v4601, %v8860
        %v8862 = vpop.f32.mrb[0].mxu0
        %v8863 = vadd.f32 %v4605, %v8862
        %v8864 = vpop.f32.mrb[0].mxu0
        %v8865 = vadd.f32 %v4601, %v8864
        %v8866 = vpop.f32.mrb[0].mxu0
        %v8867 = vadd.f32 %v4605, %v8866
        %8868 = vmatprep.mubr.bf16.mxu0 %v4029
        %8869 = vmatmul.mubr.bf16.gmra.mrb[0].mxu0 %v4028
        %v8870 = vpop.f32.mrb[0].mxu0
        %v8871 = vadd.f32 %v4601, %v8870
        %v8872 = vpop.f32.mrb[0].mxu0
        %v8873 = vadd.f32 %v4605, %v8872
        %v8874 = vpop.f32.mrb[0].mxu0
        %v8875 = vadd.f32 %v4601, %v8874
        %v8876 = vpop.f32.mrb[0].mxu0
        %v8877 = vadd.f32 %v4605, %v8876
        %8878 = vmatprep.mubr.bf16.mxu0 %v4037
        %8879 = vmatmul.mubr.bf16.gmra.mrb[0].mxu0 %v4036
        %v8880 = vpop.f32.mrb[0].mxu0
        %v8881 = vadd.f32 %v4601, %v8880
        %v8882 = vpop.f32.mrb[0].mxu0
        %v8883 = vadd.f32 %v4605, %v8882
        %v8884 = vpop.f32.mrb[0].mxu0
        %v8885 = vadd.f32 %v4601, %v8884
        %v8886 = vpop.f32.mrb[0].mxu0
        %v8887 = vadd.f32 %v4605, %v8886
        %8888 = vmatprep.mubr.bf16.mxu0 %v4045
        %8889 = vmatmul.mubr.bf16.gmra.mrb[0].mxu0 %v4044
        %v8890 = vpop.f32.mrb[0].mxu0
        %v8891 = vadd.f32 %v4601, %v8890
        %v8892 = vpop.f32.mrb[0].mxu0
        %v8893 = vadd.f32 %v4605, %v8892
        %v8894 = vpop.f32.mrb[0].mxu0
        %v8895 = vadd.f32 %v4601, %v8894
        %v8896 = vpop.f32.mrb[0].mxu0
        %v8897 = vadd.f32 %v4605, %v8896
        %8898 = vmatprep.mubr.bf16.mxu0 %v4053
        %8899 = vmatmul.mubr.bf16.gmra.mrb[0].mxu0 %v4052
        %v8900 = vpop.f32.mrb[0].mxu0
        %v8901 = vadd.f32 %v4601, %v8900
        %v8902 = vpop.f32.mrb[0].mxu0
        %v8903 = vadd.f32 %v4605, %v8902
        %v8904 = vpop.f32.mrb[0].mxu0
        %v8905 = vadd.f32 %v4601, %v8904
        %v8906 = vpop.f32.mrb[0].mxu0
        %v8907 = vadd.f32 %v4605, %v8906
        %8908 = vmatprep.mubr.bf16.mxu0 %v4061
        %8909 = vmatmul.mubr.bf16.gmra.mrb[0].mxu0 %v4060
        %v8910 = vpop.f32.mrb[0].mxu0
        %v8911 = vadd.f32 %v4601, %v8910
        %v8912 = vpop.f32.mrb[0].mxu0
        %v8913 = vadd.f32 %v4605, %v8912
        %v8914 = vpop.f32.mrb[0].mxu0
        %v8915 = vadd.f32 %v4601, %v8914
        %v8916 = vpop.f32.mrb[0].mxu0
        %v8917 = vadd.f32 %v4605, %v8916
        %8918 = vdwg.mxu0
        %8919 = vmatprep.subr.bf16.mxu0 %v6291
        %8920 = vmatpush1.bf16.msra.mxu0 %v6290
        %8921 = vmatprep.subr.bf16.mxu0 %v6299
        %8922 = vmatpush1.bf16.msra.mxu0 %v6298
        %8923 = vmatprep.subr.bf16.mxu0 %v6307
        %8924 = vmatpush1.bf16.msra.mxu0 %v6306
        %8925 = vmatprep.subr.bf16.mxu0 %v6315
        %8926 = vmatpush1.bf16.msra.mxu0 %v6314
        %8927 = vmatprep.subr.bf16.mxu0 %v6323
        %8928 = vmatpush1.bf16.msra.mxu0 %v6322
        %8929 = vmatprep.subr.bf16.mxu0 %v6331
        %8930 = vmatpush1.bf16.msra.mxu0 %v6330
        %8931 = vmatprep.subr.bf16.mxu0 %v6339
        %8932 = vmatpush1.bf16.msra.mxu0 %v6338
        %8933 = vmatprep.subr.bf16.mxu0 %v6347
        %8934 = vmatpush1.bf16.msra.mxu0 %v6346
        %8935 = vmatprep.subr.bf16.mxu0 %v6355
        %8936 = vmatpush1.bf16.msra.mxu0 %v6354
        %8937 = vmatprep.subr.bf16.mxu0 %v6363
        %8938 = vmatpush1.bf16.msra.mxu0 %v6362
        %8939 = vmatprep.subr.bf16.mxu0 %v6371
        %8940 = vmatpush1.bf16.msra.mxu0 %v6370
        %8941 = vmatprep.subr.bf16.mxu0 %v6379
        %8942 = vmatpush1.bf16.msra.mxu0 %v6378
        %8943 = vmatprep.subr.bf16.mxu0 %v6387
        %8944 = vmatpush1.bf16.msra.mxu0 %v6386
        %8945 = vmatprep.subr.bf16.mxu0 %v6395
        %8946 = vmatpush1.bf16.msra.mxu0 %v6394
        %8947 = vmatprep.subr.bf16.mxu0 %v6403
        %8948 = vmatpush1.bf16.msra.mxu0 %v6402
        %8949 = vmatprep.subr.bf16.mxu0 %v6411
        %8950 = vmatpush1.bf16.msra.mxu0 %v6410
        %8951 = vmatprep.mubr.bf16.mxu0 %v3943
        %8952 = vmatmul.mubr.bf16.gmra.mrb[0].mxu0 %v3942
        %v8953 = vpop.f32.mrb[0].mxu0
        %v8954 = vadd.f32 %v8761, %v8953
        %v8955 = vpop.f32.mrb[0].mxu0
        %v8956 = vadd.f32 %v8763, %v8955
        %v8957 = vpop.f32.mrb[0].mxu0
        %v8958 = vadd.f32 %v8765, %v8957
        %v8959 = vpop.f32.mrb[0].mxu0
        %v8960 = vadd.f32 %v8767, %v8959
        %8961 = vmatprep.mubr.bf16.mxu0 %v3951
        %8962 = vmatmul.mubr.bf16.gmra.mrb[0].mxu0 %v3950
        %v8963 = vpop.f32.mrb[0].mxu0
        %v8964 = vadd.f32 %v8771, %v8963
        %v8965 = vpop.f32.mrb[0].mxu0
        %v8966 = vadd.f32 %v8773, %v8965
        %v8967 = vpop.f32.mrb[0].mxu0
        %v8968 = vadd.f32 %v8775, %v8967
        %v8969 = vpop.f32.mrb[0].mxu0
        %v8970 = vadd.f32 %v8777, %v8969
        %8971 = vmatprep.mubr.bf16.mxu0 %v3959
        %8972 = vmatmul.mubr.bf16.gmra.mrb[0].mxu0 %v3958
        %v8973 = vpop.f32.mrb[0].mxu0
        %v8974 = vadd.f32 %v8781, %v8973
        %v8975 = vpop.f32.mrb[0].mxu0
        %v8976 = vadd.f32 %v8783, %v8975
        %v8977 = vpop.f32.mrb[0].mxu0
        %v8978 = vadd.f32 %v8785, %v8977
        %v8979 = vpop.f32.mrb[0].mxu0
        %v8980 = vadd.f32 %v8787, %v8979
        %8981 = vmatprep.mubr.bf16.mxu0 %v3967
        %8982 = vmatmul.mubr.bf16.gmra.mrb[0].mxu0 %v3966
        %v8983 = vpop.f32.mrb[0].mxu0
        %v8984 = vadd.f32 %v8791, %v8983
        %v8985 = vpop.f32.mrb[0].mxu0
        %v8986 = vadd.f32 %v8793, %v8985
        %v8987 = vpop.f32.mrb[0].mxu0
        %v8988 = vadd.f32 %v8795, %v8987
        %v8989 = vpop.f32.mrb[0].mxu0
        %v8990 = vadd.f32 %v8797, %v8989
        %8991 = vmatprep.mubr.bf16.mxu0 %v3975
        %8992 = vmatmul.mubr.bf16.gmra.mrb[0].mxu0 %v3974
        %v8993 = vpop.f32.mrb[0].mxu0
        %v8994 = vadd.f32 %v8801, %v8993
        %v8995 = vpop.f32.mrb[0].mxu0
        %v8996 = vadd.f32 %v8803, %v8995
        %v8997 = vpop.f32.mrb[0].mxu0
        %v8998 = vadd.f32 %v8805, %v8997
        %v8999 = vpop.f32.mrb[0].mxu0
        %v9000 = vadd.f32 %v8807, %v8999
        %9001 = vmatprep.mubr.bf16.mxu0 %v3983
        %9002 = vmatmul.mubr.bf16.gmra.mrb[0].mxu0 %v3982
        %v9003 = vpop.f32.mrb[0].mxu0
        %v9004 = vadd.f32 %v8811, %v9003
        %v9005 = vpop.f32.mrb[0].mxu0
        %v9006 = vadd.f32 %v8813, %v9005
        %v9007 = vpop.f32.mrb[0].mxu0
        %v9008 = vadd.f32 %v8815, %v9007
        %v9009 = vpop.f32.mrb[0].mxu0
        %v9010 = vadd.f32 %v8817, %v9009
        %9011 = vmatprep.mubr.bf16.mxu0 %v3991
        %9012 = vmatmul.mubr.bf16.gmra.mrb[0].mxu0 %v3990
        %v9013 = vpop.f32.mrb[0].mxu0
        %v9014 = vadd.f32 %v8821, %v9013
        %v9015 = vpop.f32.mrb[0].mxu0
        %v9016 = vadd.f32 %v8823, %v9015
        %v9017 = vpop.f32.mrb[0].mxu0
        %v9018 = vadd.f32 %v8825, %v9017
        %v9019 = vpop.f32.mrb[0].mxu0
        %v9020 = vadd.f32 %v8827, %v9019
        %9021 = vmatprep.mubr.bf16.mxu0 %v3999
        %9022 = vmatmul.mubr.bf16.gmra.mrb[0].mxu0 %v3998
        %v9023 = vpop.f32.mrb[0].mxu0
        %v9024 = vadd.f32 %v8831, %v9023
        %v9025 = vpop.f32.mrb[0].mxu0
        %v9026 = vadd.f32 %v8833, %v9025
        %v9027 = vpop.f32.mrb[0].mxu0
        %v9028 = vadd.f32 %v8835, %v9027
        %v9029 = vpop.f32.mrb[0].mxu0
        %v9030 = vadd.f32 %v8837, %v9029
        %9031 = vmatprep.mubr.bf16.mxu0 %v4007
        %9032 = vmatmul.mubr.bf16.gmra.mrb[0].mxu0 %v4006
        %v9033 = vpop.f32.mrb[0].mxu0
        %v9034 = vadd.f32 %v8841, %v9033
        %v9035 = vpop.f32.mrb[0].mxu0
        %v9036 = vadd.f32 %v8843, %v9035
        %v9037 = vpop.f32.mrb[0].mxu0
        %v9038 = vadd.f32 %v8845, %v9037
        %v9039 = vpop.f32.mrb[0].mxu0
        %v9040 = vadd.f32 %v8847, %v9039
        %9041 = vmatprep.mubr.bf16.mxu0 %v4015
        %9042 = vmatmul.mubr.bf16.gmra.mrb[0].mxu0 %v4014
        %v9043 = vpop.f32.mrb[0].mxu0
        %v9044 = vadd.f32 %v8851, %v9043
        %v9045 = vpop.f32.mrb[0].mxu0
        %v9046 = vadd.f32 %v8853, %v9045
        %v9047 = vpop.f32.mrb[0].mxu0
        %v9048 = vadd.f32 %v8855, %v9047
        %v9049 = vpop.f32.mrb[0].mxu0
        %v9050 = vadd.f32 %v8857, %v9049
        %9051 = vmatprep.mubr.bf16.mxu0 %v4023
        %9052 = vmatmul.mubr.bf16.gmra.mrb[0].mxu0 %v4022
        %v9053 = vpop.f32.mrb[0].mxu0
        %v9054 = vadd.f32 %v8861, %v9053
        %v9055 = vpop.f32.mrb[0].mxu0
        %v9056 = vadd.f32 %v8863, %v9055
        %v9057 = vpop.f32.mrb[0].mxu0
        %v9058 = vadd.f32 %v8865, %v9057
        %v9059 = vpop.f32.mrb[0].mxu0
        %v9060 = vadd.f32 %v8867, %v9059
        %9061 = vmatprep.mubr.bf16.mxu0 %v4031
        %9062 = vmatmul.mubr.bf16.gmra.mrb[0].mxu0 %v4030
        %v9063 = vpop.f32.mrb[0].mxu0
        %v9064 = vadd.f32 %v8871, %v9063
        %v9065 = vpop.f32.mrb[0].mxu0
        %v9066 = vadd.f32 %v8873, %v9065
        %v9067 = vpop.f32.mrb[0].mxu0
        %v9068 = vadd.f32 %v8875, %v9067
        %v9069 = vpop.f32.mrb[0].mxu0
        %v9070 = vadd.f32 %v8877, %v9069
        %9071 = vmatprep.mubr.bf16.mxu0 %v4039
        %9072 = vmatmul.mubr.bf16.gmra.mrb[0].mxu0 %v4038
        %v9073 = vpop.f32.mrb[0].mxu0
        %v9074 = vadd.f32 %v8881, %v9073
        %v9075 = vpop.f32.mrb[0].mxu0
        %v9076 = vadd.f32 %v8883, %v9075
        %v9077 = vpop.f32.mrb[0].mxu0
        %v9078 = vadd.f32 %v8885, %v9077
        %v9079 = vpop.f32.mrb[0].mxu0
        %v9080 = vadd.f32 %v8887, %v9079
        %9081 = vmatprep.mubr.bf16.mxu0 %v4047
        %9082 = vmatmul.mubr.bf16.gmra.mrb[0].mxu0 %v4046
        %v9083 = vpop.f32.mrb[0].mxu0
        %v9084 = vadd.f32 %v8891, %v9083
        %v9085 = vpop.f32.mrb[0].mxu0
        %v9086 = vadd.f32 %v8893, %v9085
        %v9087 = vpop.f32.mrb[0].mxu0
        %v9088 = vadd.f32 %v8895, %v9087
        %v9089 = vpop.f32.mrb[0].mxu0
        %v9090 = vadd.f32 %v8897, %v9089
        %9091 = vmatprep.mubr.bf16.mxu0 %v4055
        %9092 = vmatmul.mubr.bf16.gmra.mrb[0].mxu0 %v4054
        %v9093 = vpop.f32.mrb[0].mxu0
        %v9094 = vadd.f32 %v8901, %v9093
        %v9095 = vpop.f32.mrb[0].mxu0
        %v9096 = vadd.f32 %v8903, %v9095
        %v9097 = vpop.f32.mrb[0].mxu0
        %v9098 = vadd.f32 %v8905, %v9097
        %v9099 = vpop.f32.mrb[0].mxu0
        %v9100 = vadd.f32 %v8907, %v9099
        %9101 = vmatprep.mubr.bf16.mxu0 %v4063
        %9102 = vmatmul.mubr.bf16.gmra.mrb[0].mxu0 %v4062
        %v9103 = vpop.f32.mrb[0].mxu0
        %v9104 = vadd.f32 %v8911, %v9103
        %v9105 = vpop.f32.mrb[0].mxu0
        %v9106 = vadd.f32 %v8913, %v9105
        %v9107 = vpop.f32.mrb[0].mxu0
        %v9108 = vadd.f32 %v8915, %v9107
        %v9109 = vpop.f32.mrb[0].mxu0
        %v9110 = vadd.f32 %v8917, %v9109
        %9111 = vdwg.mxu0
        %9112 = vmatprep.subr.bf16.mxu0 %v6419
        %9113 = vmatpush1.bf16.msra.mxu0 %v6418
        %9114 = vmatprep.subr.bf16.mxu0 %v6427
        %9115 = vmatpush1.bf16.msra.mxu0 %v6426
        %9116 = vmatprep.subr.bf16.mxu0 %v6435
        %9117 = vmatpush1.bf16.msra.mxu0 %v6434
        %9118 = vmatprep.subr.bf16.mxu0 %v6443
        %9119 = vmatpush1.bf16.msra.mxu0 %v6442
        %9120 = vmatprep.subr.bf16.mxu0 %v6451
        %9121 = vmatpush1.bf16.msra.mxu0 %v6450
        %9122 = vmatprep.subr.bf16.mxu0 %v6459
        %9123 = vmatpush1.bf16.msra.mxu0 %v6458
        %9124 = vmatprep.subr.bf16.mxu0 %v6467
        %9125 = vmatpush1.bf16.msra.mxu0 %v6466
        %9126 = vmatprep.subr.bf16.mxu0 %v6475
        %9127 = vmatpush1.bf16.msra.mxu0 %v6474
        %9128 = vmatprep.subr.bf16.mxu0 %v6483
        %9129 = vmatpush1.bf16.msra.mxu0 %v6482
        %9130 = vmatprep.subr.bf16.mxu0 %v6491
        %9131 = vmatpush1.bf16.msra.mxu0 %v6490
        %9132 = vmatprep.subr.bf16.mxu0 %v6499
        %9133 = vmatpush1.bf16.msra.mxu0 %v6498
        %9134 = vmatprep.subr.bf16.mxu0 %v6507
        %9135 = vmatpush1.bf16.msra.mxu0 %v6506
        %9136 = vmatprep.subr.bf16.mxu0 %v6515
        %9137 = vmatpush1.bf16.msra.mxu0 %v6514
        %9138 = vmatprep.subr.bf16.mxu0 %v6523
        %9139 = vmatpush1.bf16.msra.mxu0 %v6522
        %9140 = vmatprep.subr.bf16.mxu0 %v6531
        %9141 = vmatpush1.bf16.msra.mxu0 %v6530
        %9142 = vmatprep.subr.bf16.mxu0 %v6539
        %9143 = vmatpush1.bf16.msra.mxu0 %v6538
        %9144 = vmatprep.mubr.bf16.mxu0 %v3945
        %9145 = vmatmul.mubr.bf16.gmra.mrb[0].mxu0 %v3944
        %v9146 = vpop.f32.mrb[0].mxu0
        %v9147 = vadd.f32 %v8954, %v9146
        %v9148 = vpop.f32.mrb[0].mxu0
        %v9149 = vadd.f32 %v8956, %v9148
        %v9150 = vpop.f32.mrb[0].mxu0
        %v9151 = vadd.f32 %v8958, %v9150
        %v9152 = vpop.f32.mrb[0].mxu0
        %v9153 = vadd.f32 %v8960, %v9152
        %9154 = vmatprep.mubr.bf16.mxu0 %v3953
        %9155 = vmatmul.mubr.bf16.gmra.mrb[0].mxu0 %v3952
        %v9156 = vpop.f32.mrb[0].mxu0
        %v9157 = vadd.f32 %v8964, %v9156
        %v9158 = vpop.f32.mrb[0].mxu0
        %v9159 = vadd.f32 %v8966, %v9158
        %v9160 = vpop.f32.mrb[0].mxu0
        %v9161 = vadd.f32 %v8968, %v9160
        %v9162 = vpop.f32.mrb[0].mxu0
        %v9163 = vadd.f32 %v8970, %v9162
        %9164 = vmatprep.mubr.bf16.mxu0 %v3961
        %9165 = vmatmul.mubr.bf16.gmra.mrb[0].mxu0 %v3960
        %v9166 = vpop.f32.mrb[0].mxu0
        %v9167 = vadd.f32 %v8974, %v9166
        %v9168 = vpop.f32.mrb[0].mxu0
        %v9169 = vadd.f32 %v8976, %v9168
        %v9170 = vpop.f32.mrb[0].mxu0
        %v9171 = vadd.f32 %v8978, %v9170
        %v9172 = vpop.f32.mrb[0].mxu0
        %v9173 = vadd.f32 %v8980, %v9172
        %9174 = vmatprep.mubr.bf16.mxu0 %v3969
        %9175 = vmatmul.mubr.bf16.gmra.mrb[0].mxu0 %v3968
        %v9176 = vpop.f32.mrb[0].mxu0
        %v9177 = vadd.f32 %v8984, %v9176
        %v9178 = vpop.f32.mrb[0].mxu0
        %v9179 = vadd.f32 %v8986, %v9178
        %v9180 = vpop.f32.mrb[0].mxu0
        %v9181 = vadd.f32 %v8988, %v9180
        %v9182 = vpop.f32.mrb[0].mxu0
        %v9183 = vadd.f32 %v8990, %v9182
        %9184 = vmatprep.mubr.bf16.mxu0 %v3977
        %9185 = vmatmul.mubr.bf16.gmra.mrb[0].mxu0 %v3976
        %v9186 = vpop.f32.mrb[0].mxu0
        %v9187 = vadd.f32 %v8994, %v9186
        %v9188 = vpop.f32.mrb[0].mxu0
        %v9189 = vadd.f32 %v8996, %v9188
        %v9190 = vpop.f32.mrb[0].mxu0
        %v9191 = vadd.f32 %v8998, %v9190
        %v9192 = vpop.f32.mrb[0].mxu0
        %v9193 = vadd.f32 %v9000, %v9192
        %9194 = vmatprep.mubr.bf16.mxu0 %v3985
        %9195 = vmatmul.mubr.bf16.gmra.mrb[0].mxu0 %v3984
        %v9196 = vpop.f32.mrb[0].mxu0
        %v9197 = vadd.f32 %v9004, %v9196
        %v9198 = vpop.f32.mrb[0].mxu0
        %v9199 = vadd.f32 %v9006, %v9198
        %v9200 = vpop.f32.mrb[0].mxu0
        %v9201 = vadd.f32 %v9008, %v9200
        %v9202 = vpop.f32.mrb[0].mxu0
        %v9203 = vadd.f32 %v9010, %v9202
        %9204 = vmatprep.mubr.bf16.mxu0 %v3993
        %9205 = vmatmul.mubr.bf16.gmra.mrb[0].mxu0 %v3992
        %v9206 = vpop.f32.mrb[0].mxu0
        %v9207 = vadd.f32 %v9014, %v9206
        %v9208 = vpop.f32.mrb[0].mxu0
        %v9209 = vadd.f32 %v9016, %v9208
        %v9210 = vpop.f32.mrb[0].mxu0
        %v9211 = vadd.f32 %v9018, %v9210
        %v9212 = vpop.f32.mrb[0].mxu0
        %v9213 = vadd.f32 %v9020, %v9212
        %9214 = vmatprep.mubr.bf16.mxu0 %v4001
        %9215 = vmatmul.mubr.bf16.gmra.mrb[0].mxu0 %v4000
        %v9216 = vpop.f32.mrb[0].mxu0
        %v9217 = vadd.f32 %v9024, %v9216
        %v9218 = vpop.f32.mrb[0].mxu0
        %v9219 = vadd.f32 %v9026, %v9218
        %v9220 = vpop.f32.mrb[0].mxu0
        %v9221 = vadd.f32 %v9028, %v9220
        %v9222 = vpop.f32.mrb[0].mxu0
        %v9223 = vadd.f32 %v9030, %v9222
        %9224 = vmatprep.mubr.bf16.mxu0 %v4009
        %9225 = vmatmul.mubr.bf16.gmra.mrb[0].mxu0 %v4008
        %v9226 = vpop.f32.mrb[0].mxu0
        %v9227 = vadd.f32 %v9034, %v9226
        %v9228 = vpop.f32.mrb[0].mxu0
        %v9229 = vadd.f32 %v9036, %v9228
        %v9230 = vpop.f32.mrb[0].mxu0
        %v9231 = vadd.f32 %v9038, %v9230
        %v9232 = vpop.f32.mrb[0].mxu0
        %v9233 = vadd.f32 %v9040, %v9232
        %9234 = vmatprep.mubr.bf16.mxu0 %v4017
        %9235 = vmatmul.mubr.bf16.gmra.mrb[0].mxu0 %v4016
        %v9236 = vpop.f32.mrb[0].mxu0
        %v9237 = vadd.f32 %v9044, %v9236
        %v9238 = vpop.f32.mrb[0].mxu0
        %v9239 = vadd.f32 %v9046, %v9238
        %v9240 = vpop.f32.mrb[0].mxu0
        %v9241 = vadd.f32 %v9048, %v9240
        %v9242 = vpop.f32.mrb[0].mxu0
        %v9243 = vadd.f32 %v9050, %v9242
        %9244 = vmatprep.mubr.bf16.mxu0 %v4025
        %9245 = vmatmul.mubr.bf16.gmra.mrb[0].mxu0 %v4024
        %v9246 = vpop.f32.mrb[0].mxu0
        %v9247 = vadd.f32 %v9054, %v9246
        %v9248 = vpop.f32.mrb[0].mxu0
        %v9249 = vadd.f32 %v9056, %v9248
        %v9250 = vpop.f32.mrb[0].mxu0
        %v9251 = vadd.f32 %v9058, %v9250
        %v9252 = vpop.f32.mrb[0].mxu0
        %v9253 = vadd.f32 %v9060, %v9252
        %9254 = vmatprep.mubr.bf16.mxu0 %v4033
        %9255 = vmatmul.mubr.bf16.gmra.mrb[0].mxu0 %v4032
        %v9256 = vpop.f32.mrb[0].mxu0
        %v9257 = vadd.f32 %v9064, %v9256
        %v9258 = vpop.f32.mrb[0].mxu0
        %v9259 = vadd.f32 %v9066, %v9258
        %v9260 = vpop.f32.mrb[0].mxu0
        %v9261 = vadd.f32 %v9068, %v9260
        %v9262 = vpop.f32.mrb[0].mxu0
        %v9263 = vadd.f32 %v9070, %v9262
        %9264 = vmatprep.mubr.bf16.mxu0 %v4041
        %9265 = vmatmul.mubr.bf16.gmra.mrb[0].mxu0 %v4040
        %v9266 = vpop.f32.mrb[0].mxu0
        %v9267 = vadd.f32 %v9074, %v9266
        %v9268 = vpop.f32.mrb[0].mxu0
        %v9269 = vadd.f32 %v9076, %v9268
        %v9270 = vpop.f32.mrb[0].mxu0
        %v9271 = vadd.f32 %v9078, %v9270
        %v9272 = vpop.f32.mrb[0].mxu0
        %v9273 = vadd.f32 %v9080, %v9272
        %9274 = vmatprep.mubr.bf16.mxu0 %v4049
        %9275 = vmatmul.mubr.bf16.gmra.mrb[0].mxu0 %v4048
        %v9276 = vpop.f32.mrb[0].mxu0
        %v9277 = vadd.f32 %v9084, %v9276
        %v9278 = vpop.f32.mrb[0].mxu0
        %v9279 = vadd.f32 %v9086, %v9278
        %v9280 = vpop.f32.mrb[0].mxu0
        %v9281 = vadd.f32 %v9088, %v9280
        %v9282 = vpop.f32.mrb[0].mxu0
        %v9283 = vadd.f32 %v9090, %v9282
        %9284 = vmatprep.mubr.bf16.mxu0 %v4057
        %9285 = vmatmul.mubr.bf16.gmra.mrb[0].mxu0 %v4056
        %v9286 = vpop.f32.mrb[0].mxu0
        %v9287 = vadd.f32 %v9094, %v9286
        %v9288 = vpop.f32.mrb[0].mxu0
        %v9289 = vadd.f32 %v9096, %v9288
        %v9290 = vpop.f32.mrb[0].mxu0
        %v9291 = vadd.f32 %v9098, %v9290
        %v9292 = vpop.f32.mrb[0].mxu0
        %v9293 = vadd.f32 %v9100, %v9292
        %9294 = vmatprep.mubr.bf16.mxu0 %v4065
        %9295 = vmatmul.mubr.bf16.gmra.mrb[0].mxu0 %v4064
        %v9296 = vpop.f32.mrb[0].mxu0
        %v9297 = vadd.f32 %v9104, %v9296
        %v9298 = vpop.f32.mrb[0].mxu0
        %v9299 = vadd.f32 %v9106, %v9298
        %v9300 = vpop.f32.mrb[0].mxu0
        %v9301 = vadd.f32 %v9108, %v9300
        %v9302 = vpop.f32.mrb[0].mxu0
        %v9303 = vadd.f32 %v9110, %v9302
        %9304 = vdwg.mxu0
        %9305 = vmatprep.subr.bf16.mxu0 %v6547
        %9306 = vmatpush1.bf16.msra.mxu0 %v6546
        %9307 = vmatprep.subr.bf16.mxu0 %v6555
        %9308 = vmatpush1.bf16.msra.mxu0 %v6554
        %9309 = vmatprep.subr.bf16.mxu0 %v6563
        %9310 = vmatpush1.bf16.msra.mxu0 %v6562
        %9311 = vmatprep.subr.bf16.mxu0 %v6571
        %9312 = vmatpush1.bf16.msra.mxu0 %v6570
        %9313 = vmatprep.subr.bf16.mxu0 %v6579
        %9314 = vmatpush1.bf16.msra.mxu0 %v6578
        %9315 = vmatprep.subr.bf16.mxu0 %v6587
        %9316 = vmatpush1.bf16.msra.mxu0 %v6586
        %9317 = vmatprep.subr.bf16.mxu0 %v6595
        %9318 = vmatpush1.bf16.msra.mxu0 %v6594
        %9319 = vmatprep.subr.bf16.mxu0 %v6603
        %9320 = vmatpush1.bf16.msra.mxu0 %v6602
        %9321 = vmatprep.subr.bf16.mxu0 %v6611
        %9322 = vmatpush1.bf16.msra.mxu0 %v6610
        %9323 = vmatprep.subr.bf16.mxu0 %v6619
        %9324 = vmatpush1.bf16.msra.mxu0 %v6618
        %9325 = vmatprep.subr.bf16.mxu0 %v6627
        %9326 = vmatpush1.bf16.msra.mxu0 %v6626
        %9327 = vmatprep.subr.bf16.mxu0 %v6635
        %9328 = vmatpush1.bf16.msra.mxu0 %v6634
        %9329 = vmatprep.subr.bf16.mxu0 %v6643
        %9330 = vmatpush1.bf16.msra.mxu0 %v6642
        %9331 = vmatprep.subr.bf16.mxu0 %v6651
        %9332 = vmatpush1.bf16.msra.mxu0 %v6650
        %9333 = vmatprep.subr.bf16.mxu0 %v6659
        %9334 = vmatpush1.bf16.msra.mxu0 %v6658
        %9335 = vmatprep.subr.bf16.mxu0 %v6667
        %9336 = vmatpush1.bf16.msra.mxu0 %v6666
        %9337 = vmatprep.mubr.bf16.mxu0 %v3947
        %9338 = vmatmul.mubr.bf16.gmra.mrb[0].mxu0 %v3946
        %v9339 = vpop.f32.mrb[0].mxu0
        %v9340 = vadd.f32 %v9147, %v9339
        %v9341 = vpop.f32.mrb[0].mxu0
        %v9342 = vadd.f32 %v9149, %v9341
        %v9343 = vpop.f32.mrb[0].mxu0
        %v9344 = vadd.f32 %v9151, %v9343
        %v9345 = vpop.f32.mrb[0].mxu0
        %v9346 = vadd.f32 %v9153, %v9345
        %9347 = vmatprep.mubr.bf16.mxu0 %v3955
        %9348 = vmatmul.mubr.bf16.gmra.mrb[0].mxu0 %v3954
        %v9349 = vpop.f32.mrb[0].mxu0
        %v9350 = vadd.f32 %v9157, %v9349
        %v9351 = vpop.f32.mrb[0].mxu0
        %v9352 = vadd.f32 %v9159, %v9351
        %v9353 = vpop.f32.mrb[0].mxu0
        %v9354 = vadd.f32 %v9161, %v9353
        %v9355 = vpop.f32.mrb[0].mxu0
        %v9356 = vadd.f32 %v9163, %v9355
        %9357 = vmatprep.mubr.bf16.mxu0 %v3963
        %9358 = vmatmul.mubr.bf16.gmra.mrb[0].mxu0 %v3962
        %v9359 = vpop.f32.mrb[0].mxu0
        %v9360 = vadd.f32 %v9167, %v9359
        %v9361 = vpop.f32.mrb[0].mxu0
        %v9362 = vadd.f32 %v9169, %v9361
        %v9363 = vpop.f32.mrb[0].mxu0
        %v9364 = vadd.f32 %v9171, %v9363
        %v9365 = vpop.f32.mrb[0].mxu0
        %v9366 = vadd.f32 %v9173, %v9365
        %9367 = vmatprep.mubr.bf16.mxu0 %v3971
        %9368 = vmatmul.mubr.bf16.gmra.mrb[0].mxu0 %v3970
        %v9369 = vpop.f32.mrb[0].mxu0
        %v9370 = vadd.f32 %v9177, %v9369
        %v9371 = vpop.f32.mrb[0].mxu0
        %v9372 = vadd.f32 %v9179, %v9371
        %v9373 = vpop.f32.mrb[0].mxu0
        %v9374 = vadd.f32 %v9181, %v9373
        %v9375 = vpop.f32.mrb[0].mxu0
        %v9376 = vadd.f32 %v9183, %v9375
        %9377 = vmatprep.mubr.bf16.mxu0 %v3979
        %9378 = vmatmul.mubr.bf16.gmra.mrb[0].mxu0 %v3978
        %v9379 = vpop.f32.mrb[0].mxu0
        %v9380 = vadd.f32 %v9187, %v9379
        %v9381 = vpop.f32.mrb[0].mxu0
        %v9382 = vadd.f32 %v9189, %v9381
        %v9383 = vpop.f32.mrb[0].mxu0
        %v9384 = vadd.f32 %v9191, %v9383
        %v9385 = vpop.f32.mrb[0].mxu0
        %v9386 = vadd.f32 %v9193, %v9385
        %9387 = vmatprep.mubr.bf16.mxu0 %v3987
        %9388 = vmatmul.mubr.bf16.gmra.mrb[0].mxu0 %v3986
        %v9389 = vpop.f32.mrb[0].mxu0
        %v9390 = vadd.f32 %v9197, %v9389
        %v9391 = vpop.f32.mrb[0].mxu0
        %v9392 = vadd.f32 %v9199, %v9391
        %v9393 = vpop.f32.mrb[0].mxu0
        %v9394 = vadd.f32 %v9201, %v9393
        %v9395 = vpop.f32.mrb[0].mxu0
        %v9396 = vadd.f32 %v9203, %v9395
        %9397 = vmatprep.mubr.bf16.mxu0 %v3995
        %9398 = vmatmul.mubr.bf16.gmra.mrb[0].mxu0 %v3994
        %v9399 = vpop.f32.mrb[0].mxu0
        %v9400 = vadd.f32 %v9207, %v9399
        %v9401 = vpop.f32.mrb[0].mxu0
        %v9402 = vadd.f32 %v9209, %v9401
        %v9403 = vpop.f32.mrb[0].mxu0
        %v9404 = vadd.f32 %v9211, %v9403
        %v9405 = vpop.f32.mrb[0].mxu0
        %v9406 = vadd.f32 %v9213, %v9405
        %9407 = vmatprep.mubr.bf16.mxu0 %v4003
        %9408 = vmatmul.mubr.bf16.gmra.mrb[0].mxu0 %v4002
        %v9409 = vpop.f32.mrb[0].mxu0
        %v9410 = vadd.f32 %v9217, %v9409
        %v9411 = vpop.f32.mrb[0].mxu0
        %v9412 = vadd.f32 %v9219, %v9411
        %v9413 = vpop.f32.mrb[0].mxu0
        %v9414 = vadd.f32 %v9221, %v9413
        %v9415 = vpop.f32.mrb[0].mxu0
        %v9416 = vadd.f32 %v9223, %v9415
        %9417 = vmatprep.mubr.bf16.mxu0 %v4011
        %9418 = vmatmul.mubr.bf16.gmra.mrb[0].mxu0 %v4010
        %v9419 = vpop.f32.mrb[0].mxu0
        %v9420 = vadd.f32 %v9227, %v9419
        %v9421 = vpop.f32.mrb[0].mxu0
        %v9422 = vadd.f32 %v9229, %v9421
        %v9423 = vpop.f32.mrb[0].mxu0
        %v9424 = vadd.f32 %v9231, %v9423
        %v9425 = vpop.f32.mrb[0].mxu0
        %v9426 = vadd.f32 %v9233, %v9425
        %9427 = vmatprep.mubr.bf16.mxu0 %v4019
        %9428 = vmatmul.mubr.bf16.gmra.mrb[0].mxu0 %v4018
        %v9429 = vpop.f32.mrb[0].mxu0
        %v9430 = vadd.f32 %v9237, %v9429
        %v9431 = vpop.f32.mrb[0].mxu0
        %v9432 = vadd.f32 %v9239, %v9431
        %v9433 = vpop.f32.mrb[0].mxu0
        %v9434 = vadd.f32 %v9241, %v9433
        %v9435 = vpop.f32.mrb[0].mxu0
        %v9436 = vadd.f32 %v9243, %v9435
        %9437 = vmatprep.mubr.bf16.mxu0 %v4027
        %9438 = vmatmul.mubr.bf16.gmra.mrb[0].mxu0 %v4026
        %v9439 = vpop.f32.mrb[0].mxu0
        %v9440 = vadd.f32 %v9247, %v9439
        %v9441 = vpop.f32.mrb[0].mxu0
        %v9442 = vadd.f32 %v9249, %v9441
        %v9443 = vpop.f32.mrb[0].mxu0
        %v9444 = vadd.f32 %v9251, %v9443
        %v9445 = vpop.f32.mrb[0].mxu0
        %v9446 = vadd.f32 %v9253, %v9445
        %9447 = vmatprep.mubr.bf16.mxu0 %v4035
        %9448 = vmatmul.mubr.bf16.gmra.mrb[0].mxu0 %v4034
        %v9449 = vpop.f32.mrb[0].mxu0
        %v9450 = vadd.f32 %v9257, %v9449
        %v9451 = vpop.f32.mrb[0].mxu0
        %v9452 = vadd.f32 %v9259, %v9451
        %v9453 = vpop.f32.mrb[0].mxu0
        %v9454 = vadd.f32 %v9261, %v9453
        %v9455 = vpop.f32.mrb[0].mxu0
        %v9456 = vadd.f32 %v9263, %v9455
        %9457 = vmatprep.mubr.bf16.mxu0 %v4043
        %9458 = vmatmul.mubr.bf16.gmra.mrb[0].mxu0 %v4042
        %v9459 = vpop.f32.mrb[0].mxu0
        %v9460 = vadd.f32 %v9267, %v9459
        %v9461 = vpop.f32.mrb[0].mxu0
        %v9462 = vadd.f32 %v9269, %v9461
        %v9463 = vpop.f32.mrb[0].mxu0
        %v9464 = vadd.f32 %v9271, %v9463
        %v9465 = vpop.f32.mrb[0].mxu0
        %v9466 = vadd.f32 %v9273, %v9465
        %9467 = vmatprep.mubr.bf16.mxu0 %v4051
        %9468 = vmatmul.mubr.bf16.gmra.mrb[0].mxu0 %v4050
        %v9469 = vpop.f32.mrb[0].mxu0
        %v9470 = vadd.f32 %v9277, %v9469
        %v9471 = vpop.f32.mrb[0].mxu0
        %v9472 = vadd.f32 %v9279, %v9471
        %v9473 = vpop.f32.mrb[0].mxu0
        %v9474 = vadd.f32 %v9281, %v9473
        %v9475 = vpop.f32.mrb[0].mxu0
        %v9476 = vadd.f32 %v9283, %v9475
        %9477 = vmatprep.mubr.bf16.mxu0 %v4059
        %9478 = vmatmul.mubr.bf16.gmra.mrb[0].mxu0 %v4058
        %v9479 = vpop.f32.mrb[0].mxu0
        %v9480 = vadd.f32 %v9287, %v9479
        %v9481 = vpop.f32.mrb[0].mxu0
        %v9482 = vadd.f32 %v9289, %v9481
        %v9483 = vpop.f32.mrb[0].mxu0
        %v9484 = vadd.f32 %v9291, %v9483
        %v9485 = vpop.f32.mrb[0].mxu0
        %v9486 = vadd.f32 %v9293, %v9485
        %9487 = vmatprep.mubr.bf16.mxu0 %v4067
        %9488 = vmatmul.mubr.bf16.gmra.mrb[0].mxu0 %v4066
        %v9489 = vpop.f32.mrb[0].mxu0
        %v9490 = vadd.f32 %v9297, %v9489
        %v9491 = vpop.f32.mrb[0].mxu0
        %v9492 = vadd.f32 %v9299, %v9491
        %v9493 = vpop.f32.mrb[0].mxu0
        %v9494 = vadd.f32 %v9301, %v9493
        %v9495 = vpop.f32.mrb[0].mxu0
        %v9496 = vadd.f32 %v9303, %v9495
        %9497 = vdwg.mxu0
        %9498 = vmatprep.subr.bf16.mxu0 %v6165
        %9499 = vmatpush1.bf16.msra.mxu0 %v6164
        %9500 = vmatprep.subr.bf16.mxu0 %v6173
        %9501 = vmatpush1.bf16.msra.mxu0 %v6172
        %9502 = vmatprep.subr.bf16.mxu0 %v6181
        %9503 = vmatpush1.bf16.msra.mxu0 %v6180
        %9504 = vmatprep.subr.bf16.mxu0 %v6189
        %9505 = vmatpush1.bf16.msra.mxu0 %v6188
        %9506 = vmatprep.subr.bf16.mxu0 %v6197
        %9507 = vmatpush1.bf16.msra.mxu0 %v6196
        %9508 = vmatprep.subr.bf16.mxu0 %v6205
        %9509 = vmatpush1.bf16.msra.mxu0 %v6204
        %9510 = vmatprep.subr.bf16.mxu0 %v6213
        %9511 = vmatpush1.bf16.msra.mxu0 %v6212
        %9512 = vmatprep.subr.bf16.mxu0 %v6221
        %9513 = vmatpush1.bf16.msra.mxu0 %v6220
        %9514 = vmatprep.subr.bf16.mxu0 %v6229
        %9515 = vmatpush1.bf16.msra.mxu0 %v6228
        %9516 = vmatprep.subr.bf16.mxu0 %v6237
        %9517 = vmatpush1.bf16.msra.mxu0 %v6236
        %9518 = vmatprep.subr.bf16.mxu0 %v6245
        %9519 = vmatpush1.bf16.msra.mxu0 %v6244
        %9520 = vmatprep.subr.bf16.mxu0 %v6253
        %9521 = vmatpush1.bf16.msra.mxu0 %v6252
        %9522 = vmatprep.subr.bf16.mxu0 %v6261
        %9523 = vmatpush1.bf16.msra.mxu0 %v6260
        %9524 = vmatprep.subr.bf16.mxu0 %v6269
        %9525 = vmatpush1.bf16.msra.mxu0 %v6268
        %9526 = vmatprep.subr.bf16.mxu0 %v6277
        %9527 = vmatpush1.bf16.msra.mxu0 %v6276
        %9528 = vmatprep.subr.bf16.mxu0 %v6285
        %9529 = vmatpush1.bf16.msra.mxu0 %v6284
        %9530 = vmatprep.mubr.bf16.mxu0 %v3941
        %9531 = vmatmul.mubr.bf16.gmra.mrb[0].mxu0 %v3940
        %v9532 = vpop.f32.mrb[0].mxu0
        %v9533 = vadd.f32 %v4609, %v9532
        %v9534 = vpop.f32.mrb[0].mxu0
        %v9535 = vadd.f32 %v4613, %v9534
        %v9536 = vpop.f32.mrb[0].mxu0
        %v9537 = vadd.f32 %v4609, %v9536
        %v9538 = vpop.f32.mrb[0].mxu0
        %v9539 = vadd.f32 %v4613, %v9538
        %9540 = vmatprep.mubr.bf16.mxu0 %v3949
        %9541 = vmatmul.mubr.bf16.gmra.mrb[0].mxu0 %v3948
        %v9542 = vpop.f32.mrb[0].mxu0
        %v9543 = vadd.f32 %v4609, %v9542
        %v9544 = vpop.f32.mrb[0].mxu0
        %v9545 = vadd.f32 %v4613, %v9544
        %v9546 = vpop.f32.mrb[0].mxu0
        %v9547 = vadd.f32 %v4609, %v9546
        %v9548 = vpop.f32.mrb[0].mxu0
        %v9549 = vadd.f32 %v4613, %v9548
        %9550 = vmatprep.mubr.bf16.mxu0 %v3957
        %9551 = vmatmul.mubr.bf16.gmra.mrb[0].mxu0 %v3956
        %v9552 = vpop.f32.mrb[0].mxu0
        %v9553 = vadd.f32 %v4609, %v9552
        %v9554 = vpop.f32.mrb[0].mxu0
        %v9555 = vadd.f32 %v4613, %v9554
        %v9556 = vpop.f32.mrb[0].mxu0
        %v9557 = vadd.f32 %v4609, %v9556
        %v9558 = vpop.f32.mrb[0].mxu0
        %v9559 = vadd.f32 %v4613, %v9558
        %9560 = vmatprep.mubr.bf16.mxu0 %v3965
        %9561 = vmatmul.mubr.bf16.gmra.mrb[0].mxu0 %v3964
        %v9562 = vpop.f32.mrb[0].mxu0
        %v9563 = vadd.f32 %v4609, %v9562
        %v9564 = vpop.f32.mrb[0].mxu0
        %v9565 = vadd.f32 %v4613, %v9564
        %v9566 = vpop.f32.mrb[0].mxu0
        %v9567 = vadd.f32 %v4609, %v9566
        %v9568 = vpop.f32.mrb[0].mxu0
        %v9569 = vadd.f32 %v4613, %v9568
        %9570 = vmatprep.mubr.bf16.mxu0 %v3973
        %9571 = vmatmul.mubr.bf16.gmra.mrb[0].mxu0 %v3972
        %v9572 = vpop.f32.mrb[0].mxu0
        %v9573 = vadd.f32 %v4609, %v9572
        %v9574 = vpop.f32.mrb[0].mxu0
        %v9575 = vadd.f32 %v4613, %v9574
        %v9576 = vpop.f32.mrb[0].mxu0
        %v9577 = vadd.f32 %v4609, %v9576
        %v9578 = vpop.f32.mrb[0].mxu0
        %v9579 = vadd.f32 %v4613, %v9578
        %9580 = vmatprep.mubr.bf16.mxu0 %v3981
        %9581 = vmatmul.mubr.bf16.gmra.mrb[0].mxu0 %v3980
        %v9582 = vpop.f32.mrb[0].mxu0
        %v9583 = vadd.f32 %v4609, %v9582
        %v9584 = vpop.f32.mrb[0].mxu0
        %v9585 = vadd.f32 %v4613, %v9584
        %v9586 = vpop.f32.mrb[0].mxu0
        %v9587 = vadd.f32 %v4609, %v9586
        %v9588 = vpop.f32.mrb[0].mxu0
        %v9589 = vadd.f32 %v4613, %v9588
        %9590 = vmatprep.mubr.bf16.mxu0 %v3989
        %9591 = vmatmul.mubr.bf16.gmra.mrb[0].mxu0 %v3988
        %v9592 = vpop.f32.mrb[0].mxu0
        %v9593 = vadd.f32 %v4609, %v9592
        %v9594 = vpop.f32.mrb[0].mxu0
        %v9595 = vadd.f32 %v4613, %v9594
        %v9596 = vpop.f32.mrb[0].mxu0
        %v9597 = vadd.f32 %v4609, %v9596
        %v9598 = vpop.f32.mrb[0].mxu0
        %v9599 = vadd.f32 %v4613, %v9598
        %9600 = vmatprep.mubr.bf16.mxu0 %v3997
        %9601 = vmatmul.mubr.bf16.gmra.mrb[0].mxu0 %v3996
        %v9602 = vpop.f32.mrb[0].mxu0
        %v9603 = vadd.f32 %v4609, %v9602
        %v9604 = vpop.f32.mrb[0].mxu0
        %v9605 = vadd.f32 %v4613, %v9604
        %v9606 = vpop.f32.mrb[0].mxu0
        %v9607 = vadd.f32 %v4609, %v9606
        %v9608 = vpop.f32.mrb[0].mxu0
        %v9609 = vadd.f32 %v4613, %v9608
        %9610 = vmatprep.mubr.bf16.mxu0 %v4005
        %9611 = vmatmul.mubr.bf16.gmra.mrb[0].mxu0 %v4004
        %v9612 = vpop.f32.mrb[0].mxu0
        %v9613 = vadd.f32 %v4609, %v9612
        %v9614 = vpop.f32.mrb[0].mxu0
        %v9615 = vadd.f32 %v4613, %v9614
        %v9616 = vpop.f32.mrb[0].mxu0
        %v9617 = vadd.f32 %v4609, %v9616
        %v9618 = vpop.f32.mrb[0].mxu0
        %v9619 = vadd.f32 %v4613, %v9618
        %9620 = vmatprep.mubr.bf16.mxu0 %v4013
        %9621 = vmatmul.mubr.bf16.gmra.mrb[0].mxu0 %v4012
        %v9622 = vpop.f32.mrb[0].mxu0
        %v9623 = vadd.f32 %v4609, %v9622
        %v9624 = vpop.f32.mrb[0].mxu0
        %v9625 = vadd.f32 %v4613, %v9624
        %v9626 = vpop.f32.mrb[0].mxu0
        %v9627 = vadd.f32 %v4609, %v9626
        %v9628 = vpop.f32.mrb[0].mxu0
        %v9629 = vadd.f32 %v4613, %v9628
        %9630 = vmatprep.mubr.bf16.mxu0 %v4021
        %9631 = vmatmul.mubr.bf16.gmra.mrb[0].mxu0 %v4020
        %v9632 = vpop.f32.mrb[0].mxu0
        %v9633 = vadd.f32 %v4609, %v9632
        %v9634 = vpop.f32.mrb[0].mxu0
        %v9635 = vadd.f32 %v4613, %v9634
        %v9636 = vpop.f32.mrb[0].mxu0
        %v9637 = vadd.f32 %v4609, %v9636
        %v9638 = vpop.f32.mrb[0].mxu0
        %v9639 = vadd.f32 %v4613, %v9638
        %9640 = vmatprep.mubr.bf16.mxu0 %v4029
        %9641 = vmatmul.mubr.bf16.gmra.mrb[0].mxu0 %v4028
        %v9642 = vpop.f32.mrb[0].mxu0
        %v9643 = vadd.f32 %v4609, %v9642
        %v9644 = vpop.f32.mrb[0].mxu0
        %v9645 = vadd.f32 %v4613, %v9644
        %v9646 = vpop.f32.mrb[0].mxu0
        %v9647 = vadd.f32 %v4609, %v9646
        %v9648 = vpop.f32.mrb[0].mxu0
        %v9649 = vadd.f32 %v4613, %v9648
        %9650 = vmatprep.mubr.bf16.mxu0 %v4037
        %9651 = vmatmul.mubr.bf16.gmra.mrb[0].mxu0 %v4036
        %v9652 = vpop.f32.mrb[0].mxu0
        %v9653 = vadd.f32 %v4609, %v9652
        %v9654 = vpop.f32.mrb[0].mxu0
        %v9655 = vadd.f32 %v4613, %v9654
        %v9656 = vpop.f32.mrb[0].mxu0
        %v9657 = vadd.f32 %v4609, %v9656
        %v9658 = vpop.f32.mrb[0].mxu0
        %v9659 = vadd.f32 %v4613, %v9658
        %9660 = vmatprep.mubr.bf16.mxu0 %v4045
        %9661 = vmatmul.mubr.bf16.gmra.mrb[0].mxu0 %v4044
        %v9662 = vpop.f32.mrb[0].mxu0
        %v9663 = vadd.f32 %v4609, %v9662
        %v9664 = vpop.f32.mrb[0].mxu0
        %v9665 = vadd.f32 %v4613, %v9664
        %v9666 = vpop.f32.mrb[0].mxu0
        %v9667 = vadd.f32 %v4609, %v9666
        %v9668 = vpop.f32.mrb[0].mxu0
        %v9669 = vadd.f32 %v4613, %v9668
        %9670 = vmatprep.mubr.bf16.mxu0 %v4053
        %9671 = vmatmul.mubr.bf16.gmra.mrb[0].mxu0 %v4052
        %v9672 = vpop.f32.mrb[0].mxu0
        %v9673 = vadd.f32 %v4609, %v9672
        %v9674 = vpop.f32.mrb[0].mxu0
        %v9675 = vadd.f32 %v4613, %v9674
        %v9676 = vpop.f32.mrb[0].mxu0
        %v9677 = vadd.f32 %v4609, %v9676
        %v9678 = vpop.f32.mrb[0].mxu0
        %v9679 = vadd.f32 %v4613, %v9678
        %9680 = vmatprep.mubr.bf16.mxu0 %v4061
        %9681 = vmatmul.mubr.bf16.gmra.mrb[0].mxu0 %v4060
        %v9682 = vpop.f32.mrb[0].mxu0
        %v9683 = vadd.f32 %v4609, %v9682
        %v9684 = vpop.f32.mrb[0].mxu0
        %v9685 = vadd.f32 %v4613, %v9684
        %v9686 = vpop.f32.mrb[0].mxu0
        %v9687 = vadd.f32 %v4609, %v9686
        %v9688 = vpop.f32.mrb[0].mxu0
        %v9689 = vadd.f32 %v4613, %v9688
        %9690 = vdwg.mxu0
        %9691 = vmatprep.subr.bf16.mxu0 %v6293
        %9692 = vmatpush1.bf16.msra.mxu0 %v6292
        %9693 = vmatprep.subr.bf16.mxu0 %v6301
        %9694 = vmatpush1.bf16.msra.mxu0 %v6300
        %9695 = vmatprep.subr.bf16.mxu0 %v6309
        %9696 = vmatpush1.bf16.msra.mxu0 %v6308
        %9697 = vmatprep.subr.bf16.mxu0 %v6317
        %9698 = vmatpush1.bf16.msra.mxu0 %v6316
        %9699 = vmatprep.subr.bf16.mxu0 %v6325
        %9700 = vmatpush1.bf16.msra.mxu0 %v6324
        %9701 = vmatprep.subr.bf16.mxu0 %v6333
        %9702 = vmatpush1.bf16.msra.mxu0 %v6332
        %9703 = vmatprep.subr.bf16.mxu0 %v6341
        %9704 = vmatpush1.bf16.msra.mxu0 %v6340
        %9705 = vmatprep.subr.bf16.mxu0 %v6349
        %9706 = vmatpush1.bf16.msra.mxu0 %v6348
        %9707 = vmatprep.subr.bf16.mxu0 %v6357
        %9708 = vmatpush1.bf16.msra.mxu0 %v6356
        %9709 = vmatprep.subr.bf16.mxu0 %v6365
        %9710 = vmatpush1.bf16.msra.mxu0 %v6364
        %9711 = vmatprep.subr.bf16.mxu0 %v6373
        %9712 = vmatpush1.bf16.msra.mxu0 %v6372
        %9713 = vmatprep.subr.bf16.mxu0 %v6381
        %9714 = vmatpush1.bf16.msra.mxu0 %v6380
        %9715 = vmatprep.subr.bf16.mxu0 %v6389
        %9716 = vmatpush1.bf16.msra.mxu0 %v6388
        %9717 = vmatprep.subr.bf16.mxu0 %v6397
        %9718 = vmatpush1.bf16.msra.mxu0 %v6396
        %9719 = vmatprep.subr.bf16.mxu0 %v6405
        %9720 = vmatpush1.bf16.msra.mxu0 %v6404
        %9721 = vmatprep.subr.bf16.mxu0 %v6413
        %9722 = vmatpush1.bf16.msra.mxu0 %v6412
        %9723 = vmatprep.mubr.bf16.mxu0 %v3943
        %9724 = vmatmul.mubr.bf16.gmra.mrb[0].mxu0 %v3942
        %v9725 = vpop.f32.mrb[0].mxu0
        %v9726 = vadd.f32 %v9533, %v9725
        %v9727 = vpop.f32.mrb[0].mxu0
        %v9728 = vadd.f32 %v9535, %v9727
        %v9729 = vpop.f32.mrb[0].mxu0
        %v9730 = vadd.f32 %v9537, %v9729
        %v9731 = vpop.f32.mrb[0].mxu0
        %v9732 = vadd.f32 %v9539, %v9731
        %9733 = vmatprep.mubr.bf16.mxu0 %v3951
        %9734 = vmatmul.mubr.bf16.gmra.mrb[0].mxu0 %v3950
        %v9735 = vpop.f32.mrb[0].mxu0
        %v9736 = vadd.f32 %v9543, %v9735
        %v9737 = vpop.f32.mrb[0].mxu0
        %v9738 = vadd.f32 %v9545, %v9737
        %v9739 = vpop.f32.mrb[0].mxu0
        %v9740 = vadd.f32 %v9547, %v9739
        %v9741 = vpop.f32.mrb[0].mxu0
        %v9742 = vadd.f32 %v9549, %v9741
        %9743 = vmatprep.mubr.bf16.mxu0 %v3959
        %9744 = vmatmul.mubr.bf16.gmra.mrb[0].mxu0 %v3958
        %v9745 = vpop.f32.mrb[0].mxu0
        %v9746 = vadd.f32 %v9553, %v9745
        %v9747 = vpop.f32.mrb[0].mxu0
        %v9748 = vadd.f32 %v9555, %v9747
        %v9749 = vpop.f32.mrb[0].mxu0
        %v9750 = vadd.f32 %v9557, %v9749
        %v9751 = vpop.f32.mrb[0].mxu0
        %v9752 = vadd.f32 %v9559, %v9751
        %9753 = vmatprep.mubr.bf16.mxu0 %v3967
        %9754 = vmatmul.mubr.bf16.gmra.mrb[0].mxu0 %v3966
        %v9755 = vpop.f32.mrb[0].mxu0
        %v9756 = vadd.f32 %v9563, %v9755
        %v9757 = vpop.f32.mrb[0].mxu0
        %v9758 = vadd.f32 %v9565, %v9757
        %v9759 = vpop.f32.mrb[0].mxu0
        %v9760 = vadd.f32 %v9567, %v9759
        %v9761 = vpop.f32.mrb[0].mxu0
        %v9762 = vadd.f32 %v9569, %v9761
        %9763 = vmatprep.mubr.bf16.mxu0 %v3975
        %9764 = vmatmul.mubr.bf16.gmra.mrb[0].mxu0 %v3974
        %v9765 = vpop.f32.mrb[0].mxu0
        %v9766 = vadd.f32 %v9573, %v9765
        %v9767 = vpop.f32.mrb[0].mxu0
        %v9768 = vadd.f32 %v9575, %v9767
        %v9769 = vpop.f32.mrb[0].mxu0
        %v9770 = vadd.f32 %v9577, %v9769
        %v9771 = vpop.f32.mrb[0].mxu0
        %v9772 = vadd.f32 %v9579, %v9771
        %9773 = vmatprep.mubr.bf16.mxu0 %v3983
        %9774 = vmatmul.mubr.bf16.gmra.mrb[0].mxu0 %v3982
        %v9775 = vpop.f32.mrb[0].mxu0
        %v9776 = vadd.f32 %v9583, %v9775
        %v9777 = vpop.f32.mrb[0].mxu0
        %v9778 = vadd.f32 %v9585, %v9777
        %v9779 = vpop.f32.mrb[0].mxu0
        %v9780 = vadd.f32 %v9587, %v9779
        %v9781 = vpop.f32.mrb[0].mxu0
        %v9782 = vadd.f32 %v9589, %v9781
        %9783 = vmatprep.mubr.bf16.mxu0 %v3991
        %9784 = vmatmul.mubr.bf16.gmra.mrb[0].mxu0 %v3990
        %v9785 = vpop.f32.mrb[0].mxu0
        %v9786 = vadd.f32 %v9593, %v9785
        %v9787 = vpop.f32.mrb[0].mxu0
        %v9788 = vadd.f32 %v9595, %v9787
        %v9789 = vpop.f32.mrb[0].mxu0
        %v9790 = vadd.f32 %v9597, %v9789
        %v9791 = vpop.f32.mrb[0].mxu0
        %v9792 = vadd.f32 %v9599, %v9791
        %9793 = vmatprep.mubr.bf16.mxu0 %v3999
        %9794 = vmatmul.mubr.bf16.gmra.mrb[0].mxu0 %v3998
        %v9795 = vpop.f32.mrb[0].mxu0
        %v9796 = vadd.f32 %v9603, %v9795
        %v9797 = vpop.f32.mrb[0].mxu0
        %v9798 = vadd.f32 %v9605, %v9797
        %v9799 = vpop.f32.mrb[0].mxu0
        %v9800 = vadd.f32 %v9607, %v9799
        %v9801 = vpop.f32.mrb[0].mxu0
        %v9802 = vadd.f32 %v9609, %v9801
        %9803 = vmatprep.mubr.bf16.mxu0 %v4007
        %9804 = vmatmul.mubr.bf16.gmra.mrb[0].mxu0 %v4006
        %v9805 = vpop.f32.mrb[0].mxu0
        %v9806 = vadd.f32 %v9613, %v9805
        %v9807 = vpop.f32.mrb[0].mxu0
        %v9808 = vadd.f32 %v9615, %v9807
        %v9809 = vpop.f32.mrb[0].mxu0
        %v9810 = vadd.f32 %v9617, %v9809
        %v9811 = vpop.f32.mrb[0].mxu0
        %v9812 = vadd.f32 %v9619, %v9811
        %9813 = vmatprep.mubr.bf16.mxu0 %v4015
        %9814 = vmatmul.mubr.bf16.gmra.mrb[0].mxu0 %v4014
        %v9815 = vpop.f32.mrb[0].mxu0
        %v9816 = vadd.f32 %v9623, %v9815
        %v9817 = vpop.f32.mrb[0].mxu0
        %v9818 = vadd.f32 %v9625, %v9817
        %v9819 = vpop.f32.mrb[0].mxu0
        %v9820 = vadd.f32 %v9627, %v9819
        %v9821 = vpop.f32.mrb[0].mxu0
        %v9822 = vadd.f32 %v9629, %v9821
        %9823 = vmatprep.mubr.bf16.mxu0 %v4023
        %9824 = vmatmul.mubr.bf16.gmra.mrb[0].mxu0 %v4022
        %v9825 = vpop.f32.mrb[0].mxu0
        %v9826 = vadd.f32 %v9633, %v9825
        %v9827 = vpop.f32.mrb[0].mxu0
        %v9828 = vadd.f32 %v9635, %v9827
        %v9829 = vpop.f32.mrb[0].mxu0
        %v9830 = vadd.f32 %v9637, %v9829
        %v9831 = vpop.f32.mrb[0].mxu0
        %v9832 = vadd.f32 %v9639, %v9831
        %9833 = vmatprep.mubr.bf16.mxu0 %v4031
        %9834 = vmatmul.mubr.bf16.gmra.mrb[0].mxu0 %v4030
        %v9835 = vpop.f32.mrb[0].mxu0
        %v9836 = vadd.f32 %v9643, %v9835
        %v9837 = vpop.f32.mrb[0].mxu0
        %v9838 = vadd.f32 %v9645, %v9837
        %v9839 = vpop.f32.mrb[0].mxu0
        %v9840 = vadd.f32 %v9647, %v9839
        %v9841 = vpop.f32.mrb[0].mxu0
        %v9842 = vadd.f32 %v9649, %v9841
        %9843 = vmatprep.mubr.bf16.mxu0 %v4039
        %9844 = vmatmul.mubr.bf16.gmra.mrb[0].mxu0 %v4038
        %v9845 = vpop.f32.mrb[0].mxu0
        %v9846 = vadd.f32 %v9653, %v9845
        %v9847 = vpop.f32.mrb[0].mxu0
        %v9848 = vadd.f32 %v9655, %v9847
        %v9849 = vpop.f32.mrb[0].mxu0
        %v9850 = vadd.f32 %v9657, %v9849
        %v9851 = vpop.f32.mrb[0].mxu0
        %v9852 = vadd.f32 %v9659, %v9851
        %9853 = vmatprep.mubr.bf16.mxu0 %v4047
        %9854 = vmatmul.mubr.bf16.gmra.mrb[0].mxu0 %v4046
        %v9855 = vpop.f32.mrb[0].mxu0
        %v9856 = vadd.f32 %v9663, %v9855
        %v9857 = vpop.f32.mrb[0].mxu0
        %v9858 = vadd.f32 %v9665, %v9857
        %v9859 = vpop.f32.mrb[0].mxu0
        %v9860 = vadd.f32 %v9667, %v9859
        %v9861 = vpop.f32.mrb[0].mxu0
        %v9862 = vadd.f32 %v9669, %v9861
        %9863 = vmatprep.mubr.bf16.mxu0 %v4055
        %9864 = vmatmul.mubr.bf16.gmra.mrb[0].mxu0 %v4054
        %v9865 = vpop.f32.mrb[0].mxu0
        %v9866 = vadd.f32 %v9673, %v9865
        %v9867 = vpop.f32.mrb[0].mxu0
        %v9868 = vadd.f32 %v9675, %v9867
        %v9869 = vpop.f32.mrb[0].mxu0
        %v9870 = vadd.f32 %v9677, %v9869
        %v9871 = vpop.f32.mrb[0].mxu0
        %v9872 = vadd.f32 %v9679, %v9871
        %9873 = vmatprep.mubr.bf16.mxu0 %v4063
        %9874 = vmatmul.mubr.bf16.gmra.mrb[0].mxu0 %v4062
        %v9875 = vpop.f32.mrb[0].mxu0
        %v9876 = vadd.f32 %v9683, %v9875
        %v9877 = vpop.f32.mrb[0].mxu0
        %v9878 = vadd.f32 %v9685, %v9877
        %v9879 = vpop.f32.mrb[0].mxu0
        %v9880 = vadd.f32 %v9687, %v9879
        %v9881 = vpop.f32.mrb[0].mxu0
        %v9882 = vadd.f32 %v9689, %v9881
        %9883 = vdwg.mxu0
        %9884 = vmatprep.subr.bf16.mxu0 %v6421
        %9885 = vmatpush1.bf16.msra.mxu0 %v6420
        %9886 = vmatprep.subr.bf16.mxu0 %v6429
        %9887 = vmatpush1.bf16.msra.mxu0 %v6428
        %9888 = vmatprep.subr.bf16.mxu0 %v6437
        %9889 = vmatpush1.bf16.msra.mxu0 %v6436
        %9890 = vmatprep.subr.bf16.mxu0 %v6445
        %9891 = vmatpush1.bf16.msra.mxu0 %v6444
        %9892 = vmatprep.subr.bf16.mxu0 %v6453
        %9893 = vmatpush1.bf16.msra.mxu0 %v6452
        %9894 = vmatprep.subr.bf16.mxu0 %v6461
        %9895 = vmatpush1.bf16.msra.mxu0 %v6460
        %9896 = vmatprep.subr.bf16.mxu0 %v6469
        %9897 = vmatpush1.bf16.msra.mxu0 %v6468
        %9898 = vmatprep.subr.bf16.mxu0 %v6477
        %9899 = vmatpush1.bf16.msra.mxu0 %v6476
        %9900 = vmatprep.subr.bf16.mxu0 %v6485
        %9901 = vmatpush1.bf16.msra.mxu0 %v6484
        %9902 = vmatprep.subr.bf16.mxu0 %v6493
        %9903 = vmatpush1.bf16.msra.mxu0 %v6492
        %9904 = vmatprep.subr.bf16.mxu0 %v6501
        %9905 = vmatpush1.bf16.msra.mxu0 %v6500
        %9906 = vmatprep.subr.bf16.mxu0 %v6509
        %9907 = vmatpush1.bf16.msra.mxu0 %v6508
        %9908 = vmatprep.subr.bf16.mxu0 %v6517
        %9909 = vmatpush1.bf16.msra.mxu0 %v6516
        %9910 = vmatprep.subr.bf16.mxu0 %v6525
        %9911 = vmatpush1.bf16.msra.mxu0 %v6524
        %9912 = vmatprep.subr.bf16.mxu0 %v6533
        %9913 = vmatpush1.bf16.msra.mxu0 %v6532
        %9914 = vmatprep.subr.bf16.mxu0 %v6541
        %9915 = vmatpush1.bf16.msra.mxu0 %v6540
        %9916 = vmatprep.mubr.bf16.mxu0 %v3945
        %9917 = vmatmul.mubr.bf16.gmra.mrb[0].mxu0 %v3944
        %v9918 = vpop.f32.mrb[0].mxu0
        %v9919 = vadd.f32 %v9726, %v9918
        %v9920 = vpop.f32.mrb[0].mxu0
        %v9921 = vadd.f32 %v9728, %v9920
        %v9922 = vpop.f32.mrb[0].mxu0
        %v9923 = vadd.f32 %v9730, %v9922
        %v9924 = vpop.f32.mrb[0].mxu0
        %v9925 = vadd.f32 %v9732, %v9924
        %9926 = vmatprep.mubr.bf16.mxu0 %v3953
        %9927 = vmatmul.mubr.bf16.gmra.mrb[0].mxu0 %v3952
        %v9928 = vpop.f32.mrb[0].mxu0
        %v9929 = vadd.f32 %v9736, %v9928
        %v9930 = vpop.f32.mrb[0].mxu0
        %v9931 = vadd.f32 %v9738, %v9930
        %v9932 = vpop.f32.mrb[0].mxu0
        %v9933 = vadd.f32 %v9740, %v9932
        %v9934 = vpop.f32.mrb[0].mxu0
        %v9935 = vadd.f32 %v9742, %v9934
        %9936 = vmatprep.mubr.bf16.mxu0 %v3961
        %9937 = vmatmul.mubr.bf16.gmra.mrb[0].mxu0 %v3960
        %v9938 = vpop.f32.mrb[0].mxu0
        %v9939 = vadd.f32 %v9746, %v9938
        %v9940 = vpop.f32.mrb[0].mxu0
        %v9941 = vadd.f32 %v9748, %v9940
        %v9942 = vpop.f32.mrb[0].mxu0
        %v9943 = vadd.f32 %v9750, %v9942
        %v9944 = vpop.f32.mrb[0].mxu0
        %v9945 = vadd.f32 %v9752, %v9944
        %9946 = vmatprep.mubr.bf16.mxu0 %v3969
        %9947 = vmatmul.mubr.bf16.gmra.mrb[0].mxu0 %v3968
        %v9948 = vpop.f32.mrb[0].mxu0
        %v9949 = vadd.f32 %v9756, %v9948
        %v9950 = vpop.f32.mrb[0].mxu0
        %v9951 = vadd.f32 %v9758, %v9950
        %v9952 = vpop.f32.mrb[0].mxu0
        %v9953 = vadd.f32 %v9760, %v9952
        %v9954 = vpop.f32.mrb[0].mxu0
        %v9955 = vadd.f32 %v9762, %v9954
        %9956 = vmatprep.mubr.bf16.mxu0 %v3977
        %9957 = vmatmul.mubr.bf16.gmra.mrb[0].mxu0 %v3976
        %v9958 = vpop.f32.mrb[0].mxu0
        %v9959 = vadd.f32 %v9766, %v9958
        %v9960 = vpop.f32.mrb[0].mxu0
        %v9961 = vadd.f32 %v9768, %v9960
        %v9962 = vpop.f32.mrb[0].mxu0
        %v9963 = vadd.f32 %v9770, %v9962
        %v9964 = vpop.f32.mrb[0].mxu0
        %v9965 = vadd.f32 %v9772, %v9964
        %9966 = vmatprep.mubr.bf16.mxu0 %v3985
        %9967 = vmatmul.mubr.bf16.gmra.mrb[0].mxu0 %v3984
        %v9968 = vpop.f32.mrb[0].mxu0
        %v9969 = vadd.f32 %v9776, %v9968
        %v9970 = vpop.f32.mrb[0].mxu0
        %v9971 = vadd.f32 %v9778, %v9970
        %v9972 = vpop.f32.mrb[0].mxu0
        %v9973 = vadd.f32 %v9780, %v9972
        %v9974 = vpop.f32.mrb[0].mxu0
        %v9975 = vadd.f32 %v9782, %v9974
        %9976 = vmatprep.mubr.bf16.mxu0 %v3993
        %9977 = vmatmul.mubr.bf16.gmra.mrb[0].mxu0 %v3992
        %v9978 = vpop.f32.mrb[0].mxu0
        %v9979 = vadd.f32 %v9786, %v9978
        %v9980 = vpop.f32.mrb[0].mxu0
        %v9981 = vadd.f32 %v9788, %v9980
        %v9982 = vpop.f32.mrb[0].mxu0
        %v9983 = vadd.f32 %v9790, %v9982
        %v9984 = vpop.f32.mrb[0].mxu0
        %v9985 = vadd.f32 %v9792, %v9984
        %9986 = vmatprep.mubr.bf16.mxu0 %v4001
        %9987 = vmatmul.mubr.bf16.gmra.mrb[0].mxu0 %v4000
        %v9988 = vpop.f32.mrb[0].mxu0
        %v9989 = vadd.f32 %v9796, %v9988
        %v9990 = vpop.f32.mrb[0].mxu0
        %v9991 = vadd.f32 %v9798, %v9990
        %v9992 = vpop.f32.mrb[0].mxu0
        %v9993 = vadd.f32 %v9800, %v9992
        %v9994 = vpop.f32.mrb[0].mxu0
        %v9995 = vadd.f32 %v9802, %v9994
        %9996 = vmatprep.mubr.bf16.mxu0 %v4009
        %9997 = vmatmul.mubr.bf16.gmra.mrb[0].mxu0 %v4008
        %v9998 = vpop.f32.mrb[0].mxu0
        %v9999 = vadd.f32 %v9806, %v9998
        %v10000 = vpop.f32.mrb[0].mxu0
        %v10001 = vadd.f32 %v9808, %v10000
        %v10002 = vpop.f32.mrb[0].mxu0
        %v10003 = vadd.f32 %v9810, %v10002
        %v10004 = vpop.f32.mrb[0].mxu0
        %v10005 = vadd.f32 %v9812, %v10004
        %10006 = vmatprep.mubr.bf16.mxu0 %v4017
        %10007 = vmatmul.mubr.bf16.gmra.mrb[0].mxu0 %v4016
        %v10008 = vpop.f32.mrb[0].mxu0
        %v10009 = vadd.f32 %v9816, %v10008
        %v10010 = vpop.f32.mrb[0].mxu0
        %v10011 = vadd.f32 %v9818, %v10010
        %v10012 = vpop.f32.mrb[0].mxu0
        %v10013 = vadd.f32 %v9820, %v10012
        %v10014 = vpop.f32.mrb[0].mxu0
        %v10015 = vadd.f32 %v9822, %v10014
        %10016 = vmatprep.mubr.bf16.mxu0 %v4025
        %10017 = vmatmul.mubr.bf16.gmra.mrb[0].mxu0 %v4024
        %v10018 = vpop.f32.mrb[0].mxu0
        %v10019 = vadd.f32 %v9826, %v10018
        %v10020 = vpop.f32.mrb[0].mxu0
        %v10021 = vadd.f32 %v9828, %v10020
        %v10022 = vpop.f32.mrb[0].mxu0
        %v10023 = vadd.f32 %v9830, %v10022
        %v10024 = vpop.f32.mrb[0].mxu0
        %v10025 = vadd.f32 %v9832, %v10024
        %10026 = vmatprep.mubr.bf16.mxu0 %v4033
        %10027 = vmatmul.mubr.bf16.gmra.mrb[0].mxu0 %v4032
        %v10028 = vpop.f32.mrb[0].mxu0
        %v10029 = vadd.f32 %v9836, %v10028
        %v10030 = vpop.f32.mrb[0].mxu0
        %v10031 = vadd.f32 %v9838, %v10030
        %v10032 = vpop.f32.mrb[0].mxu0
        %v10033 = vadd.f32 %v9840, %v10032
        %v10034 = vpop.f32.mrb[0].mxu0
        %v10035 = vadd.f32 %v9842, %v10034
        %10036 = vmatprep.mubr.bf16.mxu0 %v4041
        %10037 = vmatmul.mubr.bf16.gmra.mrb[0].mxu0 %v4040
        %v10038 = vpop.f32.mrb[0].mxu0
        %v10039 = vadd.f32 %v9846, %v10038
        %v10040 = vpop.f32.mrb[0].mxu0
        %v10041 = vadd.f32 %v9848, %v10040
        %v10042 = vpop.f32.mrb[0].mxu0
        %v10043 = vadd.f32 %v9850, %v10042
        %v10044 = vpop.f32.mrb[0].mxu0
        %v10045 = vadd.f32 %v9852, %v10044
        %10046 = vmatprep.mubr.bf16.mxu0 %v4049
        %10047 = vmatmul.mubr.bf16.gmra.mrb[0].mxu0 %v4048
        %v10048 = vpop.f32.mrb[0].mxu0
        %v10049 = vadd.f32 %v9856, %v10048
        %v10050 = vpop.f32.mrb[0].mxu0
        %v10051 = vadd.f32 %v9858, %v10050
        %v10052 = vpop.f32.mrb[0].mxu0
        %v10053 = vadd.f32 %v9860, %v10052
        %v10054 = vpop.f32.mrb[0].mxu0
        %v10055 = vadd.f32 %v9862, %v10054
        %10056 = vmatprep.mubr.bf16.mxu0 %v4057
        %10057 = vmatmul.mubr.bf16.gmra.mrb[0].mxu0 %v4056
        %v10058 = vpop.f32.mrb[0].mxu0
        %v10059 = vadd.f32 %v9866, %v10058
        %v10060 = vpop.f32.mrb[0].mxu0
        %v10061 = vadd.f32 %v9868, %v10060
        %v10062 = vpop.f32.mrb[0].mxu0
        %v10063 = vadd.f32 %v9870, %v10062
        %v10064 = vpop.f32.mrb[0].mxu0
        %v10065 = vadd.f32 %v9872, %v10064
        %10066 = vmatprep.mubr.bf16.mxu0 %v4065
        %10067 = vmatmul.mubr.bf16.gmra.mrb[0].mxu0 %v4064
        %v10068 = vpop.f32.mrb[0].mxu0
        %v10069 = vadd.f32 %v9876, %v10068
        %v10070 = vpop.f32.mrb[0].mxu0
        %v10071 = vadd.f32 %v9878, %v10070
        %v10072 = vpop.f32.mrb[0].mxu0
        %v10073 = vadd.f32 %v9880, %v10072
        %v10074 = vpop.f32.mrb[0].mxu0
        %v10075 = vadd.f32 %v9882, %v10074
        %10076 = vdwg.mxu0
        %10077 = vmatprep.subr.bf16.mxu0 %v6549
        %10078 = vmatpush1.bf16.msra.mxu0 %v6548
        %10079 = vmatprep.subr.bf16.mxu0 %v6557
        %10080 = vmatpush1.bf16.msra.mxu0 %v6556
        %10081 = vmatprep.subr.bf16.mxu0 %v6565
        %10082 = vmatpush1.bf16.msra.mxu0 %v6564
        %10083 = vmatprep.subr.bf16.mxu0 %v6573
        %10084 = vmatpush1.bf16.msra.mxu0 %v6572
        %10085 = vmatprep.subr.bf16.mxu0 %v6581
        %10086 = vmatpush1.bf16.msra.mxu0 %v6580
        %10087 = vmatprep.subr.bf16.mxu0 %v6589
        %10088 = vmatpush1.bf16.msra.mxu0 %v6588
        %10089 = vmatprep.subr.bf16.mxu0 %v6597
        %10090 = vmatpush1.bf16.msra.mxu0 %v6596
        %10091 = vmatprep.subr.bf16.mxu0 %v6605
        %10092 = vmatpush1.bf16.msra.mxu0 %v6604
        %10093 = vmatprep.subr.bf16.mxu0 %v6613
        %10094 = vmatpush1.bf16.msra.mxu0 %v6612
        %10095 = vmatprep.subr.bf16.mxu0 %v6621
        %10096 = vmatpush1.bf16.msra.mxu0 %v6620
        %10097 = vmatprep.subr.bf16.mxu0 %v6629
        %10098 = vmatpush1.bf16.msra.mxu0 %v6628
        %10099 = vmatprep.subr.bf16.mxu0 %v6637
        %10100 = vmatpush1.bf16.msra.mxu0 %v6636
        %10101 = vmatprep.subr.bf16.mxu0 %v6645
        %10102 = vmatpush1.bf16.msra.mxu0 %v6644
        %10103 = vmatprep.subr.bf16.mxu0 %v6653
        %10104 = vmatpush1.bf16.msra.mxu0 %v6652
        %10105 = vmatprep.subr.bf16.mxu0 %v6661
        %10106 = vmatpush1.bf16.msra.mxu0 %v6660
        %10107 = vmatprep.subr.bf16.mxu0 %v6669
        %10108 = vmatpush1.bf16.msra.mxu0 %v6668
        %10109 = vmatprep.mubr.bf16.mxu0 %v3947
        %10110 = vmatmul.mubr.bf16.gmra.mrb[0].mxu0 %v3946
        %v10111 = vpop.f32.mrb[0].mxu0
        %v10112 = vadd.f32 %v9919, %v10111
        %v10113 = vpop.f32.mrb[0].mxu0
        %v10114 = vadd.f32 %v9921, %v10113
        %v10115 = vpop.f32.mrb[0].mxu0
        %v10116 = vadd.f32 %v9923, %v10115
        %v10117 = vpop.f32.mrb[0].mxu0
        %v10118 = vadd.f32 %v9925, %v10117
        %10119 = vmatprep.mubr.bf16.mxu0 %v3955
        %10120 = vmatmul.mubr.bf16.gmra.mrb[0].mxu0 %v3954
        %v10121 = vpop.f32.mrb[0].mxu0
        %v10122 = vadd.f32 %v9929, %v10121
        %v10123 = vpop.f32.mrb[0].mxu0
        %v10124 = vadd.f32 %v9931, %v10123
        %v10125 = vpop.f32.mrb[0].mxu0
        %v10126 = vadd.f32 %v9933, %v10125
        %v10127 = vpop.f32.mrb[0].mxu0
        %v10128 = vadd.f32 %v9935, %v10127
        %10129 = vmatprep.mubr.bf16.mxu0 %v3963
        %10130 = vmatmul.mubr.bf16.gmra.mrb[0].mxu0 %v3962
        %v10131 = vpop.f32.mrb[0].mxu0
        %v10132 = vadd.f32 %v9939, %v10131
        %v10133 = vpop.f32.mrb[0].mxu0
        %v10134 = vadd.f32 %v9941, %v10133
        %v10135 = vpop.f32.mrb[0].mxu0
        %v10136 = vadd.f32 %v9943, %v10135
        %v10137 = vpop.f32.mrb[0].mxu0
        %v10138 = vadd.f32 %v9945, %v10137
        %10139 = vmatprep.mubr.bf16.mxu0 %v3971
        %10140 = vmatmul.mubr.bf16.gmra.mrb[0].mxu0 %v3970
        %v10141 = vpop.f32.mrb[0].mxu0
        %v10142 = vadd.f32 %v9949, %v10141
        %v10143 = vpop.f32.mrb[0].mxu0
        %v10144 = vadd.f32 %v9951, %v10143
        %v10145 = vpop.f32.mrb[0].mxu0
        %v10146 = vadd.f32 %v9953, %v10145
        %v10147 = vpop.f32.mrb[0].mxu0
        %v10148 = vadd.f32 %v9955, %v10147
        %10149 = vmatprep.mubr.bf16.mxu0 %v3979
        %10150 = vmatmul.mubr.bf16.gmra.mrb[0].mxu0 %v3978
        %v10151 = vpop.f32.mrb[0].mxu0
        %v10152 = vadd.f32 %v9959, %v10151
        %v10153 = vpop.f32.mrb[0].mxu0
        %v10154 = vadd.f32 %v9961, %v10153
        %v10155 = vpop.f32.mrb[0].mxu0
        %v10156 = vadd.f32 %v9963, %v10155
        %v10157 = vpop.f32.mrb[0].mxu0
        %v10158 = vadd.f32 %v9965, %v10157
        %10159 = vmatprep.mubr.bf16.mxu0 %v3987
        %10160 = vmatmul.mubr.bf16.gmra.mrb[0].mxu0 %v3986
        %v10161 = vpop.f32.mrb[0].mxu0
        %v10162 = vadd.f32 %v9969, %v10161
        %v10163 = vpop.f32.mrb[0].mxu0
        %v10164 = vadd.f32 %v9971, %v10163
        %v10165 = vpop.f32.mrb[0].mxu0
        %v10166 = vadd.f32 %v9973, %v10165
        %v10167 = vpop.f32.mrb[0].mxu0
        %v10168 = vadd.f32 %v9975, %v10167
        %10169 = vmatprep.mubr.bf16.mxu0 %v3995
        %10170 = vmatmul.mubr.bf16.gmra.mrb[0].mxu0 %v3994
        %v10171 = vpop.f32.mrb[0].mxu0
        %v10172 = vadd.f32 %v9979, %v10171
        %v10173 = vpop.f32.mrb[0].mxu0
        %v10174 = vadd.f32 %v9981, %v10173
        %v10175 = vpop.f32.mrb[0].mxu0
        %v10176 = vadd.f32 %v9983, %v10175
        %v10177 = vpop.f32.mrb[0].mxu0
        %v10178 = vadd.f32 %v9985, %v10177
        %10179 = vmatprep.mubr.bf16.mxu0 %v4003
        %10180 = vmatmul.mubr.bf16.gmra.mrb[0].mxu0 %v4002
        %v10181 = vpop.f32.mrb[0].mxu0
        %v10182 = vadd.f32 %v9989, %v10181
        %v10183 = vpop.f32.mrb[0].mxu0
        %v10184 = vadd.f32 %v9991, %v10183
        %v10185 = vpop.f32.mrb[0].mxu0
        %v10186 = vadd.f32 %v9993, %v10185
        %v10187 = vpop.f32.mrb[0].mxu0
        %v10188 = vadd.f32 %v9995, %v10187
        %10189 = vmatprep.mubr.bf16.mxu0 %v4011
        %10190 = vmatmul.mubr.bf16.gmra.mrb[0].mxu0 %v4010
        %v10191 = vpop.f32.mrb[0].mxu0
        %v10192 = vadd.f32 %v9999, %v10191
        %v10193 = vpop.f32.mrb[0].mxu0
        %v10194 = vadd.f32 %v10001, %v10193
        %v10195 = vpop.f32.mrb[0].mxu0
        %v10196 = vadd.f32 %v10003, %v10195
        %v10197 = vpop.f32.mrb[0].mxu0
        %v10198 = vadd.f32 %v10005, %v10197
        %10199 = vmatprep.mubr.bf16.mxu0 %v4019
        %10200 = vmatmul.mubr.bf16.gmra.mrb[0].mxu0 %v4018
        %v10201 = vpop.f32.mrb[0].mxu0
        %v10202 = vadd.f32 %v10009, %v10201
        %v10203 = vpop.f32.mrb[0].mxu0
        %v10204 = vadd.f32 %v10011, %v10203
        %v10205 = vpop.f32.mrb[0].mxu0
        %v10206 = vadd.f32 %v10013, %v10205
        %v10207 = vpop.f32.mrb[0].mxu0
        %v10208 = vadd.f32 %v10015, %v10207
        %10209 = vmatprep.mubr.bf16.mxu0 %v4027
        %10210 = vmatmul.mubr.bf16.gmra.mrb[0].mxu0 %v4026
        %v10211 = vpop.f32.mrb[0].mxu0
        %v10212 = vadd.f32 %v10019, %v10211
        %v10213 = vpop.f32.mrb[0].mxu0
        %v10214 = vadd.f32 %v10021, %v10213
        %v10215 = vpop.f32.mrb[0].mxu0
        %v10216 = vadd.f32 %v10023, %v10215
        %v10217 = vpop.f32.mrb[0].mxu0
        %v10218 = vadd.f32 %v10025, %v10217
        %10219 = vmatprep.mubr.bf16.mxu0 %v4035
        %10220 = vmatmul.mubr.bf16.gmra.mrb[0].mxu0 %v4034
        %v10221 = vpop.f32.mrb[0].mxu0
        %v10222 = vadd.f32 %v10029, %v10221
        %v10223 = vpop.f32.mrb[0].mxu0
        %v10224 = vadd.f32 %v10031, %v10223
        %v10225 = vpop.f32.mrb[0].mxu0
        %v10226 = vadd.f32 %v10033, %v10225
        %v10227 = vpop.f32.mrb[0].mxu0
        %v10228 = vadd.f32 %v10035, %v10227
        %10229 = vmatprep.mubr.bf16.mxu0 %v4043
        %10230 = vmatmul.mubr.bf16.gmra.mrb[0].mxu0 %v4042
        %v10231 = vpop.f32.mrb[0].mxu0
        %v10232 = vadd.f32 %v10039, %v10231
        %v10233 = vpop.f32.mrb[0].mxu0
        %v10234 = vadd.f32 %v10041, %v10233
        %v10235 = vpop.f32.mrb[0].mxu0
        %v10236 = vadd.f32 %v10043, %v10235
        %v10237 = vpop.f32.mrb[0].mxu0
        %v10238 = vadd.f32 %v10045, %v10237
        %10239 = vmatprep.mubr.bf16.mxu0 %v4051
        %10240 = vmatmul.mubr.bf16.gmra.mrb[0].mxu0 %v4050
        %v10241 = vpop.f32.mrb[0].mxu0
        %v10242 = vadd.f32 %v10049, %v10241
        %v10243 = vpop.f32.mrb[0].mxu0
        %v10244 = vadd.f32 %v10051, %v10243
        %v10245 = vpop.f32.mrb[0].mxu0
        %v10246 = vadd.f32 %v10053, %v10245
        %v10247 = vpop.f32.mrb[0].mxu0
        %v10248 = vadd.f32 %v10055, %v10247
        %10249 = vmatprep.mubr.bf16.mxu0 %v4059
        %10250 = vmatmul.mubr.bf16.gmra.mrb[0].mxu0 %v4058
        %v10251 = vpop.f32.mrb[0].mxu0
        %v10252 = vadd.f32 %v10059, %v10251
        %v10253 = vpop.f32.mrb[0].mxu0
        %v10254 = vadd.f32 %v10061, %v10253
        %v10255 = vpop.f32.mrb[0].mxu0
        %v10256 = vadd.f32 %v10063, %v10255
        %v10257 = vpop.f32.mrb[0].mxu0
        %v10258 = vadd.f32 %v10065, %v10257
        %10259 = vmatprep.mubr.bf16.mxu0 %v4067
        %10260 = vmatmul.mubr.bf16.gmra.mrb[0].mxu0 %v4066
        %v10261 = vpop.f32.mrb[0].mxu0
        %v10262 = vadd.f32 %v10069, %v10261
        %v10263 = vpop.f32.mrb[0].mxu0
        %v10264 = vadd.f32 %v10071, %v10263
        %v10265 = vpop.f32.mrb[0].mxu0
        %v10266 = vadd.f32 %v10073, %v10265
        %v10267 = vpop.f32.mrb[0].mxu0
        %v10268 = vadd.f32 %v10075, %v10267
        %10269 = vdwg.mxu0
        %v10270 = vmax.f32 %v7796, 0.0
        %v10271 = vmax.f32 %v7798, 0.0
        %v10272 = vmax.f32 %v8568, 0.0
        %v10273 = vmax.f32 %v8570, 0.0
        %v10274 = vmax.f32 %v9340, 0.0
        %v10275 = vmax.f32 %v9342, 0.0
        %v10276 = vmax.f32 %v10112, 0.0
        %v10277 = vmax.f32 %v10114, 0.0
        %v10278 = vmax.f32 %v7800, 0.0
        %v10279 = vmax.f32 %v7802, 0.0
        %v10280 = vmax.f32 %v8572, 0.0
        %v10281 = vmax.f32 %v8574, 0.0
        %v10282 = vmax.f32 %v9344, 0.0
        %v10283 = vmax.f32 %v9346, 0.0
        %v10284 = vmax.f32 %v10116, 0.0
        %v10285 = vmax.f32 %v10118, 0.0
        %v10286 = vmax.f32 %v7806, 0.0
        %v10287 = vmax.f32 %v7808, 0.0
        %v10288 = vmax.f32 %v8578, 0.0
        %v10289 = vmax.f32 %v8580, 0.0
        %v10290 = vmax.f32 %v9350, 0.0
        %v10291 = vmax.f32 %v9352, 0.0
        %v10292 = vmax.f32 %v10122, 0.0
        %v10293 = vmax.f32 %v10124, 0.0
        %v10294 = vmax.f32 %v7810, 0.0
        %v10295 = vmax.f32 %v7812, 0.0
        %v10296 = vmax.f32 %v8582, 0.0
        %v10297 = vmax.f32 %v8584, 0.0
        %v10298 = vmax.f32 %v9354, 0.0
        %v10299 = vmax.f32 %v9356, 0.0
        %v10300 = vmax.f32 %v10126, 0.0
        %v10301 = vmax.f32 %v10128, 0.0
        %v10302 = vmax.f32 %v7816, 0.0
        %v10303 = vmax.f32 %v7818, 0.0
        %v10304 = vmax.f32 %v8588, 0.0
        %v10305 = vmax.f32 %v8590, 0.0
        %v10306 = vmax.f32 %v9360, 0.0
        %v10307 = vmax.f32 %v9362, 0.0
        %v10308 = vmax.f32 %v10132, 0.0
        %v10309 = vmax.f32 %v10134, 0.0
        %v10310 = vmax.f32 %v7820, 0.0
        %v10311 = vmax.f32 %v7822, 0.0
        %v10312 = vmax.f32 %v8592, 0.0
        %v10313 = vmax.f32 %v8594, 0.0
        %v10314 = vmax.f32 %v9364, 0.0
        %v10315 = vmax.f32 %v9366, 0.0
        %v10316 = vmax.f32 %v10136, 0.0
        %v10317 = vmax.f32 %v10138, 0.0
        %v10318 = vmax.f32 %v7826, 0.0
        %v10319 = vmax.f32 %v7828, 0.0
        %v10320 = vmax.f32 %v8598, 0.0
        %v10321 = vmax.f32 %v8600, 0.0
        %v10322 = vmax.f32 %v9370, 0.0
        %v10323 = vmax.f32 %v9372, 0.0
        %v10324 = vmax.f32 %v10142, 0.0
        %v10325 = vmax.f32 %v10144, 0.0
        %v10326 = vmax.f32 %v7830, 0.0
        %v10327 = vmax.f32 %v7832, 0.0
        %v10328 = vmax.f32 %v8602, 0.0
        %v10329 = vmax.f32 %v8604, 0.0
        %v10330 = vmax.f32 %v9374, 0.0
        %v10331 = vmax.f32 %v9376, 0.0
        %v10332 = vmax.f32 %v10146, 0.0
        %v10333 = vmax.f32 %v10148, 0.0
        %v10334 = vmax.f32 %v7836, 0.0
        %v10335 = vmax.f32 %v7838, 0.0
        %v10336 = vmax.f32 %v8608, 0.0
        %v10337 = vmax.f32 %v8610, 0.0
        %v10338 = vmax.f32 %v9380, 0.0
        %v10339 = vmax.f32 %v9382, 0.0
        %v10340 = vmax.f32 %v10152, 0.0
        %v10341 = vmax.f32 %v10154, 0.0
        %v10342 = vmax.f32 %v7840, 0.0
        %v10343 = vmax.f32 %v7842, 0.0
        %v10344 = vmax.f32 %v8612, 0.0
        %v10345 = vmax.f32 %v8614, 0.0
        %v10346 = vmax.f32 %v9384, 0.0
        %v10347 = vmax.f32 %v9386, 0.0
        %v10348 = vmax.f32 %v10156, 0.0
        %v10349 = vmax.f32 %v10158, 0.0
        %v10350 = vmax.f32 %v7846, 0.0
        %v10351 = vmax.f32 %v7848, 0.0
        %v10352 = vmax.f32 %v8618, 0.0
        %v10353 = vmax.f32 %v8620, 0.0
        %v10354 = vmax.f32 %v9390, 0.0
        %v10355 = vmax.f32 %v9392, 0.0
        %v10356 = vmax.f32 %v10162, 0.0
        %v10357 = vmax.f32 %v10164, 0.0
        %v10358 = vmax.f32 %v7850, 0.0
        %v10359 = vmax.f32 %v7852, 0.0
        %v10360 = vmax.f32 %v8622, 0.0
        %v10361 = vmax.f32 %v8624, 0.0
        %v10362 = vmax.f32 %v9394, 0.0
        %v10363 = vmax.f32 %v9396, 0.0
        %v10364 = vmax.f32 %v10166, 0.0
        %v10365 = vmax.f32 %v10168, 0.0
        %v10366 = vmax.f32 %v7856, 0.0
        %v10367 = vmax.f32 %v7858, 0.0
        %v10368 = vmax.f32 %v8628, 0.0
        %v10369 = vmax.f32 %v8630, 0.0
        %v10370 = vmax.f32 %v9400, 0.0
        %v10371 = vmax.f32 %v9402, 0.0
        %v10372 = vmax.f32 %v10172, 0.0
        %v10373 = vmax.f32 %v10174, 0.0
        %v10374 = vmax.f32 %v7860, 0.0
        %v10375 = vmax.f32 %v7862, 0.0
        %v10376 = vmax.f32 %v8632, 0.0
        %v10377 = vmax.f32 %v8634, 0.0
        %v10378 = vmax.f32 %v9404, 0.0
        %v10379 = vmax.f32 %v9406, 0.0
        %v10380 = vmax.f32 %v10176, 0.0
        %v10381 = vmax.f32 %v10178, 0.0
        %v10382 = vmax.f32 %v7866, 0.0
        %v10383 = vmax.f32 %v7868, 0.0
        %v10384 = vmax.f32 %v8638, 0.0
        %v10385 = vmax.f32 %v8640, 0.0
        %v10386 = vmax.f32 %v9410, 0.0
        %v10387 = vmax.f32 %v9412, 0.0
        %v10388 = vmax.f32 %v10182, 0.0
        %v10389 = vmax.f32 %v10184, 0.0
        %v10390 = vmax.f32 %v7870, 0.0
        %v10391 = vmax.f32 %v7872, 0.0
        %v10392 = vmax.f32 %v8642, 0.0
        %v10393 = vmax.f32 %v8644, 0.0
        %v10394 = vmax.f32 %v9414, 0.0
        %v10395 = vmax.f32 %v9416, 0.0
        %v10396 = vmax.f32 %v10186, 0.0
        %v10397 = vmax.f32 %v10188, 0.0
        %v10398 = vmax.f32 %v7876, 0.0
        %v10399 = vmax.f32 %v7878, 0.0
        %v10400 = vmax.f32 %v8648, 0.0
        %v10401 = vmax.f32 %v8650, 0.0
        %v10402 = vmax.f32 %v9420, 0.0
        %v10403 = vmax.f32 %v9422, 0.0
        %v10404 = vmax.f32 %v10192, 0.0
        %v10405 = vmax.f32 %v10194, 0.0
        %v10406 = vmax.f32 %v7880, 0.0
        %v10407 = vmax.f32 %v7882, 0.0
        %v10408 = vmax.f32 %v8652, 0.0
        %v10409 = vmax.f32 %v8654, 0.0
        %v10410 = vmax.f32 %v9424, 0.0
        %v10411 = vmax.f32 %v9426, 0.0
        %v10412 = vmax.f32 %v10196, 0.0
        %v10413 = vmax.f32 %v10198, 0.0
        %v10414 = vmax.f32 %v7886, 0.0
        %v10415 = vmax.f32 %v7888, 0.0
        %v10416 = vmax.f32 %v8658, 0.0
        %v10417 = vmax.f32 %v8660, 0.0
        %v10418 = vmax.f32 %v9430, 0.0
        %v10419 = vmax.f32 %v9432, 0.0
        %v10420 = vmax.f32 %v10202, 0.0
        %v10421 = vmax.f32 %v10204, 0.0
        %v10422 = vmax.f32 %v7890, 0.0
        %v10423 = vmax.f32 %v7892, 0.0
        %v10424 = vmax.f32 %v8662, 0.0
        %v10425 = vmax.f32 %v8664, 0.0
        %v10426 = vmax.f32 %v9434, 0.0
        %v10427 = vmax.f32 %v9436, 0.0
        %v10428 = vmax.f32 %v10206, 0.0
        %v10429 = vmax.f32 %v10208, 0.0
        %v10430 = vmax.f32 %v7896, 0.0
        %v10431 = vmax.f32 %v7898, 0.0
        %v10432 = vmax.f32 %v8668, 0.0
        %v10433 = vmax.f32 %v8670, 0.0
        %v10434 = vmax.f32 %v9440, 0.0
        %v10435 = vmax.f32 %v9442, 0.0
        %v10436 = vmax.f32 %v10212, 0.0
        %v10437 = vmax.f32 %v10214, 0.0
        %v10438 = vmax.f32 %v7900, 0.0
        %v10439 = vmax.f32 %v7902, 0.0
        %v10440 = vmax.f32 %v8672, 0.0
        %v10441 = vmax.f32 %v8674, 0.0
        %v10442 = vmax.f32 %v9444, 0.0
        %v10443 = vmax.f32 %v9446, 0.0
        %v10444 = vmax.f32 %v10216, 0.0
        %v10445 = vmax.f32 %v10218, 0.0
        %v10446 = vmax.f32 %v7906, 0.0
        %v10447 = vmax.f32 %v7908, 0.0
        %v10448 = vmax.f32 %v8678, 0.0
        %v10449 = vmax.f32 %v8680, 0.0
        %v10450 = vmax.f32 %v9450, 0.0
        %v10451 = vmax.f32 %v9452, 0.0
        %v10452 = vmax.f32 %v10222, 0.0
        %v10453 = vmax.f32 %v10224, 0.0
        %v10454 = vmax.f32 %v7910, 0.0
        %v10455 = vmax.f32 %v7912, 0.0
        %v10456 = vmax.f32 %v8682, 0.0
        %v10457 = vmax.f32 %v8684, 0.0
        %v10458 = vmax.f32 %v9454, 0.0
        %v10459 = vmax.f32 %v9456, 0.0
        %v10460 = vmax.f32 %v10226, 0.0
        %v10461 = vmax.f32 %v10228, 0.0
        %v10462 = vmax.f32 %v7916, 0.0
        %v10463 = vmax.f32 %v7918, 0.0
        %v10464 = vmax.f32 %v8688, 0.0
        %v10465 = vmax.f32 %v8690, 0.0
        %v10466 = vmax.f32 %v9460, 0.0
        %v10467 = vmax.f32 %v9462, 0.0
        %v10468 = vmax.f32 %v10232, 0.0
        %v10469 = vmax.f32 %v10234, 0.0
        %v10470 = vmax.f32 %v7920, 0.0
        %v10471 = vmax.f32 %v7922, 0.0
        %v10472 = vmax.f32 %v8692, 0.0
        %v10473 = vmax.f32 %v8694, 0.0
        %v10474 = vmax.f32 %v9464, 0.0
        %v10475 = vmax.f32 %v9466, 0.0
        %v10476 = vmax.f32 %v10236, 0.0
        %v10477 = vmax.f32 %v10238, 0.0
        %v10478 = vmax.f32 %v7926, 0.0
        %v10479 = vmax.f32 %v7928, 0.0
        %v10480 = vmax.f32 %v8698, 0.0
        %v10481 = vmax.f32 %v8700, 0.0
        %v10482 = vmax.f32 %v9470, 0.0
        %v10483 = vmax.f32 %v9472, 0.0
        %v10484 = vmax.f32 %v10242, 0.0
        %v10485 = vmax.f32 %v10244, 0.0
        %v10486 = vmax.f32 %v7930, 0.0
        %v10487 = vmax.f32 %v7932, 0.0
        %v10488 = vmax.f32 %v8702, 0.0
        %v10489 = vmax.f32 %v8704, 0.0
        %v10490 = vmax.f32 %v9474, 0.0
        %v10491 = vmax.f32 %v9476, 0.0
        %v10492 = vmax.f32 %v10246, 0.0
        %v10493 = vmax.f32 %v10248, 0.0
        %v10494 = vmax.f32 %v7936, 0.0
        %v10495 = vmax.f32 %v7938, 0.0
        %v10496 = vmax.f32 %v8708, 0.0
        %v10497 = vmax.f32 %v8710, 0.0
        %v10498 = vmax.f32 %v9480, 0.0
        %v10499 = vmax.f32 %v9482, 0.0
        %v10500 = vmax.f32 %v10252, 0.0
        %v10501 = vmax.f32 %v10254, 0.0
        %v10502 = vmax.f32 %v7940, 0.0
        %v10503 = vmax.f32 %v7942, 0.0
        %v10504 = vmax.f32 %v8712, 0.0
        %v10505 = vmax.f32 %v8714, 0.0
        %v10506 = vmax.f32 %v9484, 0.0
        %v10507 = vmax.f32 %v9486, 0.0
        %v10508 = vmax.f32 %v10256, 0.0
        %v10509 = vmax.f32 %v10258, 0.0
        %v10510 = vmax.f32 %v7946, 0.0
        %v10511 = vmax.f32 %v7948, 0.0
        %v10512 = vmax.f32 %v8718, 0.0
        %v10513 = vmax.f32 %v8720, 0.0
        %v10514 = vmax.f32 %v9490, 0.0
        %v10515 = vmax.f32 %v9492, 0.0
        %v10516 = vmax.f32 %v10262, 0.0
        %v10517 = vmax.f32 %v10264, 0.0
        %v10518 = vmax.f32 %v7950, 0.0
        %v10519 = vmax.f32 %v7952, 0.0
        %v10520 = vmax.f32 %v8722, 0.0
        %v10521 = vmax.f32 %v8724, 0.0
        %v10522 = vmax.f32 %v9494, 0.0
        %v10523 = vmax.f32 %v9496, 0.0
        %v10524 = vmax.f32 %v10266, 0.0
        %v10525 = vmax.f32 %v10268, 0.0
        %v10526 = vld [vmem:[#allocation11] sm:$0xff]
        %v10528 = vlaneseq
        %v10529 = vshrl.u32 %v10528, 7
        %v10530 = vsub.s32 0, %v10529
        %v10531 = vrot.slane %v10526, %v10530
        %v10532 = vlaneseq
        %v10533 = vshrl.u32 %v10532, 7
        %v10534 = vsub.s32 1, %v10533
        %v10535 = vrot.slane %v10526, %v10534
        %v10536 = vlaneseq
        %v10537 = vshrl.u32 %v10536, 7
        %v10538 = vsub.s32 2, %v10537
        %v10539 = vrot.slane %v10526, %v10538
        %v10540 = vlaneseq
        %v10541 = vshrl.u32 %v10540, 7
        %v10542 = vsub.s32 3, %v10541
        %v10543 = vrot.slane %v10526, %v10542
        %v10544 = vlaneseq
        %v10545 = vshrl.u32 %v10544, 7
        %v10546 = vsub.s32 4, %v10545
        %v10547 = vrot.slane %v10526, %v10546
        %v10548 = vlaneseq
        %v10549 = vshrl.u32 %v10548, 7
        %v10550 = vsub.s32 5, %v10549
        %v10551 = vrot.slane %v10526, %v10550
        %v10552 = vlaneseq
        %v10553 = vshrl.u32 %v10552, 7
        %v10554 = vsub.s32 6, %v10553
        %v10555 = vrot.slane %v10526, %v10554
        %v10556 = vlaneseq
        %v10557 = vshrl.u32 %v10556, 7
        %v10558 = vsub.s32 7, %v10557
        %v10559 = vrot.slane %v10526, %v10558
        %v10568 = vmul.f32 %v10270, %v10531
        %v10569 = vmul.f32 %v10271, %v10535
        %v10570 = vmul.f32 %v10272, %v10539
        %v10571 = vmul.f32 %v10273, %v10543
        %v10572 = vmul.f32 %v10274, %v10547
        %v10573 = vmul.f32 %v10275, %v10551
        %v10574 = vmul.f32 %v10276, %v10555
        %v10575 = vmul.f32 %v10277, %v10559
        %v10576 = vmul.f32 %v10278, %v10531
        %v10577 = vmul.f32 %v10279, %v10535
        %v10578 = vmul.f32 %v10280, %v10539
        %v10579 = vmul.f32 %v10281, %v10543
        %v10580 = vmul.f32 %v10282, %v10547
        %v10581 = vmul.f32 %v10283, %v10551
        %v10582 = vmul.f32 %v10284, %v10555
        %v10583 = vmul.f32 %v10285, %v10559
        %v10584 = vmul.f32 %v10286, %v10531
        %v10585 = vmul.f32 %v10287, %v10535
        %v10586 = vmul.f32 %v10288, %v10539
        %v10587 = vmul.f32 %v10289, %v10543
        %v10588 = vmul.f32 %v10290, %v10547
        %v10589 = vmul.f32 %v10291, %v10551
        %v10590 = vmul.f32 %v10292, %v10555
        %v10591 = vmul.f32 %v10293, %v10559
        %v10592 = vmul.f32 %v10294, %v10531
        %v10593 = vmul.f32 %v10295, %v10535
        %v10594 = vmul.f32 %v10296, %v10539
        %v10595 = vmul.f32 %v10297, %v10543
        %v10596 = vmul.f32 %v10298, %v10547
        %v10597 = vmul.f32 %v10299, %v10551
        %v10598 = vmul.f32 %v10300, %v10555
        %v10599 = vmul.f32 %v10301, %v10559
        %v10600 = vmul.f32 %v10302, %v10531
        %v10601 = vmul.f32 %v10303, %v10535
        %v10602 = vmul.f32 %v10304, %v10539
        %v10603 = vmul.f32 %v10305, %v10543
        %v10604 = vmul.f32 %v10306, %v10547
        %v10605 = vmul.f32 %v10307, %v10551
        %v10606 = vmul.f32 %v10308, %v10555
        %v10607 = vmul.f32 %v10309, %v10559
        %v10608 = vmul.f32 %v10310, %v10531
        %v10609 = vmul.f32 %v10311, %v10535
        %v10610 = vmul.f32 %v10312, %v10539
        %v10611 = vmul.f32 %v10313, %v10543
        %v10612 = vmul.f32 %v10314, %v10547
        %v10613 = vmul.f32 %v10315, %v10551
        %v10614 = vmul.f32 %v10316, %v10555
        %v10615 = vmul.f32 %v10317, %v10559
        %v10616 = vmul.f32 %v10318, %v10531
        %v10617 = vmul.f32 %v10319, %v10535
        %v10618 = vmul.f32 %v10320, %v10539
        %v10619 = vmul.f32 %v10321, %v10543
        %v10620 = vmul.f32 %v10322, %v10547
        %v10621 = vmul.f32 %v10323, %v10551
        %v10622 = vmul.f32 %v10324, %v10555
        %v10623 = vmul.f32 %v10325, %v10559
        %v10624 = vmul.f32 %v10326, %v10531
        %v10625 = vmul.f32 %v10327, %v10535
        %v10626 = vmul.f32 %v10328, %v10539
        %v10627 = vmul.f32 %v10329, %v10543
        %v10628 = vmul.f32 %v10330, %v10547
        %v10629 = vmul.f32 %v10331, %v10551
        %v10630 = vmul.f32 %v10332, %v10555
        %v10631 = vmul.f32 %v10333, %v10559
        %v10632 = vmul.f32 %v10334, %v10531
        %v10633 = vmul.f32 %v10335, %v10535
        %v10634 = vmul.f32 %v10336, %v10539
        %v10635 = vmul.f32 %v10337, %v10543
        %v10636 = vmul.f32 %v10338, %v10547
        %v10637 = vmul.f32 %v10339, %v10551
        %v10638 = vmul.f32 %v10340, %v10555
        %v10639 = vmul.f32 %v10341, %v10559
        %v10640 = vmul.f32 %v10342, %v10531
        %v10641 = vmul.f32 %v10343, %v10535
        %v10642 = vmul.f32 %v10344, %v10539
        %v10643 = vmul.f32 %v10345, %v10543
        %v10644 = vmul.f32 %v10346, %v10547
        %v10645 = vmul.f32 %v10347, %v10551
        %v10646 = vmul.f32 %v10348, %v10555
        %v10647 = vmul.f32 %v10349, %v10559
        %v10648 = vmul.f32 %v10350, %v10531
        %v10649 = vmul.f32 %v10351, %v10535
        %v10650 = vmul.f32 %v10352, %v10539
        %v10651 = vmul.f32 %v10353, %v10543
        %v10652 = vmul.f32 %v10354, %v10547
        %v10653 = vmul.f32 %v10355, %v10551
        %v10654 = vmul.f32 %v10356, %v10555
        %v10655 = vmul.f32 %v10357, %v10559
        %v10656 = vmul.f32 %v10358, %v10531
        %v10657 = vmul.f32 %v10359, %v10535
        %v10658 = vmul.f32 %v10360, %v10539
        %v10659 = vmul.f32 %v10361, %v10543
        %v10660 = vmul.f32 %v10362, %v10547
        %v10661 = vmul.f32 %v10363, %v10551
        %v10662 = vmul.f32 %v10364, %v10555
        %v10663 = vmul.f32 %v10365, %v10559
        %v10664 = vmul.f32 %v10366, %v10531
        %v10665 = vmul.f32 %v10367, %v10535
        %v10666 = vmul.f32 %v10368, %v10539
        %v10667 = vmul.f32 %v10369, %v10543
        %v10668 = vmul.f32 %v10370, %v10547
        %v10669 = vmul.f32 %v10371, %v10551
        %v10670 = vmul.f32 %v10372, %v10555
        %v10671 = vmul.f32 %v10373, %v10559
        %v10672 = vmul.f32 %v10374, %v10531
        %v10673 = vmul.f32 %v10375, %v10535
        %v10674 = vmul.f32 %v10376, %v10539
        %v10675 = vmul.f32 %v10377, %v10543
        %v10676 = vmul.f32 %v10378, %v10547
        %v10677 = vmul.f32 %v10379, %v10551
        %v10678 = vmul.f32 %v10380, %v10555
        %v10679 = vmul.f32 %v10381, %v10559
        %v10680 = vmul.f32 %v10382, %v10531
        %v10681 = vmul.f32 %v10383, %v10535
        %v10682 = vmul.f32 %v10384, %v10539
        %v10683 = vmul.f32 %v10385, %v10543
        %v10684 = vmul.f32 %v10386, %v10547
        %v10685 = vmul.f32 %v10387, %v10551
        %v10686 = vmul.f32 %v10388, %v10555
        %v10687 = vmul.f32 %v10389, %v10559
        %v10688 = vmul.f32 %v10390, %v10531
        %v10689 = vmul.f32 %v10391, %v10535
        %v10690 = vmul.f32 %v10392, %v10539
        %v10691 = vmul.f32 %v10393, %v10543
        %v10692 = vmul.f32 %v10394, %v10547
        %v10693 = vmul.f32 %v10395, %v10551
        %v10694 = vmul.f32 %v10396, %v10555
        %v10695 = vmul.f32 %v10397, %v10559
        %v10696 = vmul.f32 %v10398, %v10531
        %v10697 = vmul.f32 %v10399, %v10535
        %v10698 = vmul.f32 %v10400, %v10539
        %v10699 = vmul.f32 %v10401, %v10543
        %v10700 = vmul.f32 %v10402, %v10547
        %v10701 = vmul.f32 %v10403, %v10551
        %v10702 = vmul.f32 %v10404, %v10555
        %v10703 = vmul.f32 %v10405, %v10559
        %v10704 = vmul.f32 %v10406, %v10531
        %v10705 = vmul.f32 %v10407, %v10535
        %v10706 = vmul.f32 %v10408, %v10539
        %v10707 = vmul.f32 %v10409, %v10543
        %v10708 = vmul.f32 %v10410, %v10547
        %v10709 = vmul.f32 %v10411, %v10551
        %v10710 = vmul.f32 %v10412, %v10555
        %v10711 = vmul.f32 %v10413, %v10559
        %v10712 = vmul.f32 %v10414, %v10531
        %v10713 = vmul.f32 %v10415, %v10535
        %v10714 = vmul.f32 %v10416, %v10539
        %v10715 = vmul.f32 %v10417, %v10543
        %v10716 = vmul.f32 %v10418, %v10547
        %v10717 = vmul.f32 %v10419, %v10551
        %v10718 = vmul.f32 %v10420, %v10555
        %v10719 = vmul.f32 %v10421, %v10559
        %v10720 = vmul.f32 %v10422, %v10531
        %v10721 = vmul.f32 %v10423, %v10535
        %v10722 = vmul.f32 %v10424, %v10539
        %v10723 = vmul.f32 %v10425, %v10543
        %v10724 = vmul.f32 %v10426, %v10547
        %v10725 = vmul.f32 %v10427, %v10551
        %v10726 = vmul.f32 %v10428, %v10555
        %v10727 = vmul.f32 %v10429, %v10559
        %v10728 = vmul.f32 %v10430, %v10531
        %v10729 = vmul.f32 %v10431, %v10535
        %v10730 = vmul.f32 %v10432, %v10539
        %v10731 = vmul.f32 %v10433, %v10543
        %v10732 = vmul.f32 %v10434, %v10547
        %v10733 = vmul.f32 %v10435, %v10551
        %v10734 = vmul.f32 %v10436, %v10555
        %v10735 = vmul.f32 %v10437, %v10559
        %v10736 = vmul.f32 %v10438, %v10531
        %v10737 = vmul.f32 %v10439, %v10535
        %v10738 = vmul.f32 %v10440, %v10539
        %v10739 = vmul.f32 %v10441, %v10543
        %v10740 = vmul.f32 %v10442, %v10547
        %v10741 = vmul.f32 %v10443, %v10551
        %v10742 = vmul.f32 %v10444, %v10555
        %v10743 = vmul.f32 %v10445, %v10559
        %v10744 = vmul.f32 %v10446, %v10531
        %v10745 = vmul.f32 %v10447, %v10535
        %v10746 = vmul.f32 %v10448, %v10539
        %v10747 = vmul.f32 %v10449, %v10543
        %v10748 = vmul.f32 %v10450, %v10547
        %v10749 = vmul.f32 %v10451, %v10551
        %v10750 = vmul.f32 %v10452, %v10555
        %v10751 = vmul.f32 %v10453, %v10559
        %v10752 = vmul.f32 %v10454, %v10531
        %v10753 = vmul.f32 %v10455, %v10535
        %v10754 = vmul.f32 %v10456, %v10539
        %v10755 = vmul.f32 %v10457, %v10543
        %v10756 = vmul.f32 %v10458, %v10547
        %v10757 = vmul.f32 %v10459, %v10551
        %v10758 = vmul.f32 %v10460, %v10555
        %v10759 = vmul.f32 %v10461, %v10559
        %v10760 = vmul.f32 %v10462, %v10531
        %v10761 = vmul.f32 %v10463, %v10535
        %v10762 = vmul.f32 %v10464, %v10539
        %v10763 = vmul.f32 %v10465, %v10543
        %v10764 = vmul.f32 %v10466, %v10547
        %v10765 = vmul.f32 %v10467, %v10551
        %v10766 = vmul.f32 %v10468, %v10555
        %v10767 = vmul.f32 %v10469, %v10559
        %v10768 = vmul.f32 %v10470, %v10531
        %v10769 = vmul.f32 %v10471, %v10535
        %v10770 = vmul.f32 %v10472, %v10539
        %v10771 = vmul.f32 %v10473, %v10543
        %v10772 = vmul.f32 %v10474, %v10547
        %v10773 = vmul.f32 %v10475, %v10551
        %v10774 = vmul.f32 %v10476, %v10555
        %v10775 = vmul.f32 %v10477, %v10559
        %v10776 = vmul.f32 %v10478, %v10531
        %v10777 = vmul.f32 %v10479, %v10535
        %v10778 = vmul.f32 %v10480, %v10539
        %v10779 = vmul.f32 %v10481, %v10543
        %v10780 = vmul.f32 %v10482, %v10547
        %v10781 = vmul.f32 %v10483, %v10551
        %v10782 = vmul.f32 %v10484, %v10555
        %v10783 = vmul.f32 %v10485, %v10559
        %v10784 = vmul.f32 %v10486, %v10531
        %v10785 = vmul.f32 %v10487, %v10535
        %v10786 = vmul.f32 %v10488, %v10539
        %v10787 = vmul.f32 %v10489, %v10543
        %v10788 = vmul.f32 %v10490, %v10547
        %v10789 = vmul.f32 %v10491, %v10551
        %v10790 = vmul.f32 %v10492, %v10555
        %v10791 = vmul.f32 %v10493, %v10559
        %v10792 = vmul.f32 %v10494, %v10531
        %v10793 = vmul.f32 %v10495, %v10535
        %v10794 = vmul.f32 %v10496, %v10539
        %v10795 = vmul.f32 %v10497, %v10543
        %v10796 = vmul.f32 %v10498, %v10547
        %v10797 = vmul.f32 %v10499, %v10551
        %v10798 = vmul.f32 %v10500, %v10555
        %v10799 = vmul.f32 %v10501, %v10559
        %v10800 = vmul.f32 %v10502, %v10531
        %v10801 = vmul.f32 %v10503, %v10535
        %v10802 = vmul.f32 %v10504, %v10539
        %v10803 = vmul.f32 %v10505, %v10543
        %v10804 = vmul.f32 %v10506, %v10547
        %v10805 = vmul.f32 %v10507, %v10551
        %v10806 = vmul.f32 %v10508, %v10555
        %v10807 = vmul.f32 %v10509, %v10559
        %v10808 = vmul.f32 %v10510, %v10531
        %v10809 = vmul.f32 %v10511, %v10535
        %v10810 = vmul.f32 %v10512, %v10539
        %v10811 = vmul.f32 %v10513, %v10543
        %v10812 = vmul.f32 %v10514, %v10547
        %v10813 = vmul.f32 %v10515, %v10551
        %v10814 = vmul.f32 %v10516, %v10555
        %v10815 = vmul.f32 %v10517, %v10559
        %v10816 = vmul.f32 %v10518, %v10531
        %v10817 = vmul.f32 %v10519, %v10535
        %v10818 = vmul.f32 %v10520, %v10539
        %v10819 = vmul.f32 %v10521, %v10543
        %v10820 = vmul.f32 %v10522, %v10547
        %v10821 = vmul.f32 %v10523, %v10551
        %v10822 = vmul.f32 %v10524, %v10555
        %v10823 = vmul.f32 %v10525, %v10559
        %v10824 = vadd.f32 %v10568, %v10569
        %v10825 = vadd.f32 %v10824, %v10570
        %v10826 = vadd.f32 %v10825, %v10571
        %v10827 = vadd.f32 %v10826, %v10572
        %v10828 = vadd.f32 %v10827, %v10573
        %v10829 = vadd.f32 %v10828, %v10574
        %v10830 = vadd.f32 %v10829, %v10575
        %10831 = vadd.xlane.f32.xlu0 %v10830
        %v10832 = vpop.xlane.xlu0 %10831
        %v10833 = vadd.f32 %v10576, %v10577
        %v10834 = vadd.f32 %v10833, %v10578
        %v10835 = vadd.f32 %v10834, %v10579
        %v10836 = vadd.f32 %v10835, %v10580
        %v10837 = vadd.f32 %v10836, %v10581
        %v10838 = vadd.f32 %v10837, %v10582
        %v10839 = vadd.f32 %v10838, %v10583
        %10840 = vadd.xlane.f32.xlu0 %v10839
        %v10841 = vpop.xlane.xlu0 %10840
        %v10842 = vadd.f32 %v10584, %v10585
        %v10843 = vadd.f32 %v10842, %v10586
        %v10844 = vadd.f32 %v10843, %v10587
        %v10845 = vadd.f32 %v10844, %v10588
        %v10846 = vadd.f32 %v10845, %v10589
        %v10847 = vadd.f32 %v10846, %v10590
        %v10848 = vadd.f32 %v10847, %v10591
        %10849 = vadd.xlane.f32.xlu0 %v10848
        %v10850 = vpop.xlane.xlu0 %10849
        %v10851 = vadd.f32 %v10592, %v10593
        %v10852 = vadd.f32 %v10851, %v10594
        %v10853 = vadd.f32 %v10852, %v10595
        %v10854 = vadd.f32 %v10853, %v10596
        %v10855 = vadd.f32 %v10854, %v10597
        %v10856 = vadd.f32 %v10855, %v10598
        %v10857 = vadd.f32 %v10856, %v10599
        %10858 = vadd.xlane.f32.xlu0 %v10857
        %v10859 = vpop.xlane.xlu0 %10858
        %v10860 = vadd.f32 %v10600, %v10601
        %v10861 = vadd.f32 %v10860, %v10602
        %v10862 = vadd.f32 %v10861, %v10603
        %v10863 = vadd.f32 %v10862, %v10604
        %v10864 = vadd.f32 %v10863, %v10605
        %v10865 = vadd.f32 %v10864, %v10606
        %v10866 = vadd.f32 %v10865, %v10607
        %10867 = vadd.xlane.f32.xlu0 %v10866
        %v10868 = vpop.xlane.xlu0 %10867
        %v10869 = vadd.f32 %v10608, %v10609
        %v10870 = vadd.f32 %v10869, %v10610
        %v10871 = vadd.f32 %v10870, %v10611
        %v10872 = vadd.f32 %v10871, %v10612
        %v10873 = vadd.f32 %v10872, %v10613
        %v10874 = vadd.f32 %v10873, %v10614
        %v10875 = vadd.f32 %v10874, %v10615
        %10876 = vadd.xlane.f32.xlu0 %v10875
        %v10877 = vpop.xlane.xlu0 %10876
        %v10878 = vadd.f32 %v10616, %v10617
        %v10879 = vadd.f32 %v10878, %v10618
        %v10880 = vadd.f32 %v10879, %v10619
        %v10881 = vadd.f32 %v10880, %v10620
        %v10882 = vadd.f32 %v10881, %v10621
        %v10883 = vadd.f32 %v10882, %v10622
        %v10884 = vadd.f32 %v10883, %v10623
        %10885 = vadd.xlane.f32.xlu0 %v10884
        %v10886 = vpop.xlane.xlu0 %10885
        %v10887 = vadd.f32 %v10624, %v10625
        %v10888 = vadd.f32 %v10887, %v10626
        %v10889 = vadd.f32 %v10888, %v10627
        %v10890 = vadd.f32 %v10889, %v10628
        %v10891 = vadd.f32 %v10890, %v10629
        %v10892 = vadd.f32 %v10891, %v10630
        %v10893 = vadd.f32 %v10892, %v10631
        %10894 = vadd.xlane.f32.xlu0 %v10893
        %v10895 = vpop.xlane.xlu0 %10894
        %v10896 = vadd.f32 %v10632, %v10633
        %v10897 = vadd.f32 %v10896, %v10634
        %v10898 = vadd.f32 %v10897, %v10635
        %v10899 = vadd.f32 %v10898, %v10636
        %v10900 = vadd.f32 %v10899, %v10637
        %v10901 = vadd.f32 %v10900, %v10638
        %v10902 = vadd.f32 %v10901, %v10639
        %10903 = vadd.xlane.f32.xlu0 %v10902
        %v10904 = vpop.xlane.xlu0 %10903
        %v10905 = vadd.f32 %v10640, %v10641
        %v10906 = vadd.f32 %v10905, %v10642
        %v10907 = vadd.f32 %v10906, %v10643
        %v10908 = vadd.f32 %v10907, %v10644
        %v10909 = vadd.f32 %v10908, %v10645
        %v10910 = vadd.f32 %v10909, %v10646
        %v10911 = vadd.f32 %v10910, %v10647
        %10912 = vadd.xlane.f32.xlu0 %v10911
        %v10913 = vpop.xlane.xlu0 %10912
        %v10914 = vadd.f32 %v10648, %v10649
        %v10915 = vadd.f32 %v10914, %v10650
        %v10916 = vadd.f32 %v10915, %v10651
        %v10917 = vadd.f32 %v10916, %v10652
        %v10918 = vadd.f32 %v10917, %v10653
        %v10919 = vadd.f32 %v10918, %v10654
        %v10920 = vadd.f32 %v10919, %v10655
        %10921 = vadd.xlane.f32.xlu0 %v10920
        %v10922 = vpop.xlane.xlu0 %10921
        %v10923 = vadd.f32 %v10656, %v10657
        %v10924 = vadd.f32 %v10923, %v10658
        %v10925 = vadd.f32 %v10924, %v10659
        %v10926 = vadd.f32 %v10925, %v10660
        %v10927 = vadd.f32 %v10926, %v10661
        %v10928 = vadd.f32 %v10927, %v10662
        %v10929 = vadd.f32 %v10928, %v10663
        %10930 = vadd.xlane.f32.xlu0 %v10929
        %v10931 = vpop.xlane.xlu0 %10930
        %v10932 = vadd.f32 %v10664, %v10665
        %v10933 = vadd.f32 %v10932, %v10666
        %v10934 = vadd.f32 %v10933, %v10667
        %v10935 = vadd.f32 %v10934, %v10668
        %v10936 = vadd.f32 %v10935, %v10669
        %v10937 = vadd.f32 %v10936, %v10670
        %v10938 = vadd.f32 %v10937, %v10671
        %10939 = vadd.xlane.f32.xlu0 %v10938
        %v10940 = vpop.xlane.xlu0 %10939
        %v10941 = vadd.f32 %v10672, %v10673
        %v10942 = vadd.f32 %v10941, %v10674
        %v10943 = vadd.f32 %v10942, %v10675
        %v10944 = vadd.f32 %v10943, %v10676
        %v10945 = vadd.f32 %v10944, %v10677
        %v10946 = vadd.f32 %v10945, %v10678
        %v10947 = vadd.f32 %v10946, %v10679
        %10948 = vadd.xlane.f32.xlu0 %v10947
        %v10949 = vpop.xlane.xlu0 %10948
        %v10950 = vadd.f32 %v10680, %v10681
        %v10951 = vadd.f32 %v10950, %v10682
        %v10952 = vadd.f32 %v10951, %v10683
        %v10953 = vadd.f32 %v10952, %v10684
        %v10954 = vadd.f32 %v10953, %v10685
        %v10955 = vadd.f32 %v10954, %v10686
        %v10956 = vadd.f32 %v10955, %v10687
        %10957 = vadd.xlane.f32.xlu0 %v10956
        %v10958 = vpop.xlane.xlu0 %10957
        %v10959 = vadd.f32 %v10688, %v10689
        %v10960 = vadd.f32 %v10959, %v10690
        %v10961 = vadd.f32 %v10960, %v10691
        %v10962 = vadd.f32 %v10961, %v10692
        %v10963 = vadd.f32 %v10962, %v10693
        %v10964 = vadd.f32 %v10963, %v10694
        %v10965 = vadd.f32 %v10964, %v10695
        %10966 = vadd.xlane.f32.xlu0 %v10965
        %v10967 = vpop.xlane.xlu0 %10966
        %v10968 = vadd.f32 %v10696, %v10697
        %v10969 = vadd.f32 %v10968, %v10698
        %v10970 = vadd.f32 %v10969, %v10699
        %v10971 = vadd.f32 %v10970, %v10700
        %v10972 = vadd.f32 %v10971, %v10701
        %v10973 = vadd.f32 %v10972, %v10702
        %v10974 = vadd.f32 %v10973, %v10703
        %10975 = vadd.xlane.f32.xlu0 %v10974
        %v10976 = vpop.xlane.xlu0 %10975
        %v10977 = vadd.f32 %v10704, %v10705
        %v10978 = vadd.f32 %v10977, %v10706
        %v10979 = vadd.f32 %v10978, %v10707
        %v10980 = vadd.f32 %v10979, %v10708
        %v10981 = vadd.f32 %v10980, %v10709
        %v10982 = vadd.f32 %v10981, %v10710
        %v10983 = vadd.f32 %v10982, %v10711
        %10984 = vadd.xlane.f32.xlu0 %v10983
        %v10985 = vpop.xlane.xlu0 %10984
        %v10986 = vadd.f32 %v10712, %v10713
        %v10987 = vadd.f32 %v10986, %v10714
        %v10988 = vadd.f32 %v10987, %v10715
        %v10989 = vadd.f32 %v10988, %v10716
        %v10990 = vadd.f32 %v10989, %v10717
        %v10991 = vadd.f32 %v10990, %v10718
        %v10992 = vadd.f32 %v10991, %v10719
        %10993 = vadd.xlane.f32.xlu0 %v10992
        %v10994 = vpop.xlane.xlu0 %10993
        %v10995 = vadd.f32 %v10720, %v10721
        %v10996 = vadd.f32 %v10995, %v10722
        %v10997 = vadd.f32 %v10996, %v10723
        %v10998 = vadd.f32 %v10997, %v10724
        %v10999 = vadd.f32 %v10998, %v10725
        %v11000 = vadd.f32 %v10999, %v10726
        %v11001 = vadd.f32 %v11000, %v10727
        %11002 = vadd.xlane.f32.xlu0 %v11001
        %v11003 = vpop.xlane.xlu0 %11002
        %v11004 = vadd.f32 %v10728, %v10729
        %v11005 = vadd.f32 %v11004, %v10730
        %v11006 = vadd.f32 %v11005, %v10731
        %v11007 = vadd.f32 %v11006, %v10732
        %v11008 = vadd.f32 %v11007, %v10733
        %v11009 = vadd.f32 %v11008, %v10734
        %v11010 = vadd.f32 %v11009, %v10735
        %11011 = vadd.xlane.f32.xlu0 %v11010
        %v11012 = vpop.xlane.xlu0 %11011
        %v11013 = vadd.f32 %v10736, %v10737
        %v11014 = vadd.f32 %v11013, %v10738
        %v11015 = vadd.f32 %v11014, %v10739
        %v11016 = vadd.f32 %v11015, %v10740
        %v11017 = vadd.f32 %v11016, %v10741
        %v11018 = vadd.f32 %v11017, %v10742
        %v11019 = vadd.f32 %v11018, %v10743
        %11020 = vadd.xlane.f32.xlu0 %v11019
        %v11021 = vpop.xlane.xlu0 %11020
        %v11022 = vadd.f32 %v10744, %v10745
        %v11023 = vadd.f32 %v11022, %v10746
        %v11024 = vadd.f32 %v11023, %v10747
        %v11025 = vadd.f32 %v11024, %v10748
        %v11026 = vadd.f32 %v11025, %v10749
        %v11027 = vadd.f32 %v11026, %v10750
        %v11028 = vadd.f32 %v11027, %v10751
        %11029 = vadd.xlane.f32.xlu0 %v11028
        %v11030 = vpop.xlane.xlu0 %11029
        %v11031 = vadd.f32 %v10752, %v10753
        %v11032 = vadd.f32 %v11031, %v10754
        %v11033 = vadd.f32 %v11032, %v10755
        %v11034 = vadd.f32 %v11033, %v10756
        %v11035 = vadd.f32 %v11034, %v10757
        %v11036 = vadd.f32 %v11035, %v10758
        %v11037 = vadd.f32 %v11036, %v10759
        %11038 = vadd.xlane.f32.xlu0 %v11037
        %v11039 = vpop.xlane.xlu0 %11038
        %v11040 = vadd.f32 %v10760, %v10761
        %v11041 = vadd.f32 %v11040, %v10762
        %v11042 = vadd.f32 %v11041, %v10763
        %v11043 = vadd.f32 %v11042, %v10764
        %v11044 = vadd.f32 %v11043, %v10765
        %v11045 = vadd.f32 %v11044, %v10766
        %v11046 = vadd.f32 %v11045, %v10767
        %11047 = vadd.xlane.f32.xlu0 %v11046
        %v11048 = vpop.xlane.xlu0 %11047
        %v11049 = vadd.f32 %v10768, %v10769
        %v11050 = vadd.f32 %v11049, %v10770
        %v11051 = vadd.f32 %v11050, %v10771
        %v11052 = vadd.f32 %v11051, %v10772
        %v11053 = vadd.f32 %v11052, %v10773
        %v11054 = vadd.f32 %v11053, %v10774
        %v11055 = vadd.f32 %v11054, %v10775
        %11056 = vadd.xlane.f32.xlu0 %v11055
        %v11057 = vpop.xlane.xlu0 %11056
        %v11058 = vadd.f32 %v10776, %v10777
        %v11059 = vadd.f32 %v11058, %v10778
        %v11060 = vadd.f32 %v11059, %v10779
        %v11061 = vadd.f32 %v11060, %v10780
        %v11062 = vadd.f32 %v11061, %v10781
        %v11063 = vadd.f32 %v11062, %v10782
        %v11064 = vadd.f32 %v11063, %v10783
        %11065 = vadd.xlane.f32.xlu0 %v11064
        %v11066 = vpop.xlane.xlu0 %11065
        %v11067 = vadd.f32 %v10784, %v10785
        %v11068 = vadd.f32 %v11067, %v10786
        %v11069 = vadd.f32 %v11068, %v10787
        %v11070 = vadd.f32 %v11069, %v10788
        %v11071 = vadd.f32 %v11070, %v10789
        %v11072 = vadd.f32 %v11071, %v10790
        %v11073 = vadd.f32 %v11072, %v10791
        %11074 = vadd.xlane.f32.xlu0 %v11073
        %v11075 = vpop.xlane.xlu0 %11074
        %v11076 = vadd.f32 %v10792, %v10793
        %v11077 = vadd.f32 %v11076, %v10794
        %v11078 = vadd.f32 %v11077, %v10795
        %v11079 = vadd.f32 %v11078, %v10796
        %v11080 = vadd.f32 %v11079, %v10797
        %v11081 = vadd.f32 %v11080, %v10798
        %v11082 = vadd.f32 %v11081, %v10799
        %11083 = vadd.xlane.f32.xlu0 %v11082
        %v11084 = vpop.xlane.xlu0 %11083
        %v11085 = vadd.f32 %v10800, %v10801
        %v11086 = vadd.f32 %v11085, %v10802
        %v11087 = vadd.f32 %v11086, %v10803
        %v11088 = vadd.f32 %v11087, %v10804
        %v11089 = vadd.f32 %v11088, %v10805
        %v11090 = vadd.f32 %v11089, %v10806
        %v11091 = vadd.f32 %v11090, %v10807
        %11092 = vadd.xlane.f32.xlu0 %v11091
        %v11093 = vpop.xlane.xlu0 %11092
        %v11094 = vadd.f32 %v10808, %v10809
        %v11095 = vadd.f32 %v11094, %v10810
        %v11096 = vadd.f32 %v11095, %v10811
        %v11097 = vadd.f32 %v11096, %v10812
        %v11098 = vadd.f32 %v11097, %v10813
        %v11099 = vadd.f32 %v11098, %v10814
        %v11100 = vadd.f32 %v11099, %v10815
        %11101 = vadd.xlane.f32.xlu0 %v11100
        %v11102 = vpop.xlane.xlu0 %11101
        %v11103 = vadd.f32 %v10816, %v10817
        %v11104 = vadd.f32 %v11103, %v10818
        %v11105 = vadd.f32 %v11104, %v10819
        %v11106 = vadd.f32 %v11105, %v10820
        %v11107 = vadd.f32 %v11106, %v10821
        %v11108 = vadd.f32 %v11107, %v10822
        %v11109 = vadd.f32 %v11108, %v10823
        %11110 = vadd.xlane.f32.xlu0 %v11109
        %v11111 = vpop.xlane.xlu0 %11110
        %s11112 = sld [smem:[#allocation2]]
        %v11113 = vstv %s11112
        %v11114 = vadd.f32 %v10832, %v11113
        %v11115 = vadd.f32 %v10841, %v11113
        %v11116 = vadd.f32 %v10850, %v11113
        %v11117 = vadd.f32 %v10859, %v11113
        %v11118 = vadd.f32 %v10868, %v11113
        %v11119 = vadd.f32 %v10877, %v11113
        %v11120 = vadd.f32 %v10886, %v11113
        %v11121 = vadd.f32 %v10895, %v11113
        %v11122 = vadd.f32 %v10904, %v11113
        %v11123 = vadd.f32 %v10913, %v11113
        %v11124 = vadd.f32 %v10922, %v11113
        %v11125 = vadd.f32 %v10931, %v11113
        %v11126 = vadd.f32 %v10940, %v11113
        %v11127 = vadd.f32 %v10949, %v11113
        %v11128 = vadd.f32 %v10958, %v11113
        %v11129 = vadd.f32 %v10967, %v11113
        %v11130 = vadd.f32 %v10976, %v11113
        %v11131 = vadd.f32 %v10985, %v11113
        %v11132 = vadd.f32 %v10994, %v11113
        %v11133 = vadd.f32 %v11003, %v11113
        %v11134 = vadd.f32 %v11012, %v11113
        %v11135 = vadd.f32 %v11021, %v11113
        %v11136 = vadd.f32 %v11030, %v11113
        %v11137 = vadd.f32 %v11039, %v11113
        %v11138 = vadd.f32 %v11048, %v11113
        %v11139 = vadd.f32 %v11057, %v11113
        %v11140 = vadd.f32 %v11066, %v11113
        %v11141 = vadd.f32 %v11075, %v11113
        %v11142 = vadd.f32 %v11084, %v11113
        %v11143 = vadd.f32 %v11093, %v11113
        %v11144 = vadd.f32 %v11102, %v11113
        %v11145 = vadd.f32 %v11111, %v11113
        %v11146 = vxor.u32 %v11114, 2147483648
        %v11147 = vxor.u32 %v11115, 2147483648
        %v11148 = vxor.u32 %v11116, 2147483648
        %v11149 = vxor.u32 %v11117, 2147483648
        %v11150 = vxor.u32 %v11118, 2147483648
        %v11151 = vxor.u32 %v11119, 2147483648
        %v11152 = vxor.u32 %v11120, 2147483648
        %v11153 = vxor.u32 %v11121, 2147483648
        %v11154 = vxor.u32 %v11122, 2147483648
        %v11155 = vxor.u32 %v11123, 2147483648
        %v11156 = vxor.u32 %v11124, 2147483648
        %v11157 = vxor.u32 %v11125, 2147483648
        %v11158 = vxor.u32 %v11126, 2147483648
        %v11159 = vxor.u32 %v11127, 2147483648
        %v11160 = vxor.u32 %v11128, 2147483648
        %v11161 = vxor.u32 %v11129, 2147483648
        %v11162 = vxor.u32 %v11130, 2147483648
        %v11163 = vxor.u32 %v11131, 2147483648
        %v11164 = vxor.u32 %v11132, 2147483648
        %v11165 = vxor.u32 %v11133, 2147483648
        %v11166 = vxor.u32 %v11134, 2147483648
        %v11167 = vxor.u32 %v11135, 2147483648
        %v11168 = vxor.u32 %v11136, 2147483648
        %v11169 = vxor.u32 %v11137, 2147483648
        %v11170 = vxor.u32 %v11138, 2147483648
        %v11171 = vxor.u32 %v11139, 2147483648
        %v11172 = vxor.u32 %v11140, 2147483648
        %v11173 = vxor.u32 %v11141, 2147483648
        %v11174 = vxor.u32 %v11142, 2147483648
        %v11175 = vxor.u32 %v11143, 2147483648
        %v11176 = vxor.u32 %v11144, 2147483648
        %v11177 = vxor.u32 %v11145, 2147483648
        %v11178 = vmul.f32 %v11146, 1.442695
        %v11179 = vpow.pop %v11178
        %v11180 = vmul.f32 %v11147, 1.442695
        %v11181 = vpow.pop %v11180
        %v11182 = vmul.f32 %v11148, 1.442695
        %v11183 = vpow.pop %v11182
        %v11184 = vmul.f32 %v11149, 1.442695
        %v11185 = vpow.pop %v11184
        %v11186 = vmul.f32 %v11150, 1.442695
        %v11187 = vpow.pop %v11186
        %v11188 = vmul.f32 %v11151, 1.442695
        %v11189 = vpow.pop %v11188
        %v11190 = vmul.f32 %v11152, 1.442695
        %v11191 = vpow.pop %v11190
        %v11192 = vmul.f32 %v11153, 1.442695
        %v11193 = vpow.pop %v11192
        %v11194 = vmul.f32 %v11154, 1.442695
        %v11195 = vpow.pop %v11194
        %v11196 = vmul.f32 %v11155, 1.442695
        %v11197 = vpow.pop %v11196
        %v11198 = vmul.f32 %v11156, 1.442695
        %v11199 = vpow.pop %v11198
        %v11200 = vmul.f32 %v11157, 1.442695
        %v11201 = vpow.pop %v11200
        %v11202 = vmul.f32 %v11158, 1.442695
        %v11203 = vpow.pop %v11202
        %v11204 = vmul.f32 %v11159, 1.442695
        %v11205 = vpow.pop %v11204
        %v11206 = vmul.f32 %v11160, 1.442695
        %v11207 = vpow.pop %v11206
        %v11208 = vmul.f32 %v11161, 1.442695
        %v11209 = vpow.pop %v11208
        %v11210 = vmul.f32 %v11162, 1.442695
        %v11211 = vpow.pop %v11210
        %v11212 = vmul.f32 %v11163, 1.442695
        %v11213 = vpow.pop %v11212
        %v11214 = vmul.f32 %v11164, 1.442695
        %v11215 = vpow.pop %v11214
        %v11216 = vmul.f32 %v11165, 1.442695
        %v11217 = vpow.pop %v11216
        %v11218 = vmul.f32 %v11166, 1.442695
        %v11219 = vpow.pop %v11218
        %v11220 = vmul.f32 %v11167, 1.442695
        %v11221 = vpow.pop %v11220
        %v11222 = vmul.f32 %v11168, 1.442695
        %v11223 = vpow.pop %v11222
        %v11224 = vmul.f32 %v11169, 1.442695
        %v11225 = vpow.pop %v11224
        %v11226 = vmul.f32 %v11170, 1.442695
        %v11227 = vpow.pop %v11226
        %v11228 = vmul.f32 %v11171, 1.442695
        %v11229 = vpow.pop %v11228
        %v11230 = vmul.f32 %v11172, 1.442695
        %v11231 = vpow.pop %v11230
        %v11232 = vmul.f32 %v11173, 1.442695
        %v11233 = vpow.pop %v11232
        %v11234 = vmul.f32 %v11174, 1.442695
        %v11235 = vpow.pop %v11234
        %v11236 = vmul.f32 %v11175, 1.442695
        %v11237 = vpow.pop %v11236
        %v11238 = vmul.f32 %v11176, 1.442695
        %v11239 = vpow.pop %v11238
        %v11240 = vmul.f32 %v11177, 1.442695
        %v11241 = vpow.pop %v11240
        %v11242 = vadd.f32 %v11179, 1.0
        %v11243 = vadd.f32 %v11181, 1.0
        %v11244 = vadd.f32 %v11183, 1.0
        %v11245 = vadd.f32 %v11185, 1.0
        %v11246 = vadd.f32 %v11187, 1.0
        %v11247 = vadd.f32 %v11189, 1.0
        %v11248 = vadd.f32 %v11191, 1.0
        %v11249 = vadd.f32 %v11193, 1.0
        %v11250 = vadd.f32 %v11195, 1.0
        %v11251 = vadd.f32 %v11197, 1.0
        %v11252 = vadd.f32 %v11199, 1.0
        %v11253 = vadd.f32 %v11201, 1.0
        %v11254 = vadd.f32 %v11203, 1.0
        %v11255 = vadd.f32 %v11205, 1.0
        %v11256 = vadd.f32 %v11207, 1.0
        %v11257 = vadd.f32 %v11209, 1.0
        %v11258 = vadd.f32 %v11211, 1.0
        %v11259 = vadd.f32 %v11213, 1.0
        %v11260 = vadd.f32 %v11215, 1.0
        %v11261 = vadd.f32 %v11217, 1.0
        %v11262 = vadd.f32 %v11219, 1.0
        %v11263 = vadd.f32 %v11221, 1.0
        %v11264 = vadd.f32 %v11223, 1.0
        %v11265 = vadd.f32 %v11225, 1.0
        %v11266 = vadd.f32 %v11227, 1.0
        %v11267 = vadd.f32 %v11229, 1.0
        %v11268 = vadd.f32 %v11231, 1.0
        %v11269 = vadd.f32 %v11233, 1.0
        %v11270 = vadd.f32 %v11235, 1.0
        %v11271 = vadd.f32 %v11237, 1.0
        %v11272 = vadd.f32 %v11239, 1.0
        %v11273 = vadd.f32 %v11241, 1.0
        %v11274 = vrcp.pop %v11242
        %v11275 = vmul.f32 1.0, %v11274
        %v11276 = vrcp.pop %v11243
        %v11277 = vmul.f32 1.0, %v11276
        %v11278 = vrcp.pop %v11244
        %v11279 = vmul.f32 1.0, %v11278
        %v11280 = vrcp.pop %v11245
        %v11281 = vmul.f32 1.0, %v11280
        %v11282 = vrcp.pop %v11246
        %v11283 = vmul.f32 1.0, %v11282
        %v11284 = vrcp.pop %v11247
        %v11285 = vmul.f32 1.0, %v11284
        %v11286 = vrcp.pop %v11248
        %v11287 = vmul.f32 1.0, %v11286
        %v11288 = vrcp.pop %v11249
        %v11289 = vmul.f32 1.0, %v11288
        %v11290 = vrcp.pop %v11250
        %v11291 = vmul.f32 1.0, %v11290
        %v11292 = vrcp.pop %v11251
        %v11293 = vmul.f32 1.0, %v11292
        %v11294 = vrcp.pop %v11252
        %v11295 = vmul.f32 1.0, %v11294
        %v11296 = vrcp.pop %v11253
        %v11297 = vmul.f32 1.0, %v11296
        %v11298 = vrcp.pop %v11254
        %v11299 = vmul.f32 1.0, %v11298
        %v11300 = vrcp.pop %v11255
        %v11301 = vmul.f32 1.0, %v11300
        %v11302 = vrcp.pop %v11256
        %v11303 = vmul.f32 1.0, %v11302
        %v11304 = vrcp.pop %v11257
        %v11305 = vmul.f32 1.0, %v11304
        %v11306 = vrcp.pop %v11258
        %v11307 = vmul.f32 1.0, %v11306
        %v11308 = vrcp.pop %v11259
        %v11309 = vmul.f32 1.0, %v11308
        %v11310 = vrcp.pop %v11260
        %v11311 = vmul.f32 1.0, %v11310
        %v11312 = vrcp.pop %v11261
        %v11313 = vmul.f32 1.0, %v11312
        %v11314 = vrcp.pop %v11262
        %v11315 = vmul.f32 1.0, %v11314
        %v11316 = vrcp.pop %v11263
        %v11317 = vmul.f32 1.0, %v11316
        %v11318 = vrcp.pop %v11264
        %v11319 = vmul.f32 1.0, %v11318
        %v11320 = vrcp.pop %v11265
        %v11321 = vmul.f32 1.0, %v11320
        %v11322 = vrcp.pop %v11266
        %v11323 = vmul.f32 1.0, %v11322
        %v11324 = vrcp.pop %v11267
        %v11325 = vmul.f32 1.0, %v11324
        %v11326 = vrcp.pop %v11268
        %v11327 = vmul.f32 1.0, %v11326
        %v11328 = vrcp.pop %v11269
        %v11329 = vmul.f32 1.0, %v11328
        %v11330 = vrcp.pop %v11270
        %v11331 = vmul.f32 1.0, %v11330
        %v11332 = vrcp.pop %v11271
        %v11333 = vmul.f32 1.0, %v11332
        %v11334 = vrcp.pop %v11272
        %v11335 = vmul.f32 1.0, %v11334
        %v11336 = vrcp.pop %v11273
        %v11337 = vmul.f32 1.0, %v11336
        %vm11338 = vcmask 7168
        %11339 = vst.msk [vmem:[%s368] sm:$0xff] %vm11338, %v11275
        %11340 = vst.msk [vmem:[%s368 + $0x8] sm:$0xff] %vm11338, %v11277
        %11341 = vst.msk [vmem:[%s368 + $0x10] sm:$0xff] %vm11338, %v11279
        %11342 = vst.msk [vmem:[%s368 + $0x18] sm:$0xff] %vm11338, %v11281
        %11343 = vst.msk [vmem:[%s368 + $0x20] sm:$0xff] %vm11338, %v11283
        %11344 = vst.msk [vmem:[%s368 + $0x28] sm:$0xff] %vm11338, %v11285
        %11345 = vst.msk [vmem:[%s368 + $0x30] sm:$0xff] %vm11338, %v11287
        %11346 = vst.msk [vmem:[%s368 + $0x38] sm:$0xff] %vm11338, %v11289
        %11347 = vst.msk [vmem:[%s368 + $0x40] sm:$0xff] %vm11338, %v11291
        %11348 = vst.msk [vmem:[%s368 + $0x48] sm:$0xff] %vm11338, %v11293
        %11349 = vst.msk [vmem:[%s368 + $0x50] sm:$0xff] %vm11338, %v11295
        %11350 = vst.msk [vmem:[%s368 + $0x58] sm:$0xff] %vm11338, %v11297
        %11351 = vst.msk [vmem:[%s368 + $0x60] sm:$0xff] %vm11338, %v11299
        %11352 = vst.msk [vmem:[%s368 + $0x68] sm:$0xff] %vm11338, %v11301
        %11353 = vst.msk [vmem:[%s368 + $0x70] sm:$0xff] %vm11338, %v11303
        %11354 = vst.msk [vmem:[%s368 + $0x78] sm:$0xff] %vm11338, %v11305
        %11355 = vst.msk [vmem:[%s368 + $0x80] sm:$0xff] %vm11338, %v11307
        %11356 = vst.msk [vmem:[%s368 + $0x88] sm:$0xff] %vm11338, %v11309
        %11357 = vst.msk [vmem:[%s368 + $0x90] sm:$0xff] %vm11338, %v11311
        %11358 = vst.msk [vmem:[%s368 + $0x98] sm:$0xff] %vm11338, %v11313
        %11359 = vst.msk [vmem:[%s368 + $0xa0] sm:$0xff] %vm11338, %v11315
        %11360 = vst.msk [vmem:[%s368 + $0xa8] sm:$0xff] %vm11338, %v11317
        %11361 = vst.msk [vmem:[%s368 + $0xb0] sm:$0xff] %vm11338, %v11319
        %11362 = vst.msk [vmem:[%s368 + $0xb8] sm:$0xff] %vm11338, %v11321
        %11363 = vst.msk [vmem:[%s368 + $0xc0] sm:$0xff] %vm11338, %v11323
        %11364 = vst.msk [vmem:[%s368 + $0xc8] sm:$0xff] %vm11338, %v11325
        %11365 = vst.msk [vmem:[%s368 + $0xd0] sm:$0xff] %vm11338, %v11327
        %11366 = vst.msk [vmem:[%s368 + $0xd8] sm:$0xff] %vm11338, %v11329
        %11367 = vst.msk [vmem:[%s368 + $0xe0] sm:$0xff] %vm11338, %v11331
        %11368 = vst.msk [vmem:[%s368 + $0xe8] sm:$0xff] %vm11338, %v11333
        %11369 = vst.msk [vmem:[%s368 + $0xf0] sm:$0xff] %vm11338, %v11335
        %11370 = vst.msk [vmem:[%s368 + $0xf8] sm:$0xff] %vm11338, %v11337
        %s11371 = smul.u32 32, %s25
        %p11372 = scmp.lt.s32.totalorder %s11371, 63
        %s11373 = scalar_select %p11372, %s11371, 63
        %s11374 = smul.addr %s11373, 8
        %s11375 = scalar_lea.vmem %s7, %s11374
        // Predicated region
        $region73: #{tpu_custom_call.1} parent=47 // pred_check
          %p11376 = pneg %p195
        $region74: #{tpu_custom_call.1} parent=47 // pred_check_branch
          %11378 = sbr.rel (%p11376) target = $region76
        $region75: #{tpu_custom_call.1} parent=47 // pred_region
          %s11379 = smul.u32 32, %s25
        $region76: #{tpu_custom_call.1} parent=47 // pred_fallthru
          _
      $region48: #{tpu_custom_call.1} parent=5 // pred_fallthru
        _
      %p11380 = scmp.le.s32.totalorder 2, %s20
      // Predicated region
      $region77: #{tpu_custom_call.1} parent=5 // pred_check
        %p11381 = pneg %p11380
      $region78: #{tpu_custom_call.1} parent=5 // pred_check_branch
        %11383 = sbr.rel (%p11381) target = $region80
      $region79: #{tpu_custom_call.1} parent=5 // pred_region
        %s11384 = ssub.s32 %s20, 2
        // Predicated region
        $region81: #{tpu_custom_call.1} parent=79 // pred_check
          %p11385 = pneg %p201
        $region82: #{tpu_custom_call.1} parent=79 // pred_check_branch
          %11387 = sbr.rel (%p11385) target = $region84
        $region83: #{tpu_custom_call.1} parent=79 // pred_region
          %s11388 = smul.u32 32, %s26
          %p11389 = scmp.lt.s32.totalorder %s11388, 63
          %s11390 = scalar_select %p11389, %s11388, 63
          %s11391 = smul.addr %s11390, 8
          %s11392 = scalar_lea.vmem %s7, %s11391
        $region84: #{tpu_custom_call.1} parent=79 // pred_fallthru
          _
      $region80: #{tpu_custom_call.1} parent=5 // pred_fallthru
        _
    $region6: #{tpu_custom_call.1} parent=1 // loop_footer
      %s24 = sadd.s32 1, %s20
    $region7: #{tpu_custom_call.1} parent=1 // loop_footer_branch
      %19 = sbr.rel target = $region3
    $region8: #{tpu_custom_call.1} parent=1 // loop_exit
      _
    %11393 = vsyncpa [#allocation4], 1
    %s11394 = scalar_lea.sflag [#allocation4], 1
    %11395 = vsyncpa %s11394, 1
    %11396 = vsyncpa [#allocation6], 1
    %11397 = vsyncpa [#allocation9], 1
    %11398 = vsyncpa [#allocation12], 1

</llo_original>
